<compile_context>
chip_gen: v5e
topology: v5e:2x2
jax: 0.10.0
libtpu: 0.0.40
codegen_flags: <defaults>
</compile_context>

<pallas_src>
import functools

import jax
import jax.numpy as jnp
from jax.experimental import pallas as pl
from jax.experimental.pallas import tpu as pltpu


# ----------------------------------------------------------------------------
# Small helpers
# ----------------------------------------------------------------------------
def _cdiv(a, b):
    return -(-a // b)


def _round_up(x, m):
    return _cdiv(x, m) * m


def _vmem_limit_bytes():
    """Per-generation VMEM budget: ~3/4 of capacity, capped at 96 MiB."""
    cap = 64 << 20
    try:
        info = pltpu.get_tpu_info()
        cap = int(getattr(info, "vmem_capacity_bytes", cap) or cap)
    except Exception:
        pass
    return int(min(cap * 3 // 4, 96 << 20))


def _pick_group(spatial, unit_final, unit_k, unit_n, lane=128, weight_cap=8 << 20):
    """Largest divisor G of the per-image pixel count such that the kernel's
    output row is <=128 lanes wide and the block-diagonal packed weight stays
    small.  G pixels are folded into each matmul row for lane-dense stores."""
    best = 1
    for d in range(1, spatial + 1):
        if spatial % d:
            continue
        if d * unit_final > lane:
            break
        if 2 * (d * unit_k) * (d * unit_n) > weight_cap:
            break
        best = d
    return best


def _plan_tiles(rows, per_row_bytes, resident_bytes, vmem_limit):
    """Row-tile plan: VMEM byte budget, 16-row alignment, >=2 grid steps when
    there is enough work (v7x megacore), no ~2x padding pathology."""
    align = 16
    usable = max(vmem_limit // 3 - 2 * resident_bytes, 1 << 20)
    cap = max(align, min(usable // max(per_row_bytes, 1), 4096) // align * align)
    n_tiles = max(1, _cdiv(rows, cap))
    if n_tiles == 1 and rows >= 2 * align:
        n_tiles = 2
    tr = _round_up(_cdiv(rows, n_tiles), align)
    return tr, tr * n_tiles, n_tiles


# ----------------------------------------------------------------------------
# Pallas kernels
# ----------------------------------------------------------------------------
def _enc_pool_kernel(x_ref, w_ref, b_ref, o_ref, *, width):
    """Fused Conv3x3(pad=1) + bias + ReLU + MaxPool(2,2).

    x_ref: (tr, K) bf16   -- G folded pixels per row, each a 4x4*Cin neighborhood
    w_ref: (K, 4*width) bf16 -- q-major packed block-diagonal weight
    b_ref: (1, width) f32, o_ref: (tr, width) bf16, width = G*Cout (=128).
    """
    z = jnp.dot(x_ref[...], w_ref[...], preferred_element_type=jnp.float32)
    # 2x2 max-pool == elementwise max of the four q-major, lane-aligned slices.
    m = jnp.maximum(
        jnp.maximum(z[:, 0 * width:1 * width], z[:, 1 * width:2 * width]),
        jnp.maximum(z[:, 2 * width:3 * width], z[:, 3 * width:4 * width]))
    # Bias hoisted out of the max; relu(max(.)) == max(relu(.)).
    o_ref[...] = jnp.maximum(m + b_ref[...], 0.0).astype(o_ref.dtype)


def _dec_subpixel_kernel(x_ref, w_ref, b_ref, o_ref, *, act):
    """Sub-pixel transposed conv: one matmul + bias + activation."""
    y = jnp.dot(x_ref[...], w_ref[...], preferred_element_type=jnp.float32)
    y = y + b_ref[...]
    if act == "relu":
        y = jnp.maximum(y, 0.0)
    else:  # sigmoid via EUP exp + approximate reciprocal (free EUP slot)
        y = pl.reciprocal(1.0 + jnp.exp(-y), approx=True)
    o_ref[...] = y.astype(o_ref.dtype)


def _tiled_matmul_call(kernel, lhs, weight, bias, *, out_width, z_width,
                       out_dtype, vmem_limit):
    """Shared pallas_call: row-tiled grid, weight/bias resident across steps."""
    rows, k = lhs.shape
    kp = weight.shape[0]                       # K padded to a multiple of 128
    out_bytes = jnp.dtype(out_dtype).itemsize
    per_row = 2 * 2 * kp + 2 * out_bytes * out_width + 4 * z_width
    resident = 2 * weight.size + 4 * bias.size
    tr, rows_p, n_tiles = _plan_tiles(rows, per_row, resident, vmem_limit)

    pad_r, pad_k = rows_p - rows, kp - k
    if pad_r or pad_k:
        lhs = jnp.pad(lhs, ((0, pad_r), (0, pad_k)))

    out = pl.pallas_call(
        kernel,
        out_shape=jax.ShapeDtypeStruct((rows_p, out_width), out_dtype),
        grid_spec=pltpu.PrefetchScalarGridSpec(
            num_scalar_prefetch=0,
            grid=(n_tiles,),
            in_specs=[
                pl.BlockSpec((tr, kp), lambda i: (i, 0)),
                pl.BlockSpec(weight.shape, lambda i: (0, 0)),
                pl.BlockSpec(bias.shape, lambda i: (0, 0)),
            ],
            out_specs=pl.BlockSpec((tr, out_width), lambda i: (i, 0)),
        ),
        compiler_params=pltpu.CompilerParams(
            dimension_semantics=("parallel",),
            vmem_limit_bytes=vmem_limit,
        ),
    )(lhs, weight, bias)
    return out[:rows]


# ----------------------------------------------------------------------------
# Layer wrappers (light layout glue only; all heavy math is in the kernels)
# ----------------------------------------------------------------------------
def conv3x3_relu_maxpool(x, w_packed, b_packed, G, Cout, vmem_limit):
    """nn.Conv2d(Cin, Cout, 3, padding=1) + ReLU + MaxPool2d(2, 2), fused."""
    N, H, W, Cin = x.shape
    assert H % 2 == 0 and W % 2 == 0
    Ho, Wo = H // 2, W // 2
    M = N * Ho * Wo

    xp = jnp.pad(x, ((0, 0), (1, 1), (1, 1), (0, 0)))  # bf16 zero pad
    # 4x4 input neighborhood of every pooled pixel (stride-2 windows).
    taps = jnp.stack(
        [xp[:, dh:dh + 2 * Ho - 1:2, dw:dw + 2 * Wo - 1:2, :]
         for dh in range(4) for dw in range(4)],
        axis=3)                                        # (N, Ho, Wo, 16, Cin)
    lhs = taps.reshape(M // G, G * 16 * Cin)           # fold G pixels per row

    width = G * Cout
    kernel = functools.partial(_enc_pool_kernel, width=width)
    out = _tiled_matmul_call(kernel, lhs, w_packed, b_packed,
                             out_width=width, z_width=4 * width,
                             out_dtype=jnp.bfloat16, vmem_limit=vmem_limit)
    return out.reshape(N, Ho, Wo, Cout)


def conv_transpose3x3_s2(x, w_packed, b_packed, G, Cout, act, out_dtype,
                         vmem_limit):
    """nn.ConvTranspose2d(Cin, Cout, 3, stride=2, padding=1, output_padding=1)
    + activation, as a sub-pixel conv (one matmul + pixel shuffle)."""
    N, H, W, Cin = x.shape
    M = N * H * W

    xpb = jnp.pad(x, ((0, 0), (0, 1), (0, 1), (0, 0)))
    pat = jnp.stack(
        [xpb[:, dh:dh + H, dw:dw + W, :] for dh in range(2) for dw in range(2)],
        axis=3)                                        # (N, H, W, 4, Cin)
    lhs = pat.reshape(M // G, G * 4 * Cin)             # fold G pixels per row

    width = G * 4 * Cout
    kernel = functools.partial(_dec_subpixel_kernel, act=act)
    out = _tiled_matmul_call(kernel, lhs, w_packed, b_packed,
                             out_width=width, z_width=width,
                             out_dtype=out_dtype, vmem_limit=vmem_limit)
    out = out.reshape(N, H, W, 2, 2, Cout)
    out = out.transpose(0, 1, 3, 2, 4, 5).reshape(N, 2 * H, 2 * W, Cout)
    return out


# ----------------------------------------------------------------------------
# One-time weight packing (hoisted out of the per-call path)
# ----------------------------------------------------------------------------
def _enc_pack(w_oihw, b, pooled_hw):
    Cout, Cin = int(w_oihw.shape[0]), int(w_oihw.shape[1])
    G = _pick_group(pooled_hw[0] * pooled_hw[1], unit_final=Cout,
                    unit_k=16 * Cin, unit_n=4 * Cout)
    # Per-pixel weight: rows (dh, dw, ci) over the 4x4 neighborhood,
    # cols (q, co) for the four pool-window conv positions.
    wq = jnp.zeros((4, 4, Cin, 4, Cout), jnp.float32)
    for qi in range(2):
        for qj in range(2):
            q = qi * 2 + qj
            for kh in range(3):
                for kw in range(3):
                    wq = wq.at[qi + kh, qj + kw, :, q, :].set(
                        w_oihw[:, :, kh, kw].T)
    wq = wq.reshape(16 * Cin, 4, Cout)
    # Fold G pixels block-diagonally; columns ordered (q, g, co) so the pool
    # max in the kernel is four contiguous 128-wide lane slices.
    eye = jnp.eye(G, dtype=jnp.float32)
    wf = jnp.einsum("gh,pqc->gpqhc", eye, wq).reshape(G * 16 * Cin,
                                                      4 * G * Cout)
    kp = _round_up(wf.shape[0], 128)
    if kp != wf.shape[0]:
        wf = jnp.pad(wf, ((0, kp - wf.shape[0]), (0, 0)))
    bf = jnp.tile(b, G).reshape(1, G * Cout).astype(jnp.float32)
    return wf.astype(jnp.bfloat16), bf, G, Cout


def _dec_pack(w_iohw, b, in_hw):
    Cin, Cout = int(w_iohw.shape[0]), int(w_iohw.shape[1])
    G = _pick_group(in_hw[0] * in_hw[1], unit_final=4 * Cout,
                    unit_k=4 * Cin, unit_n=4 * Cout)
    # wt[(dh,dw,ci), (ph,pw,co)] = w[ci,co,kh,kw], kh=ph+1-2dh, kw=pw+1-2dw.
    wt = jnp.zeros((2, 2, Cin, 2, 2, Cout), jnp.float32)
    for dh in range(2):
        for ph in range(2):
            kh = ph + 1 - 2 * dh
            if not 0 <= kh <= 2:
                continue
            for dw in range(2):
                for pw in range(2):
                    kw = pw + 1 - 2 * dw
                    if not 0 <= kw <= 2:
                        continue
                    wt = wt.at[dh, dw, :, ph, pw, :].set(w_iohw[:, :, kh, kw])
    wt = wt.reshape(4 * Cin, 4 * Cout)
    wf = jnp.kron(jnp.eye(G, dtype=jnp.float32), wt)   # (G*4Cin, G*4Cout)
    kp = _round_up(wf.shape[0], 128)
    if kp != wf.shape[0]:
        wf = jnp.pad(wf, ((0, kp - wf.shape[0]), (0, 0)))
    bf = jnp.tile(b, 4 * G).reshape(1, G * 4 * Cout).astype(jnp.float32)
    return wf.astype(jnp.bfloat16), bf, G, Cout


def pack_params(params, input_hw):
    H, W = input_hw
    assert H % 4 == 0 and W % 4 == 0, "input spatial dims must be multiples of 4"
    e1w, e1b, g1, c1 = _enc_pack(params["enc1_w"], params["enc1_b"], (H // 2, W // 2))
    e2w, e2b, g2, c2 = _enc_pack(params["enc2_w"], params["enc2_b"], (H // 4, W // 4))
    d1w, d1b, g3, c3 = _dec_pack(params["dec1_w"], params["dec1_b"], (H // 4, W // 4))
    d2w, d2b, g4, c4 = _dec_pack(params["dec2_w"], params["dec2_b"], (H // 2, W // 2))
    packed = {"enc1_w": e1w, "enc1_b": e1b, "enc2_w": e2w, "enc2_b": e2b,
              "dec1_w": d1w, "dec1_b": d1b, "dec2_w": d2w, "dec2_b": d2b}
    cfg = {"enc1": (g1, c1), "enc2": (g2, c2), "dec1": (g3, c3), "dec2": (g4, c4),
           "vmem_limit": _vmem_limit_bytes()}
    return packed, cfg


# ----------------------------------------------------------------------------
# Model
# ----------------------------------------------------------------------------
def init_params(key):
    ks = jax.random.split(key, 8)

    def u(k, shape, fan_in):
        bound = 1.0 / jnp.sqrt(float(fan_in))
        return jax.random.uniform(k, shape, jnp.float32, -bound, bound)

    return {
        "enc1_w": u(ks[0], (16, 1, 3, 3), 1 * 9),    # Conv2d(1, 16, 3, pad=1)
        "enc1_b": u(ks[1], (16,), 1 * 9),
        "enc2_w": u(ks[2], (8, 16, 3, 3), 16 * 9),   # Conv2d(16, 8, 3, pad=1)
        "enc2_b": u(ks[3], (8,), 16 * 9),
        "dec1_w": u(ks[4], (8, 16, 3, 3), 8 * 9),    # ConvTranspose2d(8, 16, 3): (in,out,kh,kw)
        "dec1_b": u(ks[5], (16,), 8 * 9),
        "dec2_w": u(ks[6], (16, 1, 3, 3), 16 * 9),   # ConvTranspose2d(16, 1, 3)
        "dec2_b": u(ks[7], (1,), 16 * 9),
    }


def make_forward(cfg):
    vmem = cfg["vmem_limit"]

    @jax.jit
    def forward(x_nchw, packed):
        x = jnp.transpose(x_nchw, (0, 2, 3, 1)).astype(jnp.bfloat16)  # NCHW -> NHWC
        # encoder (conv + relu + maxpool fused per stage, bf16 intermediates)
        g, c = cfg["enc1"]
        x = conv3x3_relu_maxpool(x, packed["enc1_w"], packed["enc1_b"], g, c, vmem)
        g, c = cfg["enc2"]
        x = conv3x3_relu_maxpool(x, packed["enc2_w"], packed["enc2_b"], g, c, vmem)
        # decoder (sub-pixel transposed convs, fused activation)
        g, c = cfg["dec1"]
        x = conv_transpose3x3_s2(x, packed["dec1_w"], packed["dec1_b"], g, c,
                                 act="relu", out_dtype=jnp.bfloat16,
                                 vmem_limit=vmem)
        g, c = cfg["dec2"]
        x = conv_transpose3x3_s2(x, packed["dec2_w"], packed["dec2_b"], g, c,
                                 act="sigmoid", out_dtype=jnp.float32,
                                 vmem_limit=vmem)
        return jnp.transpose(x, (0, 3, 1, 2))  # NHWC -> NCHW

    return forward


def ref_forward(x, p):
    """Pure-JAX (lax) reference for the same forward pass."""
    dn = ("NCHW", "OIHW", "NCHW")
    hp = jax.lax.Precision.HIGHEST
    y = jax.lax.conv_general_dilated(x, p["enc1_w"], (1, 1), ((1, 1), (1, 1)),
                                     dimension_numbers=dn, precision=hp)
    y = jax.nn.relu(y + p["enc1_b"][None, :, None, None])
    y = jax.lax.reduce_window(y, -jnp.inf, jax.lax.max, (1, 1, 2, 2), (1, 1, 2, 2), "VALID")
    y = jax.lax.conv_general_dilated(y, p["enc2_w"], (1, 1), ((1, 1), (1, 1)),
                                     dimension_numbers=dn, precision=hp)
    y = jax.nn.relu(y + p["enc2_b"][None, :, None, None])
    y = jax.lax.reduce_window(y, -jnp.inf, jax.lax.max, (1, 1, 2, 2), (1, 1, 2, 2), "VALID")
    w1 = jnp.transpose(p["dec1_w"][:, :, ::-1, ::-1], (1, 0, 2, 3))
    y = jax.lax.conv_general_dilated(y, w1, (1, 1), ((1, 2), (1, 2)),
                                     lhs_dilation=(2, 2), dimension_numbers=dn, precision=hp)
    y = jax.nn.relu(y + p["dec1_b"][None, :, None, None])
    w2 = jnp.transpose(p["dec2_w"][:, :, ::-1, ::-1], (1, 0, 2, 3))
    y = jax.lax.conv_general_dilated(y, w2, (1, 1), ((1, 2), (1, 2)),
                                     lhs_dilation=(2, 2), dimension_numbers=dn, precision=hp)
    return jax.nn.sigmoid(y + p["dec2_b"][None, :, None, None])


if __name__ == "__main__":
    key = jax.random.PRNGKey(0)
    kx, kp = jax.random.split(key)
    x = jax.random.uniform(kx, (2, 1, 16, 16), jnp.float32)  # NCHW, like PyTorch
    params = init_params(kp)

    packed, cfg = pack_params(params, input_hw=(16, 16))     # one-time repack
    cae_forward = make_forward(cfg)

    y = jax.block_until_ready(cae_forward(x, packed))
    assert y.shape == (2, 1, 16, 16), y.shape

    y_ref = jax.block_until_ready(ref_forward(x, params))
    max_err = float(jnp.max(jnp.abs(y - y_ref)))
    assert max_err < 3e-2, f"mismatch vs lax reference: {max_err}"

    print("KERNEL_OK")
</pallas_src>

<mosaic_0001>
module attributes {stable_mosaic.version = 11 : i64} {
  func.func @_enc_pool_kernel(%arg0: i32, %arg1: memref<16x128xbf16, #tpu.memory_space<vmem>>, %arg2: memref<128x512xbf16, #tpu.memory_space<vmem>>, %arg3: memref<1x128xf32, #tpu.memory_space<vmem>>, %arg4: memref<16x128xbf16, #tpu.memory_space<vmem>>) attributes {dimension_semantics = [#tpu.dimension_semantics<parallel>], iteration_bounds = array<i64: 1>, scalar_prefetch = 0 : i64, scratch_operands = 0 : i64, tpu.core_type = #tpu.core_type<tc>, window_params = [{transform_indices = @transform_0, window_bounds = array<i64: 16, 128>}, {pipeline_mode = #tpu.pipeline_mode<synchronous>, transform_indices = @transform_1, window_bounds = array<i64: 128, 512>}, {pipeline_mode = #tpu.pipeline_mode<synchronous>, transform_indices = @transform_2, window_bounds = array<i64: 1, 128>}, {transform_indices = @transform_3, window_bounds = array<i64: 16, 128>}]} {
    %c0 = arith.constant 0 : index
    %c0_0 = arith.constant 0 : index
    %0 = vector.load %arg1[%c0, %c0_0] : memref<16x128xbf16, #tpu.memory_space<vmem>>, vector<16x128xbf16>
    %c0_1 = arith.constant 0 : index
    %c0_2 = arith.constant 0 : index
    %1 = vector.load %arg2[%c0_1, %c0_2] : memref<128x512xbf16, #tpu.memory_space<vmem>>, vector<128x512xbf16>
    %cst = arith.constant dense<0.000000e+00> : vector<16x512xf32>
    %2 = tpu.matmul %0, %1, %cst {dimension_numbers = #tpu.dot_dimension_numbers<[1], [0], [0], [1], [0, 0, 1, 1], [], []>} : vector<16x128xbf16>, vector<128x512xbf16>, vector<16x512xf32> -> vector<16x512xf32>
    %3 = vector.extract_strided_slice %2 {offsets = [0, 0], sizes = [16, 128], strides = [1, 1]} : vector<16x512xf32> to vector<16x128xf32>
    %4 = vector.extract_strided_slice %2 {offsets = [0, 128], sizes = [16, 128], strides = [1, 1]} : vector<16x512xf32> to vector<16x128xf32>
    %5 = arith.maximumf %3, %4 : vector<16x128xf32>
    %6 = vector.extract_strided_slice %2 {offsets = [0, 256], sizes = [16, 128], strides = [1, 1]} : vector<16x512xf32> to vector<16x128xf32>
    %7 = vector.extract_strided_slice %2 {offsets = [0, 384], sizes = [16, 128], strides = [1, 1]} : vector<16x512xf32> to vector<16x128xf32>
    %8 = arith.maximumf %6, %7 : vector<16x128xf32>
    %9 = arith.maximumf %5, %8 : vector<16x128xf32>
    %c0_3 = arith.constant 0 : index
    %c0_4 = arith.constant 0 : index
    %10 = vector.load %arg3[%c0_3, %c0_4] : memref<1x128xf32, #tpu.memory_space<vmem>>, vector<1x128xf32>
    %11 = vector.broadcast %10 : vector<1x128xf32> to vector<16x128xf32>
    %12 = arith.addf %9, %11 : vector<16x128xf32>
    %cst_5 = arith.constant 0.000000e+00 : f32
    %13 = vector.broadcast %cst_5 : f32 to vector<16x128xf32>
    %14 = arith.maximumf %12, %13 : vector<16x128xf32>
    %15 = arith.truncf %14 : vector<16x128xf32> to vector<16x128xbf16>
    %c0_6 = arith.constant 0 : index
    %c0_7 = arith.constant 0 : index
    %16 = vector.load %arg4[%c0_6, %c0_7] : memref<16x128xbf16, #tpu.memory_space<vmem>>, vector<16x128xbf16>
    tpu.vector_store %arg4[%c0_6, %c0_7], %15 {strides = array<i32>} : memref<16x128xbf16, #tpu.memory_space<vmem>>, vector<16x128xbf16>,
    return
  }
  func.func @transform_0(%arg0: i32) -> (i32, i32) {
    %c0_i32 = arith.constant 0 : i32
    %c0_i32_0 = arith.constant 0 : i32
    return %arg0, %c0_i32 : i32, i32
  }
  func.func @transform_1(%arg0: i32) -> (i32, i32) {
    %c0_i32 = arith.constant 0 : i32
    %c0_i32_0 = arith.constant 0 : i32
    %c0_i32_1 = arith.constant 0 : i32
    return %c0_i32, %c0_i32_0 : i32, i32
  }
  func.func @transform_2(%arg0: i32) -> (i32, i32) {
    %c0_i32 = arith.constant 0 : i32
    %c0_i32_0 = arith.constant 0 : i32
    %c0_i32_1 = arith.constant 0 : i32
    return %c0_i32, %c0_i32_0 : i32, i32
  }
  func.func @transform_3(%arg0: i32) -> (i32, i32) {
    %c0_i32 = arith.constant 0 : i32
    %c0_i32_0 = arith.constant 0 : i32
    return %arg0, %c0_i32 : i32, i32
  }
}

module attributes {stable_mosaic.version = 11 : i64} {
  func.func @_enc_pool_kernel(%arg0: i32, %arg1: memref<16x4096xbf16, #tpu.memory_space<vmem>>, %arg2: memref<4096x512xbf16, #tpu.memory_space<vmem>>, %arg3: memref<1x128xf32, #tpu.memory_space<vmem>>, %arg4: memref<16x128xbf16, #tpu.memory_space<vmem>>) attributes {dimension_semantics = [#tpu.dimension_semantics<parallel>], iteration_bounds = array<i64: 1>, scalar_prefetch = 0 : i64, scratch_operands = 0 : i64, tpu.core_type = #tpu.core_type<tc>, window_params = [{transform_indices = @transform_0, window_bounds = array<i64: 16, 4096>}, {pipeline_mode = #tpu.pipeline_mode<synchronous>, transform_indices = @transform_1, window_bounds = array<i64: 4096, 512>}, {pipeline_mode = #tpu.pipeline_mode<synchronous>, transform_indices = @transform_2, window_bounds = array<i64: 1, 128>}, {transform_indices = @transform_3, window_bounds = array<i64: 16, 128>}]} {
    %c0 = arith.constant 0 : index
    %c0_0 = arith.constant 0 : index
    %0 = vector.load %arg1[%c0, %c0_0] : memref<16x4096xbf16, #tpu.memory_space<vmem>>, vector<16x4096xbf16>
    %c0_1 = arith.constant 0 : index
    %c0_2 = arith.constant 0 : index
    %1 = vector.load %arg2[%c0_1, %c0_2] : memref<4096x512xbf16, #tpu.memory_space<vmem>>, vector<4096x512xbf16>
    %cst = arith.constant dense<0.000000e+00> : vector<16x512xf32>
    %2 = tpu.matmul %0, %1, %cst {dimension_numbers = #tpu.dot_dimension_numbers<[1], [0], [0], [1], [0, 0, 1, 1], [], []>} : vector<16x4096xbf16>, vector<4096x512xbf16>, vector<16x512xf32> -> vector<16x512xf32>
    %3 = vector.extract_strided_slice %2 {offsets = [0, 0], sizes = [16, 128], strides = [1, 1]} : vector<16x512xf32> to vector<16x128xf32>
    %4 = vector.extract_strided_slice %2 {offsets = [0, 128], sizes = [16, 128], strides = [1, 1]} : vector<16x512xf32> to vector<16x128xf32>
    %5 = arith.maximumf %3, %4 : vector<16x128xf32>
    %6 = vector.extract_strided_slice %2 {offsets = [0, 256], sizes = [16, 128], strides = [1, 1]} : vector<16x512xf32> to vector<16x128xf32>
    %7 = vector.extract_strided_slice %2 {offsets = [0, 384], sizes = [16, 128], strides = [1, 1]} : vector<16x512xf32> to vector<16x128xf32>
    %8 = arith.maximumf %6, %7 : vector<16x128xf32>
    %9 = arith.maximumf %5, %8 : vector<16x128xf32>
    %c0_3 = arith.constant 0 : index
    %c0_4 = arith.constant 0 : index
    %10 = vector.load %arg3[%c0_3, %c0_4] : memref<1x128xf32, #tpu.memory_space<vmem>>, vector<1x128xf32>
    %11 = vector.broadcast %10 : vector<1x128xf32> to vector<16x128xf32>
    %12 = arith.addf %9, %11 : vector<16x128xf32>
    %cst_5 = arith.constant 0.000000e+00 : f32
    %13 = vector.broadcast %cst_5 : f32 to vector<16x128xf32>
    %14 = arith.maximumf %12, %13 : vector<16x128xf32>
    %15 = arith.truncf %14 : vector<16x128xf32> to vector<16x128xbf16>
    %c0_6 = arith.constant 0 : index
    %c0_7 = arith.constant 0 : index
    %16 = vector.load %arg4[%c0_6, %c0_7] : memref<16x128xbf16, #tpu.memory_space<vmem>>, vector<16x128xbf16>
    tpu.vector_store %arg4[%c0_6, %c0_7], %15 {strides = array<i32>} : memref<16x128xbf16, #tpu.memory_space<vmem>>, vector<16x128xbf16>,
    return
  }
  func.func @transform_0(%arg0: i32) -> (i32, i32) {
    %c0_i32 = arith.constant 0 : i32
    %c0_i32_0 = arith.constant 0 : i32
    return %arg0, %c0_i32 : i32, i32
  }
  func.func @transform_1(%arg0: i32) -> (i32, i32) {
    %c0_i32 = arith.constant 0 : i32
    %c0_i32_0 = arith.constant 0 : i32
    %c0_i32_1 = arith.constant 0 : i32
    return %c0_i32, %c0_i32_0 : i32, i32
  }
  func.func @transform_2(%arg0: i32) -> (i32, i32) {
    %c0_i32 = arith.constant 0 : i32
    %c0_i32_0 = arith.constant 0 : i32
    %c0_i32_1 = arith.constant 0 : i32
    return %c0_i32, %c0_i32_0 : i32, i32
  }
  func.func @transform_3(%arg0: i32) -> (i32, i32) {
    %c0_i32 = arith.constant 0 : i32
    %c0_i32_0 = arith.constant 0 : i32
    return %arg0, %c0_i32 : i32, i32
  }
}

module attributes {stable_mosaic.version = 11 : i64} {
  func.func @_dec_subpixel_kernel(%arg0: i32, %arg1: memref<16x128xbf16, #tpu.memory_space<vmem>>, %arg2: memref<128x128xbf16, #tpu.memory_space<vmem>>, %arg3: memref<1x128xf32, #tpu.memory_space<vmem>>, %arg4: memref<16x128xbf16, #tpu.memory_space<vmem>>) attributes {dimension_semantics = [#tpu.dimension_semantics<parallel>], iteration_bounds = array<i64: 1>, scalar_prefetch = 0 : i64, scratch_operands = 0 : i64, tpu.core_type = #tpu.core_type<tc>, window_params = [{transform_indices = @transform_0, window_bounds = array<i64: 16, 128>}, {pipeline_mode = #tpu.pipeline_mode<synchronous>, transform_indices = @transform_1, window_bounds = array<i64: 128, 128>}, {pipeline_mode = #tpu.pipeline_mode<synchronous>, transform_indices = @transform_2, window_bounds = array<i64: 1, 128>}, {transform_indices = @transform_3, window_bounds = array<i64: 16, 128>}]} {
    %c0 = arith.constant 0 : index
    %c0_0 = arith.constant 0 : index
    %0 = vector.load %arg1[%c0, %c0_0] : memref<16x128xbf16, #tpu.memory_space<vmem>>, vector<16x128xbf16>
    %c0_1 = arith.constant 0 : index
    %c0_2 = arith.constant 0 : index
    %1 = vector.load %arg2[%c0_1, %c0_2] : memref<128x128xbf16, #tpu.memory_space<vmem>>, vector<128x128xbf16>
    %cst = arith.constant dense<0.000000e+00> : vector<16x128xf32>
    %2 = tpu.matmul %0, %1, %cst {dimension_numbers = #tpu.dot_dimension_numbers<[1], [0], [0], [1], [0, 0, 1, 1], [], []>} : vector<16x128xbf16>, vector<128x128xbf16>, vector<16x128xf32> -> vector<16x128xf32>
    %c0_3 = arith.constant 0 : index
    %c0_4 = arith.constant 0 : index
    %3 = vector.load %arg3[%c0_3, %c0_4] : memref<1x128xf32, #tpu.memory_space<vmem>>, vector<1x128xf32>
    %4 = vector.broadcast %3 : vector<1x128xf32> to vector<16x128xf32>
    %5 = arith.addf %2, %4 : vector<16x128xf32>
    %cst_5 = arith.constant 0.000000e+00 : f32
    %6 = vector.broadcast %cst_5 : f32 to vector<16x128xf32>
    %7 = arith.maximumf %5, %6 : vector<16x128xf32>
    %8 = arith.truncf %7 : vector<16x128xf32> to vector<16x128xbf16>
    %c0_6 = arith.constant 0 : index
    %c0_7 = arith.constant 0 : index
    %9 = vector.load %arg4[%c0_6, %c0_7] : memref<16x128xbf16, #tpu.memory_space<vmem>>, vector<16x128xbf16>
    tpu.vector_store %arg4[%c0_6, %c0_7], %8 {strides = array<i32>} : memref<16x128xbf16, #tpu.memory_space<vmem>>, vector<16x128xbf16>,
    return
  }
  func.func @transform_0(%arg0: i32) -> (i32, i32) {
    %c0_i32 = arith.constant 0 : i32
    %c0_i32_0 = arith.constant 0 : i32
    return %arg0, %c0_i32 : i32, i32
  }
  func.func @transform_1(%arg0: i32) -> (i32, i32) {
    %c0_i32 = arith.constant 0 : i32
    %c0_i32_0 = arith.constant 0 : i32
    %c0_i32_1 = arith.constant 0 : i32
    return %c0_i32, %c0_i32_0 : i32, i32
  }
  func.func @transform_2(%arg0: i32) -> (i32, i32) {
    %c0_i32 = arith.constant 0 : i32
    %c0_i32_0 = arith.constant 0 : i32
    %c0_i32_1 = arith.constant 0 : i32
    return %c0_i32, %c0_i32_0 : i32, i32
  }
  func.func @transform_3(%arg0: i32) -> (i32, i32) {
    %c0_i32 = arith.constant 0 : i32
    %c0_i32_0 = arith.constant 0 : i32
    return %arg0, %c0_i32 : i32, i32
  }
}

module attributes {stable_mosaic.version = 11 : i64} {
  func.func @_dec_subpixel_kernel(%arg0: i32, %arg1: memref<16x2048xbf16, #tpu.memory_space<vmem>>, %arg2: memref<2048x128xbf16, #tpu.memory_space<vmem>>, %arg3: memref<1x128xf32, #tpu.memory_space<vmem>>, %arg4: memref<16x128xf32, #tpu.memory_space<vmem>>) attributes {dimension_semantics = [#tpu.dimension_semantics<parallel>], iteration_bounds = array<i64: 1>, scalar_prefetch = 0 : i64, scratch_operands = 0 : i64, tpu.core_type = #tpu.core_type<tc>, window_params = [{transform_indices = @transform_0, window_bounds = array<i64: 16, 2048>}, {pipeline_mode = #tpu.pipeline_mode<synchronous>, transform_indices = @transform_1, window_bounds = array<i64: 2048, 128>}, {pipeline_mode = #tpu.pipeline_mode<synchronous>, transform_indices = @transform_2, window_bounds = array<i64: 1, 128>}, {transform_indices = @transform_3, window_bounds = array<i64: 16, 128>}]} {
    %c0 = arith.constant 0 : index
    %c0_0 = arith.constant 0 : index
    %0 = vector.load %arg1[%c0, %c0_0] : memref<16x2048xbf16, #tpu.memory_space<vmem>>, vector<16x2048xbf16>
    %c0_1 = arith.constant 0 : index
    %c0_2 = arith.constant 0 : index
    %1 = vector.load %arg2[%c0_1, %c0_2] : memref<2048x128xbf16, #tpu.memory_space<vmem>>, vector<2048x128xbf16>
    %cst = arith.constant dense<0.000000e+00> : vector<16x128xf32>
    %2 = tpu.matmul %0, %1, %cst {dimension_numbers = #tpu.dot_dimension_numbers<[1], [0], [0], [1], [0, 0, 1, 1], [], []>} : vector<16x2048xbf16>, vector<2048x128xbf16>, vector<16x128xf32> -> vector<16x128xf32>
    %c0_3 = arith.constant 0 : index
    %c0_4 = arith.constant 0 : index
    %3 = vector.load %arg3[%c0_3, %c0_4] : memref<1x128xf32, #tpu.memory_space<vmem>>, vector<1x128xf32>
    %4 = vector.broadcast %3 : vector<1x128xf32> to vector<16x128xf32>
    %5 = arith.addf %2, %4 : vector<16x128xf32>
    %cst_5 = arith.constant 0.000000e+00 : f32
    %6 = vector.broadcast %cst_5 : f32 to vector<16x128xf32>
    %7 = arith.subf %6, %5 : vector<16x128xf32>
    %8 = math.exp %7 : vector<16x128xf32>
    %cst_6 = arith.constant 1.000000e+00 : f32
    %9 = vector.broadcast %cst_6 : f32 to vector<16x128xf32>
    %10 = arith.addf %9, %8 : vector<16x128xf32>
    %11 = tpu.reciprocal %10 {approx = true} : vector<16x128xf32> -> vector<16x128xf32>
    %c0_7 = arith.constant 0 : index
    %c0_8 = arith.constant 0 : index
    %12 = vector.load %arg4[%c0_7, %c0_8] : memref<16x128xf32, #tpu.memory_space<vmem>>, vector<16x128xf32>
    tpu.vector_store %arg4[%c0_7, %c0_8], %11 {strides = array<i32>} : memref<16x128xf32, #tpu.memory_space<vmem>>, vector<16x128xf32>,
    return
  }
  func.func @transform_0(%arg0: i32) -> (i32, i32) {
    %c0_i32 = arith.constant 0 : i32
    %c0_i32_0 = arith.constant 0 : i32
    return %arg0, %c0_i32 : i32, i32
  }
  func.func @transform_1(%arg0: i32) -> (i32, i32) {
    %c0_i32 = arith.constant 0 : i32
    %c0_i32_0 = arith.constant 0 : i32
    %c0_i32_1 = arith.constant 0 : i32
    return %c0_i32, %c0_i32_0 : i32, i32
  }
  func.func @transform_2(%arg0: i32) -> (i32, i32) {
    %c0_i32 = arith.constant 0 : i32
    %c0_i32_0 = arith.constant 0 : i32
    %c0_i32_1 = arith.constant 0 : i32
    return %c0_i32, %c0_i32_0 : i32, i32
  }
  func.func @transform_3(%arg0: i32) -> (i32, i32) {
    %c0_i32 = arith.constant 0 : i32
    %c0_i32_0 = arith.constant 0 : i32
    return %arg0, %c0_i32 : i32, i32
  }
}

</mosaic_0001>

<llo_original>
// kernel: forward.4
$region0: #{forward.4}
  #allocation0 [shape = 'u32[]', space=smem, size = 0x4, offset = 0x4, fixed_abs, tag = 'smem constant byte address 0x4 - core index']
  #allocation1 [shape = 'u32[72,128]{1,0:T(1,128)}', space=vmem, size = 0x9000, scoped, tag = 'internal scratch']
  %s0 = inlined_call_operand.vmem [shape: bf16[16,128], index: 0, kind: input, shape index: {}]
  %s1 = inlined_call_operand.hbm [shape: bf16[128,512], index: 1, kind: input, shape index: {}]
  %s2 = inlined_call_operand.hbm [shape: f32[1,128], index: 2, kind: input, shape index: {}]
  %s3 = inlined_call_operand.vmem [shape: bf16[16,128], index: 3, kind: output, shape index: {}]
  %s4 = sld [smem:[#allocation0]]
  $region30: #{forward.4} parent=0
    _
  %s6 = ssub.s32 1, %s4
  %s7 = scalar_select 0, %s6, %s4
  $region1: #{forward.4} parent=0
    #allocation2 [shape = 'u8[131072]{0}', space=vmem, size = 0x20000, scoped, tag = 'input window, operand 1, single buffered']
    #allocation3 [shape = 's32[1]{0}', space=sflag, size = 0x4, scoped, tag = 'scoped memory for forward.4']
    #allocation4 [shape = 'u8[512]{0}', space=vmem, size = 0x400, scoped, tag = 'input window, operand 2, single buffered']
    #allocation5 [shape = 's32[1]{0}', space=sflag, size = 0x4, scoped, tag = 'scoped memory for forward.4']
    %8 = vsyncpa [#allocation3], 0
    %9 = vsyncpa [#allocation5], 0
    // Predicated region
    $region2: #{forward.4} parent=1 // pred_check
      _
    $region3: #{forward.4} parent=1 // pred_check_branch
      %11 = sbr.rel (0) target = $region5
    $region4: #{forward.4} parent=1 // pred_region
      _
    $region5: #{forward.4} parent=1 // pred_fallthru
      _
    // Predicated region
    $region6: #{forward.4} parent=1 // pred_check
      _
    $region7: #{forward.4} parent=1 // pred_check_branch
      %13 = sbr.rel (0) target = $region9
    $region8: #{forward.4} parent=1 // pred_region
      %15 = vsyncadd [#allocation3], 0
      %s16 = sshll.u32 %s1, 4
      %s17 = int_to_ptr.hbm [resolvable:$true] %s16
      %s18 = sshll.u32 [#allocation2], 4
      %s19 = int_to_ptr.vmem [resolvable:$true] %s18
      %24 = dma.hbm_to_vmem [thread:$0]  %s17, 4096, %s19, [#allocation3], 256, 256, 16
    $region9: #{forward.4} parent=1 // pred_fallthru
      _
    // Predicated region
    $region10: #{forward.4} parent=1 // pred_check
      _
    $region11: #{forward.4} parent=1 // pred_check_branch
      %26 = sbr.rel (0) target = $region13
    $region12: #{forward.4} parent=1 // pred_region
      %28 = vsyncadd [#allocation5], 0
      %s30 = sshll.u32 %s2, 4
      %s31 = int_to_ptr.hbm [resolvable:$true] %s30
      %s32 = sshll.u32 [#allocation4], 4
      %s33 = int_to_ptr.vmem [resolvable:$true] %s32
      %35 = dma.hbm_to_vmem [thread:$0]  %s31, 16, %s33, [#allocation5]
    $region13: #{forward.4} parent=1 // pred_fallthru
      _
    // Predicated region
    $region14: #{forward.4} parent=1 // pred_check
      _
    $region15: #{forward.4} parent=1 // pred_check_branch
      %37 = sbr.rel (0) target = $region17
    $region16: #{forward.4} parent=1 // pred_region
      %39 = dma.done [#allocation3], 4096
    $region17: #{forward.4} parent=1 // pred_fallthru
      _
    // Predicated region
    $region18: #{forward.4} parent=1 // pred_check
      _
    $region19: #{forward.4} parent=1 // pred_check_branch
      %41 = sbr.rel (0) target = $region21
    $region20: #{forward.4} parent=1 // pred_region
      %43 = dma.done [#allocation5], 16
    $region21: #{forward.4} parent=1 // pred_fallthru
      _
    %v44 = vld [vmem:[%s0] sm:$0xf]
    %v45 = vld [vmem:[%s0 + $0x4] sm:$0xf]
    %v46 = vld [vmem:[#allocation2] sm:$0xff]
    %v47 = vld [vmem:[#allocation2 + $0x8] sm:$0xff]
    %v48 = vld [vmem:[#allocation2 + $0x10] sm:$0xff]
    %v49 = vld [vmem:[#allocation2 + $0x18] sm:$0xff]
    %v50 = vld [vmem:[#allocation2 + $0x20] sm:$0xff]
    %v51 = vld [vmem:[#allocation2 + $0x28] sm:$0xff]
    %v52 = vld [vmem:[#allocation2 + $0x30] sm:$0xff]
    %v53 = vld [vmem:[#allocation2 + $0x38] sm:$0xff]
    %v54 = vld [vmem:[#allocation2 + $0x40] sm:$0xff]
    %v55 = vld [vmem:[#allocation2 + $0x48] sm:$0xff]
    %v56 = vld [vmem:[#allocation2 + $0x50] sm:$0xff]
    %v57 = vld [vmem:[#allocation2 + $0x58] sm:$0xff]
    %v58 = vld [vmem:[#allocation2 + $0x60] sm:$0xff]
    %v59 = vld [vmem:[#allocation2 + $0x68] sm:$0xff]
    %v60 = vld [vmem:[#allocation2 + $0x70] sm:$0xff]
    %v61 = vld [vmem:[#allocation2 + $0x78] sm:$0xff]
    %v62 = vld [vmem:[#allocation2 + $0x80] sm:$0xff]
    %v63 = vld [vmem:[#allocation2 + $0x88] sm:$0xff]
    %v64 = vld [vmem:[#allocation2 + $0x90] sm:$0xff]
    %v65 = vld [vmem:[#allocation2 + $0x98] sm:$0xff]
    %v66 = vld [vmem:[#allocation2 + $0xa0] sm:$0xff]
    %v67 = vld [vmem:[#allocation2 + $0xa8] sm:$0xff]
    %v68 = vld [vmem:[#allocation2 + $0xb0] sm:$0xff]
    %v69 = vld [vmem:[#allocation2 + $0xb8] sm:$0xff]
    %v70 = vld [vmem:[#allocation2 + $0xc0] sm:$0xff]
    %v71 = vld [vmem:[#allocation2 + $0xc8] sm:$0xff]
    %v72 = vld [vmem:[#allocation2 + $0xd0] sm:$0xff]
    %v73 = vld [vmem:[#allocation2 + $0xd8] sm:$0xff]
    %v74 = vld [vmem:[#allocation2 + $0xe0] sm:$0xff]
    %v75 = vld [vmem:[#allocation2 + $0xe8] sm:$0xff]
    %v76 = vld [vmem:[#allocation2 + $0xf0] sm:$0xff]
    %v77 = vld [vmem:[#allocation2 + $0xf8] sm:$0xff]
    %v80 = vunpack.c.l.b16 %v44
    %v81 = vunpack.c.l.b16 %v45
    %v82 = vpack.c.b16 %v81, %v80
    %v116 = vunpack.c.l.b16 %v46
    %v117 = vunpack.c.h.b16 %v46
    %v118 = vunpack.c.l.b16 %v47
    %v119 = vunpack.c.h.b16 %v47
    %v120 = vunpack.c.l.b16 %v48
    %v121 = vunpack.c.h.b16 %v48
    %v122 = vunpack.c.l.b16 %v49
    %v123 = vunpack.c.h.b16 %v49
    %v124 = vunpack.c.l.b16 %v50
    %v125 = vunpack.c.h.b16 %v50
    %v126 = vunpack.c.l.b16 %v51
    %v127 = vunpack.c.h.b16 %v51
    %v128 = vunpack.c.l.b16 %v52
    %v129 = vunpack.c.h.b16 %v52
    %v130 = vunpack.c.l.b16 %v53
    %v131 = vunpack.c.h.b16 %v53
    %v132 = vunpack.c.l.b16 %v54
    %v133 = vunpack.c.h.b16 %v54
    %v134 = vunpack.c.l.b16 %v55
    %v135 = vunpack.c.h.b16 %v55
    %v136 = vunpack.c.l.b16 %v56
    %v137 = vunpack.c.h.b16 %v56
    %v138 = vunpack.c.l.b16 %v57
    %v139 = vunpack.c.h.b16 %v57
    %v140 = vunpack.c.l.b16 %v58
    %v141 = vunpack.c.h.b16 %v58
    %v142 = vunpack.c.l.b16 %v59
    %v143 = vunpack.c.h.b16 %v59
    %v144 = vunpack.c.l.b16 %v60
    %v145 = vunpack.c.h.b16 %v60
    %v146 = vunpack.c.l.b16 %v61
    %v147 = vunpack.c.h.b16 %v61
    %v148 = vunpack.c.l.b16 %v62
    %v149 = vunpack.c.h.b16 %v62
    %v150 = vunpack.c.l.b16 %v63
    %v151 = vunpack.c.h.b16 %v63
    %v152 = vunpack.c.l.b16 %v64
    %v153 = vunpack.c.h.b16 %v64
    %v154 = vunpack.c.l.b16 %v65
    %v155 = vunpack.c.h.b16 %v65
    %v156 = vunpack.c.l.b16 %v66
    %v157 = vunpack.c.h.b16 %v66
    %v158 = vunpack.c.l.b16 %v67
    %v159 = vunpack.c.h.b16 %v67
    %v160 = vunpack.c.l.b16 %v68
    %v161 = vunpack.c.h.b16 %v68
    %v162 = vunpack.c.l.b16 %v69
    %v163 = vunpack.c.h.b16 %v69
    %v164 = vunpack.c.l.b16 %v70
    %v165 = vunpack.c.h.b16 %v70
    %v166 = vunpack.c.l.b16 %v71
    %v167 = vunpack.c.h.b16 %v71
    %v168 = vunpack.c.l.b16 %v72
    %v169 = vunpack.c.h.b16 %v72
    %v170 = vunpack.c.l.b16 %v73
    %v171 = vunpack.c.h.b16 %v73
    %v172 = vunpack.c.l.b16 %v74
    %v173 = vunpack.c.h.b16 %v74
    %v174 = vunpack.c.l.b16 %v75
    %v175 = vunpack.c.h.b16 %v75
    %v176 = vunpack.c.l.b16 %v76
    %v177 = vunpack.c.h.b16 %v76
    %v178 = vunpack.c.l.b16 %v77
    %v179 = vunpack.c.h.b16 %v77
    %v180 = vpack.c.b16 %v120, %v116
    %v181 = vpack.c.b16 %v121, %v117
    %v182 = vpack.c.b16 %v122, %v118
    %v183 = vpack.c.b16 %v123, %v119
    %v184 = vpack.c.b16 %v128, %v124
    %v185 = vpack.c.b16 %v129, %v125
    %v186 = vpack.c.b16 %v130, %v126
    %v187 = vpack.c.b16 %v131, %v127
    %v188 = vpack.c.b16 %v136, %v132
    %v189 = vpack.c.b16 %v137, %v133
    %v190 = vpack.c.b16 %v138, %v134
    %v191 = vpack.c.b16 %v139, %v135
    %v192 = vpack.c.b16 %v144, %v140
    %v193 = vpack.c.b16 %v145, %v141
    %v194 = vpack.c.b16 %v146, %v142
    %v195 = vpack.c.b16 %v147, %v143
    %v196 = vpack.c.b16 %v152, %v148
    %v197 = vpack.c.b16 %v153, %v149
    %v198 = vpack.c.b16 %v154, %v150
    %v199 = vpack.c.b16 %v155, %v151
    %v200 = vpack.c.b16 %v160, %v156
    %v201 = vpack.c.b16 %v161, %v157
    %v202 = vpack.c.b16 %v162, %v158
    %v203 = vpack.c.b16 %v163, %v159
    %v204 = vpack.c.b16 %v168, %v164
    %v205 = vpack.c.b16 %v169, %v165
    %v206 = vpack.c.b16 %v170, %v166
    %v207 = vpack.c.b16 %v171, %v167
    %v208 = vpack.c.b16 %v176, %v172
    %v209 = vpack.c.b16 %v177, %v173
    %v210 = vpack.c.b16 %v178, %v174
    %v211 = vpack.c.b16 %v179, %v175
    %244 = vmatpush.bf16.msra.mxu0 %v208
    %245 = vmatpush.bf16.msra.mxu0 %v204
    %246 = vmatpush.bf16.msra.mxu0 %v200
    %247 = vmatpush.bf16.msra.mxu0 %v196
    %248 = vmatpush.bf16.msra.mxu0 %v192
    %249 = vmatpush.bf16.msra.mxu0 %v188
    %250 = vmatpush.bf16.msra.mxu0 %v184
    %251 = vmatpush.bf16.msra.mxu0 %v180
    %252 = vmatmul.bf16.gmra.mxu0 %v82
    %v253 = vpop.f32.mrf.mxu0
    %v254 = vadd.f32 0.0, %v253
    %v255 = vpop.f32.mrf.mxu0
    %v256 = vadd.f32 0.0, %v255
    %257 = vdwg.mxu0
    %258 = vmatpush.bf16.msra.mxu0 %v209
    %259 = vmatpush.bf16.msra.mxu0 %v205
    %260 = vmatpush.bf16.msra.mxu0 %v201
    %261 = vmatpush.bf16.msra.mxu0 %v197
    %262 = vmatpush.bf16.msra.mxu0 %v193
    %263 = vmatpush.bf16.msra.mxu0 %v189
    %264 = vmatpush.bf16.msra.mxu0 %v185
    %265 = vmatpush.bf16.msra.mxu0 %v181
    %266 = vmatmul.bf16.gmra.mxu0 %v82
    %v267 = vpop.f32.mrf.mxu0
    %v268 = vadd.f32 0.0, %v267
    %v269 = vpop.f32.mrf.mxu0
    %v270 = vadd.f32 0.0, %v269
    %271 = vdwg.mxu0
    %272 = vmatpush.bf16.msra.mxu0 %v210
    %273 = vmatpush.bf16.msra.mxu0 %v206
    %274 = vmatpush.bf16.msra.mxu0 %v202
    %275 = vmatpush.bf16.msra.mxu0 %v198
    %276 = vmatpush.bf16.msra.mxu0 %v194
    %277 = vmatpush.bf16.msra.mxu0 %v190
    %278 = vmatpush.bf16.msra.mxu0 %v186
    %279 = vmatpush.bf16.msra.mxu0 %v182
    %280 = vmatmul.bf16.gmra.mxu0 %v82
    %v281 = vpop.f32.mrf.mxu0
    %v282 = vadd.f32 0.0, %v281
    %v283 = vpop.f32.mrf.mxu0
    %v284 = vadd.f32 0.0, %v283
    %285 = vdwg.mxu0
    %286 = vmatpush.bf16.msra.mxu0 %v211
    %287 = vmatpush.bf16.msra.mxu0 %v207
    %288 = vmatpush.bf16.msra.mxu0 %v203
    %289 = vmatpush.bf16.msra.mxu0 %v199
    %290 = vmatpush.bf16.msra.mxu0 %v195
    %291 = vmatpush.bf16.msra.mxu0 %v191
    %292 = vmatpush.bf16.msra.mxu0 %v187
    %293 = vmatpush.bf16.msra.mxu0 %v183
    %294 = vmatmul.bf16.gmra.mxu0 %v82
    %v295 = vpop.f32.mrf.mxu0
    %v296 = vadd.f32 0.0, %v295
    %v297 = vpop.f32.mrf.mxu0
    %v298 = vadd.f32 0.0, %v297
    %299 = vdwg.mxu0
    %v300 = vmax.f32 %v254, %v268
    %v301 = vmax.f32 %v256, %v270
    %v302 = vmax.f32 %v282, %v296
    %v303 = vmax.f32 %v284, %v298
    %v304 = vmax.f32 %v300, %v302
    %v305 = vmax.f32 %v301, %v303
    %v306 = vld [vmem:[#allocation4] sm:$0x1]
    %v308 = vperm.slane %v306, 0
    %v310 = vadd.f32 %v304, %v308
    %v311 = vadd.f32 %v305, %v308
    %v312 = vmax.f32 %v310, 0.0
    %v313 = vmax.f32 %v311, 0.0
    %v314 = vpack.c.bf16 %v312, %v312
    %v315 = vpack.c.bf16 %v313, %v313
    %316 = vst [vmem:[%s3] sm:$0xf] %v314
    %317 = vst [vmem:[%s3 + $0x4] sm:$0xf] %v315
    // Predicated region
    $region22: #{forward.4} parent=1 // pred_check
      _
    $region23: #{forward.4} parent=1 // pred_check_branch
      %319 = sbr.rel (0) target = $region25
    $region24: #{forward.4} parent=1 // pred_region
      _
    $region25: #{forward.4} parent=1 // pred_fallthru
      _
    // Predicated region
    $region26: #{forward.4} parent=1 // pred_check
      _
    $region27: #{forward.4} parent=1 // pred_check_branch
      %321 = sbr.rel (0) target = $region29
    $region28: #{forward.4} parent=1 // pred_region
      _
    $region29: #{forward.4} parent=1 // pred_fallthru
      _
    %322 = vsyncpa [#allocation3], 1
    %323 = vsyncpa [#allocation5], 1

// kernel: forward.6
$region0: #{forward.6}
  #allocation0 [shape = 'u32[]', space=smem, size = 0x4, offset = 0x4, fixed_abs, tag = 'smem constant byte address 0x4 - core index']
  #allocation1 [shape = 'u32[72,128]{1,0:T(1,128)}', space=vmem, size = 0x9000, scoped, tag = 'internal scratch']
  %s0 = inlined_call_operand.vmem [shape: bf16[16,128], index: 0, kind: input, shape index: {}]
  %s1 = inlined_call_operand.hbm [shape: bf16[128,128], index: 1, kind: input, shape index: {}]
  %s2 = inlined_call_operand.hbm [shape: f32[1,128], index: 2, kind: input, shape index: {}]
  %s3 = inlined_call_operand.vmem [shape: bf16[16,128], index: 3, kind: output, shape index: {}]
  %s4 = sld [smem:[#allocation0]]
  $region30: #{forward.6} parent=0
    _
  %s6 = ssub.s32 1, %s4
  %s7 = scalar_select 0, %s6, %s4
  $region1: #{forward.6} parent=0
    #allocation2 [shape = 'u8[32768]{0}', space=vmem, size = 0x8000, scoped, tag = 'input window, operand 1, single buffered']
    #allocation3 [shape = 's32[1]{0}', space=sflag, size = 0x4, scoped, tag = 'scoped memory for forward.6']
    #allocation4 [shape = 'u8[512]{0}', space=vmem, size = 0x400, scoped, tag = 'input window, operand 2, single buffered']
    #allocation5 [shape = 's32[1]{0}', space=sflag, size = 0x4, scoped, tag = 'scoped memory for forward.6']
    %8 = vsyncpa [#allocation3], 0
    %9 = vsyncpa [#allocation5], 0
    // Predicated region
    $region2: #{forward.6} parent=1 // pred_check
      _
    $region3: #{forward.6} parent=1 // pred_check_branch
      %11 = sbr.rel (0) target = $region5
    $region4: #{forward.6} parent=1 // pred_region
      _
    $region5: #{forward.6} parent=1 // pred_fallthru
      _
    // Predicated region
    $region6: #{forward.6} parent=1 // pred_check
      _
    $region7: #{forward.6} parent=1 // pred_check_branch
      %13 = sbr.rel (0) target = $region9
    $region8: #{forward.6} parent=1 // pred_region
      %15 = vsyncadd [#allocation3], 0
      %s16 = sshll.u32 %s1, 4
      %s17 = int_to_ptr.hbm [resolvable:$true] %s16
      %s18 = sshll.u32 [#allocation2], 4
      %s19 = int_to_ptr.vmem [resolvable:$true] %s18
      %24 = dma.hbm_to_vmem [thread:$0]  %s17, 1024, %s19, [#allocation3], 64, 64, 4
    $region9: #{forward.6} parent=1 // pred_fallthru
      _
    // Predicated region
    $region10: #{forward.6} parent=1 // pred_check
      _
    $region11: #{forward.6} parent=1 // pred_check_branch
      %26 = sbr.rel (0) target = $region13
    $region12: #{forward.6} parent=1 // pred_region
      %28 = vsyncadd [#allocation5], 0
      %s30 = sshll.u32 %s2, 4
      %s31 = int_to_ptr.hbm [resolvable:$true] %s30
      %s32 = sshll.u32 [#allocation4], 4
      %s33 = int_to_ptr.vmem [resolvable:$true] %s32
      %35 = dma.hbm_to_vmem [thread:$0]  %s31, 16, %s33, [#allocation5]
    $region13: #{forward.6} parent=1 // pred_fallthru
      _
    // Predicated region
    $region14: #{forward.6} parent=1 // pred_check
      _
    $region15: #{forward.6} parent=1 // pred_check_branch
      %37 = sbr.rel (0) target = $region17
    $region16: #{forward.6} parent=1 // pred_region
      %39 = dma.done [#allocation3], 1024
    $region17: #{forward.6} parent=1 // pred_fallthru
      _
    // Predicated region
    $region18: #{forward.6} parent=1 // pred_check
      _
    $region19: #{forward.6} parent=1 // pred_check_branch
      %41 = sbr.rel (0) target = $region21
    $region20: #{forward.6} parent=1 // pred_region
      %43 = dma.done [#allocation5], 16
    $region21: #{forward.6} parent=1 // pred_fallthru
      _
    %v44 = vld [vmem:[%s0] sm:$0xf]
    %v45 = vld [vmem:[%s0 + $0x4] sm:$0xf]
    %v46 = vld [vmem:[#allocation2] sm:$0xf]
    %v47 = vld [vmem:[#allocation2 + $0x4] sm:$0xf]
    %v48 = vld [vmem:[#allocation2 + $0x8] sm:$0xf]
    %v49 = vld [vmem:[#allocation2 + $0xc] sm:$0xf]
    %v50 = vld [vmem:[#allocation2 + $0x10] sm:$0xf]
    %v51 = vld [vmem:[#allocation2 + $0x14] sm:$0xf]
    %v52 = vld [vmem:[#allocation2 + $0x18] sm:$0xf]
    %v53 = vld [vmem:[#allocation2 + $0x1c] sm:$0xf]
    %v54 = vld [vmem:[#allocation2 + $0x20] sm:$0xf]
    %v55 = vld [vmem:[#allocation2 + $0x24] sm:$0xf]
    %v56 = vld [vmem:[#allocation2 + $0x28] sm:$0xf]
    %v57 = vld [vmem:[#allocation2 + $0x2c] sm:$0xf]
    %v58 = vld [vmem:[#allocation2 + $0x30] sm:$0xf]
    %v59 = vld [vmem:[#allocation2 + $0x34] sm:$0xf]
    %v60 = vld [vmem:[#allocation2 + $0x38] sm:$0xf]
    %v61 = vld [vmem:[#allocation2 + $0x3c] sm:$0xf]
    %v62 = vld [vmem:[#allocation4] sm:$0x1]
    %v64 = vperm.slane %v62, 0
    %v68 = vunpack.c.l.b16 %v44
    %v69 = vunpack.c.l.b16 %v45
    %v70 = vpack.c.b16 %v69, %v68
    %v88 = vunpack.c.l.b16 %v46
    %v89 = vunpack.c.l.b16 %v47
    %v90 = vunpack.c.l.b16 %v48
    %v91 = vunpack.c.l.b16 %v49
    %v92 = vunpack.c.l.b16 %v50
    %v93 = vunpack.c.l.b16 %v51
    %v94 = vunpack.c.l.b16 %v52
    %v95 = vunpack.c.l.b16 %v53
    %v96 = vunpack.c.l.b16 %v54
    %v97 = vunpack.c.l.b16 %v55
    %v98 = vunpack.c.l.b16 %v56
    %v99 = vunpack.c.l.b16 %v57
    %v100 = vunpack.c.l.b16 %v58
    %v101 = vunpack.c.l.b16 %v59
    %v102 = vunpack.c.l.b16 %v60
    %v103 = vunpack.c.l.b16 %v61
    %v104 = vpack.c.b16 %v89, %v88
    %v105 = vpack.c.b16 %v91, %v90
    %v106 = vpack.c.b16 %v93, %v92
    %v107 = vpack.c.b16 %v95, %v94
    %v108 = vpack.c.b16 %v97, %v96
    %v109 = vpack.c.b16 %v99, %v98
    %v110 = vpack.c.b16 %v101, %v100
    %v111 = vpack.c.b16 %v103, %v102
    %120 = vmatpush.bf16.msra.mxu0 %v111
    %121 = vmatpush.bf16.msra.mxu0 %v110
    %122 = vmatpush.bf16.msra.mxu0 %v109
    %123 = vmatpush.bf16.msra.mxu0 %v108
    %124 = vmatpush.bf16.msra.mxu0 %v107
    %125 = vmatpush.bf16.msra.mxu0 %v106
    %126 = vmatpush.bf16.msra.mxu0 %v105
    %127 = vmatpush.bf16.msra.mxu0 %v104
    %128 = vmatmul.bf16.gmra.mxu0 %v70
    %v129 = vpop.f32.mrf.mxu0
    %v130 = vadd.f32 %v64, %v129
    %v131 = vpop.f32.mrf.mxu0
    %v132 = vadd.f32 %v64, %v131
    %133 = vdwg.mxu0
    %v134 = vmax.f32 %v130, 0.0
    %v135 = vmax.f32 %v132, 0.0
    %v136 = vpack.c.bf16 %v134, %v134
    %v137 = vpack.c.bf16 %v135, %v135
    %138 = vst [vmem:[%s3] sm:$0xf] %v136
    %139 = vst [vmem:[%s3 + $0x4] sm:$0xf] %v137
    // Predicated region
    $region22: #{forward.6} parent=1 // pred_check
      _
    $region23: #{forward.6} parent=1 // pred_check_branch
      %141 = sbr.rel (0) target = $region25
    $region24: #{forward.6} parent=1 // pred_region
      _
    $region25: #{forward.6} parent=1 // pred_fallthru
      _
    // Predicated region
    $region26: #{forward.6} parent=1 // pred_check
      _
    $region27: #{forward.6} parent=1 // pred_check_branch
      %143 = sbr.rel (0) target = $region29
    $region28: #{forward.6} parent=1 // pred_region
      _
    $region29: #{forward.6} parent=1 // pred_fallthru
      _
    %144 = vsyncpa [#allocation3], 1
    %145 = vsyncpa [#allocation5], 1

// kernel: forward.7
$region0: #{forward.7}
  #allocation0 [shape = 'u32[]', space=smem, size = 0x4, offset = 0x4, fixed_abs, tag = 'smem constant byte address 0x4 - core index']
  #allocation1 [shape = 'u32[72,128]{1,0:T(1,128)}', space=vmem, size = 0x9000, scoped, tag = 'internal scratch']
  %s0 = inlined_call_operand.vmem [shape: bf16[16,2048], index: 0, kind: input, shape index: {}]
  %s1 = inlined_call_operand.hbm [shape: bf16[2048,128], index: 1, kind: input, shape index: {}]
  %s2 = inlined_call_operand.hbm [shape: f32[1,128], index: 2, kind: input, shape index: {}]
  %s3 = inlined_call_operand.vmem [shape: f32[16,128], index: 3, kind: output, shape index: {}]
  %s4 = sld [smem:[#allocation0]]
  $region30: #{forward.7} parent=0
    _
  %s6 = ssub.s32 1, %s4
  %s7 = scalar_select 0, %s6, %s4
  $region1: #{forward.7} parent=0
    #allocation2 [shape = 'u8[524288]{0}', space=vmem, size = 0x80000, scoped, tag = 'input window, operand 1, single buffered']
    #allocation3 [shape = 's32[1]{0}', space=sflag, size = 0x4, scoped, tag = 'scoped memory for forward.7']
    #allocation4 [shape = 'u8[512]{0}', space=vmem, size = 0x400, scoped, tag = 'input window, operand 2, single buffered']
    #allocation5 [shape = 's32[1]{0}', space=sflag, size = 0x4, scoped, tag = 'scoped memory for forward.7']
    %8 = vsyncpa [#allocation3], 0
    %9 = vsyncpa [#allocation5], 0
    // Predicated region
    $region2: #{forward.7} parent=1 // pred_check
      _
    $region3: #{forward.7} parent=1 // pred_check_branch
      %11 = sbr.rel (0) target = $region5
    $region4: #{forward.7} parent=1 // pred_region
      _
    $region5: #{forward.7} parent=1 // pred_fallthru
      _
    // Predicated region
    $region6: #{forward.7} parent=1 // pred_check
      _
    $region7: #{forward.7} parent=1 // pred_check_branch
      %13 = sbr.rel (0) target = $region9
    $region8: #{forward.7} parent=1 // pred_region
      %15 = vsyncadd [#allocation3], 0
      %s16 = sshll.u32 %s1, 4
      %s17 = int_to_ptr.hbm [resolvable:$true] %s16
      %s18 = sshll.u32 [#allocation2], 4
      %s19 = int_to_ptr.vmem [resolvable:$true] %s18
      %24 = dma.hbm_to_vmem [thread:$0]  %s17, 16384, %s19, [#allocation3], 64, 64, 4
    $region9: #{forward.7} parent=1 // pred_fallthru
      _
    // Predicated region
    $region10: #{forward.7} parent=1 // pred_check
      _
    $region11: #{forward.7} parent=1 // pred_check_branch
      %26 = sbr.rel (0) target = $region13
    $region12: #{forward.7} parent=1 // pred_region
      %28 = vsyncadd [#allocation5], 0
      %s30 = sshll.u32 %s2, 4
      %s31 = int_to_ptr.hbm [resolvable:$true] %s30
      %s32 = sshll.u32 [#allocation4], 4
      %s33 = int_to_ptr.vmem [resolvable:$true] %s32
      %35 = dma.hbm_to_vmem [thread:$0]  %s31, 16, %s33, [#allocation5]
    $region13: #{forward.7} parent=1 // pred_fallthru
      _
    // Predicated region
    $region14: #{forward.7} parent=1 // pred_check
      _
    $region15: #{forward.7} parent=1 // pred_check_branch
      %37 = sbr.rel (0) target = $region17
    $region16: #{forward.7} parent=1 // pred_region
      %39 = dma.done [#allocation3], 16384
    $region17: #{forward.7} parent=1 // pred_fallthru
      _
    // Predicated region
    $region18: #{forward.7} parent=1 // pred_check
      _
    $region19: #{forward.7} parent=1 // pred_check_branch
      %41 = sbr.rel (0) target = $region21
    $region20: #{forward.7} parent=1 // pred_region
      %43 = dma.done [#allocation5], 16
    $region21: #{forward.7} parent=1 // pred_fallthru
      _
    %v44 = vld [vmem:[%s0] sm:$0xff]
    %v45 = vld [vmem:[%s0 + $0x8] sm:$0xff]
    %v46 = vld [vmem:[%s0 + $0x10] sm:$0xff]
    %v47 = vld [vmem:[%s0 + $0x18] sm:$0xff]
    %v48 = vld [vmem:[%s0 + $0x20] sm:$0xff]
    %v49 = vld [vmem:[%s0 + $0x28] sm:$0xff]
    %v50 = vld [vmem:[%s0 + $0x30] sm:$0xff]
    %v51 = vld [vmem:[%s0 + $0x38] sm:$0xff]
    %v52 = vld [vmem:[%s0 + $0x40] sm:$0xff]
    %v53 = vld [vmem:[%s0 + $0x48] sm:$0xff]
    %v54 = vld [vmem:[%s0 + $0x50] sm:$0xff]
    %v55 = vld [vmem:[%s0 + $0x58] sm:$0xff]
    %v56 = vld [vmem:[%s0 + $0x60] sm:$0xff]
    %v57 = vld [vmem:[%s0 + $0x68] sm:$0xff]
    %v58 = vld [vmem:[%s0 + $0x70] sm:$0xff]
    %v59 = vld [vmem:[%s0 + $0x78] sm:$0xff]
    %v60 = vld [vmem:[#allocation2] sm:$0xf]
    %v61 = vld [vmem:[#allocation2 + $0x4] sm:$0xf]
    %v62 = vld [vmem:[#allocation2 + $0x8] sm:$0xf]
    %v63 = vld [vmem:[#allocation2 + $0xc] sm:$0xf]
    %v64 = vld [vmem:[#allocation2 + $0x10] sm:$0xf]
    %v65 = vld [vmem:[#allocation2 + $0x14] sm:$0xf]
    %v66 = vld [vmem:[#allocation2 + $0x18] sm:$0xf]
    %v67 = vld [vmem:[#allocation2 + $0x1c] sm:$0xf]
    %v68 = vld [vmem:[#allocation2 + $0x20] sm:$0xf]
    %v69 = vld [vmem:[#allocation2 + $0x24] sm:$0xf]
    %v70 = vld [vmem:[#allocation2 + $0x28] sm:$0xf]
    %v71 = vld [vmem:[#allocation2 + $0x2c] sm:$0xf]
    %v72 = vld [vmem:[#allocation2 + $0x30] sm:$0xf]
    %v73 = vld [vmem:[#allocation2 + $0x34] sm:$0xf]
    %v74 = vld [vmem:[#allocation2 + $0x38] sm:$0xf]
    %v75 = vld [vmem:[#allocation2 + $0x3c] sm:$0xf]
    %v76 = vld [vmem:[#allocation2 + $0x40] sm:$0xf]
    %v77 = vld [vmem:[#allocation2 + $0x44] sm:$0xf]
    %v78 = vld [vmem:[#allocation2 + $0x48] sm:$0xf]
    %v79 = vld [vmem:[#allocation2 + $0x4c] sm:$0xf]
    %v80 = vld [vmem:[#allocation2 + $0x50] sm:$0xf]
    %v81 = vld [vmem:[#allocation2 + $0x54] sm:$0xf]
    %v82 = vld [vmem:[#allocation2 + $0x58] sm:$0xf]
    %v83 = vld [vmem:[#allocation2 + $0x5c] sm:$0xf]
    %v84 = vld [vmem:[#allocation2 + $0x60] sm:$0xf]
    %v85 = vld [vmem:[#allocation2 + $0x64] sm:$0xf]
    %v86 = vld [vmem:[#allocation2 + $0x68] sm:$0xf]
    %v87 = vld [vmem:[#allocation2 + $0x6c] sm:$0xf]
    %v88 = vld [vmem:[#allocation2 + $0x70] sm:$0xf]
    %v89 = vld [vmem:[#allocation2 + $0x74] sm:$0xf]
    %v90 = vld [vmem:[#allocation2 + $0x78] sm:$0xf]
    %v91 = vld [vmem:[#allocation2 + $0x7c] sm:$0xf]
    %v92 = vld [vmem:[#allocation2 + $0x80] sm:$0xf]
    %v93 = vld [vmem:[#allocation2 + $0x84] sm:$0xf]
    %v94 = vld [vmem:[#allocation2 + $0x88] sm:$0xf]
    %v95 = vld [vmem:[#allocation2 + $0x8c] sm:$0xf]
    %v96 = vld [vmem:[#allocation2 + $0x90] sm:$0xf]
    %v97 = vld [vmem:[#allocation2 + $0x94] sm:$0xf]
    %v98 = vld [vmem:[#allocation2 + $0x98] sm:$0xf]
    %v99 = vld [vmem:[#allocation2 + $0x9c] sm:$0xf]
    %v100 = vld [vmem:[#allocation2 + $0xa0] sm:$0xf]
    %v101 = vld [vmem:[#allocation2 + $0xa4] sm:$0xf]
    %v102 = vld [vmem:[#allocation2 + $0xa8] sm:$0xf]
    %v103 = vld [vmem:[#allocation2 + $0xac] sm:$0xf]
    %v104 = vld [vmem:[#allocation2 + $0xb0] sm:$0xf]
    %v105 = vld [vmem:[#allocation2 + $0xb4] sm:$0xf]
    %v106 = vld [vmem:[#allocation2 + $0xb8] sm:$0xf]
    %v107 = vld [vmem:[#allocation2 + $0xbc] sm:$0xf]
    %v108 = vld [vmem:[#allocation2 + $0xc0] sm:$0xf]
    %v109 = vld [vmem:[#allocation2 + $0xc4] sm:$0xf]
    %v110 = vld [vmem:[#allocation2 + $0xc8] sm:$0xf]
    %v111 = vld [vmem:[#allocation2 + $0xcc] sm:$0xf]
    %v112 = vld [vmem:[#allocation2 + $0xd0] sm:$0xf]
    %v113 = vld [vmem:[#allocation2 + $0xd4] sm:$0xf]
    %v114 = vld [vmem:[#allocation2 + $0xd8] sm:$0xf]
    %v115 = vld [vmem:[#allocation2 + $0xdc] sm:$0xf]
    %v116 = vld [vmem:[#allocation2 + $0xe0] sm:$0xf]
    %v117 = vld [vmem:[#allocation2 + $0xe4] sm:$0xf]
    %v118 = vld [vmem:[#allocation2 + $0xe8] sm:$0xf]
    %v119 = vld [vmem:[#allocation2 + $0xec] sm:$0xf]
    %v120 = vld [vmem:[#allocation2 + $0xf0] sm:$0xf]
    %v121 = vld [vmem:[#allocation2 + $0xf4] sm:$0xf]
    %v122 = vld [vmem:[#allocation2 + $0xf8] sm:$0xf]
    %v123 = vld [vmem:[#allocation2 + $0xfc] sm:$0xf]
    %v124 = vld [vmem:[#allocation2 + $0x100] sm:$0xf]
    %v125 = vld [vmem:[#allocation2 + $0x104] sm:$0xf]
    %v126 = vld [vmem:[#allocation2 + $0x108] sm:$0xf]
    %v127 = vld [vmem:[#allocation2 + $0x10c] sm:$0xf]
    %v128 = vld [vmem:[#allocation2 + $0x110] sm:$0xf]
    %v129 = vld [vmem:[#allocation2 + $0x114] sm:$0xf]
    %v130 = vld [vmem:[#allocation2 + $0x118] sm:$0xf]
    %v131 = vld [vmem:[#allocation2 + $0x11c] sm:$0xf]
    %v132 = vld [vmem:[#allocation2 + $0x120] sm:$0xf]
    %v133 = vld [vmem:[#allocation2 + $0x124] sm:$0xf]
    %v134 = vld [vmem:[#allocation2 + $0x128] sm:$0xf]
    %v135 = vld [vmem:[#allocation2 + $0x12c] sm:$0xf]
    %v136 = vld [vmem:[#allocation2 + $0x130] sm:$0xf]
    %v137 = vld [vmem:[#allocation2 + $0x134] sm:$0xf]
    %v138 = vld [vmem:[#allocation2 + $0x138] sm:$0xf]
    %v139 = vld [vmem:[#allocation2 + $0x13c] sm:$0xf]
    %v140 = vld [vmem:[#allocation2 + $0x140] sm:$0xf]
    %v141 = vld [vmem:[#allocation2 + $0x144] sm:$0xf]
    %v142 = vld [vmem:[#allocation2 + $0x148] sm:$0xf]
    %v143 = vld [vmem:[#allocation2 + $0x14c] sm:$0xf]
    %v144 = vld [vmem:[#allocation2 + $0x150] sm:$0xf]
    %v145 = vld [vmem:[#allocation2 + $0x154] sm:$0xf]
    %v146 = vld [vmem:[#allocation2 + $0x158] sm:$0xf]
    %v147 = vld [vmem:[#allocation2 + $0x15c] sm:$0xf]
    %v148 = vld [vmem:[#allocation2 + $0x160] sm:$0xf]
    %v149 = vld [vmem:[#allocation2 + $0x164] sm:$0xf]
    %v150 = vld [vmem:[#allocation2 + $0x168] sm:$0xf]
    %v151 = vld [vmem:[#allocation2 + $0x16c] sm:$0xf]
    %v152 = vld [vmem:[#allocation2 + $0x170] sm:$0xf]
    %v153 = vld [vmem:[#allocation2 + $0x174] sm:$0xf]
    %v154 = vld [vmem:[#allocation2 + $0x178] sm:$0xf]
    %v155 = vld [vmem:[#allocation2 + $0x17c] sm:$0xf]
    %v156 = vld [vmem:[#allocation2 + $0x180] sm:$0xf]
    %v157 = vld [vmem:[#allocation2 + $0x184] sm:$0xf]
    %v158 = vld [vmem:[#allocation2 + $0x188] sm:$0xf]
    %v159 = vld [vmem:[#allocation2 + $0x18c] sm:$0xf]
    %v160 = vld [vmem:[#allocation2 + $0x190] sm:$0xf]
    %v161 = vld [vmem:[#allocation2 + $0x194] sm:$0xf]
    %v162 = vld [vmem:[#allocation2 + $0x198] sm:$0xf]
    %v163 = vld [vmem:[#allocation2 + $0x19c] sm:$0xf]
    %v164 = vld [vmem:[#allocation2 + $0x1a0] sm:$0xf]
    %v165 = vld [vmem:[#allocation2 + $0x1a4] sm:$0xf]
    %v166 = vld [vmem:[#allocation2 + $0x1a8] sm:$0xf]
    %v167 = vld [vmem:[#allocation2 + $0x1ac] sm:$0xf]
    %v168 = vld [vmem:[#allocation2 + $0x1b0] sm:$0xf]
    %v169 = vld [vmem:[#allocation2 + $0x1b4] sm:$0xf]
    %v170 = vld [vmem:[#allocation2 + $0x1b8] sm:$0xf]
    %v171 = vld [vmem:[#allocation2 + $0x1bc] sm:$0xf]
    %v172 = vld [vmem:[#allocation2 + $0x1c0] sm:$0xf]
    %v173 = vld [vmem:[#allocation2 + $0x1c4] sm:$0xf]
    %v174 = vld [vmem:[#allocation2 + $0x1c8] sm:$0xf]
    %v175 = vld [vmem:[#allocation2 + $0x1cc] sm:$0xf]
    %v176 = vld [vmem:[#allocation2 + $0x1d0] sm:$0xf]
    %v177 = vld [vmem:[#allocation2 + $0x1d4] sm:$0xf]
    %v178 = vld [vmem:[#allocation2 + $0x1d8] sm:$0xf]
    %v179 = vld [vmem:[#allocation2 + $0x1dc] sm:$0xf]
    %v180 = vld [vmem:[#allocation2 + $0x1e0] sm:$0xf]
    %v181 = vld [vmem:[#allocation2 + $0x1e4] sm:$0xf]
    %v182 = vld [vmem:[#allocation2 + $0x1e8] sm:$0xf]
    %v183 = vld [vmem:[#allocation2 + $0x1ec] sm:$0xf]
    %v184 = vld [vmem:[#allocation2 + $0x1f0] sm:$0xf]
    %v185 = vld [vmem:[#allocation2 + $0x1f4] sm:$0xf]
    %v186 = vld [vmem:[#allocation2 + $0x1f8] sm:$0xf]
    %v187 = vld [vmem:[#allocation2 + $0x1fc] sm:$0xf]
    %v188 = vld [vmem:[#allocation2 + $0x200] sm:$0xf]
    %v189 = vld [vmem:[#allocation2 + $0x204] sm:$0xf]
    %v190 = vld [vmem:[#allocation2 + $0x208] sm:$0xf]
    %v191 = vld [vmem:[#allocation2 + $0x20c] sm:$0xf]
    %v192 = vld [vmem:[#allocation2 + $0x210] sm:$0xf]
    %v193 = vld [vmem:[#allocation2 + $0x214] sm:$0xf]
    %v194 = vld [vmem:[#allocation2 + $0x218] sm:$0xf]
    %v195 = vld [vmem:[#allocation2 + $0x21c] sm:$0xf]
    %v196 = vld [vmem:[#allocation2 + $0x220] sm:$0xf]
    %v197 = vld [vmem:[#allocation2 + $0x224] sm:$0xf]
    %v198 = vld [vmem:[#allocation2 + $0x228] sm:$0xf]
    %v199 = vld [vmem:[#allocation2 + $0x22c] sm:$0xf]
    %v200 = vld [vmem:[#allocation2 + $0x230] sm:$0xf]
    %v201 = vld [vmem:[#allocation2 + $0x234] sm:$0xf]
    %v202 = vld [vmem:[#allocation2 + $0x238] sm:$0xf]
    %v203 = vld [vmem:[#allocation2 + $0x23c] sm:$0xf]
    %v204 = vld [vmem:[#allocation2 + $0x240] sm:$0xf]
    %v205 = vld [vmem:[#allocation2 + $0x244] sm:$0xf]
    %v206 = vld [vmem:[#allocation2 + $0x248] sm:$0xf]
    %v207 = vld [vmem:[#allocation2 + $0x24c] sm:$0xf]
    %v208 = vld [vmem:[#allocation2 + $0x250] sm:$0xf]
    %v209 = vld [vmem:[#allocation2 + $0x254] sm:$0xf]
    %v210 = vld [vmem:[#allocation2 + $0x258] sm:$0xf]
    %v211 = vld [vmem:[#allocation2 + $0x25c] sm:$0xf]
    %v212 = vld [vmem:[#allocation2 + $0x260] sm:$0xf]
    %v213 = vld [vmem:[#allocation2 + $0x264] sm:$0xf]
    %v214 = vld [vmem:[#allocation2 + $0x268] sm:$0xf]
    %v215 = vld [vmem:[#allocation2 + $0x26c] sm:$0xf]
    %v216 = vld [vmem:[#allocation2 + $0x270] sm:$0xf]
    %v217 = vld [vmem:[#allocation2 + $0x274] sm:$0xf]
    %v218 = vld [vmem:[#allocation2 + $0x278] sm:$0xf]
    %v219 = vld [vmem:[#allocation2 + $0x27c] sm:$0xf]
    %v220 = vld [vmem:[#allocation2 + $0x280] sm:$0xf]
    %v221 = vld [vmem:[#allocation2 + $0x284] sm:$0xf]
    %v222 = vld [vmem:[#allocation2 + $0x288] sm:$0xf]
    %v223 = vld [vmem:[#allocation2 + $0x28c] sm:$0xf]
    %v224 = vld [vmem:[#allocation2 + $0x290] sm:$0xf]
    %v225 = vld [vmem:[#allocation2 + $0x294] sm:$0xf]
    %v226 = vld [vmem:[#allocation2 + $0x298] sm:$0xf]
    %v227 = vld [vmem:[#allocation2 + $0x29c] sm:$0xf]
    %v228 = vld [vmem:[#allocation2 + $0x2a0] sm:$0xf]
    %v229 = vld [vmem:[#allocation2 + $0x2a4] sm:$0xf]
    %v230 = vld [vmem:[#allocation2 + $0x2a8] sm:$0xf]
    %v231 = vld [vmem:[#allocation2 + $0x2ac] sm:$0xf]
    %v232 = vld [vmem:[#allocation2 + $0x2b0] sm:$0xf]
    %v233 = vld [vmem:[#allocation2 + $0x2b4] sm:$0xf]
    %v234 = vld [vmem:[#allocation2 + $0x2b8] sm:$0xf]
    %v235 = vld [vmem:[#allocation2 + $0x2bc] sm:$0xf]
    %v236 = vld [vmem:[#allocation2 + $0x2c0] sm:$0xf]
    %v237 = vld [vmem:[#allocation2 + $0x2c4] sm:$0xf]
    %v238 = vld [vmem:[#allocation2 + $0x2c8] sm:$0xf]
    %v239 = vld [vmem:[#allocation2 + $0x2cc] sm:$0xf]
    %v240 = vld [vmem:[#allocation2 + $0x2d0] sm:$0xf]
    %v241 = vld [vmem:[#allocation2 + $0x2d4] sm:$0xf]
    %v242 = vld [vmem:[#allocation2 + $0x2d8] sm:$0xf]
    %v243 = vld [vmem:[#allocation2 + $0x2dc] sm:$0xf]
    %v244 = vld [vmem:[#allocation2 + $0x2e0] sm:$0xf]
    %v245 = vld [vmem:[#allocation2 + $0x2e4] sm:$0xf]
    %v246 = vld [vmem:[#allocation2 + $0x2e8] sm:$0xf]
    %v247 = vld [vmem:[#allocation2 + $0x2ec] sm:$0xf]
    %v248 = vld [vmem:[#allocation2 + $0x2f0] sm:$0xf]
    %v249 = vld [vmem:[#allocation2 + $0x2f4] sm:$0xf]
    %v250 = vld [vmem:[#allocation2 + $0x2f8] sm:$0xf]
    %v251 = vld [vmem:[#allocation2 + $0x2fc] sm:$0xf]
    %v252 = vld [vmem:[#allocation2 + $0x300] sm:$0xf]
    %v253 = vld [vmem:[#allocation2 + $0x304] sm:$0xf]
    %v254 = vld [vmem:[#allocation2 + $0x308] sm:$0xf]
    %v255 = vld [vmem:[#allocation2 + $0x30c] sm:$0xf]
    %v256 = vld [vmem:[#allocation2 + $0x310] sm:$0xf]
    %v257 = vld [vmem:[#allocation2 + $0x314] sm:$0xf]
    %v258 = vld [vmem:[#allocation2 + $0x318] sm:$0xf]
    %v259 = vld [vmem:[#allocation2 + $0x31c] sm:$0xf]
    %v260 = vld [vmem:[#allocation2 + $0x320] sm:$0xf]
    %v261 = vld [vmem:[#allocation2 + $0x324] sm:$0xf]
    %v262 = vld [vmem:[#allocation2 + $0x328] sm:$0xf]
    %v263 = vld [vmem:[#allocation2 + $0x32c] sm:$0xf]
    %v264 = vld [vmem:[#allocation2 + $0x330] sm:$0xf]
    %v265 = vld [vmem:[#allocation2 + $0x334] sm:$0xf]
    %v266 = vld [vmem:[#allocation2 + $0x338] sm:$0xf]
    %v267 = vld [vmem:[#allocation2 + $0x33c] sm:$0xf]
    %v268 = vld [vmem:[#allocation2 + $0x340] sm:$0xf]
    %v269 = vld [vmem:[#allocation2 + $0x344] sm:$0xf]
    %v270 = vld [vmem:[#allocation2 + $0x348] sm:$0xf]
    %v271 = vld [vmem:[#allocation2 + $0x34c] sm:$0xf]
    %v272 = vld [vmem:[#allocation2 + $0x350] sm:$0xf]
    %v273 = vld [vmem:[#allocation2 + $0x354] sm:$0xf]
    %v274 = vld [vmem:[#allocation2 + $0x358] sm:$0xf]
    %v275 = vld [vmem:[#allocation2 + $0x35c] sm:$0xf]
    %v276 = vld [vmem:[#allocation2 + $0x360] sm:$0xf]
    %v277 = vld [vmem:[#allocation2 + $0x364] sm:$0xf]
    %v278 = vld [vmem:[#allocation2 + $0x368] sm:$0xf]
    %v279 = vld [vmem:[#allocation2 + $0x36c] sm:$0xf]
    %v280 = vld [vmem:[#allocation2 + $0x370] sm:$0xf]
    %v281 = vld [vmem:[#allocation2 + $0x374] sm:$0xf]
    %v282 = vld [vmem:[#allocation2 + $0x378] sm:$0xf]
    %v283 = vld [vmem:[#allocation2 + $0x37c] sm:$0xf]
    %v284 = vld [vmem:[#allocation2 + $0x380] sm:$0xf]
    %v285 = vld [vmem:[#allocation2 + $0x384] sm:$0xf]
    %v286 = vld [vmem:[#allocation2 + $0x388] sm:$0xf]
    %v287 = vld [vmem:[#allocation2 + $0x38c] sm:$0xf]
    %v288 = vld [vmem:[#allocation2 + $0x390] sm:$0xf]
    %v289 = vld [vmem:[#allocation2 + $0x394] sm:$0xf]
    %v290 = vld [vmem:[#allocation2 + $0x398] sm:$0xf]
    %v291 = vld [vmem:[#allocation2 + $0x39c] sm:$0xf]
    %v292 = vld [vmem:[#allocation2 + $0x3a0] sm:$0xf]
    %v293 = vld [vmem:[#allocation2 + $0x3a4] sm:$0xf]
    %v294 = vld [vmem:[#allocation2 + $0x3a8] sm:$0xf]
    %v295 = vld [vmem:[#allocation2 + $0x3ac] sm:$0xf]
    %v296 = vld [vmem:[#allocation2 + $0x3b0] sm:$0xf]
    %v297 = vld [vmem:[#allocation2 + $0x3b4] sm:$0xf]
    %v298 = vld [vmem:[#allocation2 + $0x3b8] sm:$0xf]
    %v299 = vld [vmem:[#allocation2 + $0x3bc] sm:$0xf]
    %v300 = vld [vmem:[#allocation2 + $0x3c0] sm:$0xf]
    %v301 = vld [vmem:[#allocation2 + $0x3c4] sm:$0xf]
    %v302 = vld [vmem:[#allocation2 + $0x3c8] sm:$0xf]
    %v303 = vld [vmem:[#allocation2 + $0x3cc] sm:$0xf]
    %v304 = vld [vmem:[#allocation2 + $0x3d0] sm:$0xf]
    %v305 = vld [vmem:[#allocation2 + $0x3d4] sm:$0xf]
    %v306 = vld [vmem:[#allocation2 + $0x3d8] sm:$0xf]
    %v307 = vld [vmem:[#allocation2 + $0x3dc] sm:$0xf]
    %v308 = vld [vmem:[#allocation2 + $0x3e0] sm:$0xf]
    %v309 = vld [vmem:[#allocation2 + $0x3e4] sm:$0xf]
    %v310 = vld [vmem:[#allocation2 + $0x3e8] sm:$0xf]
    %v311 = vld [vmem:[#allocation2 + $0x3ec] sm:$0xf]
    %v312 = vld [vmem:[#allocation2 + $0x3f0] sm:$0xf]
    %v313 = vld [vmem:[#allocation2 + $0x3f4] sm:$0xf]
    %v314 = vld [vmem:[#allocation2 + $0x3f8] sm:$0xf]
    %v315 = vld [vmem:[#allocation2 + $0x3fc] sm:$0xf]
    %v316 = vld [vmem:[#allocation4] sm:$0x1]
    %v318 = vperm.slane %v316, 0
    %v336 = vunpack.c.l.b16 %v44
    %v337 = vunpack.c.h.b16 %v44
    %v338 = vunpack.c.l.b16 %v45
    %v339 = vunpack.c.h.b16 %v45
    %v340 = vunpack.c.l.b16 %v46
    %v341 = vunpack.c.h.b16 %v46
    %v342 = vunpack.c.l.b16 %v47
    %v343 = vunpack.c.h.b16 %v47
    %v344 = vunpack.c.l.b16 %v48
    %v345 = vunpack.c.h.b16 %v48
    %v346 = vunpack.c.l.b16 %v49
    %v347 = vunpack.c.h.b16 %v49
    %v348 = vunpack.c.l.b16 %v50
    %v349 = vunpack.c.h.b16 %v50
    %v350 = vunpack.c.l.b16 %v51
    %v351 = vunpack.c.h.b16 %v51
    %v352 = vunpack.c.l.b16 %v52
    %v353 = vunpack.c.h.b16 %v52
    %v354 = vunpack.c.l.b16 %v53
    %v355 = vunpack.c.h.b16 %v53
    %v356 = vunpack.c.l.b16 %v54
    %v357 = vunpack.c.h.b16 %v54
    %v358 = vunpack.c.l.b16 %v55
    %v359 = vunpack.c.h.b16 %v55
    %v360 = vunpack.c.l.b16 %v56
    %v361 = vunpack.c.h.b16 %v56
    %v362 = vunpack.c.l.b16 %v57
    %v363 = vunpack.c.h.b16 %v57
    %v364 = vunpack.c.l.b16 %v58
    %v365 = vunpack.c.h.b16 %v58
    %v366 = vunpack.c.l.b16 %v59
    %v367 = vunpack.c.h.b16 %v59
    %v368 = vpack.c.b16 %v352, %v336
    %v369 = vpack.c.b16 %v353, %v337
    %v370 = vpack.c.b16 %v354, %v338
    %v371 = vpack.c.b16 %v355, %v339
    %v372 = vpack.c.b16 %v356, %v340
    %v373 = vpack.c.b16 %v357, %v341
    %v374 = vpack.c.b16 %v358, %v342
    %v375 = vpack.c.b16 %v359, %v343
    %v376 = vpack.c.b16 %v360, %v344
    %v377 = vpack.c.b16 %v361, %v345
    %v378 = vpack.c.b16 %v362, %v346
    %v379 = vpack.c.b16 %v363, %v347
    %v380 = vpack.c.b16 %v364, %v348
    %v381 = vpack.c.b16 %v365, %v349
    %v382 = vpack.c.b16 %v366, %v350
    %v383 = vpack.c.b16 %v367, %v351
    %v656 = vunpack.c.l.b16 %v60
    %v657 = vunpack.c.l.b16 %v61
    %v658 = vunpack.c.l.b16 %v62
    %v659 = vunpack.c.l.b16 %v63
    %v660 = vunpack.c.l.b16 %v64
    %v661 = vunpack.c.l.b16 %v65
    %v662 = vunpack.c.l.b16 %v66
    %v663 = vunpack.c.l.b16 %v67
    %v664 = vunpack.c.l.b16 %v68
    %v665 = vunpack.c.l.b16 %v69
    %v666 = vunpack.c.l.b16 %v70
    %v667 = vunpack.c.l.b16 %v71
    %v668 = vunpack.c.l.b16 %v72
    %v669 = vunpack.c.l.b16 %v73
    %v670 = vunpack.c.l.b16 %v74
    %v671 = vunpack.c.l.b16 %v75
    %v672 = vunpack.c.l.b16 %v76
    %v673 = vunpack.c.l.b16 %v77
    %v674 = vunpack.c.l.b16 %v78
    %v675 = vunpack.c.l.b16 %v79
    %v676 = vunpack.c.l.b16 %v80
    %v677 = vunpack.c.l.b16 %v81
    %v678 = vunpack.c.l.b16 %v82
    %v679 = vunpack.c.l.b16 %v83
    %v680 = vunpack.c.l.b16 %v84
    %v681 = vunpack.c.l.b16 %v85
    %v682 = vunpack.c.l.b16 %v86
    %v683 = vunpack.c.l.b16 %v87
    %v684 = vunpack.c.l.b16 %v88
    %v685 = vunpack.c.l.b16 %v89
    %v686 = vunpack.c.l.b16 %v90
    %v687 = vunpack.c.l.b16 %v91
    %v688 = vunpack.c.l.b16 %v92
    %v689 = vunpack.c.l.b16 %v93
    %v690 = vunpack.c.l.b16 %v94
    %v691 = vunpack.c.l.b16 %v95
    %v692 = vunpack.c.l.b16 %v96
    %v693 = vunpack.c.l.b16 %v97
    %v694 = vunpack.c.l.b16 %v98
    %v695 = vunpack.c.l.b16 %v99
    %v696 = vunpack.c.l.b16 %v100
    %v697 = vunpack.c.l.b16 %v101
    %v698 = vunpack.c.l.b16 %v102
    %v699 = vunpack.c.l.b16 %v103
    %v700 = vunpack.c.l.b16 %v104
    %v701 = vunpack.c.l.b16 %v105
    %v702 = vunpack.c.l.b16 %v106
    %v703 = vunpack.c.l.b16 %v107
    %v704 = vunpack.c.l.b16 %v108
    %v705 = vunpack.c.l.b16 %v109
    %v706 = vunpack.c.l.b16 %v110
    %v707 = vunpack.c.l.b16 %v111
    %v708 = vunpack.c.l.b16 %v112
    %v709 = vunpack.c.l.b16 %v113
    %v710 = vunpack.c.l.b16 %v114
    %v711 = vunpack.c.l.b16 %v115
    %v712 = vunpack.c.l.b16 %v116
    %v713 = vunpack.c.l.b16 %v117
    %v714 = vunpack.c.l.b16 %v118
    %v715 = vunpack.c.l.b16 %v119
    %v716 = vunpack.c.l.b16 %v120
    %v717 = vunpack.c.l.b16 %v121
    %v718 = vunpack.c.l.b16 %v122
    %v719 = vunpack.c.l.b16 %v123
    %v720 = vunpack.c.l.b16 %v124
    %v721 = vunpack.c.l.b16 %v125
    %v722 = vunpack.c.l.b16 %v126
    %v723 = vunpack.c.l.b16 %v127
    %v724 = vunpack.c.l.b16 %v128
    %v725 = vunpack.c.l.b16 %v129
    %v726 = vunpack.c.l.b16 %v130
    %v727 = vunpack.c.l.b16 %v131
    %v728 = vunpack.c.l.b16 %v132
    %v729 = vunpack.c.l.b16 %v133
    %v730 = vunpack.c.l.b16 %v134
    %v731 = vunpack.c.l.b16 %v135
    %v732 = vunpack.c.l.b16 %v136
    %v733 = vunpack.c.l.b16 %v137
    %v734 = vunpack.c.l.b16 %v138
    %v735 = vunpack.c.l.b16 %v139
    %v736 = vunpack.c.l.b16 %v140
    %v737 = vunpack.c.l.b16 %v141
    %v738 = vunpack.c.l.b16 %v142
    %v739 = vunpack.c.l.b16 %v143
    %v740 = vunpack.c.l.b16 %v144
    %v741 = vunpack.c.l.b16 %v145
    %v742 = vunpack.c.l.b16 %v146
    %v743 = vunpack.c.l.b16 %v147
    %v744 = vunpack.c.l.b16 %v148
    %v745 = vunpack.c.l.b16 %v149
    %v746 = vunpack.c.l.b16 %v150
    %v747 = vunpack.c.l.b16 %v151
    %v748 = vunpack.c.l.b16 %v152
    %v749 = vunpack.c.l.b16 %v153
    %v750 = vunpack.c.l.b16 %v154
    %v751 = vunpack.c.l.b16 %v155
    %v752 = vunpack.c.l.b16 %v156
    %v753 = vunpack.c.l.b16 %v157
    %v754 = vunpack.c.l.b16 %v158
    %v755 = vunpack.c.l.b16 %v159
    %v756 = vunpack.c.l.b16 %v160
    %v757 = vunpack.c.l.b16 %v161
    %v758 = vunpack.c.l.b16 %v162
    %v759 = vunpack.c.l.b16 %v163
    %v760 = vunpack.c.l.b16 %v164
    %v761 = vunpack.c.l.b16 %v165
    %v762 = vunpack.c.l.b16 %v166
    %v763 = vunpack.c.l.b16 %v167
    %v764 = vunpack.c.l.b16 %v168
    %v765 = vunpack.c.l.b16 %v169
    %v766 = vunpack.c.l.b16 %v170
    %v767 = vunpack.c.l.b16 %v171
    %v768 = vunpack.c.l.b16 %v172
    %v769 = vunpack.c.l.b16 %v173
    %v770 = vunpack.c.l.b16 %v174
    %v771 = vunpack.c.l.b16 %v175
    %v772 = vunpack.c.l.b16 %v176
    %v773 = vunpack.c.l.b16 %v177
    %v774 = vunpack.c.l.b16 %v178
    %v775 = vunpack.c.l.b16 %v179
    %v776 = vunpack.c.l.b16 %v180
    %v777 = vunpack.c.l.b16 %v181
    %v778 = vunpack.c.l.b16 %v182
    %v779 = vunpack.c.l.b16 %v183
    %v780 = vunpack.c.l.b16 %v184
    %v781 = vunpack.c.l.b16 %v185
    %v782 = vunpack.c.l.b16 %v186
    %v783 = vunpack.c.l.b16 %v187
    %v784 = vunpack.c.l.b16 %v188
    %v785 = vunpack.c.l.b16 %v189
    %v786 = vunpack.c.l.b16 %v190
    %v787 = vunpack.c.l.b16 %v191
    %v788 = vunpack.c.l.b16 %v192
    %v789 = vunpack.c.l.b16 %v193
    %v790 = vunpack.c.l.b16 %v194
    %v791 = vunpack.c.l.b16 %v195
    %v792 = vunpack.c.l.b16 %v196
    %v793 = vunpack.c.l.b16 %v197
    %v794 = vunpack.c.l.b16 %v198
    %v795 = vunpack.c.l.b16 %v199
    %v796 = vunpack.c.l.b16 %v200
    %v797 = vunpack.c.l.b16 %v201
    %v798 = vunpack.c.l.b16 %v202
    %v799 = vunpack.c.l.b16 %v203
    %v800 = vunpack.c.l.b16 %v204
    %v801 = vunpack.c.l.b16 %v205
    %v802 = vunpack.c.l.b16 %v206
    %v803 = vunpack.c.l.b16 %v207
    %v804 = vunpack.c.l.b16 %v208
    %v805 = vunpack.c.l.b16 %v209
    %v806 = vunpack.c.l.b16 %v210
    %v807 = vunpack.c.l.b16 %v211
    %v808 = vunpack.c.l.b16 %v212
    %v809 = vunpack.c.l.b16 %v213
    %v810 = vunpack.c.l.b16 %v214
    %v811 = vunpack.c.l.b16 %v215
    %v812 = vunpack.c.l.b16 %v216
    %v813 = vunpack.c.l.b16 %v217
    %v814 = vunpack.c.l.b16 %v218
    %v815 = vunpack.c.l.b16 %v219
    %v816 = vunpack.c.l.b16 %v220
    %v817 = vunpack.c.l.b16 %v221
    %v818 = vunpack.c.l.b16 %v222
    %v819 = vunpack.c.l.b16 %v223
    %v820 = vunpack.c.l.b16 %v224
    %v821 = vunpack.c.l.b16 %v225
    %v822 = vunpack.c.l.b16 %v226
    %v823 = vunpack.c.l.b16 %v227
    %v824 = vunpack.c.l.b16 %v228
    %v825 = vunpack.c.l.b16 %v229
    %v826 = vunpack.c.l.b16 %v230
    %v827 = vunpack.c.l.b16 %v231
    %v828 = vunpack.c.l.b16 %v232
    %v829 = vunpack.c.l.b16 %v233
    %v830 = vunpack.c.l.b16 %v234
    %v831 = vunpack.c.l.b16 %v235
    %v832 = vunpack.c.l.b16 %v236
    %v833 = vunpack.c.l.b16 %v237
    %v834 = vunpack.c.l.b16 %v238
    %v835 = vunpack.c.l.b16 %v239
    %v836 = vunpack.c.l.b16 %v240
    %v837 = vunpack.c.l.b16 %v241
    %v838 = vunpack.c.l.b16 %v242
    %v839 = vunpack.c.l.b16 %v243
    %v840 = vunpack.c.l.b16 %v244
    %v841 = vunpack.c.l.b16 %v245
    %v842 = vunpack.c.l.b16 %v246
    %v843 = vunpack.c.l.b16 %v247
    %v844 = vunpack.c.l.b16 %v248
    %v845 = vunpack.c.l.b16 %v249
    %v846 = vunpack.c.l.b16 %v250
    %v847 = vunpack.c.l.b16 %v251
    %v848 = vunpack.c.l.b16 %v252
    %v849 = vunpack.c.l.b16 %v253
    %v850 = vunpack.c.l.b16 %v254
    %v851 = vunpack.c.l.b16 %v255
    %v852 = vunpack.c.l.b16 %v256
    %v853 = vunpack.c.l.b16 %v257
    %v854 = vunpack.c.l.b16 %v258
    %v855 = vunpack.c.l.b16 %v259
    %v856 = vunpack.c.l.b16 %v260
    %v857 = vunpack.c.l.b16 %v261
    %v858 = vunpack.c.l.b16 %v262
    %v859 = vunpack.c.l.b16 %v263
    %v860 = vunpack.c.l.b16 %v264
    %v861 = vunpack.c.l.b16 %v265
    %v862 = vunpack.c.l.b16 %v266
    %v863 = vunpack.c.l.b16 %v267
    %v864 = vunpack.c.l.b16 %v268
    %v865 = vunpack.c.l.b16 %v269
    %v866 = vunpack.c.l.b16 %v270
    %v867 = vunpack.c.l.b16 %v271
    %v868 = vunpack.c.l.b16 %v272
    %v869 = vunpack.c.l.b16 %v273
    %v870 = vunpack.c.l.b16 %v274
    %v871 = vunpack.c.l.b16 %v275
    %v872 = vunpack.c.l.b16 %v276
    %v873 = vunpack.c.l.b16 %v277
    %v874 = vunpack.c.l.b16 %v278
    %v875 = vunpack.c.l.b16 %v279
    %v876 = vunpack.c.l.b16 %v280
    %v877 = vunpack.c.l.b16 %v281
    %v878 = vunpack.c.l.b16 %v282
    %v879 = vunpack.c.l.b16 %v283
    %v880 = vunpack.c.l.b16 %v284
    %v881 = vunpack.c.l.b16 %v285
    %v882 = vunpack.c.l.b16 %v286
    %v883 = vunpack.c.l.b16 %v287
    %v884 = vunpack.c.l.b16 %v288
    %v885 = vunpack.c.l.b16 %v289
    %v886 = vunpack.c.l.b16 %v290
    %v887 = vunpack.c.l.b16 %v291
    %v888 = vunpack.c.l.b16 %v292
    %v889 = vunpack.c.l.b16 %v293
    %v890 = vunpack.c.l.b16 %v294
    %v891 = vunpack.c.l.b16 %v295
    %v892 = vunpack.c.l.b16 %v296
    %v893 = vunpack.c.l.b16 %v297
    %v894 = vunpack.c.l.b16 %v298
    %v895 = vunpack.c.l.b16 %v299
    %v896 = vunpack.c.l.b16 %v300
    %v897 = vunpack.c.l.b16 %v301
    %v898 = vunpack.c.l.b16 %v302
    %v899 = vunpack.c.l.b16 %v303
    %v900 = vunpack.c.l.b16 %v304
    %v901 = vunpack.c.l.b16 %v305
    %v902 = vunpack.c.l.b16 %v306
    %v903 = vunpack.c.l.b16 %v307
    %v904 = vunpack.c.l.b16 %v308
    %v905 = vunpack.c.l.b16 %v309
    %v906 = vunpack.c.l.b16 %v310
    %v907 = vunpack.c.l.b16 %v311
    %v908 = vunpack.c.l.b16 %v312
    %v909 = vunpack.c.l.b16 %v313
    %v910 = vunpack.c.l.b16 %v314
    %v911 = vunpack.c.l.b16 %v315
    %v912 = vpack.c.b16 %v657, %v656
    %v913 = vpack.c.b16 %v659, %v658
    %v914 = vpack.c.b16 %v661, %v660
    %v915 = vpack.c.b16 %v663, %v662
    %v916 = vpack.c.b16 %v665, %v664
    %v917 = vpack.c.b16 %v667, %v666
    %v918 = vpack.c.b16 %v669, %v668
    %v919 = vpack.c.b16 %v671, %v670
    %v920 = vpack.c.b16 %v673, %v672
    %v921 = vpack.c.b16 %v675, %v674
    %v922 = vpack.c.b16 %v677, %v676
    %v923 = vpack.c.b16 %v679, %v678
    %v924 = vpack.c.b16 %v681, %v680
    %v925 = vpack.c.b16 %v683, %v682
    %v926 = vpack.c.b16 %v685, %v684
    %v927 = vpack.c.b16 %v687, %v686
    %v928 = vpack.c.b16 %v689, %v688
    %v929 = vpack.c.b16 %v691, %v690
    %v930 = vpack.c.b16 %v693, %v692
    %v931 = vpack.c.b16 %v695, %v694
    %v932 = vpack.c.b16 %v697, %v696
    %v933 = vpack.c.b16 %v699, %v698
    %v934 = vpack.c.b16 %v701, %v700
    %v935 = vpack.c.b16 %v703, %v702
    %v936 = vpack.c.b16 %v705, %v704
    %v937 = vpack.c.b16 %v707, %v706
    %v938 = vpack.c.b16 %v709, %v708
    %v939 = vpack.c.b16 %v711, %v710
    %v940 = vpack.c.b16 %v713, %v712
    %v941 = vpack.c.b16 %v715, %v714
    %v942 = vpack.c.b16 %v717, %v716
    %v943 = vpack.c.b16 %v719, %v718
    %v944 = vpack.c.b16 %v721, %v720
    %v945 = vpack.c.b16 %v723, %v722
    %v946 = vpack.c.b16 %v725, %v724
    %v947 = vpack.c.b16 %v727, %v726
    %v948 = vpack.c.b16 %v729, %v728
    %v949 = vpack.c.b16 %v731, %v730
    %v950 = vpack.c.b16 %v733, %v732
    %v951 = vpack.c.b16 %v735, %v734
    %v952 = vpack.c.b16 %v737, %v736
    %v953 = vpack.c.b16 %v739, %v738
    %v954 = vpack.c.b16 %v741, %v740
    %v955 = vpack.c.b16 %v743, %v742
    %v956 = vpack.c.b16 %v745, %v744
    %v957 = vpack.c.b16 %v747, %v746
    %v958 = vpack.c.b16 %v749, %v748
    %v959 = vpack.c.b16 %v751, %v750
    %v960 = vpack.c.b16 %v753, %v752
    %v961 = vpack.c.b16 %v755, %v754
    %v962 = vpack.c.b16 %v757, %v756
    %v963 = vpack.c.b16 %v759, %v758
    %v964 = vpack.c.b16 %v761, %v760
    %v965 = vpack.c.b16 %v763, %v762
    %v966 = vpack.c.b16 %v765, %v764
    %v967 = vpack.c.b16 %v767, %v766
    %v968 = vpack.c.b16 %v769, %v768
    %v969 = vpack.c.b16 %v771, %v770
    %v970 = vpack.c.b16 %v773, %v772
    %v971 = vpack.c.b16 %v775, %v774
    %v972 = vpack.c.b16 %v777, %v776
    %v973 = vpack.c.b16 %v779, %v778
    %v974 = vpack.c.b16 %v781, %v780
    %v975 = vpack.c.b16 %v783, %v782
    %v976 = vpack.c.b16 %v785, %v784
    %v977 = vpack.c.b16 %v787, %v786
    %v978 = vpack.c.b16 %v789, %v788
    %v979 = vpack.c.b16 %v791, %v790
    %v980 = vpack.c.b16 %v793, %v792
    %v981 = vpack.c.b16 %v795, %v794
    %v982 = vpack.c.b16 %v797, %v796
    %v983 = vpack.c.b16 %v799, %v798
    %v984 = vpack.c.b16 %v801, %v800
    %v985 = vpack.c.b16 %v803, %v802
    %v986 = vpack.c.b16 %v805, %v804
    %v987 = vpack.c.b16 %v807, %v806
    %v988 = vpack.c.b16 %v809, %v808
    %v989 = vpack.c.b16 %v811, %v810
    %v990 = vpack.c.b16 %v813, %v812
    %v991 = vpack.c.b16 %v815, %v814
    %v992 = vpack.c.b16 %v817, %v816
    %v993 = vpack.c.b16 %v819, %v818
    %v994 = vpack.c.b16 %v821, %v820
    %v995 = vpack.c.b16 %v823, %v822
    %v996 = vpack.c.b16 %v825, %v824
    %v997 = vpack.c.b16 %v827, %v826
    %v998 = vpack.c.b16 %v829, %v828
    %v999 = vpack.c.b16 %v831, %v830
    %v1000 = vpack.c.b16 %v833, %v832
    %v1001 = vpack.c.b16 %v835, %v834
    %v1002 = vpack.c.b16 %v837, %v836
    %v1003 = vpack.c.b16 %v839, %v838
    %v1004 = vpack.c.b16 %v841, %v840
    %v1005 = vpack.c.b16 %v843, %v842
    %v1006 = vpack.c.b16 %v845, %v844
    %v1007 = vpack.c.b16 %v847, %v846
    %v1008 = vpack.c.b16 %v849, %v848
    %v1009 = vpack.c.b16 %v851, %v850
    %v1010 = vpack.c.b16 %v853, %v852
    %v1011 = vpack.c.b16 %v855, %v854
    %v1012 = vpack.c.b16 %v857, %v856
    %v1013 = vpack.c.b16 %v859, %v858
    %v1014 = vpack.c.b16 %v861, %v860
    %v1015 = vpack.c.b16 %v863, %v862
    %v1016 = vpack.c.b16 %v865, %v864
    %v1017 = vpack.c.b16 %v867, %v866
    %v1018 = vpack.c.b16 %v869, %v868
    %v1019 = vpack.c.b16 %v871, %v870
    %v1020 = vpack.c.b16 %v873, %v872
    %v1021 = vpack.c.b16 %v875, %v874
    %v1022 = vpack.c.b16 %v877, %v876
    %v1023 = vpack.c.b16 %v879, %v878
    %v1024 = vpack.c.b16 %v881, %v880
    %v1025 = vpack.c.b16 %v883, %v882
    %v1026 = vpack.c.b16 %v885, %v884
    %v1027 = vpack.c.b16 %v887, %v886
    %v1028 = vpack.c.b16 %v889, %v888
    %v1029 = vpack.c.b16 %v891, %v890
    %v1030 = vpack.c.b16 %v893, %v892
    %v1031 = vpack.c.b16 %v895, %v894
    %v1032 = vpack.c.b16 %v897, %v896
    %v1033 = vpack.c.b16 %v899, %v898
    %v1034 = vpack.c.b16 %v901, %v900
    %v1035 = vpack.c.b16 %v903, %v902
    %v1036 = vpack.c.b16 %v905, %v904
    %v1037 = vpack.c.b16 %v907, %v906
    %v1038 = vpack.c.b16 %v909, %v908
    %v1039 = vpack.c.b16 %v911, %v910
    %1168 = vmatpush.bf16.msra.mxu0 %v919
    %1169 = vmatpush.bf16.msra.mxu0 %v918
    %1170 = vmatpush.bf16.msra.mxu0 %v917
    %1171 = vmatpush.bf16.msra.mxu0 %v916
    %1172 = vmatpush.bf16.msra.mxu0 %v915
    %1173 = vmatpush.bf16.msra.mxu0 %v914
    %1174 = vmatpush.bf16.msra.mxu0 %v913
    %1175 = vmatpush.bf16.msra.mxu0 %v912
    %1176 = vmatmul.bf16.gmra.mxu0 %v368
    %v1177 = vpop.f32.mrf.mxu0
    %v1178 = vadd.f32 %v318, %v1177
    %v1179 = vpop.f32.mrf.mxu0
    %v1180 = vadd.f32 %v318, %v1179
    %1181 = vdwg.mxu0
    %1182 = vmatpush.bf16.msra.mxu0 %v927
    %1183 = vmatpush.bf16.msra.mxu0 %v926
    %1184 = vmatpush.bf16.msra.mxu0 %v925
    %1185 = vmatpush.bf16.msra.mxu0 %v924
    %1186 = vmatpush.bf16.msra.mxu0 %v923
    %1187 = vmatpush.bf16.msra.mxu0 %v922
    %1188 = vmatpush.bf16.msra.mxu0 %v921
    %1189 = vmatpush.bf16.msra.mxu0 %v920
    %1190 = vmatmul.bf16.gmra.mxu0 %v369
    %v1191 = vpop.f32.mrf.mxu0
    %v1192 = vadd.f32 %v1178, %v1191
    %v1193 = vpop.f32.mrf.mxu0
    %v1194 = vadd.f32 %v1180, %v1193
    %1195 = vdwg.mxu0
    %1196 = vmatpush.bf16.msra.mxu0 %v935
    %1197 = vmatpush.bf16.msra.mxu0 %v934
    %1198 = vmatpush.bf16.msra.mxu0 %v933
    %1199 = vmatpush.bf16.msra.mxu0 %v932
    %1200 = vmatpush.bf16.msra.mxu0 %v931
    %1201 = vmatpush.bf16.msra.mxu0 %v930
    %1202 = vmatpush.bf16.msra.mxu0 %v929
    %1203 = vmatpush.bf16.msra.mxu0 %v928
    %1204 = vmatmul.bf16.gmra.mxu0 %v370
    %v1205 = vpop.f32.mrf.mxu0
    %v1206 = vadd.f32 %v1192, %v1205
    %v1207 = vpop.f32.mrf.mxu0
    %v1208 = vadd.f32 %v1194, %v1207
    %1209 = vdwg.mxu0
    %1210 = vmatpush.bf16.msra.mxu0 %v943
    %1211 = vmatpush.bf16.msra.mxu0 %v942
    %1212 = vmatpush.bf16.msra.mxu0 %v941
    %1213 = vmatpush.bf16.msra.mxu0 %v940
    %1214 = vmatpush.bf16.msra.mxu0 %v939
    %1215 = vmatpush.bf16.msra.mxu0 %v938
    %1216 = vmatpush.bf16.msra.mxu0 %v937
    %1217 = vmatpush.bf16.msra.mxu0 %v936
    %1218 = vmatmul.bf16.gmra.mxu0 %v371
    %v1219 = vpop.f32.mrf.mxu0
    %v1220 = vadd.f32 %v1206, %v1219
    %v1221 = vpop.f32.mrf.mxu0
    %v1222 = vadd.f32 %v1208, %v1221
    %1223 = vdwg.mxu0
    %1224 = vmatpush.bf16.msra.mxu0 %v951
    %1225 = vmatpush.bf16.msra.mxu0 %v950
    %1226 = vmatpush.bf16.msra.mxu0 %v949
    %1227 = vmatpush.bf16.msra.mxu0 %v948
    %1228 = vmatpush.bf16.msra.mxu0 %v947
    %1229 = vmatpush.bf16.msra.mxu0 %v946
    %1230 = vmatpush.bf16.msra.mxu0 %v945
    %1231 = vmatpush.bf16.msra.mxu0 %v944
    %1232 = vmatmul.bf16.gmra.mxu0 %v372
    %v1233 = vpop.f32.mrf.mxu0
    %v1234 = vadd.f32 %v1220, %v1233
    %v1235 = vpop.f32.mrf.mxu0
    %v1236 = vadd.f32 %v1222, %v1235
    %1237 = vdwg.mxu0
    %1238 = vmatpush.bf16.msra.mxu0 %v959
    %1239 = vmatpush.bf16.msra.mxu0 %v958
    %1240 = vmatpush.bf16.msra.mxu0 %v957
    %1241 = vmatpush.bf16.msra.mxu0 %v956
    %1242 = vmatpush.bf16.msra.mxu0 %v955
    %1243 = vmatpush.bf16.msra.mxu0 %v954
    %1244 = vmatpush.bf16.msra.mxu0 %v953
    %1245 = vmatpush.bf16.msra.mxu0 %v952
    %1246 = vmatmul.bf16.gmra.mxu0 %v373
    %v1247 = vpop.f32.mrf.mxu0
    %v1248 = vadd.f32 %v1234, %v1247
    %v1249 = vpop.f32.mrf.mxu0
    %v1250 = vadd.f32 %v1236, %v1249
    %1251 = vdwg.mxu0
    %1252 = vmatpush.bf16.msra.mxu0 %v967
    %1253 = vmatpush.bf16.msra.mxu0 %v966
    %1254 = vmatpush.bf16.msra.mxu0 %v965
    %1255 = vmatpush.bf16.msra.mxu0 %v964
    %1256 = vmatpush.bf16.msra.mxu0 %v963
    %1257 = vmatpush.bf16.msra.mxu0 %v962
    %1258 = vmatpush.bf16.msra.mxu0 %v961
    %1259 = vmatpush.bf16.msra.mxu0 %v960
    %1260 = vmatmul.bf16.gmra.mxu0 %v374
    %v1261 = vpop.f32.mrf.mxu0
    %v1262 = vadd.f32 %v1248, %v1261
    %v1263 = vpop.f32.mrf.mxu0
    %v1264 = vadd.f32 %v1250, %v1263
    %1265 = vdwg.mxu0
    %1266 = vmatpush.bf16.msra.mxu0 %v975
    %1267 = vmatpush.bf16.msra.mxu0 %v974
    %1268 = vmatpush.bf16.msra.mxu0 %v973
    %1269 = vmatpush.bf16.msra.mxu0 %v972
    %1270 = vmatpush.bf16.msra.mxu0 %v971
    %1271 = vmatpush.bf16.msra.mxu0 %v970
    %1272 = vmatpush.bf16.msra.mxu0 %v969
    %1273 = vmatpush.bf16.msra.mxu0 %v968
    %1274 = vmatmul.bf16.gmra.mxu0 %v375
    %v1275 = vpop.f32.mrf.mxu0
    %v1276 = vadd.f32 %v1262, %v1275
    %v1277 = vpop.f32.mrf.mxu0
    %v1278 = vadd.f32 %v1264, %v1277
    %1279 = vdwg.mxu0
    %1280 = vmatpush.bf16.msra.mxu0 %v983
    %1281 = vmatpush.bf16.msra.mxu0 %v982
    %1282 = vmatpush.bf16.msra.mxu0 %v981
    %1283 = vmatpush.bf16.msra.mxu0 %v980
    %1284 = vmatpush.bf16.msra.mxu0 %v979
    %1285 = vmatpush.bf16.msra.mxu0 %v978
    %1286 = vmatpush.bf16.msra.mxu0 %v977
    %1287 = vmatpush.bf16.msra.mxu0 %v976
    %1288 = vmatmul.bf16.gmra.mxu0 %v376
    %v1289 = vpop.f32.mrf.mxu0
    %v1290 = vadd.f32 %v1276, %v1289
    %v1291 = vpop.f32.mrf.mxu0
    %v1292 = vadd.f32 %v1278, %v1291
    %1293 = vdwg.mxu0
    %1294 = vmatpush.bf16.msra.mxu0 %v991
    %1295 = vmatpush.bf16.msra.mxu0 %v990
    %1296 = vmatpush.bf16.msra.mxu0 %v989
    %1297 = vmatpush.bf16.msra.mxu0 %v988
    %1298 = vmatpush.bf16.msra.mxu0 %v987
    %1299 = vmatpush.bf16.msra.mxu0 %v986
    %1300 = vmatpush.bf16.msra.mxu0 %v985
    %1301 = vmatpush.bf16.msra.mxu0 %v984
    %1302 = vmatmul.bf16.gmra.mxu0 %v377
    %v1303 = vpop.f32.mrf.mxu0
    %v1304 = vadd.f32 %v1290, %v1303
    %v1305 = vpop.f32.mrf.mxu0
    %v1306 = vadd.f32 %v1292, %v1305
    %1307 = vdwg.mxu0
    %1308 = vmatpush.bf16.msra.mxu0 %v999
    %1309 = vmatpush.bf16.msra.mxu0 %v998
    %1310 = vmatpush.bf16.msra.mxu0 %v997
    %1311 = vmatpush.bf16.msra.mxu0 %v996
    %1312 = vmatpush.bf16.msra.mxu0 %v995
    %1313 = vmatpush.bf16.msra.mxu0 %v994
    %1314 = vmatpush.bf16.msra.mxu0 %v993
    %1315 = vmatpush.bf16.msra.mxu0 %v992
    %1316 = vmatmul.bf16.gmra.mxu0 %v378
    %v1317 = vpop.f32.mrf.mxu0
    %v1318 = vadd.f32 %v1304, %v1317
    %v1319 = vpop.f32.mrf.mxu0
    %v1320 = vadd.f32 %v1306, %v1319
    %1321 = vdwg.mxu0
    %1322 = vmatpush.bf16.msra.mxu0 %v1007
    %1323 = vmatpush.bf16.msra.mxu0 %v1006
    %1324 = vmatpush.bf16.msra.mxu0 %v1005
    %1325 = vmatpush.bf16.msra.mxu0 %v1004
    %1326 = vmatpush.bf16.msra.mxu0 %v1003
    %1327 = vmatpush.bf16.msra.mxu0 %v1002
    %1328 = vmatpush.bf16.msra.mxu0 %v1001
    %1329 = vmatpush.bf16.msra.mxu0 %v1000
    %1330 = vmatmul.bf16.gmra.mxu0 %v379
    %v1331 = vpop.f32.mrf.mxu0
    %v1332 = vadd.f32 %v1318, %v1331
    %v1333 = vpop.f32.mrf.mxu0
    %v1334 = vadd.f32 %v1320, %v1333
    %1335 = vdwg.mxu0
    %1336 = vmatpush.bf16.msra.mxu0 %v1015
    %1337 = vmatpush.bf16.msra.mxu0 %v1014
    %1338 = vmatpush.bf16.msra.mxu0 %v1013
    %1339 = vmatpush.bf16.msra.mxu0 %v1012
    %1340 = vmatpush.bf16.msra.mxu0 %v1011
    %1341 = vmatpush.bf16.msra.mxu0 %v1010
    %1342 = vmatpush.bf16.msra.mxu0 %v1009
    %1343 = vmatpush.bf16.msra.mxu0 %v1008
    %1344 = vmatmul.bf16.gmra.mxu0 %v380
    %v1345 = vpop.f32.mrf.mxu0
    %v1346 = vadd.f32 %v1332, %v1345
    %v1347 = vpop.f32.mrf.mxu0
    %v1348 = vadd.f32 %v1334, %v1347
    %1349 = vdwg.mxu0
    %1350 = vmatpush.bf16.msra.mxu0 %v1023
    %1351 = vmatpush.bf16.msra.mxu0 %v1022
    %1352 = vmatpush.bf16.msra.mxu0 %v1021
    %1353 = vmatpush.bf16.msra.mxu0 %v1020
    %1354 = vmatpush.bf16.msra.mxu0 %v1019
    %1355 = vmatpush.bf16.msra.mxu0 %v1018
    %1356 = vmatpush.bf16.msra.mxu0 %v1017
    %1357 = vmatpush.bf16.msra.mxu0 %v1016
    %1358 = vmatmul.bf16.gmra.mxu0 %v381
    %v1359 = vpop.f32.mrf.mxu0
    %v1360 = vadd.f32 %v1346, %v1359
    %v1361 = vpop.f32.mrf.mxu0
    %v1362 = vadd.f32 %v1348, %v1361
    %1363 = vdwg.mxu0
    %1364 = vmatpush.bf16.msra.mxu0 %v1031
    %1365 = vmatpush.bf16.msra.mxu0 %v1030
    %1366 = vmatpush.bf16.msra.mxu0 %v1029
    %1367 = vmatpush.bf16.msra.mxu0 %v1028
    %1368 = vmatpush.bf16.msra.mxu0 %v1027
    %1369 = vmatpush.bf16.msra.mxu0 %v1026
    %1370 = vmatpush.bf16.msra.mxu0 %v1025
    %1371 = vmatpush.bf16.msra.mxu0 %v1024
    %1372 = vmatmul.bf16.gmra.mxu0 %v382
    %v1373 = vpop.f32.mrf.mxu0
    %v1374 = vadd.f32 %v1360, %v1373
    %v1375 = vpop.f32.mrf.mxu0
    %v1376 = vadd.f32 %v1362, %v1375
    %1377 = vdwg.mxu0
    %1378 = vmatpush.bf16.msra.mxu0 %v1039
    %1379 = vmatpush.bf16.msra.mxu0 %v1038
    %1380 = vmatpush.bf16.msra.mxu0 %v1037
    %1381 = vmatpush.bf16.msra.mxu0 %v1036
    %1382 = vmatpush.bf16.msra.mxu0 %v1035
    %1383 = vmatpush.bf16.msra.mxu0 %v1034
    %1384 = vmatpush.bf16.msra.mxu0 %v1033
    %1385 = vmatpush.bf16.msra.mxu0 %v1032
    %1386 = vmatmul.bf16.gmra.mxu0 %v383
    %v1387 = vpop.f32.mrf.mxu0
    %v1388 = vadd.f32 %v1374, %v1387
    %v1389 = vpop.f32.mrf.mxu0
    %v1390 = vadd.f32 %v1376, %v1389
    %1391 = vdwg.mxu0
    %v1392 = vsub.f32 0.0, %v1388
    %v1393 = vsub.f32 0.0, %v1390
    %v1394 = vmul.f32 %v1392, 1.442695
    %v1395 = vpow.pop %v1394
    %v1396 = vmul.f32 %v1393, 1.442695
    %v1397 = vpow.pop %v1396
    %v1398 = vadd.f32 %v1395, 1.0
    %v1399 = vadd.f32 %v1397, 1.0
    %v1400 = vrcp.pop %v1398
    %v1401 = vrcp.pop %v1399
    %1402 = vst [vmem:[%s3] sm:$0xff] %v1400
    %1403 = vst [vmem:[%s3 + $0x8] sm:$0xff] %v1401
    // Predicated region
    $region22: #{forward.7} parent=1 // pred_check
      _
    $region23: #{forward.7} parent=1 // pred_check_branch
      %1405 = sbr.rel (0) target = $region25
    $region24: #{forward.7} parent=1 // pred_region
      _
    $region25: #{forward.7} parent=1 // pred_fallthru
      _
    // Predicated region
    $region26: #{forward.7} parent=1 // pred_check
      _
    $region27: #{forward.7} parent=1 // pred_check_branch
      %1407 = sbr.rel (0) target = $region29
    $region28: #{forward.7} parent=1 // pred_region
      _
    $region29: #{forward.7} parent=1 // pred_fallthru
      _
    %1408 = vsyncpa [#allocation3], 1
    %1409 = vsyncpa [#allocation5], 1

// kernel: forward.5
$region0: #{forward.5}
  #allocation0 [shape = 'u32[]', space=smem, size = 0x4, offset = 0x4, fixed_abs, tag = 'smem constant byte address 0x4 - core index']
  #allocation1 [shape = 'u32[72,128]{1,0:T(1,128)}', space=vmem, size = 0x9000, scoped, tag = 'internal scratch']
  %s0 = inlined_call_operand.vmem [shape: bf16[16,4096], index: 0, kind: input, shape index: {}]
  %s1 = inlined_call_operand.hbm [shape: bf16[4096,512], index: 1, kind: input, shape index: {}]
  %s2 = inlined_call_operand.hbm [shape: f32[1,128], index: 2, kind: input, shape index: {}]
  %s3 = inlined_call_operand.vmem [shape: bf16[16,128], index: 3, kind: output, shape index: {}]
  %s4 = sld [smem:[#allocation0]]
  $region30: #{forward.5} parent=0
    _
  %s6 = ssub.s32 1, %s4
  %s7 = scalar_select 0, %s6, %s4
  $region1: #{forward.5} parent=0
    #allocation2 [shape = 'u8[4194304]{0}', space=vmem, size = 0x400000, scoped, tag = 'input window, operand 1, single buffered']
    #allocation3 [shape = 's32[1]{0}', space=sflag, size = 0x4, scoped, tag = 'scoped memory for forward.5']
    #allocation4 [shape = 'u8[512]{0}', space=vmem, size = 0x400, scoped, tag = 'input window, operand 2, single buffered']
    #allocation5 [shape = 's32[1]{0}', space=sflag, size = 0x4, scoped, tag = 'scoped memory for forward.5']
    %8 = vsyncpa [#allocation3], 0
    %9 = vsyncpa [#allocation5], 0
    // Predicated region
    $region2: #{forward.5} parent=1 // pred_check
      _
    $region3: #{forward.5} parent=1 // pred_check_branch
      %11 = sbr.rel (0) target = $region5
    $region4: #{forward.5} parent=1 // pred_region
      _
    $region5: #{forward.5} parent=1 // pred_fallthru
      _
    // Predicated region
    $region6: #{forward.5} parent=1 // pred_check
      _
    $region7: #{forward.5} parent=1 // pred_check_branch
      %13 = sbr.rel (0) target = $region9
    $region8: #{forward.5} parent=1 // pred_region
      %15 = vsyncadd [#allocation3], 0
      %s16 = sshll.u32 %s1, 4
      %s17 = int_to_ptr.hbm [resolvable:$true] %s16
      %s18 = sshll.u32 [#allocation2], 4
      %s19 = int_to_ptr.vmem [resolvable:$true] %s18
      %24 = dma.hbm_to_vmem [thread:$0]  %s17, 131072, %s19, [#allocation3], 256, 256, 16
    $region9: #{forward.5} parent=1 // pred_fallthru
      _
    // Predicated region
    $region10: #{forward.5} parent=1 // pred_check
      _
    $region11: #{forward.5} parent=1 // pred_check_branch
      %26 = sbr.rel (0) target = $region13
    $region12: #{forward.5} parent=1 // pred_region
      %28 = vsyncadd [#allocation5], 0
      %s30 = sshll.u32 %s2, 4
      %s31 = int_to_ptr.hbm [resolvable:$true] %s30
      %s32 = sshll.u32 [#allocation4], 4
      %s33 = int_to_ptr.vmem [resolvable:$true] %s32
      %35 = dma.hbm_to_vmem [thread:$0]  %s31, 16, %s33, [#allocation5]
    $region13: #{forward.5} parent=1 // pred_fallthru
      _
    // Predicated region
    $region14: #{forward.5} parent=1 // pred_check
      _
    $region15: #{forward.5} parent=1 // pred_check_branch
      %37 = sbr.rel (0) target = $region17
    $region16: #{forward.5} parent=1 // pred_region
      %39 = dma.done [#allocation3], 131072
    $region17: #{forward.5} parent=1 // pred_fallthru
      _
    // Predicated region
    $region18: #{forward.5} parent=1 // pred_check
      _
    $region19: #{forward.5} parent=1 // pred_check_branch
      %41 = sbr.rel (0) target = $region21
    $region20: #{forward.5} parent=1 // pred_region
      %43 = dma.done [#allocation5], 16
    $region21: #{forward.5} parent=1 // pred_fallthru
      _
    %v44 = vld [vmem:[%s0] sm:$0xff]
    %v45 = vld [vmem:[%s0 + $0x8] sm:$0xff]
    %v46 = vld [vmem:[%s0 + $0x10] sm:$0xff]
    %v47 = vld [vmem:[%s0 + $0x18] sm:$0xff]
    %v48 = vld [vmem:[%s0 + $0x20] sm:$0xff]
    %v49 = vld [vmem:[%s0 + $0x28] sm:$0xff]
    %v50 = vld [vmem:[%s0 + $0x30] sm:$0xff]
    %v51 = vld [vmem:[%s0 + $0x38] sm:$0xff]
    %v52 = vld [vmem:[%s0 + $0x40] sm:$0xff]
    %v53 = vld [vmem:[%s0 + $0x48] sm:$0xff]
    %v54 = vld [vmem:[%s0 + $0x50] sm:$0xff]
    %v55 = vld [vmem:[%s0 + $0x58] sm:$0xff]
    %v56 = vld [vmem:[%s0 + $0x60] sm:$0xff]
    %v57 = vld [vmem:[%s0 + $0x68] sm:$0xff]
    %v58 = vld [vmem:[%s0 + $0x70] sm:$0xff]
    %v59 = vld [vmem:[%s0 + $0x78] sm:$0xff]
    %v60 = vld [vmem:[%s0 + $0x80] sm:$0xff]
    %v61 = vld [vmem:[%s0 + $0x88] sm:$0xff]
    %v62 = vld [vmem:[%s0 + $0x90] sm:$0xff]
    %v63 = vld [vmem:[%s0 + $0x98] sm:$0xff]
    %v64 = vld [vmem:[%s0 + $0xa0] sm:$0xff]
    %v65 = vld [vmem:[%s0 + $0xa8] sm:$0xff]
    %v66 = vld [vmem:[%s0 + $0xb0] sm:$0xff]
    %v67 = vld [vmem:[%s0 + $0xb8] sm:$0xff]
    %v68 = vld [vmem:[%s0 + $0xc0] sm:$0xff]
    %v69 = vld [vmem:[%s0 + $0xc8] sm:$0xff]
    %v70 = vld [vmem:[%s0 + $0xd0] sm:$0xff]
    %v71 = vld [vmem:[%s0 + $0xd8] sm:$0xff]
    %v72 = vld [vmem:[%s0 + $0xe0] sm:$0xff]
    %v73 = vld [vmem:[%s0 + $0xe8] sm:$0xff]
    %v74 = vld [vmem:[%s0 + $0xf0] sm:$0xff]
    %v75 = vld [vmem:[%s0 + $0xf8] sm:$0xff]
    %v76 = vld [vmem:[#allocation2] sm:$0xff]
    %v77 = vld [vmem:[#allocation2 + $0x8] sm:$0xff]
    %v78 = vld [vmem:[#allocation2 + $0x10] sm:$0xff]
    %v79 = vld [vmem:[#allocation2 + $0x18] sm:$0xff]
    %v80 = vld [vmem:[#allocation2 + $0x20] sm:$0xff]
    %v81 = vld [vmem:[#allocation2 + $0x28] sm:$0xff]
    %v82 = vld [vmem:[#allocation2 + $0x30] sm:$0xff]
    %v83 = vld [vmem:[#allocation2 + $0x38] sm:$0xff]
    %v84 = vld [vmem:[#allocation2 + $0x40] sm:$0xff]
    %v85 = vld [vmem:[#allocation2 + $0x48] sm:$0xff]
    %v86 = vld [vmem:[#allocation2 + $0x50] sm:$0xff]
    %v87 = vld [vmem:[#allocation2 + $0x58] sm:$0xff]
    %v88 = vld [vmem:[#allocation2 + $0x60] sm:$0xff]
    %v89 = vld [vmem:[#allocation2 + $0x68] sm:$0xff]
    %v90 = vld [vmem:[#allocation2 + $0x70] sm:$0xff]
    %v91 = vld [vmem:[#allocation2 + $0x78] sm:$0xff]
    %v92 = vld [vmem:[#allocation2 + $0x80] sm:$0xff]
    %v93 = vld [vmem:[#allocation2 + $0x88] sm:$0xff]
    %v94 = vld [vmem:[#allocation2 + $0x90] sm:$0xff]
    %v95 = vld [vmem:[#allocation2 + $0x98] sm:$0xff]
    %v96 = vld [vmem:[#allocation2 + $0xa0] sm:$0xff]
    %v97 = vld [vmem:[#allocation2 + $0xa8] sm:$0xff]
    %v98 = vld [vmem:[#allocation2 + $0xb0] sm:$0xff]
    %v99 = vld [vmem:[#allocation2 + $0xb8] sm:$0xff]
    %v100 = vld [vmem:[#allocation2 + $0xc0] sm:$0xff]
    %v101 = vld [vmem:[#allocation2 + $0xc8] sm:$0xff]
    %v102 = vld [vmem:[#allocation2 + $0xd0] sm:$0xff]
    %v103 = vld [vmem:[#allocation2 + $0xd8] sm:$0xff]
    %v104 = vld [vmem:[#allocation2 + $0xe0] sm:$0xff]
    %v105 = vld [vmem:[#allocation2 + $0xe8] sm:$0xff]
    %v106 = vld [vmem:[#allocation2 + $0xf0] sm:$0xff]
    %v107 = vld [vmem:[#allocation2 + $0xf8] sm:$0xff]
    %v108 = vld [vmem:[#allocation2 + $0x100] sm:$0xff]
    %v109 = vld [vmem:[#allocation2 + $0x108] sm:$0xff]
    %v110 = vld [vmem:[#allocation2 + $0x110] sm:$0xff]
    %v111 = vld [vmem:[#allocation2 + $0x118] sm:$0xff]
    %v112 = vld [vmem:[#allocation2 + $0x120] sm:$0xff]
    %v113 = vld [vmem:[#allocation2 + $0x128] sm:$0xff]
    %v114 = vld [vmem:[#allocation2 + $0x130] sm:$0xff]
    %v115 = vld [vmem:[#allocation2 + $0x138] sm:$0xff]
    %v116 = vld [vmem:[#allocation2 + $0x140] sm:$0xff]
    %v117 = vld [vmem:[#allocation2 + $0x148] sm:$0xff]
    %v118 = vld [vmem:[#allocation2 + $0x150] sm:$0xff]
    %v119 = vld [vmem:[#allocation2 + $0x158] sm:$0xff]
    %v120 = vld [vmem:[#allocation2 + $0x160] sm:$0xff]
    %v121 = vld [vmem:[#allocation2 + $0x168] sm:$0xff]
    %v122 = vld [vmem:[#allocation2 + $0x170] sm:$0xff]
    %v123 = vld [vmem:[#allocation2 + $0x178] sm:$0xff]
    %v124 = vld [vmem:[#allocation2 + $0x180] sm:$0xff]
    %v125 = vld [vmem:[#allocation2 + $0x188] sm:$0xff]
    %v126 = vld [vmem:[#allocation2 + $0x190] sm:$0xff]
    %v127 = vld [vmem:[#allocation2 + $0x198] sm:$0xff]
    %v128 = vld [vmem:[#allocation2 + $0x1a0] sm:$0xff]
    %v129 = vld [vmem:[#allocation2 + $0x1a8] sm:$0xff]
    %v130 = vld [vmem:[#allocation2 + $0x1b0] sm:$0xff]
    %v131 = vld [vmem:[#allocation2 + $0x1b8] sm:$0xff]
    %v132 = vld [vmem:[#allocation2 + $0x1c0] sm:$0xff]
    %v133 = vld [vmem:[#allocation2 + $0x1c8] sm:$0xff]
    %v134 = vld [vmem:[#allocation2 + $0x1d0] sm:$0xff]
    %v135 = vld [vmem:[#allocation2 + $0x1d8] sm:$0xff]
    %v136 = vld [vmem:[#allocation2 + $0x1e0] sm:$0xff]
    %v137 = vld [vmem:[#allocation2 + $0x1e8] sm:$0xff]
    %v138 = vld [vmem:[#allocation2 + $0x1f0] sm:$0xff]
    %v139 = vld [vmem:[#allocation2 + $0x1f8] sm:$0xff]
    %v140 = vld [vmem:[#allocation2 + $0x200] sm:$0xff]
    %v141 = vld [vmem:[#allocation2 + $0x208] sm:$0xff]
    %v142 = vld [vmem:[#allocation2 + $0x210] sm:$0xff]
    %v143 = vld [vmem:[#allocation2 + $0x218] sm:$0xff]
    %v144 = vld [vmem:[#allocation2 + $0x220] sm:$0xff]
    %v145 = vld [vmem:[#allocation2 + $0x228] sm:$0xff]
    %v146 = vld [vmem:[#allocation2 + $0x230] sm:$0xff]
    %v147 = vld [vmem:[#allocation2 + $0x238] sm:$0xff]
    %v148 = vld [vmem:[#allocation2 + $0x240] sm:$0xff]
    %v149 = vld [vmem:[#allocation2 + $0x248] sm:$0xff]
    %v150 = vld [vmem:[#allocation2 + $0x250] sm:$0xff]
    %v151 = vld [vmem:[#allocation2 + $0x258] sm:$0xff]
    %v152 = vld [vmem:[#allocation2 + $0x260] sm:$0xff]
    %v153 = vld [vmem:[#allocation2 + $0x268] sm:$0xff]
    %v154 = vld [vmem:[#allocation2 + $0x270] sm:$0xff]
    %v155 = vld [vmem:[#allocation2 + $0x278] sm:$0xff]
    %v156 = vld [vmem:[#allocation2 + $0x280] sm:$0xff]
    %v157 = vld [vmem:[#allocation2 + $0x288] sm:$0xff]
    %v158 = vld [vmem:[#allocation2 + $0x290] sm:$0xff]
    %v159 = vld [vmem:[#allocation2 + $0x298] sm:$0xff]
    %v160 = vld [vmem:[#allocation2 + $0x2a0] sm:$0xff]
    %v161 = vld [vmem:[#allocation2 + $0x2a8] sm:$0xff]
    %v162 = vld [vmem:[#allocation2 + $0x2b0] sm:$0xff]
    %v163 = vld [vmem:[#allocation2 + $0x2b8] sm:$0xff]
    %v164 = vld [vmem:[#allocation2 + $0x2c0] sm:$0xff]
    %v165 = vld [vmem:[#allocation2 + $0x2c8] sm:$0xff]
    %v166 = vld [vmem:[#allocation2 + $0x2d0] sm:$0xff]
    %v167 = vld [vmem:[#allocation2 + $0x2d8] sm:$0xff]
    %v168 = vld [vmem:[#allocation2 + $0x2e0] sm:$0xff]
    %v169 = vld [vmem:[#allocation2 + $0x2e8] sm:$0xff]
    %v170 = vld [vmem:[#allocation2 + $0x2f0] sm:$0xff]
    %v171 = vld [vmem:[#allocation2 + $0x2f8] sm:$0xff]
    %v172 = vld [vmem:[#allocation2 + $0x300] sm:$0xff]
    %v173 = vld [vmem:[#allocation2 + $0x308] sm:$0xff]
    %v174 = vld [vmem:[#allocation2 + $0x310] sm:$0xff]
    %v175 = vld [vmem:[#allocation2 + $0x318] sm:$0xff]
    %v176 = vld [vmem:[#allocation2 + $0x320] sm:$0xff]
    %v177 = vld [vmem:[#allocation2 + $0x328] sm:$0xff]
    %v178 = vld [vmem:[#allocation2 + $0x330] sm:$0xff]
    %v179 = vld [vmem:[#allocation2 + $0x338] sm:$0xff]
    %v180 = vld [vmem:[#allocation2 + $0x340] sm:$0xff]
    %v181 = vld [vmem:[#allocation2 + $0x348] sm:$0xff]
    %v182 = vld [vmem:[#allocation2 + $0x350] sm:$0xff]
    %v183 = vld [vmem:[#allocation2 + $0x358] sm:$0xff]
    %v184 = vld [vmem:[#allocation2 + $0x360] sm:$0xff]
    %v185 = vld [vmem:[#allocation2 + $0x368] sm:$0xff]
    %v186 = vld [vmem:[#allocation2 + $0x370] sm:$0xff]
    %v187 = vld [vmem:[#allocation2 + $0x378] sm:$0xff]
    %v188 = vld [vmem:[#allocation2 + $0x380] sm:$0xff]
    %v189 = vld [vmem:[#allocation2 + $0x388] sm:$0xff]
    %v190 = vld [vmem:[#allocation2 + $0x390] sm:$0xff]
    %v191 = vld [vmem:[#allocation2 + $0x398] sm:$0xff]
    %v192 = vld [vmem:[#allocation2 + $0x3a0] sm:$0xff]
    %v193 = vld [vmem:[#allocation2 + $0x3a8] sm:$0xff]
    %v194 = vld [vmem:[#allocation2 + $0x3b0] sm:$0xff]
    %v195 = vld [vmem:[#allocation2 + $0x3b8] sm:$0xff]
    %v196 = vld [vmem:[#allocation2 + $0x3c0] sm:$0xff]
    %v197 = vld [vmem:[#allocation2 + $0x3c8] sm:$0xff]
    %v198 = vld [vmem:[#allocation2 + $0x3d0] sm:$0xff]
    %v199 = vld [vmem:[#allocation2 + $0x3d8] sm:$0xff]
    %v200 = vld [vmem:[#allocation2 + $0x3e0] sm:$0xff]
    %v201 = vld [vmem:[#allocation2 + $0x3e8] sm:$0xff]
    %v202 = vld [vmem:[#allocation2 + $0x3f0] sm:$0xff]
    %v203 = vld [vmem:[#allocation2 + $0x3f8] sm:$0xff]
    %v204 = vld [vmem:[#allocation2 + $0x400] sm:$0xff]
    %v205 = vld [vmem:[#allocation2 + $0x408] sm:$0xff]
    %v206 = vld [vmem:[#allocation2 + $0x410] sm:$0xff]
    %v207 = vld [vmem:[#allocation2 + $0x418] sm:$0xff]
    %v208 = vld [vmem:[#allocation2 + $0x420] sm:$0xff]
    %v209 = vld [vmem:[#allocation2 + $0x428] sm:$0xff]
    %v210 = vld [vmem:[#allocation2 + $0x430] sm:$0xff]
    %v211 = vld [vmem:[#allocation2 + $0x438] sm:$0xff]
    %v212 = vld [vmem:[#allocation2 + $0x440] sm:$0xff]
    %v213 = vld [vmem:[#allocation2 + $0x448] sm:$0xff]
    %v214 = vld [vmem:[#allocation2 + $0x450] sm:$0xff]
    %v215 = vld [vmem:[#allocation2 + $0x458] sm:$0xff]
    %v216 = vld [vmem:[#allocation2 + $0x460] sm:$0xff]
    %v217 = vld [vmem:[#allocation2 + $0x468] sm:$0xff]
    %v218 = vld [vmem:[#allocation2 + $0x470] sm:$0xff]
    %v219 = vld [vmem:[#allocation2 + $0x478] sm:$0xff]
    %v220 = vld [vmem:[#allocation2 + $0x480] sm:$0xff]
    %v221 = vld [vmem:[#allocation2 + $0x488] sm:$0xff]
    %v222 = vld [vmem:[#allocation2 + $0x490] sm:$0xff]
    %v223 = vld [vmem:[#allocation2 + $0x498] sm:$0xff]
    %v224 = vld [vmem:[#allocation2 + $0x4a0] sm:$0xff]
    %v225 = vld [vmem:[#allocation2 + $0x4a8] sm:$0xff]
    %v226 = vld [vmem:[#allocation2 + $0x4b0] sm:$0xff]
    %v227 = vld [vmem:[#allocation2 + $0x4b8] sm:$0xff]
    %v228 = vld [vmem:[#allocation2 + $0x4c0] sm:$0xff]
    %v229 = vld [vmem:[#allocation2 + $0x4c8] sm:$0xff]
    %v230 = vld [vmem:[#allocation2 + $0x4d0] sm:$0xff]
    %v231 = vld [vmem:[#allocation2 + $0x4d8] sm:$0xff]
    %v232 = vld [vmem:[#allocation2 + $0x4e0] sm:$0xff]
    %v233 = vld [vmem:[#allocation2 + $0x4e8] sm:$0xff]
    %v234 = vld [vmem:[#allocation2 + $0x4f0] sm:$0xff]
    %v235 = vld [vmem:[#allocation2 + $0x4f8] sm:$0xff]
    %v236 = vld [vmem:[#allocation2 + $0x500] sm:$0xff]
    %v237 = vld [vmem:[#allocation2 + $0x508] sm:$0xff]
    %v238 = vld [vmem:[#allocation2 + $0x510] sm:$0xff]
    %v239 = vld [vmem:[#allocation2 + $0x518] sm:$0xff]
    %v240 = vld [vmem:[#allocation2 + $0x520] sm:$0xff]
    %v241 = vld [vmem:[#allocation2 + $0x528] sm:$0xff]
    %v242 = vld [vmem:[#allocation2 + $0x530] sm:$0xff]
    %v243 = vld [vmem:[#allocation2 + $0x538] sm:$0xff]
    %v244 = vld [vmem:[#allocation2 + $0x540] sm:$0xff]
    %v245 = vld [vmem:[#allocation2 + $0x548] sm:$0xff]
    %v246 = vld [vmem:[#allocation2 + $0x550] sm:$0xff]
    %v247 = vld [vmem:[#allocation2 + $0x558] sm:$0xff]
    %v248 = vld [vmem:[#allocation2 + $0x560] sm:$0xff]
    %v249 = vld [vmem:[#allocation2 + $0x568] sm:$0xff]
    %v250 = vld [vmem:[#allocation2 + $0x570] sm:$0xff]
    %v251 = vld [vmem:[#allocation2 + $0x578] sm:$0xff]
    %v252 = vld [vmem:[#allocation2 + $0x580] sm:$0xff]
    %v253 = vld [vmem:[#allocation2 + $0x588] sm:$0xff]
    %v254 = vld [vmem:[#allocation2 + $0x590] sm:$0xff]
    %v255 = vld [vmem:[#allocation2 + $0x598] sm:$0xff]
    %v256 = vld [vmem:[#allocation2 + $0x5a0] sm:$0xff]
    %v257 = vld [vmem:[#allocation2 + $0x5a8] sm:$0xff]
    %v258 = vld [vmem:[#allocation2 + $0x5b0] sm:$0xff]
    %v259 = vld [vmem:[#allocation2 + $0x5b8] sm:$0xff]
    %v260 = vld [vmem:[#allocation2 + $0x5c0] sm:$0xff]
    %v261 = vld [vmem:[#allocation2 + $0x5c8] sm:$0xff]
    %v262 = vld [vmem:[#allocation2 + $0x5d0] sm:$0xff]
    %v263 = vld [vmem:[#allocation2 + $0x5d8] sm:$0xff]
    %v264 = vld [vmem:[#allocation2 + $0x5e0] sm:$0xff]
    %v265 = vld [vmem:[#allocation2 + $0x5e8] sm:$0xff]
    %v266 = vld [vmem:[#allocation2 + $0x5f0] sm:$0xff]
    %v267 = vld [vmem:[#allocation2 + $0x5f8] sm:$0xff]
    %v268 = vld [vmem:[#allocation2 + $0x600] sm:$0xff]
    %v269 = vld [vmem:[#allocation2 + $0x608] sm:$0xff]
    %v270 = vld [vmem:[#allocation2 + $0x610] sm:$0xff]
    %v271 = vld [vmem:[#allocation2 + $0x618] sm:$0xff]
    %v272 = vld [vmem:[#allocation2 + $0x620] sm:$0xff]
    %v273 = vld [vmem:[#allocation2 + $0x628] sm:$0xff]
    %v274 = vld [vmem:[#allocation2 + $0x630] sm:$0xff]
    %v275 = vld [vmem:[#allocation2 + $0x638] sm:$0xff]
    %v276 = vld [vmem:[#allocation2 + $0x640] sm:$0xff]
    %v277 = vld [vmem:[#allocation2 + $0x648] sm:$0xff]
    %v278 = vld [vmem:[#allocation2 + $0x650] sm:$0xff]
    %v279 = vld [vmem:[#allocation2 + $0x658] sm:$0xff]
    %v280 = vld [vmem:[#allocation2 + $0x660] sm:$0xff]
    %v281 = vld [vmem:[#allocation2 + $0x668] sm:$0xff]
    %v282 = vld [vmem:[#allocation2 + $0x670] sm:$0xff]
    %v283 = vld [vmem:[#allocation2 + $0x678] sm:$0xff]
    %v284 = vld [vmem:[#allocation2 + $0x680] sm:$0xff]
    %v285 = vld [vmem:[#allocation2 + $0x688] sm:$0xff]
    %v286 = vld [vmem:[#allocation2 + $0x690] sm:$0xff]
    %v287 = vld [vmem:[#allocation2 + $0x698] sm:$0xff]
    %v288 = vld [vmem:[#allocation2 + $0x6a0] sm:$0xff]
    %v289 = vld [vmem:[#allocation2 + $0x6a8] sm:$0xff]
    %v290 = vld [vmem:[#allocation2 + $0x6b0] sm:$0xff]
    %v291 = vld [vmem:[#allocation2 + $0x6b8] sm:$0xff]
    %v292 = vld [vmem:[#allocation2 + $0x6c0] sm:$0xff]
    %v293 = vld [vmem:[#allocation2 + $0x6c8] sm:$0xff]
    %v294 = vld [vmem:[#allocation2 + $0x6d0] sm:$0xff]
    %v295 = vld [vmem:[#allocation2 + $0x6d8] sm:$0xff]
    %v296 = vld [vmem:[#allocation2 + $0x6e0] sm:$0xff]
    %v297 = vld [vmem:[#allocation2 + $0x6e8] sm:$0xff]
    %v298 = vld [vmem:[#allocation2 + $0x6f0] sm:$0xff]
    %v299 = vld [vmem:[#allocation2 + $0x6f8] sm:$0xff]
    %v300 = vld [vmem:[#allocation2 + $0x700] sm:$0xff]
    %v301 = vld [vmem:[#allocation2 + $0x708] sm:$0xff]
    %v302 = vld [vmem:[#allocation2 + $0x710] sm:$0xff]
    %v303 = vld [vmem:[#allocation2 + $0x718] sm:$0xff]
    %v304 = vld [vmem:[#allocation2 + $0x720] sm:$0xff]
    %v305 = vld [vmem:[#allocation2 + $0x728] sm:$0xff]
    %v306 = vld [vmem:[#allocation2 + $0x730] sm:$0xff]
    %v307 = vld [vmem:[#allocation2 + $0x738] sm:$0xff]
    %v308 = vld [vmem:[#allocation2 + $0x740] sm:$0xff]
    %v309 = vld [vmem:[#allocation2 + $0x748] sm:$0xff]
    %v310 = vld [vmem:[#allocation2 + $0x750] sm:$0xff]
    %v311 = vld [vmem:[#allocation2 + $0x758] sm:$0xff]
    %v312 = vld [vmem:[#allocation2 + $0x760] sm:$0xff]
    %v313 = vld [vmem:[#allocation2 + $0x768] sm:$0xff]
    %v314 = vld [vmem:[#allocation2 + $0x770] sm:$0xff]
    %v315 = vld [vmem:[#allocation2 + $0x778] sm:$0xff]
    %v316 = vld [vmem:[#allocation2 + $0x780] sm:$0xff]
    %v317 = vld [vmem:[#allocation2 + $0x788] sm:$0xff]
    %v318 = vld [vmem:[#allocation2 + $0x790] sm:$0xff]
    %v319 = vld [vmem:[#allocation2 + $0x798] sm:$0xff]
    %v320 = vld [vmem:[#allocation2 + $0x7a0] sm:$0xff]
    %v321 = vld [vmem:[#allocation2 + $0x7a8] sm:$0xff]
    %v322 = vld [vmem:[#allocation2 + $0x7b0] sm:$0xff]
    %v323 = vld [vmem:[#allocation2 + $0x7b8] sm:$0xff]
    %v324 = vld [vmem:[#allocation2 + $0x7c0] sm:$0xff]
    %v325 = vld [vmem:[#allocation2 + $0x7c8] sm:$0xff]
    %v326 = vld [vmem:[#allocation2 + $0x7d0] sm:$0xff]
    %v327 = vld [vmem:[#allocation2 + $0x7d8] sm:$0xff]
    %v328 = vld [vmem:[#allocation2 + $0x7e0] sm:$0xff]
    %v329 = vld [vmem:[#allocation2 + $0x7e8] sm:$0xff]
    %v330 = vld [vmem:[#allocation2 + $0x7f0] sm:$0xff]
    %v331 = vld [vmem:[#allocation2 + $0x7f8] sm:$0xff]
    %v332 = vld [vmem:[#allocation2 + $0x800] sm:$0xff]
    %v333 = vld [vmem:[#allocation2 + $0x808] sm:$0xff]
    %v334 = vld [vmem:[#allocation2 + $0x810] sm:$0xff]
    %v335 = vld [vmem:[#allocation2 + $0x818] sm:$0xff]
    %v336 = vld [vmem:[#allocation2 + $0x820] sm:$0xff]
    %v337 = vld [vmem:[#allocation2 + $0x828] sm:$0xff]
    %v338 = vld [vmem:[#allocation2 + $0x830] sm:$0xff]
    %v339 = vld [vmem:[#allocation2 + $0x838] sm:$0xff]
    %v340 = vld [vmem:[#allocation2 + $0x840] sm:$0xff]
    %v341 = vld [vmem:[#allocation2 + $0x848] sm:$0xff]
    %v342 = vld [vmem:[#allocation2 + $0x850] sm:$0xff]
    %v343 = vld [vmem:[#allocation2 + $0x858] sm:$0xff]
    %v344 = vld [vmem:[#allocation2 + $0x860] sm:$0xff]
    %v345 = vld [vmem:[#allocation2 + $0x868] sm:$0xff]
    %v346 = vld [vmem:[#allocation2 + $0x870] sm:$0xff]
    %v347 = vld [vmem:[#allocation2 + $0x878] sm:$0xff]
    %v348 = vld [vmem:[#allocation2 + $0x880] sm:$0xff]
    %v349 = vld [vmem:[#allocation2 + $0x888] sm:$0xff]
    %v350 = vld [vmem:[#allocation2 + $0x890] sm:$0xff]
    %v351 = vld [vmem:[#allocation2 + $0x898] sm:$0xff]
    %v352 = vld [vmem:[#allocation2 + $0x8a0] sm:$0xff]
    %v353 = vld [vmem:[#allocation2 + $0x8a8] sm:$0xff]
    %v354 = vld [vmem:[#allocation2 + $0x8b0] sm:$0xff]
    %v355 = vld [vmem:[#allocation2 + $0x8b8] sm:$0xff]
    %v356 = vld [vmem:[#allocation2 + $0x8c0] sm:$0xff]
    %v357 = vld [vmem:[#allocation2 + $0x8c8] sm:$0xff]
    %v358 = vld [vmem:[#allocation2 + $0x8d0] sm:$0xff]
    %v359 = vld [vmem:[#allocation2 + $0x8d8] sm:$0xff]
    %v360 = vld [vmem:[#allocation2 + $0x8e0] sm:$0xff]
    %v361 = vld [vmem:[#allocation2 + $0x8e8] sm:$0xff]
    %v362 = vld [vmem:[#allocation2 + $0x8f0] sm:$0xff]
    %v363 = vld [vmem:[#allocation2 + $0x8f8] sm:$0xff]
    %v364 = vld [vmem:[#allocation2 + $0x900] sm:$0xff]
    %v365 = vld [vmem:[#allocation2 + $0x908] sm:$0xff]
    %v366 = vld [vmem:[#allocation2 + $0x910] sm:$0xff]
    %v367 = vld [vmem:[#allocation2 + $0x918] sm:$0xff]
    %v368 = vld [vmem:[#allocation2 + $0x920] sm:$0xff]
    %v369 = vld [vmem:[#allocation2 + $0x928] sm:$0xff]
    %v370 = vld [vmem:[#allocation2 + $0x930] sm:$0xff]
    %v371 = vld [vmem:[#allocation2 + $0x938] sm:$0xff]
    %v372 = vld [vmem:[#allocation2 + $0x940] sm:$0xff]
    %v373 = vld [vmem:[#allocation2 + $0x948] sm:$0xff]
    %v374 = vld [vmem:[#allocation2 + $0x950] sm:$0xff]
    %v375 = vld [vmem:[#allocation2 + $0x958] sm:$0xff]
    %v376 = vld [vmem:[#allocation2 + $0x960] sm:$0xff]
    %v377 = vld [vmem:[#allocation2 + $0x968] sm:$0xff]
    %v378 = vld [vmem:[#allocation2 + $0x970] sm:$0xff]
    %v379 = vld [vmem:[#allocation2 + $0x978] sm:$0xff]
    %v380 = vld [vmem:[#allocation2 + $0x980] sm:$0xff]
    %v381 = vld [vmem:[#allocation2 + $0x988] sm:$0xff]
    %v382 = vld [vmem:[#allocation2 + $0x990] sm:$0xff]
    %v383 = vld [vmem:[#allocation2 + $0x998] sm:$0xff]
    %v384 = vld [vmem:[#allocation2 + $0x9a0] sm:$0xff]
    %v385 = vld [vmem:[#allocation2 + $0x9a8] sm:$0xff]
    %v386 = vld [vmem:[#allocation2 + $0x9b0] sm:$0xff]
    %v387 = vld [vmem:[#allocation2 + $0x9b8] sm:$0xff]
    %v388 = vld [vmem:[#allocation2 + $0x9c0] sm:$0xff]
    %v389 = vld [vmem:[#allocation2 + $0x9c8] sm:$0xff]
    %v390 = vld [vmem:[#allocation2 + $0x9d0] sm:$0xff]
    %v391 = vld [vmem:[#allocation2 + $0x9d8] sm:$0xff]
    %v392 = vld [vmem:[#allocation2 + $0x9e0] sm:$0xff]
    %v393 = vld [vmem:[#allocation2 + $0x9e8] sm:$0xff]
    %v394 = vld [vmem:[#allocation2 + $0x9f0] sm:$0xff]
    %v395 = vld [vmem:[#allocation2 + $0x9f8] sm:$0xff]
    %v396 = vld [vmem:[#allocation2 + $0xa00] sm:$0xff]
    %v397 = vld [vmem:[#allocation2 + $0xa08] sm:$0xff]
    %v398 = vld [vmem:[#allocation2 + $0xa10] sm:$0xff]
    %v399 = vld [vmem:[#allocation2 + $0xa18] sm:$0xff]
    %v400 = vld [vmem:[#allocation2 + $0xa20] sm:$0xff]
    %v401 = vld [vmem:[#allocation2 + $0xa28] sm:$0xff]
    %v402 = vld [vmem:[#allocation2 + $0xa30] sm:$0xff]
    %v403 = vld [vmem:[#allocation2 + $0xa38] sm:$0xff]
    %v404 = vld [vmem:[#allocation2 + $0xa40] sm:$0xff]
    %v405 = vld [vmem:[#allocation2 + $0xa48] sm:$0xff]
    %v406 = vld [vmem:[#allocation2 + $0xa50] sm:$0xff]
    %v407 = vld [vmem:[#allocation2 + $0xa58] sm:$0xff]
    %v408 = vld [vmem:[#allocation2 + $0xa60] sm:$0xff]
    %v409 = vld [vmem:[#allocation2 + $0xa68] sm:$0xff]
    %v410 = vld [vmem:[#allocation2 + $0xa70] sm:$0xff]
    %v411 = vld [vmem:[#allocation2 + $0xa78] sm:$0xff]
    %v412 = vld [vmem:[#allocation2 + $0xa80] sm:$0xff]
    %v413 = vld [vmem:[#allocation2 + $0xa88] sm:$0xff]
    %v414 = vld [vmem:[#allocation2 + $0xa90] sm:$0xff]
    %v415 = vld [vmem:[#allocation2 + $0xa98] sm:$0xff]
    %v416 = vld [vmem:[#allocation2 + $0xaa0] sm:$0xff]
    %v417 = vld [vmem:[#allocation2 + $0xaa8] sm:$0xff]
    %v418 = vld [vmem:[#allocation2 + $0xab0] sm:$0xff]
    %v419 = vld [vmem:[#allocation2 + $0xab8] sm:$0xff]
    %v420 = vld [vmem:[#allocation2 + $0xac0] sm:$0xff]
    %v421 = vld [vmem:[#allocation2 + $0xac8] sm:$0xff]
    %v422 = vld [vmem:[#allocation2 + $0xad0] sm:$0xff]
    %v423 = vld [vmem:[#allocation2 + $0xad8] sm:$0xff]
    %v424 = vld [vmem:[#allocation2 + $0xae0] sm:$0xff]
    %v425 = vld [vmem:[#allocation2 + $0xae8] sm:$0xff]
    %v426 = vld [vmem:[#allocation2 + $0xaf0] sm:$0xff]
    %v427 = vld [vmem:[#allocation2 + $0xaf8] sm:$0xff]
    %v428 = vld [vmem:[#allocation2 + $0xb00] sm:$0xff]
    %v429 = vld [vmem:[#allocation2 + $0xb08] sm:$0xff]
    %v430 = vld [vmem:[#allocation2 + $0xb10] sm:$0xff]
    %v431 = vld [vmem:[#allocation2 + $0xb18] sm:$0xff]
    %v432 = vld [vmem:[#allocation2 + $0xb20] sm:$0xff]
    %v433 = vld [vmem:[#allocation2 + $0xb28] sm:$0xff]
    %v434 = vld [vmem:[#allocation2 + $0xb30] sm:$0xff]
    %v435 = vld [vmem:[#allocation2 + $0xb38] sm:$0xff]
    %v436 = vld [vmem:[#allocation2 + $0xb40] sm:$0xff]
    %v437 = vld [vmem:[#allocation2 + $0xb48] sm:$0xff]
    %v438 = vld [vmem:[#allocation2 + $0xb50] sm:$0xff]
    %v439 = vld [vmem:[#allocation2 + $0xb58] sm:$0xff]
    %v440 = vld [vmem:[#allocation2 + $0xb60] sm:$0xff]
    %v441 = vld [vmem:[#allocation2 + $0xb68] sm:$0xff]
    %v442 = vld [vmem:[#allocation2 + $0xb70] sm:$0xff]
    %v443 = vld [vmem:[#allocation2 + $0xb78] sm:$0xff]
    %v444 = vld [vmem:[#allocation2 + $0xb80] sm:$0xff]
    %v445 = vld [vmem:[#allocation2 + $0xb88] sm:$0xff]
    %v446 = vld [vmem:[#allocation2 + $0xb90] sm:$0xff]
    %v447 = vld [vmem:[#allocation2 + $0xb98] sm:$0xff]
    %v448 = vld [vmem:[#allocation2 + $0xba0] sm:$0xff]
    %v449 = vld [vmem:[#allocation2 + $0xba8] sm:$0xff]
    %v450 = vld [vmem:[#allocation2 + $0xbb0] sm:$0xff]
    %v451 = vld [vmem:[#allocation2 + $0xbb8] sm:$0xff]
    %v452 = vld [vmem:[#allocation2 + $0xbc0] sm:$0xff]
    %v453 = vld [vmem:[#allocation2 + $0xbc8] sm:$0xff]
    %v454 = vld [vmem:[#allocation2 + $0xbd0] sm:$0xff]
    %v455 = vld [vmem:[#allocation2 + $0xbd8] sm:$0xff]
    %v456 = vld [vmem:[#allocation2 + $0xbe0] sm:$0xff]
    %v457 = vld [vmem:[#allocation2 + $0xbe8] sm:$0xff]
    %v458 = vld [vmem:[#allocation2 + $0xbf0] sm:$0xff]
    %v459 = vld [vmem:[#allocation2 + $0xbf8] sm:$0xff]
    %v460 = vld [vmem:[#allocation2 + $0xc00] sm:$0xff]
    %v461 = vld [vmem:[#allocation2 + $0xc08] sm:$0xff]
    %v462 = vld [vmem:[#allocation2 + $0xc10] sm:$0xff]
    %v463 = vld [vmem:[#allocation2 + $0xc18] sm:$0xff]
    %v464 = vld [vmem:[#allocation2 + $0xc20] sm:$0xff]
    %v465 = vld [vmem:[#allocation2 + $0xc28] sm:$0xff]
    %v466 = vld [vmem:[#allocation2 + $0xc30] sm:$0xff]
    %v467 = vld [vmem:[#allocation2 + $0xc38] sm:$0xff]
    %v468 = vld [vmem:[#allocation2 + $0xc40] sm:$0xff]
    %v469 = vld [vmem:[#allocation2 + $0xc48] sm:$0xff]
    %v470 = vld [vmem:[#allocation2 + $0xc50] sm:$0xff]
    %v471 = vld [vmem:[#allocation2 + $0xc58] sm:$0xff]
    %v472 = vld [vmem:[#allocation2 + $0xc60] sm:$0xff]
    %v473 = vld [vmem:[#allocation2 + $0xc68] sm:$0xff]
    %v474 = vld [vmem:[#allocation2 + $0xc70] sm:$0xff]
    %v475 = vld [vmem:[#allocation2 + $0xc78] sm:$0xff]
    %v476 = vld [vmem:[#allocation2 + $0xc80] sm:$0xff]
    %v477 = vld [vmem:[#allocation2 + $0xc88] sm:$0xff]
    %v478 = vld [vmem:[#allocation2 + $0xc90] sm:$0xff]
    %v479 = vld [vmem:[#allocation2 + $0xc98] sm:$0xff]
    %v480 = vld [vmem:[#allocation2 + $0xca0] sm:$0xff]
    %v481 = vld [vmem:[#allocation2 + $0xca8] sm:$0xff]
    %v482 = vld [vmem:[#allocation2 + $0xcb0] sm:$0xff]
    %v483 = vld [vmem:[#allocation2 + $0xcb8] sm:$0xff]
    %v484 = vld [vmem:[#allocation2 + $0xcc0] sm:$0xff]
    %v485 = vld [vmem:[#allocation2 + $0xcc8] sm:$0xff]
    %v486 = vld [vmem:[#allocation2 + $0xcd0] sm:$0xff]
    %v487 = vld [vmem:[#allocation2 + $0xcd8] sm:$0xff]
    %v488 = vld [vmem:[#allocation2 + $0xce0] sm:$0xff]
    %v489 = vld [vmem:[#allocation2 + $0xce8] sm:$0xff]
    %v490 = vld [vmem:[#allocation2 + $0xcf0] sm:$0xff]
    %v491 = vld [vmem:[#allocation2 + $0xcf8] sm:$0xff]
    %v492 = vld [vmem:[#allocation2 + $0xd00] sm:$0xff]
    %v493 = vld [vmem:[#allocation2 + $0xd08] sm:$0xff]
    %v494 = vld [vmem:[#allocation2 + $0xd10] sm:$0xff]
    %v495 = vld [vmem:[#allocation2 + $0xd18] sm:$0xff]
    %v496 = vld [vmem:[#allocation2 + $0xd20] sm:$0xff]
    %v497 = vld [vmem:[#allocation2 + $0xd28] sm:$0xff]
    %v498 = vld [vmem:[#allocation2 + $0xd30] sm:$0xff]
    %v499 = vld [vmem:[#allocation2 + $0xd38] sm:$0xff]
    %v500 = vld [vmem:[#allocation2 + $0xd40] sm:$0xff]
    %v501 = vld [vmem:[#allocation2 + $0xd48] sm:$0xff]
    %v502 = vld [vmem:[#allocation2 + $0xd50] sm:$0xff]
    %v503 = vld [vmem:[#allocation2 + $0xd58] sm:$0xff]
    %v504 = vld [vmem:[#allocation2 + $0xd60] sm:$0xff]
    %v505 = vld [vmem:[#allocation2 + $0xd68] sm:$0xff]
    %v506 = vld [vmem:[#allocation2 + $0xd70] sm:$0xff]
    %v507 = vld [vmem:[#allocation2 + $0xd78] sm:$0xff]
    %v508 = vld [vmem:[#allocation2 + $0xd80] sm:$0xff]
    %v509 = vld [vmem:[#allocation2 + $0xd88] sm:$0xff]
    %v510 = vld [vmem:[#allocation2 + $0xd90] sm:$0xff]
    %v511 = vld [vmem:[#allocation2 + $0xd98] sm:$0xff]
    %v512 = vld [vmem:[#allocation2 + $0xda0] sm:$0xff]
    %v513 = vld [vmem:[#allocation2 + $0xda8] sm:$0xff]
    %v514 = vld [vmem:[#allocation2 + $0xdb0] sm:$0xff]
    %v515 = vld [vmem:[#allocation2 + $0xdb8] sm:$0xff]
    %v516 = vld [vmem:[#allocation2 + $0xdc0] sm:$0xff]
    %v517 = vld [vmem:[#allocation2 + $0xdc8] sm:$0xff]
    %v518 = vld [vmem:[#allocation2 + $0xdd0] sm:$0xff]
    %v519 = vld [vmem:[#allocation2 + $0xdd8] sm:$0xff]
    %v520 = vld [vmem:[#allocation2 + $0xde0] sm:$0xff]
    %v521 = vld [vmem:[#allocation2 + $0xde8] sm:$0xff]
    %v522 = vld [vmem:[#allocation2 + $0xdf0] sm:$0xff]
    %v523 = vld [vmem:[#allocation2 + $0xdf8] sm:$0xff]
    %v524 = vld [vmem:[#allocation2 + $0xe00] sm:$0xff]
    %v525 = vld [vmem:[#allocation2 + $0xe08] sm:$0xff]
    %v526 = vld [vmem:[#allocation2 + $0xe10] sm:$0xff]
    %v527 = vld [vmem:[#allocation2 + $0xe18] sm:$0xff]
    %v528 = vld [vmem:[#allocation2 + $0xe20] sm:$0xff]
    %v529 = vld [vmem:[#allocation2 + $0xe28] sm:$0xff]
    %v530 = vld [vmem:[#allocation2 + $0xe30] sm:$0xff]
    %v531 = vld [vmem:[#allocation2 + $0xe38] sm:$0xff]
    %v532 = vld [vmem:[#allocation2 + $0xe40] sm:$0xff]
    %v533 = vld [vmem:[#allocation2 + $0xe48] sm:$0xff]
    %v534 = vld [vmem:[#allocation2 + $0xe50] sm:$0xff]
    %v535 = vld [vmem:[#allocation2 + $0xe58] sm:$0xff]
    %v536 = vld [vmem:[#allocation2 + $0xe60] sm:$0xff]
    %v537 = vld [vmem:[#allocation2 + $0xe68] sm:$0xff]
    %v538 = vld [vmem:[#allocation2 + $0xe70] sm:$0xff]
    %v539 = vld [vmem:[#allocation2 + $0xe78] sm:$0xff]
    %v540 = vld [vmem:[#allocation2 + $0xe80] sm:$0xff]
    %v541 = vld [vmem:[#allocation2 + $0xe88] sm:$0xff]
    %v542 = vld [vmem:[#allocation2 + $0xe90] sm:$0xff]
    %v543 = vld [vmem:[#allocation2 + $0xe98] sm:$0xff]
    %v544 = vld [vmem:[#allocation2 + $0xea0] sm:$0xff]
    %v545 = vld [vmem:[#allocation2 + $0xea8] sm:$0xff]
    %v546 = vld [vmem:[#allocation2 + $0xeb0] sm:$0xff]
    %v547 = vld [vmem:[#allocation2 + $0xeb8] sm:$0xff]
    %v548 = vld [vmem:[#allocation2 + $0xec0] sm:$0xff]
    %v549 = vld [vmem:[#allocation2 + $0xec8] sm:$0xff]
    %v550 = vld [vmem:[#allocation2 + $0xed0] sm:$0xff]
    %v551 = vld [vmem:[#allocation2 + $0xed8] sm:$0xff]
    %v552 = vld [vmem:[#allocation2 + $0xee0] sm:$0xff]
    %v553 = vld [vmem:[#allocation2 + $0xee8] sm:$0xff]
    %v554 = vld [vmem:[#allocation2 + $0xef0] sm:$0xff]
    %v555 = vld [vmem:[#allocation2 + $0xef8] sm:$0xff]
    %v556 = vld [vmem:[#allocation2 + $0xf00] sm:$0xff]
    %v557 = vld [vmem:[#allocation2 + $0xf08] sm:$0xff]
    %v558 = vld [vmem:[#allocation2 + $0xf10] sm:$0xff]
    %v559 = vld [vmem:[#allocation2 + $0xf18] sm:$0xff]
    %v560 = vld [vmem:[#allocation2 + $0xf20] sm:$0xff]
    %v561 = vld [vmem:[#allocation2 + $0xf28] sm:$0xff]
    %v562 = vld [vmem:[#allocation2 + $0xf30] sm:$0xff]
    %v563 = vld [vmem:[#allocation2 + $0xf38] sm:$0xff]
    %v564 = vld [vmem:[#allocation2 + $0xf40] sm:$0xff]
    %v565 = vld [vmem:[#allocation2 + $0xf48] sm:$0xff]
    %v566 = vld [vmem:[#allocation2 + $0xf50] sm:$0xff]
    %v567 = vld [vmem:[#allocation2 + $0xf58] sm:$0xff]
    %v568 = vld [vmem:[#allocation2 + $0xf60] sm:$0xff]
    %v569 = vld [vmem:[#allocation2 + $0xf68] sm:$0xff]
    %v570 = vld [vmem:[#allocation2 + $0xf70] sm:$0xff]
    %v571 = vld [vmem:[#allocation2 + $0xf78] sm:$0xff]
    %v572 = vld [vmem:[#allocation2 + $0xf80] sm:$0xff]
    %v573 = vld [vmem:[#allocation2 + $0xf88] sm:$0xff]
    %v574 = vld [vmem:[#allocation2 + $0xf90] sm:$0xff]
    %v575 = vld [vmem:[#allocation2 + $0xf98] sm:$0xff]
    %v576 = vld [vmem:[#allocation2 + $0xfa0] sm:$0xff]
    %v577 = vld [vmem:[#allocation2 + $0xfa8] sm:$0xff]
    %v578 = vld [vmem:[#allocation2 + $0xfb0] sm:$0xff]
    %v579 = vld [vmem:[#allocation2 + $0xfb8] sm:$0xff]
    %v580 = vld [vmem:[#allocation2 + $0xfc0] sm:$0xff]
    %v581 = vld [vmem:[#allocation2 + $0xfc8] sm:$0xff]
    %v582 = vld [vmem:[#allocation2 + $0xfd0] sm:$0xff]
    %v583 = vld [vmem:[#allocation2 + $0xfd8] sm:$0xff]
    %v584 = vld [vmem:[#allocation2 + $0xfe0] sm:$0xff]
    %v585 = vld [vmem:[#allocation2 + $0xfe8] sm:$0xff]
    %v586 = vld [vmem:[#allocation2 + $0xff0] sm:$0xff]
    %v587 = vld [vmem:[#allocation2 + $0xff8] sm:$0xff]
    %v588 = vld [vmem:[#allocation2 + $0x1000] sm:$0xff]
    %v589 = vld [vmem:[#allocation2 + $0x1008] sm:$0xff]
    %v590 = vld [vmem:[#allocation2 + $0x1010] sm:$0xff]
    %v591 = vld [vmem:[#allocation2 + $0x1018] sm:$0xff]
    %v592 = vld [vmem:[#allocation2 + $0x1020] sm:$0xff]
    %v593 = vld [vmem:[#allocation2 + $0x1028] sm:$0xff]
    %v594 = vld [vmem:[#allocation2 + $0x1030] sm:$0xff]
    %v595 = vld [vmem:[#allocation2 + $0x1038] sm:$0xff]
    %v596 = vld [vmem:[#allocation2 + $0x1040] sm:$0xff]
    %v597 = vld [vmem:[#allocation2 + $0x1048] sm:$0xff]
    %v598 = vld [vmem:[#allocation2 + $0x1050] sm:$0xff]
    %v599 = vld [vmem:[#allocation2 + $0x1058] sm:$0xff]
    %v600 = vld [vmem:[#allocation2 + $0x1060] sm:$0xff]
    %v601 = vld [vmem:[#allocation2 + $0x1068] sm:$0xff]
    %v602 = vld [vmem:[#allocation2 + $0x1070] sm:$0xff]
    %v603 = vld [vmem:[#allocation2 + $0x1078] sm:$0xff]
    %v604 = vld [vmem:[#allocation2 + $0x1080] sm:$0xff]
    %v605 = vld [vmem:[#allocation2 + $0x1088] sm:$0xff]
    %v606 = vld [vmem:[#allocation2 + $0x1090] sm:$0xff]
    %v607 = vld [vmem:[#allocation2 + $0x1098] sm:$0xff]
    %v608 = vld [vmem:[#allocation2 + $0x10a0] sm:$0xff]
    %v609 = vld [vmem:[#allocation2 + $0x10a8] sm:$0xff]
    %v610 = vld [vmem:[#allocation2 + $0x10b0] sm:$0xff]
    %v611 = vld [vmem:[#allocation2 + $0x10b8] sm:$0xff]
    %v612 = vld [vmem:[#allocation2 + $0x10c0] sm:$0xff]
    %v613 = vld [vmem:[#allocation2 + $0x10c8] sm:$0xff]
    %v614 = vld [vmem:[#allocation2 + $0x10d0] sm:$0xff]
    %v615 = vld [vmem:[#allocation2 + $0x10d8] sm:$0xff]
    %v616 = vld [vmem:[#allocation2 + $0x10e0] sm:$0xff]
    %v617 = vld [vmem:[#allocation2 + $0x10e8] sm:$0xff]
    %v618 = vld [vmem:[#allocation2 + $0x10f0] sm:$0xff]
    %v619 = vld [vmem:[#allocation2 + $0x10f8] sm:$0xff]
    %v620 = vld [vmem:[#allocation2 + $0x1100] sm:$0xff]
    %v621 = vld [vmem:[#allocation2 + $0x1108] sm:$0xff]
    %v622 = vld [vmem:[#allocation2 + $0x1110] sm:$0xff]
    %v623 = vld [vmem:[#allocation2 + $0x1118] sm:$0xff]
    %v624 = vld [vmem:[#allocation2 + $0x1120] sm:$0xff]
    %v625 = vld [vmem:[#allocation2 + $0x1128] sm:$0xff]
    %v626 = vld [vmem:[#allocation2 + $0x1130] sm:$0xff]
    %v627 = vld [vmem:[#allocation2 + $0x1138] sm:$0xff]
    %v628 = vld [vmem:[#allocation2 + $0x1140] sm:$0xff]
    %v629 = vld [vmem:[#allocation2 + $0x1148] sm:$0xff]
    %v630 = vld [vmem:[#allocation2 + $0x1150] sm:$0xff]
    %v631 = vld [vmem:[#allocation2 + $0x1158] sm:$0xff]
    %v632 = vld [vmem:[#allocation2 + $0x1160] sm:$0xff]
    %v633 = vld [vmem:[#allocation2 + $0x1168] sm:$0xff]
    %v634 = vld [vmem:[#allocation2 + $0x1170] sm:$0xff]
    %v635 = vld [vmem:[#allocation2 + $0x1178] sm:$0xff]
    %v636 = vld [vmem:[#allocation2 + $0x1180] sm:$0xff]
    %v637 = vld [vmem:[#allocation2 + $0x1188] sm:$0xff]
    %v638 = vld [vmem:[#allocation2 + $0x1190] sm:$0xff]
    %v639 = vld [vmem:[#allocation2 + $0x1198] sm:$0xff]
    %v640 = vld [vmem:[#allocation2 + $0x11a0] sm:$0xff]
    %v641 = vld [vmem:[#allocation2 + $0x11a8] sm:$0xff]
    %v642 = vld [vmem:[#allocation2 + $0x11b0] sm:$0xff]
    %v643 = vld [vmem:[#allocation2 + $0x11b8] sm:$0xff]
    %v644 = vld [vmem:[#allocation2 + $0x11c0] sm:$0xff]
    %v645 = vld [vmem:[#allocation2 + $0x11c8] sm:$0xff]
    %v646 = vld [vmem:[#allocation2 + $0x11d0] sm:$0xff]
    %v647 = vld [vmem:[#allocation2 + $0x11d8] sm:$0xff]
    %v648 = vld [vmem:[#allocation2 + $0x11e0] sm:$0xff]
    %v649 = vld [vmem:[#allocation2 + $0x11e8] sm:$0xff]
    %v650 = vld [vmem:[#allocation2 + $0x11f0] sm:$0xff]
    %v651 = vld [vmem:[#allocation2 + $0x11f8] sm:$0xff]
    %v652 = vld [vmem:[#allocation2 + $0x1200] sm:$0xff]
    %v653 = vld [vmem:[#allocation2 + $0x1208] sm:$0xff]
    %v654 = vld [vmem:[#allocation2 + $0x1210] sm:$0xff]
    %v655 = vld [vmem:[#allocation2 + $0x1218] sm:$0xff]
    %v656 = vld [vmem:[#allocation2 + $0x1220] sm:$0xff]
    %v657 = vld [vmem:[#allocation2 + $0x1228] sm:$0xff]
    %v658 = vld [vmem:[#allocation2 + $0x1230] sm:$0xff]
    %v659 = vld [vmem:[#allocation2 + $0x1238] sm:$0xff]
    %v660 = vld [vmem:[#allocation2 + $0x1240] sm:$0xff]
    %v661 = vld [vmem:[#allocation2 + $0x1248] sm:$0xff]
    %v662 = vld [vmem:[#allocation2 + $0x1250] sm:$0xff]
    %v663 = vld [vmem:[#allocation2 + $0x1258] sm:$0xff]
    %v664 = vld [vmem:[#allocation2 + $0x1260] sm:$0xff]
    %v665 = vld [vmem:[#allocation2 + $0x1268] sm:$0xff]
    %v666 = vld [vmem:[#allocation2 + $0x1270] sm:$0xff]
    %v667 = vld [vmem:[#allocation2 + $0x1278] sm:$0xff]
    %v668 = vld [vmem:[#allocation2 + $0x1280] sm:$0xff]
    %v669 = vld [vmem:[#allocation2 + $0x1288] sm:$0xff]
    %v670 = vld [vmem:[#allocation2 + $0x1290] sm:$0xff]
    %v671 = vld [vmem:[#allocation2 + $0x1298] sm:$0xff]
    %v672 = vld [vmem:[#allocation2 + $0x12a0] sm:$0xff]
    %v673 = vld [vmem:[#allocation2 + $0x12a8] sm:$0xff]
    %v674 = vld [vmem:[#allocation2 + $0x12b0] sm:$0xff]
    %v675 = vld [vmem:[#allocation2 + $0x12b8] sm:$0xff]
    %v676 = vld [vmem:[#allocation2 + $0x12c0] sm:$0xff]
    %v677 = vld [vmem:[#allocation2 + $0x12c8] sm:$0xff]
    %v678 = vld [vmem:[#allocation2 + $0x12d0] sm:$0xff]
    %v679 = vld [vmem:[#allocation2 + $0x12d8] sm:$0xff]
    %v680 = vld [vmem:[#allocation2 + $0x12e0] sm:$0xff]
    %v681 = vld [vmem:[#allocation2 + $0x12e8] sm:$0xff]
    %v682 = vld [vmem:[#allocation2 + $0x12f0] sm:$0xff]
    %v683 = vld [vmem:[#allocation2 + $0x12f8] sm:$0xff]
    %v684 = vld [vmem:[#allocation2 + $0x1300] sm:$0xff]
    %v685 = vld [vmem:[#allocation2 + $0x1308] sm:$0xff]
    %v686 = vld [vmem:[#allocation2 + $0x1310] sm:$0xff]
    %v687 = vld [vmem:[#allocation2 + $0x1318] sm:$0xff]
    %v688 = vld [vmem:[#allocation2 + $0x1320] sm:$0xff]
    %v689 = vld [vmem:[#allocation2 + $0x1328] sm:$0xff]
    %v690 = vld [vmem:[#allocation2 + $0x1330] sm:$0xff]
    %v691 = vld [vmem:[#allocation2 + $0x1338] sm:$0xff]
    %v692 = vld [vmem:[#allocation2 + $0x1340] sm:$0xff]
    %v693 = vld [vmem:[#allocation2 + $0x1348] sm:$0xff]
    %v694 = vld [vmem:[#allocation2 + $0x1350] sm:$0xff]
    %v695 = vld [vmem:[#allocation2 + $0x1358] sm:$0xff]
    %v696 = vld [vmem:[#allocation2 + $0x1360] sm:$0xff]
    %v697 = vld [vmem:[#allocation2 + $0x1368] sm:$0xff]
    %v698 = vld [vmem:[#allocation2 + $0x1370] sm:$0xff]
    %v699 = vld [vmem:[#allocation2 + $0x1378] sm:$0xff]
    %v700 = vld [vmem:[#allocation2 + $0x1380] sm:$0xff]
    %v701 = vld [vmem:[#allocation2 + $0x1388] sm:$0xff]
    %v702 = vld [vmem:[#allocation2 + $0x1390] sm:$0xff]
    %v703 = vld [vmem:[#allocation2 + $0x1398] sm:$0xff]
    %v704 = vld [vmem:[#allocation2 + $0x13a0] sm:$0xff]
    %v705 = vld [vmem:[#allocation2 + $0x13a8] sm:$0xff]
    %v706 = vld [vmem:[#allocation2 + $0x13b0] sm:$0xff]
    %v707 = vld [vmem:[#allocation2 + $0x13b8] sm:$0xff]
    %v708 = vld [vmem:[#allocation2 + $0x13c0] sm:$0xff]
    %v709 = vld [vmem:[#allocation2 + $0x13c8] sm:$0xff]
    %v710 = vld [vmem:[#allocation2 + $0x13d0] sm:$0xff]
    %v711 = vld [vmem:[#allocation2 + $0x13d8] sm:$0xff]
    %v712 = vld [vmem:[#allocation2 + $0x13e0] sm:$0xff]
    %v713 = vld [vmem:[#allocation2 + $0x13e8] sm:$0xff]
    %v714 = vld [vmem:[#allocation2 + $0x13f0] sm:$0xff]
    %v715 = vld [vmem:[#allocation2 + $0x13f8] sm:$0xff]
    %v716 = vld [vmem:[#allocation2 + $0x1400] sm:$0xff]
    %v717 = vld [vmem:[#allocation2 + $0x1408] sm:$0xff]
    %v718 = vld [vmem:[#allocation2 + $0x1410] sm:$0xff]
    %v719 = vld [vmem:[#allocation2 + $0x1418] sm:$0xff]
    %v720 = vld [vmem:[#allocation2 + $0x1420] sm:$0xff]
    %v721 = vld [vmem:[#allocation2 + $0x1428] sm:$0xff]
    %v722 = vld [vmem:[#allocation2 + $0x1430] sm:$0xff]
    %v723 = vld [vmem:[#allocation2 + $0x1438] sm:$0xff]
    %v724 = vld [vmem:[#allocation2 + $0x1440] sm:$0xff]
    %v725 = vld [vmem:[#allocation2 + $0x1448] sm:$0xff]
    %v726 = vld [vmem:[#allocation2 + $0x1450] sm:$0xff]
    %v727 = vld [vmem:[#allocation2 + $0x1458] sm:$0xff]
    %v728 = vld [vmem:[#allocation2 + $0x1460] sm:$0xff]
    %v729 = vld [vmem:[#allocation2 + $0x1468] sm:$0xff]
    %v730 = vld [vmem:[#allocation2 + $0x1470] sm:$0xff]
    %v731 = vld [vmem:[#allocation2 + $0x1478] sm:$0xff]
    %v732 = vld [vmem:[#allocation2 + $0x1480] sm:$0xff]
    %v733 = vld [vmem:[#allocation2 + $0x1488] sm:$0xff]
    %v734 = vld [vmem:[#allocation2 + $0x1490] sm:$0xff]
    %v735 = vld [vmem:[#allocation2 + $0x1498] sm:$0xff]
    %v736 = vld [vmem:[#allocation2 + $0x14a0] sm:$0xff]
    %v737 = vld [vmem:[#allocation2 + $0x14a8] sm:$0xff]
    %v738 = vld [vmem:[#allocation2 + $0x14b0] sm:$0xff]
    %v739 = vld [vmem:[#allocation2 + $0x14b8] sm:$0xff]
    %v740 = vld [vmem:[#allocation2 + $0x14c0] sm:$0xff]
    %v741 = vld [vmem:[#allocation2 + $0x14c8] sm:$0xff]
    %v742 = vld [vmem:[#allocation2 + $0x14d0] sm:$0xff]
    %v743 = vld [vmem:[#allocation2 + $0x14d8] sm:$0xff]
    %v744 = vld [vmem:[#allocation2 + $0x14e0] sm:$0xff]
    %v745 = vld [vmem:[#allocation2 + $0x14e8] sm:$0xff]
    %v746 = vld [vmem:[#allocation2 + $0x14f0] sm:$0xff]
    %v747 = vld [vmem:[#allocation2 + $0x14f8] sm:$0xff]
    %v748 = vld [vmem:[#allocation2 + $0x1500] sm:$0xff]
    %v749 = vld [vmem:[#allocation2 + $0x1508] sm:$0xff]
    %v750 = vld [vmem:[#allocation2 + $0x1510] sm:$0xff]
    %v751 = vld [vmem:[#allocation2 + $0x1518] sm:$0xff]
    %v752 = vld [vmem:[#allocation2 + $0x1520] sm:$0xff]
    %v753 = vld [vmem:[#allocation2 + $0x1528] sm:$0xff]
    %v754 = vld [vmem:[#allocation2 + $0x1530] sm:$0xff]
    %v755 = vld [vmem:[#allocation2 + $0x1538] sm:$0xff]
    %v756 = vld [vmem:[#allocation2 + $0x1540] sm:$0xff]
    %v757 = vld [vmem:[#allocation2 + $0x1548] sm:$0xff]
    %v758 = vld [vmem:[#allocation2 + $0x1550] sm:$0xff]
    %v759 = vld [vmem:[#allocation2 + $0x1558] sm:$0xff]
    %v760 = vld [vmem:[#allocation2 + $0x1560] sm:$0xff]
    %v761 = vld [vmem:[#allocation2 + $0x1568] sm:$0xff]
    %v762 = vld [vmem:[#allocation2 + $0x1570] sm:$0xff]
    %v763 = vld [vmem:[#allocation2 + $0x1578] sm:$0xff]
    %v764 = vld [vmem:[#allocation2 + $0x1580] sm:$0xff]
    %v765 = vld [vmem:[#allocation2 + $0x1588] sm:$0xff]
    %v766 = vld [vmem:[#allocation2 + $0x1590] sm:$0xff]
    %v767 = vld [vmem:[#allocation2 + $0x1598] sm:$0xff]
    %v768 = vld [vmem:[#allocation2 + $0x15a0] sm:$0xff]
    %v769 = vld [vmem:[#allocation2 + $0x15a8] sm:$0xff]
    %v770 = vld [vmem:[#allocation2 + $0x15b0] sm:$0xff]
    %v771 = vld [vmem:[#allocation2 + $0x15b8] sm:$0xff]
    %v772 = vld [vmem:[#allocation2 + $0x15c0] sm:$0xff]
    %v773 = vld [vmem:[#allocation2 + $0x15c8] sm:$0xff]
    %v774 = vld [vmem:[#allocation2 + $0x15d0] sm:$0xff]
    %v775 = vld [vmem:[#allocation2 + $0x15d8] sm:$0xff]
    %v776 = vld [vmem:[#allocation2 + $0x15e0] sm:$0xff]
    %v777 = vld [vmem:[#allocation2 + $0x15e8] sm:$0xff]
    %v778 = vld [vmem:[#allocation2 + $0x15f0] sm:$0xff]
    %v779 = vld [vmem:[#allocation2 + $0x15f8] sm:$0xff]
    %v780 = vld [vmem:[#allocation2 + $0x1600] sm:$0xff]
    %v781 = vld [vmem:[#allocation2 + $0x1608] sm:$0xff]
    %v782 = vld [vmem:[#allocation2 + $0x1610] sm:$0xff]
    %v783 = vld [vmem:[#allocation2 + $0x1618] sm:$0xff]
    %v784 = vld [vmem:[#allocation2 + $0x1620] sm:$0xff]
    %v785 = vld [vmem:[#allocation2 + $0x1628] sm:$0xff]
    %v786 = vld [vmem:[#allocation2 + $0x1630] sm:$0xff]
    %v787 = vld [vmem:[#allocation2 + $0x1638] sm:$0xff]
    %v788 = vld [vmem:[#allocation2 + $0x1640] sm:$0xff]
    %v789 = vld [vmem:[#allocation2 + $0x1648] sm:$0xff]
    %v790 = vld [vmem:[#allocation2 + $0x1650] sm:$0xff]
    %v791 = vld [vmem:[#allocation2 + $0x1658] sm:$0xff]
    %v792 = vld [vmem:[#allocation2 + $0x1660] sm:$0xff]
    %v793 = vld [vmem:[#allocation2 + $0x1668] sm:$0xff]
    %v794 = vld [vmem:[#allocation2 + $0x1670] sm:$0xff]
    %v795 = vld [vmem:[#allocation2 + $0x1678] sm:$0xff]
    %v796 = vld [vmem:[#allocation2 + $0x1680] sm:$0xff]
    %v797 = vld [vmem:[#allocation2 + $0x1688] sm:$0xff]
    %v798 = vld [vmem:[#allocation2 + $0x1690] sm:$0xff]
    %v799 = vld [vmem:[#allocation2 + $0x1698] sm:$0xff]
    %v800 = vld [vmem:[#allocation2 + $0x16a0] sm:$0xff]
    %v801 = vld [vmem:[#allocation2 + $0x16a8] sm:$0xff]
    %v802 = vld [vmem:[#allocation2 + $0x16b0] sm:$0xff]
    %v803 = vld [vmem:[#allocation2 + $0x16b8] sm:$0xff]
    %v804 = vld [vmem:[#allocation2 + $0x16c0] sm:$0xff]
    %v805 = vld [vmem:[#allocation2 + $0x16c8] sm:$0xff]
    %v806 = vld [vmem:[#allocation2 + $0x16d0] sm:$0xff]
    %v807 = vld [vmem:[#allocation2 + $0x16d8] sm:$0xff]
    %v808 = vld [vmem:[#allocation2 + $0x16e0] sm:$0xff]
    %v809 = vld [vmem:[#allocation2 + $0x16e8] sm:$0xff]
    %v810 = vld [vmem:[#allocation2 + $0x16f0] sm:$0xff]
    %v811 = vld [vmem:[#allocation2 + $0x16f8] sm:$0xff]
    %v812 = vld [vmem:[#allocation2 + $0x1700] sm:$0xff]
    %v813 = vld [vmem:[#allocation2 + $0x1708] sm:$0xff]
    %v814 = vld [vmem:[#allocation2 + $0x1710] sm:$0xff]
    %v815 = vld [vmem:[#allocation2 + $0x1718] sm:$0xff]
    %v816 = vld [vmem:[#allocation2 + $0x1720] sm:$0xff]
    %v817 = vld [vmem:[#allocation2 + $0x1728] sm:$0xff]
    %v818 = vld [vmem:[#allocation2 + $0x1730] sm:$0xff]
    %v819 = vld [vmem:[#allocation2 + $0x1738] sm:$0xff]
    %v820 = vld [vmem:[#allocation2 + $0x1740] sm:$0xff]
    %v821 = vld [vmem:[#allocation2 + $0x1748] sm:$0xff]
    %v822 = vld [vmem:[#allocation2 + $0x1750] sm:$0xff]
    %v823 = vld [vmem:[#allocation2 + $0x1758] sm:$0xff]
    %v824 = vld [vmem:[#allocation2 + $0x1760] sm:$0xff]
    %v825 = vld [vmem:[#allocation2 + $0x1768] sm:$0xff]
    %v826 = vld [vmem:[#allocation2 + $0x1770] sm:$0xff]
    %v827 = vld [vmem:[#allocation2 + $0x1778] sm:$0xff]
    %v828 = vld [vmem:[#allocation2 + $0x1780] sm:$0xff]
    %v829 = vld [vmem:[#allocation2 + $0x1788] sm:$0xff]
    %v830 = vld [vmem:[#allocation2 + $0x1790] sm:$0xff]
    %v831 = vld [vmem:[#allocation2 + $0x1798] sm:$0xff]
    %v832 = vld [vmem:[#allocation2 + $0x17a0] sm:$0xff]
    %v833 = vld [vmem:[#allocation2 + $0x17a8] sm:$0xff]
    %v834 = vld [vmem:[#allocation2 + $0x17b0] sm:$0xff]
    %v835 = vld [vmem:[#allocation2 + $0x17b8] sm:$0xff]
    %v836 = vld [vmem:[#allocation2 + $0x17c0] sm:$0xff]
    %v837 = vld [vmem:[#allocation2 + $0x17c8] sm:$0xff]
    %v838 = vld [vmem:[#allocation2 + $0x17d0] sm:$0xff]
    %v839 = vld [vmem:[#allocation2 + $0x17d8] sm:$0xff]
    %v840 = vld [vmem:[#allocation2 + $0x17e0] sm:$0xff]
    %v841 = vld [vmem:[#allocation2 + $0x17e8] sm:$0xff]
    %v842 = vld [vmem:[#allocation2 + $0x17f0] sm:$0xff]
    %v843 = vld [vmem:[#allocation2 + $0x17f8] sm:$0xff]
    %v844 = vld [vmem:[#allocation2 + $0x1800] sm:$0xff]
    %v845 = vld [vmem:[#allocation2 + $0x1808] sm:$0xff]
    %v846 = vld [vmem:[#allocation2 + $0x1810] sm:$0xff]
    %v847 = vld [vmem:[#allocation2 + $0x1818] sm:$0xff]
    %v848 = vld [vmem:[#allocation2 + $0x1820] sm:$0xff]
    %v849 = vld [vmem:[#allocation2 + $0x1828] sm:$0xff]
    %v850 = vld [vmem:[#allocation2 + $0x1830] sm:$0xff]
    %v851 = vld [vmem:[#allocation2 + $0x1838] sm:$0xff]
    %v852 = vld [vmem:[#allocation2 + $0x1840] sm:$0xff]
    %v853 = vld [vmem:[#allocation2 + $0x1848] sm:$0xff]
    %v854 = vld [vmem:[#allocation2 + $0x1850] sm:$0xff]
    %v855 = vld [vmem:[#allocation2 + $0x1858] sm:$0xff]
    %v856 = vld [vmem:[#allocation2 + $0x1860] sm:$0xff]
    %v857 = vld [vmem:[#allocation2 + $0x1868] sm:$0xff]
    %v858 = vld [vmem:[#allocation2 + $0x1870] sm:$0xff]
    %v859 = vld [vmem:[#allocation2 + $0x1878] sm:$0xff]
    %v860 = vld [vmem:[#allocation2 + $0x1880] sm:$0xff]
    %v861 = vld [vmem:[#allocation2 + $0x1888] sm:$0xff]
    %v862 = vld [vmem:[#allocation2 + $0x1890] sm:$0xff]
    %v863 = vld [vmem:[#allocation2 + $0x1898] sm:$0xff]
    %v864 = vld [vmem:[#allocation2 + $0x18a0] sm:$0xff]
    %v865 = vld [vmem:[#allocation2 + $0x18a8] sm:$0xff]
    %v866 = vld [vmem:[#allocation2 + $0x18b0] sm:$0xff]
    %v867 = vld [vmem:[#allocation2 + $0x18b8] sm:$0xff]
    %v868 = vld [vmem:[#allocation2 + $0x18c0] sm:$0xff]
    %v869 = vld [vmem:[#allocation2 + $0x18c8] sm:$0xff]
    %v870 = vld [vmem:[#allocation2 + $0x18d0] sm:$0xff]
    %v871 = vld [vmem:[#allocation2 + $0x18d8] sm:$0xff]
    %v872 = vld [vmem:[#allocation2 + $0x18e0] sm:$0xff]
    %v873 = vld [vmem:[#allocation2 + $0x18e8] sm:$0xff]
    %v874 = vld [vmem:[#allocation2 + $0x18f0] sm:$0xff]
    %v875 = vld [vmem:[#allocation2 + $0x18f8] sm:$0xff]
    %v876 = vld [vmem:[#allocation2 + $0x1900] sm:$0xff]
    %v877 = vld [vmem:[#allocation2 + $0x1908] sm:$0xff]
    %v878 = vld [vmem:[#allocation2 + $0x1910] sm:$0xff]
    %v879 = vld [vmem:[#allocation2 + $0x1918] sm:$0xff]
    %v880 = vld [vmem:[#allocation2 + $0x1920] sm:$0xff]
    %v881 = vld [vmem:[#allocation2 + $0x1928] sm:$0xff]
    %v882 = vld [vmem:[#allocation2 + $0x1930] sm:$0xff]
    %v883 = vld [vmem:[#allocation2 + $0x1938] sm:$0xff]
    %v884 = vld [vmem:[#allocation2 + $0x1940] sm:$0xff]
    %v885 = vld [vmem:[#allocation2 + $0x1948] sm:$0xff]
    %v886 = vld [vmem:[#allocation2 + $0x1950] sm:$0xff]
    %v887 = vld [vmem:[#allocation2 + $0x1958] sm:$0xff]
    %v888 = vld [vmem:[#allocation2 + $0x1960] sm:$0xff]
    %v889 = vld [vmem:[#allocation2 + $0x1968] sm:$0xff]
    %v890 = vld [vmem:[#allocation2 + $0x1970] sm:$0xff]
    %v891 = vld [vmem:[#allocation2 + $0x1978] sm:$0xff]
    %v892 = vld [vmem:[#allocation2 + $0x1980] sm:$0xff]
    %v893 = vld [vmem:[#allocation2 + $0x1988] sm:$0xff]
    %v894 = vld [vmem:[#allocation2 + $0x1990] sm:$0xff]
    %v895 = vld [vmem:[#allocation2 + $0x1998] sm:$0xff]
    %v896 = vld [vmem:[#allocation2 + $0x19a0] sm:$0xff]
    %v897 = vld [vmem:[#allocation2 + $0x19a8] sm:$0xff]
    %v898 = vld [vmem:[#allocation2 + $0x19b0] sm:$0xff]
    %v899 = vld [vmem:[#allocation2 + $0x19b8] sm:$0xff]
    %v900 = vld [vmem:[#allocation2 + $0x19c0] sm:$0xff]
    %v901 = vld [vmem:[#allocation2 + $0x19c8] sm:$0xff]
    %v902 = vld [vmem:[#allocation2 + $0x19d0] sm:$0xff]
    %v903 = vld [vmem:[#allocation2 + $0x19d8] sm:$0xff]
    %v904 = vld [vmem:[#allocation2 + $0x19e0] sm:$0xff]
    %v905 = vld [vmem:[#allocation2 + $0x19e8] sm:$0xff]
    %v906 = vld [vmem:[#allocation2 + $0x19f0] sm:$0xff]
    %v907 = vld [vmem:[#allocation2 + $0x19f8] sm:$0xff]
    %v908 = vld [vmem:[#allocation2 + $0x1a00] sm:$0xff]
    %v909 = vld [vmem:[#allocation2 + $0x1a08] sm:$0xff]
    %v910 = vld [vmem:[#allocation2 + $0x1a10] sm:$0xff]
    %v911 = vld [vmem:[#allocation2 + $0x1a18] sm:$0xff]
    %v912 = vld [vmem:[#allocation2 + $0x1a20] sm:$0xff]
    %v913 = vld [vmem:[#allocation2 + $0x1a28] sm:$0xff]
    %v914 = vld [vmem:[#allocation2 + $0x1a30] sm:$0xff]
    %v915 = vld [vmem:[#allocation2 + $0x1a38] sm:$0xff]
    %v916 = vld [vmem:[#allocation2 + $0x1a40] sm:$0xff]
    %v917 = vld [vmem:[#allocation2 + $0x1a48] sm:$0xff]
    %v918 = vld [vmem:[#allocation2 + $0x1a50] sm:$0xff]
    %v919 = vld [vmem:[#allocation2 + $0x1a58] sm:$0xff]
    %v920 = vld [vmem:[#allocation2 + $0x1a60] sm:$0xff]
    %v921 = vld [vmem:[#allocation2 + $0x1a68] sm:$0xff]
    %v922 = vld [vmem:[#allocation2 + $0x1a70] sm:$0xff]
    %v923 = vld [vmem:[#allocation2 + $0x1a78] sm:$0xff]
    %v924 = vld [vmem:[#allocation2 + $0x1a80] sm:$0xff]
    %v925 = vld [vmem:[#allocation2 + $0x1a88] sm:$0xff]
    %v926 = vld [vmem:[#allocation2 + $0x1a90] sm:$0xff]
    %v927 = vld [vmem:[#allocation2 + $0x1a98] sm:$0xff]
    %v928 = vld [vmem:[#allocation2 + $0x1aa0] sm:$0xff]
    %v929 = vld [vmem:[#allocation2 + $0x1aa8] sm:$0xff]
    %v930 = vld [vmem:[#allocation2 + $0x1ab0] sm:$0xff]
    %v931 = vld [vmem:[#allocation2 + $0x1ab8] sm:$0xff]
    %v932 = vld [vmem:[#allocation2 + $0x1ac0] sm:$0xff]
    %v933 = vld [vmem:[#allocation2 + $0x1ac8] sm:$0xff]
    %v934 = vld [vmem:[#allocation2 + $0x1ad0] sm:$0xff]
    %v935 = vld [vmem:[#allocation2 + $0x1ad8] sm:$0xff]
    %v936 = vld [vmem:[#allocation2 + $0x1ae0] sm:$0xff]
    %v937 = vld [vmem:[#allocation2 + $0x1ae8] sm:$0xff]
    %v938 = vld [vmem:[#allocation2 + $0x1af0] sm:$0xff]
    %v939 = vld [vmem:[#allocation2 + $0x1af8] sm:$0xff]
    %v940 = vld [vmem:[#allocation2 + $0x1b00] sm:$0xff]
    %v941 = vld [vmem:[#allocation2 + $0x1b08] sm:$0xff]
    %v942 = vld [vmem:[#allocation2 + $0x1b10] sm:$0xff]
    %v943 = vld [vmem:[#allocation2 + $0x1b18] sm:$0xff]
    %v944 = vld [vmem:[#allocation2 + $0x1b20] sm:$0xff]
    %v945 = vld [vmem:[#allocation2 + $0x1b28] sm:$0xff]
    %v946 = vld [vmem:[#allocation2 + $0x1b30] sm:$0xff]
    %v947 = vld [vmem:[#allocation2 + $0x1b38] sm:$0xff]
    %v948 = vld [vmem:[#allocation2 + $0x1b40] sm:$0xff]
    %v949 = vld [vmem:[#allocation2 + $0x1b48] sm:$0xff]
    %v950 = vld [vmem:[#allocation2 + $0x1b50] sm:$0xff]
    %v951 = vld [vmem:[#allocation2 + $0x1b58] sm:$0xff]
    %v952 = vld [vmem:[#allocation2 + $0x1b60] sm:$0xff]
    %v953 = vld [vmem:[#allocation2 + $0x1b68] sm:$0xff]
    %v954 = vld [vmem:[#allocation2 + $0x1b70] sm:$0xff]
    %v955 = vld [vmem:[#allocation2 + $0x1b78] sm:$0xff]
    %v956 = vld [vmem:[#allocation2 + $0x1b80] sm:$0xff]
    %v957 = vld [vmem:[#allocation2 + $0x1b88] sm:$0xff]
    %v958 = vld [vmem:[#allocation2 + $0x1b90] sm:$0xff]
    %v959 = vld [vmem:[#allocation2 + $0x1b98] sm:$0xff]
    %v960 = vld [vmem:[#allocation2 + $0x1ba0] sm:$0xff]
    %v961 = vld [vmem:[#allocation2 + $0x1ba8] sm:$0xff]
    %v962 = vld [vmem:[#allocation2 + $0x1bb0] sm:$0xff]
    %v963 = vld [vmem:[#allocation2 + $0x1bb8] sm:$0xff]
    %v964 = vld [vmem:[#allocation2 + $0x1bc0] sm:$0xff]
    %v965 = vld [vmem:[#allocation2 + $0x1bc8] sm:$0xff]
    %v966 = vld [vmem:[#allocation2 + $0x1bd0] sm:$0xff]
    %v967 = vld [vmem:[#allocation2 + $0x1bd8] sm:$0xff]
    %v968 = vld [vmem:[#allocation2 + $0x1be0] sm:$0xff]
    %v969 = vld [vmem:[#allocation2 + $0x1be8] sm:$0xff]
    %v970 = vld [vmem:[#allocation2 + $0x1bf0] sm:$0xff]
    %v971 = vld [vmem:[#allocation2 + $0x1bf8] sm:$0xff]
    %v972 = vld [vmem:[#allocation2 + $0x1c00] sm:$0xff]
    %v973 = vld [vmem:[#allocation2 + $0x1c08] sm:$0xff]
    %v974 = vld [vmem:[#allocation2 + $0x1c10] sm:$0xff]
    %v975 = vld [vmem:[#allocation2 + $0x1c18] sm:$0xff]
    %v976 = vld [vmem:[#allocation2 + $0x1c20] sm:$0xff]
    %v977 = vld [vmem:[#allocation2 + $0x1c28] sm:$0xff]
    %v978 = vld [vmem:[#allocation2 + $0x1c30] sm:$0xff]
    %v979 = vld [vmem:[#allocation2 + $0x1c38] sm:$0xff]
    %v980 = vld [vmem:[#allocation2 + $0x1c40] sm:$0xff]
    %v981 = vld [vmem:[#allocation2 + $0x1c48] sm:$0xff]
    %v982 = vld [vmem:[#allocation2 + $0x1c50] sm:$0xff]
    %v983 = vld [vmem:[#allocation2 + $0x1c58] sm:$0xff]
    %v984 = vld [vmem:[#allocation2 + $0x1c60] sm:$0xff]
    %v985 = vld [vmem:[#allocation2 + $0x1c68] sm:$0xff]
    %v986 = vld [vmem:[#allocation2 + $0x1c70] sm:$0xff]
    %v987 = vld [vmem:[#allocation2 + $0x1c78] sm:$0xff]
    %v988 = vld [vmem:[#allocation2 + $0x1c80] sm:$0xff]
    %v989 = vld [vmem:[#allocation2 + $0x1c88] sm:$0xff]
    %v990 = vld [vmem:[#allocation2 + $0x1c90] sm:$0xff]
    %v991 = vld [vmem:[#allocation2 + $0x1c98] sm:$0xff]
    %v992 = vld [vmem:[#allocation2 + $0x1ca0] sm:$0xff]
    %v993 = vld [vmem:[#allocation2 + $0x1ca8] sm:$0xff]
    %v994 = vld [vmem:[#allocation2 + $0x1cb0] sm:$0xff]
    %v995 = vld [vmem:[#allocation2 + $0x1cb8] sm:$0xff]
    %v996 = vld [vmem:[#allocation2 + $0x1cc0] sm:$0xff]
    %v997 = vld [vmem:[#allocation2 + $0x1cc8] sm:$0xff]
    %v998 = vld [vmem:[#allocation2 + $0x1cd0] sm:$0xff]
    %v999 = vld [vmem:[#allocation2 + $0x1cd8] sm:$0xff]
    %v1000 = vld [vmem:[#allocation2 + $0x1ce0] sm:$0xff]
    %v1001 = vld [vmem:[#allocation2 + $0x1ce8] sm:$0xff]
    %v1002 = vld [vmem:[#allocation2 + $0x1cf0] sm:$0xff]
    %v1003 = vld [vmem:[#allocation2 + $0x1cf8] sm:$0xff]
    %v1004 = vld [vmem:[#allocation2 + $0x1d00] sm:$0xff]
    %v1005 = vld [vmem:[#allocation2 + $0x1d08] sm:$0xff]
    %v1006 = vld [vmem:[#allocation2 + $0x1d10] sm:$0xff]
    %v1007 = vld [vmem:[#allocation2 + $0x1d18] sm:$0xff]
    %v1008 = vld [vmem:[#allocation2 + $0x1d20] sm:$0xff]
    %v1009 = vld [vmem:[#allocation2 + $0x1d28] sm:$0xff]
    %v1010 = vld [vmem:[#allocation2 + $0x1d30] sm:$0xff]
    %v1011 = vld [vmem:[#allocation2 + $0x1d38] sm:$0xff]
    %v1012 = vld [vmem:[#allocation2 + $0x1d40] sm:$0xff]
    %v1013 = vld [vmem:[#allocation2 + $0x1d48] sm:$0xff]
    %v1014 = vld [vmem:[#allocation2 + $0x1d50] sm:$0xff]
    %v1015 = vld [vmem:[#allocation2 + $0x1d58] sm:$0xff]
    %v1016 = vld [vmem:[#allocation2 + $0x1d60] sm:$0xff]
    %v1017 = vld [vmem:[#allocation2 + $0x1d68] sm:$0xff]
    %v1018 = vld [vmem:[#allocation2 + $0x1d70] sm:$0xff]
    %v1019 = vld [vmem:[#allocation2 + $0x1d78] sm:$0xff]
    %v1020 = vld [vmem:[#allocation2 + $0x1d80] sm:$0xff]
    %v1021 = vld [vmem:[#allocation2 + $0x1d88] sm:$0xff]
    %v1022 = vld [vmem:[#allocation2 + $0x1d90] sm:$0xff]
    %v1023 = vld [vmem:[#allocation2 + $0x1d98] sm:$0xff]
    %v1024 = vld [vmem:[#allocation2 + $0x1da0] sm:$0xff]
    %v1025 = vld [vmem:[#allocation2 + $0x1da8] sm:$0xff]
    %v1026 = vld [vmem:[#allocation2 + $0x1db0] sm:$0xff]
    %v1027 = vld [vmem:[#allocation2 + $0x1db8] sm:$0xff]
    %v1028 = vld [vmem:[#allocation2 + $0x1dc0] sm:$0xff]
    %v1029 = vld [vmem:[#allocation2 + $0x1dc8] sm:$0xff]
    %v1030 = vld [vmem:[#allocation2 + $0x1dd0] sm:$0xff]
    %v1031 = vld [vmem:[#allocation2 + $0x1dd8] sm:$0xff]
    %v1032 = vld [vmem:[#allocation2 + $0x1de0] sm:$0xff]
    %v1033 = vld [vmem:[#allocation2 + $0x1de8] sm:$0xff]
    %v1034 = vld [vmem:[#allocation2 + $0x1df0] sm:$0xff]
    %v1035 = vld [vmem:[#allocation2 + $0x1df8] sm:$0xff]
    %v1036 = vld [vmem:[#allocation2 + $0x1e00] sm:$0xff]
    %v1037 = vld [vmem:[#allocation2 + $0x1e08] sm:$0xff]
    %v1038 = vld [vmem:[#allocation2 + $0x1e10] sm:$0xff]
    %v1039 = vld [vmem:[#allocation2 + $0x1e18] sm:$0xff]
    %v1040 = vld [vmem:[#allocation2 + $0x1e20] sm:$0xff]
    %v1041 = vld [vmem:[#allocation2 + $0x1e28] sm:$0xff]
    %v1042 = vld [vmem:[#allocation2 + $0x1e30] sm:$0xff]
    %v1043 = vld [vmem:[#allocation2 + $0x1e38] sm:$0xff]
    %v1044 = vld [vmem:[#allocation2 + $0x1e40] sm:$0xff]
    %v1045 = vld [vmem:[#allocation2 + $0x1e48] sm:$0xff]
    %v1046 = vld [vmem:[#allocation2 + $0x1e50] sm:$0xff]
    %v1047 = vld [vmem:[#allocation2 + $0x1e58] sm:$0xff]
    %v1048 = vld [vmem:[#allocation2 + $0x1e60] sm:$0xff]
    %v1049 = vld [vmem:[#allocation2 + $0x1e68] sm:$0xff]
    %v1050 = vld [vmem:[#allocation2 + $0x1e70] sm:$0xff]
    %v1051 = vld [vmem:[#allocation2 + $0x1e78] sm:$0xff]
    %v1052 = vld [vmem:[#allocation2 + $0x1e80] sm:$0xff]
    %v1053 = vld [vmem:[#allocation2 + $0x1e88] sm:$0xff]
    %v1054 = vld [vmem:[#allocation2 + $0x1e90] sm:$0xff]
    %v1055 = vld [vmem:[#allocation2 + $0x1e98] sm:$0xff]
    %v1056 = vld [vmem:[#allocation2 + $0x1ea0] sm:$0xff]
    %v1057 = vld [vmem:[#allocation2 + $0x1ea8] sm:$0xff]
    %v1058 = vld [vmem:[#allocation2 + $0x1eb0] sm:$0xff]
    %v1059 = vld [vmem:[#allocation2 + $0x1eb8] sm:$0xff]
    %v1060 = vld [vmem:[#allocation2 + $0x1ec0] sm:$0xff]
    %v1061 = vld [vmem:[#allocation2 + $0x1ec8] sm:$0xff]
    %v1062 = vld [vmem:[#allocation2 + $0x1ed0] sm:$0xff]
    %v1063 = vld [vmem:[#allocation2 + $0x1ed8] sm:$0xff]
    %v1064 = vld [vmem:[#allocation2 + $0x1ee0] sm:$0xff]
    %v1065 = vld [vmem:[#allocation2 + $0x1ee8] sm:$0xff]
    %v1066 = vld [vmem:[#allocation2 + $0x1ef0] sm:$0xff]
    %v1067 = vld [vmem:[#allocation2 + $0x1ef8] sm:$0xff]
    %v1068 = vld [vmem:[#allocation2 + $0x1f00] sm:$0xff]
    %v1069 = vld [vmem:[#allocation2 + $0x1f08] sm:$0xff]
    %v1070 = vld [vmem:[#allocation2 + $0x1f10] sm:$0xff]
    %v1071 = vld [vmem:[#allocation2 + $0x1f18] sm:$0xff]
    %v1072 = vld [vmem:[#allocation2 + $0x1f20] sm:$0xff]
    %v1073 = vld [vmem:[#allocation2 + $0x1f28] sm:$0xff]
    %v1074 = vld [vmem:[#allocation2 + $0x1f30] sm:$0xff]
    %v1075 = vld [vmem:[#allocation2 + $0x1f38] sm:$0xff]
    %v1076 = vld [vmem:[#allocation2 + $0x1f40] sm:$0xff]
    %v1077 = vld [vmem:[#allocation2 + $0x1f48] sm:$0xff]
    %v1078 = vld [vmem:[#allocation2 + $0x1f50] sm:$0xff]
    %v1079 = vld [vmem:[#allocation2 + $0x1f58] sm:$0xff]
    %v1080 = vld [vmem:[#allocation2 + $0x1f60] sm:$0xff]
    %v1081 = vld [vmem:[#allocation2 + $0x1f68] sm:$0xff]
    %v1082 = vld [vmem:[#allocation2 + $0x1f70] sm:$0xff]
    %v1083 = vld [vmem:[#allocation2 + $0x1f78] sm:$0xff]
    %v1084 = vld [vmem:[#allocation2 + $0x1f80] sm:$0xff]
    %v1085 = vld [vmem:[#allocation2 + $0x1f88] sm:$0xff]
    %v1086 = vld [vmem:[#allocation2 + $0x1f90] sm:$0xff]
    %v1087 = vld [vmem:[#allocation2 + $0x1f98] sm:$0xff]
    %v1088 = vld [vmem:[#allocation2 + $0x1fa0] sm:$0xff]
    %v1089 = vld [vmem:[#allocation2 + $0x1fa8] sm:$0xff]
    %v1090 = vld [vmem:[#allocation2 + $0x1fb0] sm:$0xff]
    %v1091 = vld [vmem:[#allocation2 + $0x1fb8] sm:$0xff]
    %v1092 = vld [vmem:[#allocation2 + $0x1fc0] sm:$0xff]
    %v1093 = vld [vmem:[#allocation2 + $0x1fc8] sm:$0xff]
    %v1094 = vld [vmem:[#allocation2 + $0x1fd0] sm:$0xff]
    %v1095 = vld [vmem:[#allocation2 + $0x1fd8] sm:$0xff]
    %v1096 = vld [vmem:[#allocation2 + $0x1fe0] sm:$0xff]
    %v1097 = vld [vmem:[#allocation2 + $0x1fe8] sm:$0xff]
    %v1098 = vld [vmem:[#allocation2 + $0x1ff0] sm:$0xff]
    %v1099 = vld [vmem:[#allocation2 + $0x1ff8] sm:$0xff]
    %v1132 = vunpack.c.l.b16 %v44
    %v1133 = vunpack.c.h.b16 %v44
    %v1134 = vunpack.c.l.b16 %v45
    %v1135 = vunpack.c.h.b16 %v45
    %v1136 = vunpack.c.l.b16 %v46
    %v1137 = vunpack.c.h.b16 %v46
    %v1138 = vunpack.c.l.b16 %v47
    %v1139 = vunpack.c.h.b16 %v47
    %v1140 = vunpack.c.l.b16 %v48
    %v1141 = vunpack.c.h.b16 %v48
    %v1142 = vunpack.c.l.b16 %v49
    %v1143 = vunpack.c.h.b16 %v49
    %v1144 = vunpack.c.l.b16 %v50
    %v1145 = vunpack.c.h.b16 %v50
    %v1146 = vunpack.c.l.b16 %v51
    %v1147 = vunpack.c.h.b16 %v51
    %v1148 = vunpack.c.l.b16 %v52
    %v1149 = vunpack.c.h.b16 %v52
    %v1150 = vunpack.c.l.b16 %v53
    %v1151 = vunpack.c.h.b16 %v53
    %v1152 = vunpack.c.l.b16 %v54
    %v1153 = vunpack.c.h.b16 %v54
    %v1154 = vunpack.c.l.b16 %v55
    %v1155 = vunpack.c.h.b16 %v55
    %v1156 = vunpack.c.l.b16 %v56
    %v1157 = vunpack.c.h.b16 %v56
    %v1158 = vunpack.c.l.b16 %v57
    %v1159 = vunpack.c.h.b16 %v57
    %v1160 = vunpack.c.l.b16 %v58
    %v1161 = vunpack.c.h.b16 %v58
    %v1162 = vunpack.c.l.b16 %v59
    %v1163 = vunpack.c.h.b16 %v59
    %v1164 = vunpack.c.l.b16 %v60
    %v1165 = vunpack.c.h.b16 %v60
    %v1166 = vunpack.c.l.b16 %v61
    %v1167 = vunpack.c.h.b16 %v61
    %v1168 = vunpack.c.l.b16 %v62
    %v1169 = vunpack.c.h.b16 %v62
    %v1170 = vunpack.c.l.b16 %v63
    %v1171 = vunpack.c.h.b16 %v63
    %v1172 = vunpack.c.l.b16 %v64
    %v1173 = vunpack.c.h.b16 %v64
    %v1174 = vunpack.c.l.b16 %v65
    %v1175 = vunpack.c.h.b16 %v65
    %v1176 = vunpack.c.l.b16 %v66
    %v1177 = vunpack.c.h.b16 %v66
    %v1178 = vunpack.c.l.b16 %v67
    %v1179 = vunpack.c.h.b16 %v67
    %v1180 = vunpack.c.l.b16 %v68
    %v1181 = vunpack.c.h.b16 %v68
    %v1182 = vunpack.c.l.b16 %v69
    %v1183 = vunpack.c.h.b16 %v69
    %v1184 = vunpack.c.l.b16 %v70
    %v1185 = vunpack.c.h.b16 %v70
    %v1186 = vunpack.c.l.b16 %v71
    %v1187 = vunpack.c.h.b16 %v71
    %v1188 = vunpack.c.l.b16 %v72
    %v1189 = vunpack.c.h.b16 %v72
    %v1190 = vunpack.c.l.b16 %v73
    %v1191 = vunpack.c.h.b16 %v73
    %v1192 = vunpack.c.l.b16 %v74
    %v1193 = vunpack.c.h.b16 %v74
    %v1194 = vunpack.c.l.b16 %v75
    %v1195 = vunpack.c.h.b16 %v75
    %v1196 = vpack.c.b16 %v1164, %v1132
    %v1197 = vpack.c.b16 %v1165, %v1133
    %v1198 = vpack.c.b16 %v1166, %v1134
    %v1199 = vpack.c.b16 %v1167, %v1135
    %v1200 = vpack.c.b16 %v1168, %v1136
    %v1201 = vpack.c.b16 %v1169, %v1137
    %v1202 = vpack.c.b16 %v1170, %v1138
    %v1203 = vpack.c.b16 %v1171, %v1139
    %v1204 = vpack.c.b16 %v1172, %v1140
    %v1205 = vpack.c.b16 %v1173, %v1141
    %v1206 = vpack.c.b16 %v1174, %v1142
    %v1207 = vpack.c.b16 %v1175, %v1143
    %v1208 = vpack.c.b16 %v1176, %v1144
    %v1209 = vpack.c.b16 %v1177, %v1145
    %v1210 = vpack.c.b16 %v1178, %v1146
    %v1211 = vpack.c.b16 %v1179, %v1147
    %v1212 = vpack.c.b16 %v1180, %v1148
    %v1213 = vpack.c.b16 %v1181, %v1149
    %v1214 = vpack.c.b16 %v1182, %v1150
    %v1215 = vpack.c.b16 %v1183, %v1151
    %v1216 = vpack.c.b16 %v1184, %v1152
    %v1217 = vpack.c.b16 %v1185, %v1153
    %v1218 = vpack.c.b16 %v1186, %v1154
    %v1219 = vpack.c.b16 %v1187, %v1155
    %v1220 = vpack.c.b16 %v1188, %v1156
    %v1221 = vpack.c.b16 %v1189, %v1157
    %v1222 = vpack.c.b16 %v1190, %v1158
    %v1223 = vpack.c.b16 %v1191, %v1159
    %v1224 = vpack.c.b16 %v1192, %v1160
    %v1225 = vpack.c.b16 %v1193, %v1161
    %v1226 = vpack.c.b16 %v1194, %v1162
    %v1227 = vpack.c.b16 %v1195, %v1163
    %v2284 = vunpack.c.l.b16 %v76
    %v2285 = vunpack.c.h.b16 %v76
    %v2286 = vunpack.c.l.b16 %v77
    %v2287 = vunpack.c.h.b16 %v77
    %v2288 = vunpack.c.l.b16 %v78
    %v2289 = vunpack.c.h.b16 %v78
    %v2290 = vunpack.c.l.b16 %v79
    %v2291 = vunpack.c.h.b16 %v79
    %v2292 = vunpack.c.l.b16 %v80
    %v2293 = vunpack.c.h.b16 %v80
    %v2294 = vunpack.c.l.b16 %v81
    %v2295 = vunpack.c.h.b16 %v81
    %v2296 = vunpack.c.l.b16 %v82
    %v2297 = vunpack.c.h.b16 %v82
    %v2298 = vunpack.c.l.b16 %v83
    %v2299 = vunpack.c.h.b16 %v83
    %v2300 = vunpack.c.l.b16 %v84
    %v2301 = vunpack.c.h.b16 %v84
    %v2302 = vunpack.c.l.b16 %v85
    %v2303 = vunpack.c.h.b16 %v85
    %v2304 = vunpack.c.l.b16 %v86
    %v2305 = vunpack.c.h.b16 %v86
    %v2306 = vunpack.c.l.b16 %v87
    %v2307 = vunpack.c.h.b16 %v87
    %v2308 = vunpack.c.l.b16 %v88
    %v2309 = vunpack.c.h.b16 %v88
    %v2310 = vunpack.c.l.b16 %v89
    %v2311 = vunpack.c.h.b16 %v89
    %v2312 = vunpack.c.l.b16 %v90
    %v2313 = vunpack.c.h.b16 %v90
    %v2314 = vunpack.c.l.b16 %v91
    %v2315 = vunpack.c.h.b16 %v91
    %v2316 = vunpack.c.l.b16 %v92
    %v2317 = vunpack.c.h.b16 %v92
    %v2318 = vunpack.c.l.b16 %v93
    %v2319 = vunpack.c.h.b16 %v93
    %v2320 = vunpack.c.l.b16 %v94
    %v2321 = vunpack.c.h.b16 %v94
    %v2322 = vunpack.c.l.b16 %v95
    %v2323 = vunpack.c.h.b16 %v95
    %v2324 = vunpack.c.l.b16 %v96
    %v2325 = vunpack.c.h.b16 %v96
    %v2326 = vunpack.c.l.b16 %v97
    %v2327 = vunpack.c.h.b16 %v97
    %v2328 = vunpack.c.l.b16 %v98
    %v2329 = vunpack.c.h.b16 %v98
    %v2330 = vunpack.c.l.b16 %v99
    %v2331 = vunpack.c.h.b16 %v99
    %v2332 = vunpack.c.l.b16 %v100
    %v2333 = vunpack.c.h.b16 %v100
    %v2334 = vunpack.c.l.b16 %v101
    %v2335 = vunpack.c.h.b16 %v101
    %v2336 = vunpack.c.l.b16 %v102
    %v2337 = vunpack.c.h.b16 %v102
    %v2338 = vunpack.c.l.b16 %v103
    %v2339 = vunpack.c.h.b16 %v103
    %v2340 = vunpack.c.l.b16 %v104
    %v2341 = vunpack.c.h.b16 %v104
    %v2342 = vunpack.c.l.b16 %v105
    %v2343 = vunpack.c.h.b16 %v105
    %v2344 = vunpack.c.l.b16 %v106
    %v2345 = vunpack.c.h.b16 %v106
    %v2346 = vunpack.c.l.b16 %v107
    %v2347 = vunpack.c.h.b16 %v107
    %v2348 = vunpack.c.l.b16 %v108
    %v2349 = vunpack.c.h.b16 %v108
    %v2350 = vunpack.c.l.b16 %v109
    %v2351 = vunpack.c.h.b16 %v109
    %v2352 = vunpack.c.l.b16 %v110
    %v2353 = vunpack.c.h.b16 %v110
    %v2354 = vunpack.c.l.b16 %v111
    %v2355 = vunpack.c.h.b16 %v111
    %v2356 = vunpack.c.l.b16 %v112
    %v2357 = vunpack.c.h.b16 %v112
    %v2358 = vunpack.c.l.b16 %v113
    %v2359 = vunpack.c.h.b16 %v113
    %v2360 = vunpack.c.l.b16 %v114
    %v2361 = vunpack.c.h.b16 %v114
    %v2362 = vunpack.c.l.b16 %v115
    %v2363 = vunpack.c.h.b16 %v115
    %v2364 = vunpack.c.l.b16 %v116
    %v2365 = vunpack.c.h.b16 %v116
    %v2366 = vunpack.c.l.b16 %v117
    %v2367 = vunpack.c.h.b16 %v117
    %v2368 = vunpack.c.l.b16 %v118
    %v2369 = vunpack.c.h.b16 %v118
    %v2370 = vunpack.c.l.b16 %v119
    %v2371 = vunpack.c.h.b16 %v119
    %v2372 = vunpack.c.l.b16 %v120
    %v2373 = vunpack.c.h.b16 %v120
    %v2374 = vunpack.c.l.b16 %v121
    %v2375 = vunpack.c.h.b16 %v121
    %v2376 = vunpack.c.l.b16 %v122
    %v2377 = vunpack.c.h.b16 %v122
    %v2378 = vunpack.c.l.b16 %v123
    %v2379 = vunpack.c.h.b16 %v123
    %v2380 = vunpack.c.l.b16 %v124
    %v2381 = vunpack.c.h.b16 %v124
    %v2382 = vunpack.c.l.b16 %v125
    %v2383 = vunpack.c.h.b16 %v125
    %v2384 = vunpack.c.l.b16 %v126
    %v2385 = vunpack.c.h.b16 %v126
    %v2386 = vunpack.c.l.b16 %v127
    %v2387 = vunpack.c.h.b16 %v127
    %v2388 = vunpack.c.l.b16 %v128
    %v2389 = vunpack.c.h.b16 %v128
    %v2390 = vunpack.c.l.b16 %v129
    %v2391 = vunpack.c.h.b16 %v129
    %v2392 = vunpack.c.l.b16 %v130
    %v2393 = vunpack.c.h.b16 %v130
    %v2394 = vunpack.c.l.b16 %v131
    %v2395 = vunpack.c.h.b16 %v131
    %v2396 = vunpack.c.l.b16 %v132
    %v2397 = vunpack.c.h.b16 %v132
    %v2398 = vunpack.c.l.b16 %v133
    %v2399 = vunpack.c.h.b16 %v133
    %v2400 = vunpack.c.l.b16 %v134
    %v2401 = vunpack.c.h.b16 %v134
    %v2402 = vunpack.c.l.b16 %v135
    %v2403 = vunpack.c.h.b16 %v135
    %v2404 = vunpack.c.l.b16 %v136
    %v2405 = vunpack.c.h.b16 %v136
    %v2406 = vunpack.c.l.b16 %v137
    %v2407 = vunpack.c.h.b16 %v137
    %v2408 = vunpack.c.l.b16 %v138
    %v2409 = vunpack.c.h.b16 %v138
    %v2410 = vunpack.c.l.b16 %v139
    %v2411 = vunpack.c.h.b16 %v139
    %v2412 = vunpack.c.l.b16 %v140
    %v2413 = vunpack.c.h.b16 %v140
    %v2414 = vunpack.c.l.b16 %v141
    %v2415 = vunpack.c.h.b16 %v141
    %v2416 = vunpack.c.l.b16 %v142
    %v2417 = vunpack.c.h.b16 %v142
    %v2418 = vunpack.c.l.b16 %v143
    %v2419 = vunpack.c.h.b16 %v143
    %v2420 = vunpack.c.l.b16 %v144
    %v2421 = vunpack.c.h.b16 %v144
    %v2422 = vunpack.c.l.b16 %v145
    %v2423 = vunpack.c.h.b16 %v145
    %v2424 = vunpack.c.l.b16 %v146
    %v2425 = vunpack.c.h.b16 %v146
    %v2426 = vunpack.c.l.b16 %v147
    %v2427 = vunpack.c.h.b16 %v147
    %v2428 = vunpack.c.l.b16 %v148
    %v2429 = vunpack.c.h.b16 %v148
    %v2430 = vunpack.c.l.b16 %v149
    %v2431 = vunpack.c.h.b16 %v149
    %v2432 = vunpack.c.l.b16 %v150
    %v2433 = vunpack.c.h.b16 %v150
    %v2434 = vunpack.c.l.b16 %v151
    %v2435 = vunpack.c.h.b16 %v151
    %v2436 = vunpack.c.l.b16 %v152
    %v2437 = vunpack.c.h.b16 %v152
    %v2438 = vunpack.c.l.b16 %v153
    %v2439 = vunpack.c.h.b16 %v153
    %v2440 = vunpack.c.l.b16 %v154
    %v2441 = vunpack.c.h.b16 %v154
    %v2442 = vunpack.c.l.b16 %v155
    %v2443 = vunpack.c.h.b16 %v155
    %v2444 = vunpack.c.l.b16 %v156
    %v2445 = vunpack.c.h.b16 %v156
    %v2446 = vunpack.c.l.b16 %v157
    %v2447 = vunpack.c.h.b16 %v157
    %v2448 = vunpack.c.l.b16 %v158
    %v2449 = vunpack.c.h.b16 %v158
    %v2450 = vunpack.c.l.b16 %v159
    %v2451 = vunpack.c.h.b16 %v159
    %v2452 = vunpack.c.l.b16 %v160
    %v2453 = vunpack.c.h.b16 %v160
    %v2454 = vunpack.c.l.b16 %v161
    %v2455 = vunpack.c.h.b16 %v161
    %v2456 = vunpack.c.l.b16 %v162
    %v2457 = vunpack.c.h.b16 %v162
    %v2458 = vunpack.c.l.b16 %v163
    %v2459 = vunpack.c.h.b16 %v163
    %v2460 = vunpack.c.l.b16 %v164
    %v2461 = vunpack.c.h.b16 %v164
    %v2462 = vunpack.c.l.b16 %v165
    %v2463 = vunpack.c.h.b16 %v165
    %v2464 = vunpack.c.l.b16 %v166
    %v2465 = vunpack.c.h.b16 %v166
    %v2466 = vunpack.c.l.b16 %v167
    %v2467 = vunpack.c.h.b16 %v167
    %v2468 = vunpack.c.l.b16 %v168
    %v2469 = vunpack.c.h.b16 %v168
    %v2470 = vunpack.c.l.b16 %v169
    %v2471 = vunpack.c.h.b16 %v169
    %v2472 = vunpack.c.l.b16 %v170
    %v2473 = vunpack.c.h.b16 %v170
    %v2474 = vunpack.c.l.b16 %v171
    %v2475 = vunpack.c.h.b16 %v171
    %v2476 = vunpack.c.l.b16 %v172
    %v2477 = vunpack.c.h.b16 %v172
    %v2478 = vunpack.c.l.b16 %v173
    %v2479 = vunpack.c.h.b16 %v173
    %v2480 = vunpack.c.l.b16 %v174
    %v2481 = vunpack.c.h.b16 %v174
    %v2482 = vunpack.c.l.b16 %v175
    %v2483 = vunpack.c.h.b16 %v175
    %v2484 = vunpack.c.l.b16 %v176
    %v2485 = vunpack.c.h.b16 %v176
    %v2486 = vunpack.c.l.b16 %v177
    %v2487 = vunpack.c.h.b16 %v177
    %v2488 = vunpack.c.l.b16 %v178
    %v2489 = vunpack.c.h.b16 %v178
    %v2490 = vunpack.c.l.b16 %v179
    %v2491 = vunpack.c.h.b16 %v179
    %v2492 = vunpack.c.l.b16 %v180
    %v2493 = vunpack.c.h.b16 %v180
    %v2494 = vunpack.c.l.b16 %v181
    %v2495 = vunpack.c.h.b16 %v181
    %v2496 = vunpack.c.l.b16 %v182
    %v2497 = vunpack.c.h.b16 %v182
    %v2498 = vunpack.c.l.b16 %v183
    %v2499 = vunpack.c.h.b16 %v183
    %v2500 = vunpack.c.l.b16 %v184
    %v2501 = vunpack.c.h.b16 %v184
    %v2502 = vunpack.c.l.b16 %v185
    %v2503 = vunpack.c.h.b16 %v185
    %v2504 = vunpack.c.l.b16 %v186
    %v2505 = vunpack.c.h.b16 %v186
    %v2506 = vunpack.c.l.b16 %v187
    %v2507 = vunpack.c.h.b16 %v187
    %v2508 = vunpack.c.l.b16 %v188
    %v2509 = vunpack.c.h.b16 %v188
    %v2510 = vunpack.c.l.b16 %v189
    %v2511 = vunpack.c.h.b16 %v189
    %v2512 = vunpack.c.l.b16 %v190
    %v2513 = vunpack.c.h.b16 %v190
    %v2514 = vunpack.c.l.b16 %v191
    %v2515 = vunpack.c.h.b16 %v191
    %v2516 = vunpack.c.l.b16 %v192
    %v2517 = vunpack.c.h.b16 %v192
    %v2518 = vunpack.c.l.b16 %v193
    %v2519 = vunpack.c.h.b16 %v193
    %v2520 = vunpack.c.l.b16 %v194
    %v2521 = vunpack.c.h.b16 %v194
    %v2522 = vunpack.c.l.b16 %v195
    %v2523 = vunpack.c.h.b16 %v195
    %v2524 = vunpack.c.l.b16 %v196
    %v2525 = vunpack.c.h.b16 %v196
    %v2526 = vunpack.c.l.b16 %v197
    %v2527 = vunpack.c.h.b16 %v197
    %v2528 = vunpack.c.l.b16 %v198
    %v2529 = vunpack.c.h.b16 %v198
    %v2530 = vunpack.c.l.b16 %v199
    %v2531 = vunpack.c.h.b16 %v199
    %v2532 = vunpack.c.l.b16 %v200
    %v2533 = vunpack.c.h.b16 %v200
    %v2534 = vunpack.c.l.b16 %v201
    %v2535 = vunpack.c.h.b16 %v201
    %v2536 = vunpack.c.l.b16 %v202
    %v2537 = vunpack.c.h.b16 %v202
    %v2538 = vunpack.c.l.b16 %v203
    %v2539 = vunpack.c.h.b16 %v203
    %v2540 = vunpack.c.l.b16 %v204
    %v2541 = vunpack.c.h.b16 %v204
    %v2542 = vunpack.c.l.b16 %v205
    %v2543 = vunpack.c.h.b16 %v205
    %v2544 = vunpack.c.l.b16 %v206
    %v2545 = vunpack.c.h.b16 %v206
    %v2546 = vunpack.c.l.b16 %v207
    %v2547 = vunpack.c.h.b16 %v207
    %v2548 = vunpack.c.l.b16 %v208
    %v2549 = vunpack.c.h.b16 %v208
    %v2550 = vunpack.c.l.b16 %v209
    %v2551 = vunpack.c.h.b16 %v209
    %v2552 = vunpack.c.l.b16 %v210
    %v2553 = vunpack.c.h.b16 %v210
    %v2554 = vunpack.c.l.b16 %v211
    %v2555 = vunpack.c.h.b16 %v211
    %v2556 = vunpack.c.l.b16 %v212
    %v2557 = vunpack.c.h.b16 %v212
    %v2558 = vunpack.c.l.b16 %v213
    %v2559 = vunpack.c.h.b16 %v213
    %v2560 = vunpack.c.l.b16 %v214
    %v2561 = vunpack.c.h.b16 %v214
    %v2562 = vunpack.c.l.b16 %v215
    %v2563 = vunpack.c.h.b16 %v215
    %v2564 = vunpack.c.l.b16 %v216
    %v2565 = vunpack.c.h.b16 %v216
    %v2566 = vunpack.c.l.b16 %v217
    %v2567 = vunpack.c.h.b16 %v217
    %v2568 = vunpack.c.l.b16 %v218
    %v2569 = vunpack.c.h.b16 %v218
    %v2570 = vunpack.c.l.b16 %v219
    %v2571 = vunpack.c.h.b16 %v219
    %v2572 = vunpack.c.l.b16 %v220
    %v2573 = vunpack.c.h.b16 %v220
    %v2574 = vunpack.c.l.b16 %v221
    %v2575 = vunpack.c.h.b16 %v221
    %v2576 = vunpack.c.l.b16 %v222
    %v2577 = vunpack.c.h.b16 %v222
    %v2578 = vunpack.c.l.b16 %v223
    %v2579 = vunpack.c.h.b16 %v223
    %v2580 = vunpack.c.l.b16 %v224
    %v2581 = vunpack.c.h.b16 %v224
    %v2582 = vunpack.c.l.b16 %v225
    %v2583 = vunpack.c.h.b16 %v225
    %v2584 = vunpack.c.l.b16 %v226
    %v2585 = vunpack.c.h.b16 %v226
    %v2586 = vunpack.c.l.b16 %v227
    %v2587 = vunpack.c.h.b16 %v227
    %v2588 = vunpack.c.l.b16 %v228
    %v2589 = vunpack.c.h.b16 %v228
    %v2590 = vunpack.c.l.b16 %v229
    %v2591 = vunpack.c.h.b16 %v229
    %v2592 = vunpack.c.l.b16 %v230
    %v2593 = vunpack.c.h.b16 %v230
    %v2594 = vunpack.c.l.b16 %v231
    %v2595 = vunpack.c.h.b16 %v231
    %v2596 = vunpack.c.l.b16 %v232
    %v2597 = vunpack.c.h.b16 %v232
    %v2598 = vunpack.c.l.b16 %v233
    %v2599 = vunpack.c.h.b16 %v233
    %v2600 = vunpack.c.l.b16 %v234
    %v2601 = vunpack.c.h.b16 %v234
    %v2602 = vunpack.c.l.b16 %v235
    %v2603 = vunpack.c.h.b16 %v235
    %v2604 = vunpack.c.l.b16 %v236
    %v2605 = vunpack.c.h.b16 %v236
    %v2606 = vunpack.c.l.b16 %v237
    %v2607 = vunpack.c.h.b16 %v237
    %v2608 = vunpack.c.l.b16 %v238
    %v2609 = vunpack.c.h.b16 %v238
    %v2610 = vunpack.c.l.b16 %v239
    %v2611 = vunpack.c.h.b16 %v239
    %v2612 = vunpack.c.l.b16 %v240
    %v2613 = vunpack.c.h.b16 %v240
    %v2614 = vunpack.c.l.b16 %v241
    %v2615 = vunpack.c.h.b16 %v241
    %v2616 = vunpack.c.l.b16 %v242
    %v2617 = vunpack.c.h.b16 %v242
    %v2618 = vunpack.c.l.b16 %v243
    %v2619 = vunpack.c.h.b16 %v243
    %v2620 = vunpack.c.l.b16 %v244
    %v2621 = vunpack.c.h.b16 %v244
    %v2622 = vunpack.c.l.b16 %v245
    %v2623 = vunpack.c.h.b16 %v245
    %v2624 = vunpack.c.l.b16 %v246
    %v2625 = vunpack.c.h.b16 %v246
    %v2626 = vunpack.c.l.b16 %v247
    %v2627 = vunpack.c.h.b16 %v247
    %v2628 = vunpack.c.l.b16 %v248
    %v2629 = vunpack.c.h.b16 %v248
    %v2630 = vunpack.c.l.b16 %v249
    %v2631 = vunpack.c.h.b16 %v249
    %v2632 = vunpack.c.l.b16 %v250
    %v2633 = vunpack.c.h.b16 %v250
    %v2634 = vunpack.c.l.b16 %v251
    %v2635 = vunpack.c.h.b16 %v251
    %v2636 = vunpack.c.l.b16 %v252
    %v2637 = vunpack.c.h.b16 %v252
    %v2638 = vunpack.c.l.b16 %v253
    %v2639 = vunpack.c.h.b16 %v253
    %v2640 = vunpack.c.l.b16 %v254
    %v2641 = vunpack.c.h.b16 %v254
    %v2642 = vunpack.c.l.b16 %v255
    %v2643 = vunpack.c.h.b16 %v255
    %v2644 = vunpack.c.l.b16 %v256
    %v2645 = vunpack.c.h.b16 %v256
    %v2646 = vunpack.c.l.b16 %v257
    %v2647 = vunpack.c.h.b16 %v257
    %v2648 = vunpack.c.l.b16 %v258
    %v2649 = vunpack.c.h.b16 %v258
    %v2650 = vunpack.c.l.b16 %v259
    %v2651 = vunpack.c.h.b16 %v259
    %v2652 = vunpack.c.l.b16 %v260
    %v2653 = vunpack.c.h.b16 %v260
    %v2654 = vunpack.c.l.b16 %v261
    %v2655 = vunpack.c.h.b16 %v261
    %v2656 = vunpack.c.l.b16 %v262
    %v2657 = vunpack.c.h.b16 %v262
    %v2658 = vunpack.c.l.b16 %v263
    %v2659 = vunpack.c.h.b16 %v263
    %v2660 = vunpack.c.l.b16 %v264
    %v2661 = vunpack.c.h.b16 %v264
    %v2662 = vunpack.c.l.b16 %v265
    %v2663 = vunpack.c.h.b16 %v265
    %v2664 = vunpack.c.l.b16 %v266
    %v2665 = vunpack.c.h.b16 %v266
    %v2666 = vunpack.c.l.b16 %v267
    %v2667 = vunpack.c.h.b16 %v267
    %v2668 = vunpack.c.l.b16 %v268
    %v2669 = vunpack.c.h.b16 %v268
    %v2670 = vunpack.c.l.b16 %v269
    %v2671 = vunpack.c.h.b16 %v269
    %v2672 = vunpack.c.l.b16 %v270
    %v2673 = vunpack.c.h.b16 %v270
    %v2674 = vunpack.c.l.b16 %v271
    %v2675 = vunpack.c.h.b16 %v271
    %v2676 = vunpack.c.l.b16 %v272
    %v2677 = vunpack.c.h.b16 %v272
    %v2678 = vunpack.c.l.b16 %v273
    %v2679 = vunpack.c.h.b16 %v273
    %v2680 = vunpack.c.l.b16 %v274
    %v2681 = vunpack.c.h.b16 %v274
    %v2682 = vunpack.c.l.b16 %v275
    %v2683 = vunpack.c.h.b16 %v275
    %v2684 = vunpack.c.l.b16 %v276
    %v2685 = vunpack.c.h.b16 %v276
    %v2686 = vunpack.c.l.b16 %v277
    %v2687 = vunpack.c.h.b16 %v277
    %v2688 = vunpack.c.l.b16 %v278
    %v2689 = vunpack.c.h.b16 %v278
    %v2690 = vunpack.c.l.b16 %v279
    %v2691 = vunpack.c.h.b16 %v279
    %v2692 = vunpack.c.l.b16 %v280
    %v2693 = vunpack.c.h.b16 %v280
    %v2694 = vunpack.c.l.b16 %v281
    %v2695 = vunpack.c.h.b16 %v281
    %v2696 = vunpack.c.l.b16 %v282
    %v2697 = vunpack.c.h.b16 %v282
    %v2698 = vunpack.c.l.b16 %v283
    %v2699 = vunpack.c.h.b16 %v283
    %v2700 = vunpack.c.l.b16 %v284
    %v2701 = vunpack.c.h.b16 %v284
    %v2702 = vunpack.c.l.b16 %v285
    %v2703 = vunpack.c.h.b16 %v285
    %v2704 = vunpack.c.l.b16 %v286
    %v2705 = vunpack.c.h.b16 %v286
    %v2706 = vunpack.c.l.b16 %v287
    %v2707 = vunpack.c.h.b16 %v287
    %v2708 = vunpack.c.l.b16 %v288
    %v2709 = vunpack.c.h.b16 %v288
    %v2710 = vunpack.c.l.b16 %v289
    %v2711 = vunpack.c.h.b16 %v289
    %v2712 = vunpack.c.l.b16 %v290
    %v2713 = vunpack.c.h.b16 %v290
    %v2714 = vunpack.c.l.b16 %v291
    %v2715 = vunpack.c.h.b16 %v291
    %v2716 = vunpack.c.l.b16 %v292
    %v2717 = vunpack.c.h.b16 %v292
    %v2718 = vunpack.c.l.b16 %v293
    %v2719 = vunpack.c.h.b16 %v293
    %v2720 = vunpack.c.l.b16 %v294
    %v2721 = vunpack.c.h.b16 %v294
    %v2722 = vunpack.c.l.b16 %v295
    %v2723 = vunpack.c.h.b16 %v295
    %v2724 = vunpack.c.l.b16 %v296
    %v2725 = vunpack.c.h.b16 %v296
    %v2726 = vunpack.c.l.b16 %v297
    %v2727 = vunpack.c.h.b16 %v297
    %v2728 = vunpack.c.l.b16 %v298
    %v2729 = vunpack.c.h.b16 %v298
    %v2730 = vunpack.c.l.b16 %v299
    %v2731 = vunpack.c.h.b16 %v299
    %v2732 = vunpack.c.l.b16 %v300
    %v2733 = vunpack.c.h.b16 %v300
    %v2734 = vunpack.c.l.b16 %v301
    %v2735 = vunpack.c.h.b16 %v301
    %v2736 = vunpack.c.l.b16 %v302
    %v2737 = vunpack.c.h.b16 %v302
    %v2738 = vunpack.c.l.b16 %v303
    %v2739 = vunpack.c.h.b16 %v303
    %v2740 = vunpack.c.l.b16 %v304
    %v2741 = vunpack.c.h.b16 %v304
    %v2742 = vunpack.c.l.b16 %v305
    %v2743 = vunpack.c.h.b16 %v305
    %v2744 = vunpack.c.l.b16 %v306
    %v2745 = vunpack.c.h.b16 %v306
    %v2746 = vunpack.c.l.b16 %v307
    %v2747 = vunpack.c.h.b16 %v307
    %v2748 = vunpack.c.l.b16 %v308
    %v2749 = vunpack.c.h.b16 %v308
    %v2750 = vunpack.c.l.b16 %v309
    %v2751 = vunpack.c.h.b16 %v309
    %v2752 = vunpack.c.l.b16 %v310
    %v2753 = vunpack.c.h.b16 %v310
    %v2754 = vunpack.c.l.b16 %v311
    %v2755 = vunpack.c.h.b16 %v311
    %v2756 = vunpack.c.l.b16 %v312
    %v2757 = vunpack.c.h.b16 %v312
    %v2758 = vunpack.c.l.b16 %v313
    %v2759 = vunpack.c.h.b16 %v313
    %v2760 = vunpack.c.l.b16 %v314
    %v2761 = vunpack.c.h.b16 %v314
    %v2762 = vunpack.c.l.b16 %v315
    %v2763 = vunpack.c.h.b16 %v315
    %v2764 = vunpack.c.l.b16 %v316
    %v2765 = vunpack.c.h.b16 %v316
    %v2766 = vunpack.c.l.b16 %v317
    %v2767 = vunpack.c.h.b16 %v317
    %v2768 = vunpack.c.l.b16 %v318
    %v2769 = vunpack.c.h.b16 %v318
    %v2770 = vunpack.c.l.b16 %v319
    %v2771 = vunpack.c.h.b16 %v319
    %v2772 = vunpack.c.l.b16 %v320
    %v2773 = vunpack.c.h.b16 %v320
    %v2774 = vunpack.c.l.b16 %v321
    %v2775 = vunpack.c.h.b16 %v321
    %v2776 = vunpack.c.l.b16 %v322
    %v2777 = vunpack.c.h.b16 %v322
    %v2778 = vunpack.c.l.b16 %v323
    %v2779 = vunpack.c.h.b16 %v323
    %v2780 = vunpack.c.l.b16 %v324
    %v2781 = vunpack.c.h.b16 %v324
    %v2782 = vunpack.c.l.b16 %v325
    %v2783 = vunpack.c.h.b16 %v325
    %v2784 = vunpack.c.l.b16 %v326
    %v2785 = vunpack.c.h.b16 %v326
    %v2786 = vunpack.c.l.b16 %v327
    %v2787 = vunpack.c.h.b16 %v327
    %v2788 = vunpack.c.l.b16 %v328
    %v2789 = vunpack.c.h.b16 %v328
    %v2790 = vunpack.c.l.b16 %v329
    %v2791 = vunpack.c.h.b16 %v329
    %v2792 = vunpack.c.l.b16 %v330
    %v2793 = vunpack.c.h.b16 %v330
    %v2794 = vunpack.c.l.b16 %v331
    %v2795 = vunpack.c.h.b16 %v331
    %v2796 = vunpack.c.l.b16 %v332
    %v2797 = vunpack.c.h.b16 %v332
    %v2798 = vunpack.c.l.b16 %v333
    %v2799 = vunpack.c.h.b16 %v333
    %v2800 = vunpack.c.l.b16 %v334
    %v2801 = vunpack.c.h.b16 %v334
    %v2802 = vunpack.c.l.b16 %v335
    %v2803 = vunpack.c.h.b16 %v335
    %v2804 = vunpack.c.l.b16 %v336
    %v2805 = vunpack.c.h.b16 %v336
    %v2806 = vunpack.c.l.b16 %v337
    %v2807 = vunpack.c.h.b16 %v337
    %v2808 = vunpack.c.l.b16 %v338
    %v2809 = vunpack.c.h.b16 %v338
    %v2810 = vunpack.c.l.b16 %v339
    %v2811 = vunpack.c.h.b16 %v339
    %v2812 = vunpack.c.l.b16 %v340
    %v2813 = vunpack.c.h.b16 %v340
    %v2814 = vunpack.c.l.b16 %v341
    %v2815 = vunpack.c.h.b16 %v341
    %v2816 = vunpack.c.l.b16 %v342
    %v2817 = vunpack.c.h.b16 %v342
    %v2818 = vunpack.c.l.b16 %v343
    %v2819 = vunpack.c.h.b16 %v343
    %v2820 = vunpack.c.l.b16 %v344
    %v2821 = vunpack.c.h.b16 %v344
    %v2822 = vunpack.c.l.b16 %v345
    %v2823 = vunpack.c.h.b16 %v345
    %v2824 = vunpack.c.l.b16 %v346
    %v2825 = vunpack.c.h.b16 %v346
    %v2826 = vunpack.c.l.b16 %v347
    %v2827 = vunpack.c.h.b16 %v347
    %v2828 = vunpack.c.l.b16 %v348
    %v2829 = vunpack.c.h.b16 %v348
    %v2830 = vunpack.c.l.b16 %v349
    %v2831 = vunpack.c.h.b16 %v349
    %v2832 = vunpack.c.l.b16 %v350
    %v2833 = vunpack.c.h.b16 %v350
    %v2834 = vunpack.c.l.b16 %v351
    %v2835 = vunpack.c.h.b16 %v351
    %v2836 = vunpack.c.l.b16 %v352
    %v2837 = vunpack.c.h.b16 %v352
    %v2838 = vunpack.c.l.b16 %v353
    %v2839 = vunpack.c.h.b16 %v353
    %v2840 = vunpack.c.l.b16 %v354
    %v2841 = vunpack.c.h.b16 %v354
    %v2842 = vunpack.c.l.b16 %v355
    %v2843 = vunpack.c.h.b16 %v355
    %v2844 = vunpack.c.l.b16 %v356
    %v2845 = vunpack.c.h.b16 %v356
    %v2846 = vunpack.c.l.b16 %v357
    %v2847 = vunpack.c.h.b16 %v357
    %v2848 = vunpack.c.l.b16 %v358
    %v2849 = vunpack.c.h.b16 %v358
    %v2850 = vunpack.c.l.b16 %v359
    %v2851 = vunpack.c.h.b16 %v359
    %v2852 = vunpack.c.l.b16 %v360
    %v2853 = vunpack.c.h.b16 %v360
    %v2854 = vunpack.c.l.b16 %v361
    %v2855 = vunpack.c.h.b16 %v361
    %v2856 = vunpack.c.l.b16 %v362
    %v2857 = vunpack.c.h.b16 %v362
    %v2858 = vunpack.c.l.b16 %v363
    %v2859 = vunpack.c.h.b16 %v363
    %v2860 = vunpack.c.l.b16 %v364
    %v2861 = vunpack.c.h.b16 %v364
    %v2862 = vunpack.c.l.b16 %v365
    %v2863 = vunpack.c.h.b16 %v365
    %v2864 = vunpack.c.l.b16 %v366
    %v2865 = vunpack.c.h.b16 %v366
    %v2866 = vunpack.c.l.b16 %v367
    %v2867 = vunpack.c.h.b16 %v367
    %v2868 = vunpack.c.l.b16 %v368
    %v2869 = vunpack.c.h.b16 %v368
    %v2870 = vunpack.c.l.b16 %v369
    %v2871 = vunpack.c.h.b16 %v369
    %v2872 = vunpack.c.l.b16 %v370
    %v2873 = vunpack.c.h.b16 %v370
    %v2874 = vunpack.c.l.b16 %v371
    %v2875 = vunpack.c.h.b16 %v371
    %v2876 = vunpack.c.l.b16 %v372
    %v2877 = vunpack.c.h.b16 %v372
    %v2878 = vunpack.c.l.b16 %v373
    %v2879 = vunpack.c.h.b16 %v373
    %v2880 = vunpack.c.l.b16 %v374
    %v2881 = vunpack.c.h.b16 %v374
    %v2882 = vunpack.c.l.b16 %v375
    %v2883 = vunpack.c.h.b16 %v375
    %v2884 = vunpack.c.l.b16 %v376
    %v2885 = vunpack.c.h.b16 %v376
    %v2886 = vunpack.c.l.b16 %v377
    %v2887 = vunpack.c.h.b16 %v377
    %v2888 = vunpack.c.l.b16 %v378
    %v2889 = vunpack.c.h.b16 %v378
    %v2890 = vunpack.c.l.b16 %v379
    %v2891 = vunpack.c.h.b16 %v379
    %v2892 = vunpack.c.l.b16 %v380
    %v2893 = vunpack.c.h.b16 %v380
    %v2894 = vunpack.c.l.b16 %v381
    %v2895 = vunpack.c.h.b16 %v381
    %v2896 = vunpack.c.l.b16 %v382
    %v2897 = vunpack.c.h.b16 %v382
    %v2898 = vunpack.c.l.b16 %v383
    %v2899 = vunpack.c.h.b16 %v383
    %v2900 = vunpack.c.l.b16 %v384
    %v2901 = vunpack.c.h.b16 %v384
    %v2902 = vunpack.c.l.b16 %v385
    %v2903 = vunpack.c.h.b16 %v385
    %v2904 = vunpack.c.l.b16 %v386
    %v2905 = vunpack.c.h.b16 %v386
    %v2906 = vunpack.c.l.b16 %v387
    %v2907 = vunpack.c.h.b16 %v387
    %v2908 = vunpack.c.l.b16 %v388
    %v2909 = vunpack.c.h.b16 %v388
    %v2910 = vunpack.c.l.b16 %v389
    %v2911 = vunpack.c.h.b16 %v389
    %v2912 = vunpack.c.l.b16 %v390
    %v2913 = vunpack.c.h.b16 %v390
    %v2914 = vunpack.c.l.b16 %v391
    %v2915 = vunpack.c.h.b16 %v391
    %v2916 = vunpack.c.l.b16 %v392
    %v2917 = vunpack.c.h.b16 %v392
    %v2918 = vunpack.c.l.b16 %v393
    %v2919 = vunpack.c.h.b16 %v393
    %v2920 = vunpack.c.l.b16 %v394
    %v2921 = vunpack.c.h.b16 %v394
    %v2922 = vunpack.c.l.b16 %v395
    %v2923 = vunpack.c.h.b16 %v395
    %v2924 = vunpack.c.l.b16 %v396
    %v2925 = vunpack.c.h.b16 %v396
    %v2926 = vunpack.c.l.b16 %v397
    %v2927 = vunpack.c.h.b16 %v397
    %v2928 = vunpack.c.l.b16 %v398
    %v2929 = vunpack.c.h.b16 %v398
    %v2930 = vunpack.c.l.b16 %v399
    %v2931 = vunpack.c.h.b16 %v399
    %v2932 = vunpack.c.l.b16 %v400
    %v2933 = vunpack.c.h.b16 %v400
    %v2934 = vunpack.c.l.b16 %v401
    %v2935 = vunpack.c.h.b16 %v401
    %v2936 = vunpack.c.l.b16 %v402
    %v2937 = vunpack.c.h.b16 %v402
    %v2938 = vunpack.c.l.b16 %v403
    %v2939 = vunpack.c.h.b16 %v403
    %v2940 = vunpack.c.l.b16 %v404
    %v2941 = vunpack.c.h.b16 %v404
    %v2942 = vunpack.c.l.b16 %v405
    %v2943 = vunpack.c.h.b16 %v405
    %v2944 = vunpack.c.l.b16 %v406
    %v2945 = vunpack.c.h.b16 %v406
    %v2946 = vunpack.c.l.b16 %v407
    %v2947 = vunpack.c.h.b16 %v407
    %v2948 = vunpack.c.l.b16 %v408
    %v2949 = vunpack.c.h.b16 %v408
    %v2950 = vunpack.c.l.b16 %v409
    %v2951 = vunpack.c.h.b16 %v409
    %v2952 = vunpack.c.l.b16 %v410
    %v2953 = vunpack.c.h.b16 %v410
    %v2954 = vunpack.c.l.b16 %v411
    %v2955 = vunpack.c.h.b16 %v411
    %v2956 = vunpack.c.l.b16 %v412
    %v2957 = vunpack.c.h.b16 %v412
    %v2958 = vunpack.c.l.b16 %v413
    %v2959 = vunpack.c.h.b16 %v413
    %v2960 = vunpack.c.l.b16 %v414
    %v2961 = vunpack.c.h.b16 %v414
    %v2962 = vunpack.c.l.b16 %v415
    %v2963 = vunpack.c.h.b16 %v415
    %v2964 = vunpack.c.l.b16 %v416
    %v2965 = vunpack.c.h.b16 %v416
    %v2966 = vunpack.c.l.b16 %v417
    %v2967 = vunpack.c.h.b16 %v417
    %v2968 = vunpack.c.l.b16 %v418
    %v2969 = vunpack.c.h.b16 %v418
    %v2970 = vunpack.c.l.b16 %v419
    %v2971 = vunpack.c.h.b16 %v419
    %v2972 = vunpack.c.l.b16 %v420
    %v2973 = vunpack.c.h.b16 %v420
    %v2974 = vunpack.c.l.b16 %v421
    %v2975 = vunpack.c.h.b16 %v421
    %v2976 = vunpack.c.l.b16 %v422
    %v2977 = vunpack.c.h.b16 %v422
    %v2978 = vunpack.c.l.b16 %v423
    %v2979 = vunpack.c.h.b16 %v423
    %v2980 = vunpack.c.l.b16 %v424
    %v2981 = vunpack.c.h.b16 %v424
    %v2982 = vunpack.c.l.b16 %v425
    %v2983 = vunpack.c.h.b16 %v425
    %v2984 = vunpack.c.l.b16 %v426
    %v2985 = vunpack.c.h.b16 %v426
    %v2986 = vunpack.c.l.b16 %v427
    %v2987 = vunpack.c.h.b16 %v427
    %v2988 = vunpack.c.l.b16 %v428
    %v2989 = vunpack.c.h.b16 %v428
    %v2990 = vunpack.c.l.b16 %v429
    %v2991 = vunpack.c.h.b16 %v429
    %v2992 = vunpack.c.l.b16 %v430
    %v2993 = vunpack.c.h.b16 %v430
    %v2994 = vunpack.c.l.b16 %v431
    %v2995 = vunpack.c.h.b16 %v431
    %v2996 = vunpack.c.l.b16 %v432
    %v2997 = vunpack.c.h.b16 %v432
    %v2998 = vunpack.c.l.b16 %v433
    %v2999 = vunpack.c.h.b16 %v433
    %v3000 = vunpack.c.l.b16 %v434
    %v3001 = vunpack.c.h.b16 %v434
    %v3002 = vunpack.c.l.b16 %v435
    %v3003 = vunpack.c.h.b16 %v435
    %v3004 = vunpack.c.l.b16 %v436
    %v3005 = vunpack.c.h.b16 %v436
    %v3006 = vunpack.c.l.b16 %v437
    %v3007 = vunpack.c.h.b16 %v437
    %v3008 = vunpack.c.l.b16 %v438
    %v3009 = vunpack.c.h.b16 %v438
    %v3010 = vunpack.c.l.b16 %v439
    %v3011 = vunpack.c.h.b16 %v439
    %v3012 = vunpack.c.l.b16 %v440
    %v3013 = vunpack.c.h.b16 %v440
    %v3014 = vunpack.c.l.b16 %v441
    %v3015 = vunpack.c.h.b16 %v441
    %v3016 = vunpack.c.l.b16 %v442
    %v3017 = vunpack.c.h.b16 %v442
    %v3018 = vunpack.c.l.b16 %v443
    %v3019 = vunpack.c.h.b16 %v443
    %v3020 = vunpack.c.l.b16 %v444
    %v3021 = vunpack.c.h.b16 %v444
    %v3022 = vunpack.c.l.b16 %v445
    %v3023 = vunpack.c.h.b16 %v445
    %v3024 = vunpack.c.l.b16 %v446
    %v3025 = vunpack.c.h.b16 %v446
    %v3026 = vunpack.c.l.b16 %v447
    %v3027 = vunpack.c.h.b16 %v447
    %v3028 = vunpack.c.l.b16 %v448
    %v3029 = vunpack.c.h.b16 %v448
    %v3030 = vunpack.c.l.b16 %v449
    %v3031 = vunpack.c.h.b16 %v449
    %v3032 = vunpack.c.l.b16 %v450
    %v3033 = vunpack.c.h.b16 %v450
    %v3034 = vunpack.c.l.b16 %v451
    %v3035 = vunpack.c.h.b16 %v451
    %v3036 = vunpack.c.l.b16 %v452
    %v3037 = vunpack.c.h.b16 %v452
    %v3038 = vunpack.c.l.b16 %v453
    %v3039 = vunpack.c.h.b16 %v453
    %v3040 = vunpack.c.l.b16 %v454
    %v3041 = vunpack.c.h.b16 %v454
    %v3042 = vunpack.c.l.b16 %v455
    %v3043 = vunpack.c.h.b16 %v455
    %v3044 = vunpack.c.l.b16 %v456
    %v3045 = vunpack.c.h.b16 %v456
    %v3046 = vunpack.c.l.b16 %v457
    %v3047 = vunpack.c.h.b16 %v457
    %v3048 = vunpack.c.l.b16 %v458
    %v3049 = vunpack.c.h.b16 %v458
    %v3050 = vunpack.c.l.b16 %v459
    %v3051 = vunpack.c.h.b16 %v459
    %v3052 = vunpack.c.l.b16 %v460
    %v3053 = vunpack.c.h.b16 %v460
    %v3054 = vunpack.c.l.b16 %v461
    %v3055 = vunpack.c.h.b16 %v461
    %v3056 = vunpack.c.l.b16 %v462
    %v3057 = vunpack.c.h.b16 %v462
    %v3058 = vunpack.c.l.b16 %v463
    %v3059 = vunpack.c.h.b16 %v463
    %v3060 = vunpack.c.l.b16 %v464
    %v3061 = vunpack.c.h.b16 %v464
    %v3062 = vunpack.c.l.b16 %v465
    %v3063 = vunpack.c.h.b16 %v465
    %v3064 = vunpack.c.l.b16 %v466
    %v3065 = vunpack.c.h.b16 %v466
    %v3066 = vunpack.c.l.b16 %v467
    %v3067 = vunpack.c.h.b16 %v467
    %v3068 = vunpack.c.l.b16 %v468
    %v3069 = vunpack.c.h.b16 %v468
    %v3070 = vunpack.c.l.b16 %v469
    %v3071 = vunpack.c.h.b16 %v469
    %v3072 = vunpack.c.l.b16 %v470
    %v3073 = vunpack.c.h.b16 %v470
    %v3074 = vunpack.c.l.b16 %v471
    %v3075 = vunpack.c.h.b16 %v471
    %v3076 = vunpack.c.l.b16 %v472
    %v3077 = vunpack.c.h.b16 %v472
    %v3078 = vunpack.c.l.b16 %v473
    %v3079 = vunpack.c.h.b16 %v473
    %v3080 = vunpack.c.l.b16 %v474
    %v3081 = vunpack.c.h.b16 %v474
    %v3082 = vunpack.c.l.b16 %v475
    %v3083 = vunpack.c.h.b16 %v475
    %v3084 = vunpack.c.l.b16 %v476
    %v3085 = vunpack.c.h.b16 %v476
    %v3086 = vunpack.c.l.b16 %v477
    %v3087 = vunpack.c.h.b16 %v477
    %v3088 = vunpack.c.l.b16 %v478
    %v3089 = vunpack.c.h.b16 %v478
    %v3090 = vunpack.c.l.b16 %v479
    %v3091 = vunpack.c.h.b16 %v479
    %v3092 = vunpack.c.l.b16 %v480
    %v3093 = vunpack.c.h.b16 %v480
    %v3094 = vunpack.c.l.b16 %v481
    %v3095 = vunpack.c.h.b16 %v481
    %v3096 = vunpack.c.l.b16 %v482
    %v3097 = vunpack.c.h.b16 %v482
    %v3098 = vunpack.c.l.b16 %v483
    %v3099 = vunpack.c.h.b16 %v483
    %v3100 = vunpack.c.l.b16 %v484
    %v3101 = vunpack.c.h.b16 %v484
    %v3102 = vunpack.c.l.b16 %v485
    %v3103 = vunpack.c.h.b16 %v485
    %v3104 = vunpack.c.l.b16 %v486
    %v3105 = vunpack.c.h.b16 %v486
    %v3106 = vunpack.c.l.b16 %v487
    %v3107 = vunpack.c.h.b16 %v487
    %v3108 = vunpack.c.l.b16 %v488
    %v3109 = vunpack.c.h.b16 %v488
    %v3110 = vunpack.c.l.b16 %v489
    %v3111 = vunpack.c.h.b16 %v489
    %v3112 = vunpack.c.l.b16 %v490
    %v3113 = vunpack.c.h.b16 %v490
    %v3114 = vunpack.c.l.b16 %v491
    %v3115 = vunpack.c.h.b16 %v491
    %v3116 = vunpack.c.l.b16 %v492
    %v3117 = vunpack.c.h.b16 %v492
    %v3118 = vunpack.c.l.b16 %v493
    %v3119 = vunpack.c.h.b16 %v493
    %v3120 = vunpack.c.l.b16 %v494
    %v3121 = vunpack.c.h.b16 %v494
    %v3122 = vunpack.c.l.b16 %v495
    %v3123 = vunpack.c.h.b16 %v495
    %v3124 = vunpack.c.l.b16 %v496
    %v3125 = vunpack.c.h.b16 %v496
    %v3126 = vunpack.c.l.b16 %v497
    %v3127 = vunpack.c.h.b16 %v497
    %v3128 = vunpack.c.l.b16 %v498
    %v3129 = vunpack.c.h.b16 %v498
    %v3130 = vunpack.c.l.b16 %v499
    %v3131 = vunpack.c.h.b16 %v499
    %v3132 = vunpack.c.l.b16 %v500
    %v3133 = vunpack.c.h.b16 %v500
    %v3134 = vunpack.c.l.b16 %v501
    %v3135 = vunpack.c.h.b16 %v501
    %v3136 = vunpack.c.l.b16 %v502
    %v3137 = vunpack.c.h.b16 %v502
    %v3138 = vunpack.c.l.b16 %v503
    %v3139 = vunpack.c.h.b16 %v503
    %v3140 = vunpack.c.l.b16 %v504
    %v3141 = vunpack.c.h.b16 %v504
    %v3142 = vunpack.c.l.b16 %v505
    %v3143 = vunpack.c.h.b16 %v505
    %v3144 = vunpack.c.l.b16 %v506
    %v3145 = vunpack.c.h.b16 %v506
    %v3146 = vunpack.c.l.b16 %v507
    %v3147 = vunpack.c.h.b16 %v507
    %v3148 = vunpack.c.l.b16 %v508
    %v3149 = vunpack.c.h.b16 %v508
    %v3150 = vunpack.c.l.b16 %v509
    %v3151 = vunpack.c.h.b16 %v509
    %v3152 = vunpack.c.l.b16 %v510
    %v3153 = vunpack.c.h.b16 %v510
    %v3154 = vunpack.c.l.b16 %v511
    %v3155 = vunpack.c.h.b16 %v511
    %v3156 = vunpack.c.l.b16 %v512
    %v3157 = vunpack.c.h.b16 %v512
    %v3158 = vunpack.c.l.b16 %v513
    %v3159 = vunpack.c.h.b16 %v513
    %v3160 = vunpack.c.l.b16 %v514
    %v3161 = vunpack.c.h.b16 %v514
    %v3162 = vunpack.c.l.b16 %v515
    %v3163 = vunpack.c.h.b16 %v515
    %v3164 = vunpack.c.l.b16 %v516
    %v3165 = vunpack.c.h.b16 %v516
    %v3166 = vunpack.c.l.b16 %v517
    %v3167 = vunpack.c.h.b16 %v517
    %v3168 = vunpack.c.l.b16 %v518
    %v3169 = vunpack.c.h.b16 %v518
    %v3170 = vunpack.c.l.b16 %v519
    %v3171 = vunpack.c.h.b16 %v519
    %v3172 = vunpack.c.l.b16 %v520
    %v3173 = vunpack.c.h.b16 %v520
    %v3174 = vunpack.c.l.b16 %v521
    %v3175 = vunpack.c.h.b16 %v521
    %v3176 = vunpack.c.l.b16 %v522
    %v3177 = vunpack.c.h.b16 %v522
    %v3178 = vunpack.c.l.b16 %v523
    %v3179 = vunpack.c.h.b16 %v523
    %v3180 = vunpack.c.l.b16 %v524
    %v3181 = vunpack.c.h.b16 %v524
    %v3182 = vunpack.c.l.b16 %v525
    %v3183 = vunpack.c.h.b16 %v525
    %v3184 = vunpack.c.l.b16 %v526
    %v3185 = vunpack.c.h.b16 %v526
    %v3186 = vunpack.c.l.b16 %v527
    %v3187 = vunpack.c.h.b16 %v527
    %v3188 = vunpack.c.l.b16 %v528
    %v3189 = vunpack.c.h.b16 %v528
    %v3190 = vunpack.c.l.b16 %v529
    %v3191 = vunpack.c.h.b16 %v529
    %v3192 = vunpack.c.l.b16 %v530
    %v3193 = vunpack.c.h.b16 %v530
    %v3194 = vunpack.c.l.b16 %v531
    %v3195 = vunpack.c.h.b16 %v531
    %v3196 = vunpack.c.l.b16 %v532
    %v3197 = vunpack.c.h.b16 %v532
    %v3198 = vunpack.c.l.b16 %v533
    %v3199 = vunpack.c.h.b16 %v533
    %v3200 = vunpack.c.l.b16 %v534
    %v3201 = vunpack.c.h.b16 %v534
    %v3202 = vunpack.c.l.b16 %v535
    %v3203 = vunpack.c.h.b16 %v535
    %v3204 = vunpack.c.l.b16 %v536
    %v3205 = vunpack.c.h.b16 %v536
    %v3206 = vunpack.c.l.b16 %v537
    %v3207 = vunpack.c.h.b16 %v537
    %v3208 = vunpack.c.l.b16 %v538
    %v3209 = vunpack.c.h.b16 %v538
    %v3210 = vunpack.c.l.b16 %v539
    %v3211 = vunpack.c.h.b16 %v539
    %v3212 = vunpack.c.l.b16 %v540
    %v3213 = vunpack.c.h.b16 %v540
    %v3214 = vunpack.c.l.b16 %v541
    %v3215 = vunpack.c.h.b16 %v541
    %v3216 = vunpack.c.l.b16 %v542
    %v3217 = vunpack.c.h.b16 %v542
    %v3218 = vunpack.c.l.b16 %v543
    %v3219 = vunpack.c.h.b16 %v543
    %v3220 = vunpack.c.l.b16 %v544
    %v3221 = vunpack.c.h.b16 %v544
    %v3222 = vunpack.c.l.b16 %v545
    %v3223 = vunpack.c.h.b16 %v545
    %v3224 = vunpack.c.l.b16 %v546
    %v3225 = vunpack.c.h.b16 %v546
    %v3226 = vunpack.c.l.b16 %v547
    %v3227 = vunpack.c.h.b16 %v547
    %v3228 = vunpack.c.l.b16 %v548
    %v3229 = vunpack.c.h.b16 %v548
    %v3230 = vunpack.c.l.b16 %v549
    %v3231 = vunpack.c.h.b16 %v549
    %v3232 = vunpack.c.l.b16 %v550
    %v3233 = vunpack.c.h.b16 %v550
    %v3234 = vunpack.c.l.b16 %v551
    %v3235 = vunpack.c.h.b16 %v551
    %v3236 = vunpack.c.l.b16 %v552
    %v3237 = vunpack.c.h.b16 %v552
    %v3238 = vunpack.c.l.b16 %v553
    %v3239 = vunpack.c.h.b16 %v553
    %v3240 = vunpack.c.l.b16 %v554
    %v3241 = vunpack.c.h.b16 %v554
    %v3242 = vunpack.c.l.b16 %v555
    %v3243 = vunpack.c.h.b16 %v555
    %v3244 = vunpack.c.l.b16 %v556
    %v3245 = vunpack.c.h.b16 %v556
    %v3246 = vunpack.c.l.b16 %v557
    %v3247 = vunpack.c.h.b16 %v557
    %v3248 = vunpack.c.l.b16 %v558
    %v3249 = vunpack.c.h.b16 %v558
    %v3250 = vunpack.c.l.b16 %v559
    %v3251 = vunpack.c.h.b16 %v559
    %v3252 = vunpack.c.l.b16 %v560
    %v3253 = vunpack.c.h.b16 %v560
    %v3254 = vunpack.c.l.b16 %v561
    %v3255 = vunpack.c.h.b16 %v561
    %v3256 = vunpack.c.l.b16 %v562
    %v3257 = vunpack.c.h.b16 %v562
    %v3258 = vunpack.c.l.b16 %v563
    %v3259 = vunpack.c.h.b16 %v563
    %v3260 = vunpack.c.l.b16 %v564
    %v3261 = vunpack.c.h.b16 %v564
    %v3262 = vunpack.c.l.b16 %v565
    %v3263 = vunpack.c.h.b16 %v565
    %v3264 = vunpack.c.l.b16 %v566
    %v3265 = vunpack.c.h.b16 %v566
    %v3266 = vunpack.c.l.b16 %v567
    %v3267 = vunpack.c.h.b16 %v567
    %v3268 = vunpack.c.l.b16 %v568
    %v3269 = vunpack.c.h.b16 %v568
    %v3270 = vunpack.c.l.b16 %v569
    %v3271 = vunpack.c.h.b16 %v569
    %v3272 = vunpack.c.l.b16 %v570
    %v3273 = vunpack.c.h.b16 %v570
    %v3274 = vunpack.c.l.b16 %v571
    %v3275 = vunpack.c.h.b16 %v571
    %v3276 = vunpack.c.l.b16 %v572
    %v3277 = vunpack.c.h.b16 %v572
    %v3278 = vunpack.c.l.b16 %v573
    %v3279 = vunpack.c.h.b16 %v573
    %v3280 = vunpack.c.l.b16 %v574
    %v3281 = vunpack.c.h.b16 %v574
    %v3282 = vunpack.c.l.b16 %v575
    %v3283 = vunpack.c.h.b16 %v575
    %v3284 = vunpack.c.l.b16 %v576
    %v3285 = vunpack.c.h.b16 %v576
    %v3286 = vunpack.c.l.b16 %v577
    %v3287 = vunpack.c.h.b16 %v577
    %v3288 = vunpack.c.l.b16 %v578
    %v3289 = vunpack.c.h.b16 %v578
    %v3290 = vunpack.c.l.b16 %v579
    %v3291 = vunpack.c.h.b16 %v579
    %v3292 = vunpack.c.l.b16 %v580
    %v3293 = vunpack.c.h.b16 %v580
    %v3294 = vunpack.c.l.b16 %v581
    %v3295 = vunpack.c.h.b16 %v581
    %v3296 = vunpack.c.l.b16 %v582
    %v3297 = vunpack.c.h.b16 %v582
    %v3298 = vunpack.c.l.b16 %v583
    %v3299 = vunpack.c.h.b16 %v583
    %v3300 = vunpack.c.l.b16 %v584
    %v3301 = vunpack.c.h.b16 %v584
    %v3302 = vunpack.c.l.b16 %v585
    %v3303 = vunpack.c.h.b16 %v585
    %v3304 = vunpack.c.l.b16 %v586
    %v3305 = vunpack.c.h.b16 %v586
    %v3306 = vunpack.c.l.b16 %v587
    %v3307 = vunpack.c.h.b16 %v587
    %v3308 = vunpack.c.l.b16 %v588
    %v3309 = vunpack.c.h.b16 %v588
    %v3310 = vunpack.c.l.b16 %v589
    %v3311 = vunpack.c.h.b16 %v589
    %v3312 = vunpack.c.l.b16 %v590
    %v3313 = vunpack.c.h.b16 %v590
    %v3314 = vunpack.c.l.b16 %v591
    %v3315 = vunpack.c.h.b16 %v591
    %v3316 = vunpack.c.l.b16 %v592
    %v3317 = vunpack.c.h.b16 %v592
    %v3318 = vunpack.c.l.b16 %v593
    %v3319 = vunpack.c.h.b16 %v593
    %v3320 = vunpack.c.l.b16 %v594
    %v3321 = vunpack.c.h.b16 %v594
    %v3322 = vunpack.c.l.b16 %v595
    %v3323 = vunpack.c.h.b16 %v595
    %v3324 = vunpack.c.l.b16 %v596
    %v3325 = vunpack.c.h.b16 %v596
    %v3326 = vunpack.c.l.b16 %v597
    %v3327 = vunpack.c.h.b16 %v597
    %v3328 = vunpack.c.l.b16 %v598
    %v3329 = vunpack.c.h.b16 %v598
    %v3330 = vunpack.c.l.b16 %v599
    %v3331 = vunpack.c.h.b16 %v599
    %v3332 = vunpack.c.l.b16 %v600
    %v3333 = vunpack.c.h.b16 %v600
    %v3334 = vunpack.c.l.b16 %v601
    %v3335 = vunpack.c.h.b16 %v601
    %v3336 = vunpack.c.l.b16 %v602
    %v3337 = vunpack.c.h.b16 %v602
    %v3338 = vunpack.c.l.b16 %v603
    %v3339 = vunpack.c.h.b16 %v603
    %v3340 = vunpack.c.l.b16 %v604
    %v3341 = vunpack.c.h.b16 %v604
    %v3342 = vunpack.c.l.b16 %v605
    %v3343 = vunpack.c.h.b16 %v605
    %v3344 = vunpack.c.l.b16 %v606
    %v3345 = vunpack.c.h.b16 %v606
    %v3346 = vunpack.c.l.b16 %v607
    %v3347 = vunpack.c.h.b16 %v607
    %v3348 = vunpack.c.l.b16 %v608
    %v3349 = vunpack.c.h.b16 %v608
    %v3350 = vunpack.c.l.b16 %v609
    %v3351 = vunpack.c.h.b16 %v609
    %v3352 = vunpack.c.l.b16 %v610
    %v3353 = vunpack.c.h.b16 %v610
    %v3354 = vunpack.c.l.b16 %v611
    %v3355 = vunpack.c.h.b16 %v611
    %v3356 = vunpack.c.l.b16 %v612
    %v3357 = vunpack.c.h.b16 %v612
    %v3358 = vunpack.c.l.b16 %v613
    %v3359 = vunpack.c.h.b16 %v613
    %v3360 = vunpack.c.l.b16 %v614
    %v3361 = vunpack.c.h.b16 %v614
    %v3362 = vunpack.c.l.b16 %v615
    %v3363 = vunpack.c.h.b16 %v615
    %v3364 = vunpack.c.l.b16 %v616
    %v3365 = vunpack.c.h.b16 %v616
    %v3366 = vunpack.c.l.b16 %v617
    %v3367 = vunpack.c.h.b16 %v617
    %v3368 = vunpack.c.l.b16 %v618
    %v3369 = vunpack.c.h.b16 %v618
    %v3370 = vunpack.c.l.b16 %v619
    %v3371 = vunpack.c.h.b16 %v619
    %v3372 = vunpack.c.l.b16 %v620
    %v3373 = vunpack.c.h.b16 %v620
    %v3374 = vunpack.c.l.b16 %v621
    %v3375 = vunpack.c.h.b16 %v621
    %v3376 = vunpack.c.l.b16 %v622
    %v3377 = vunpack.c.h.b16 %v622
    %v3378 = vunpack.c.l.b16 %v623
    %v3379 = vunpack.c.h.b16 %v623
    %v3380 = vunpack.c.l.b16 %v624
    %v3381 = vunpack.c.h.b16 %v624
    %v3382 = vunpack.c.l.b16 %v625
    %v3383 = vunpack.c.h.b16 %v625
    %v3384 = vunpack.c.l.b16 %v626
    %v3385 = vunpack.c.h.b16 %v626
    %v3386 = vunpack.c.l.b16 %v627
    %v3387 = vunpack.c.h.b16 %v627
    %v3388 = vunpack.c.l.b16 %v628
    %v3389 = vunpack.c.h.b16 %v628
    %v3390 = vunpack.c.l.b16 %v629
    %v3391 = vunpack.c.h.b16 %v629
    %v3392 = vunpack.c.l.b16 %v630
    %v3393 = vunpack.c.h.b16 %v630
    %v3394 = vunpack.c.l.b16 %v631
    %v3395 = vunpack.c.h.b16 %v631
    %v3396 = vunpack.c.l.b16 %v632
    %v3397 = vunpack.c.h.b16 %v632
    %v3398 = vunpack.c.l.b16 %v633
    %v3399 = vunpack.c.h.b16 %v633
    %v3400 = vunpack.c.l.b16 %v634
    %v3401 = vunpack.c.h.b16 %v634
    %v3402 = vunpack.c.l.b16 %v635
    %v3403 = vunpack.c.h.b16 %v635
    %v3404 = vunpack.c.l.b16 %v636
    %v3405 = vunpack.c.h.b16 %v636
    %v3406 = vunpack.c.l.b16 %v637
    %v3407 = vunpack.c.h.b16 %v637
    %v3408 = vunpack.c.l.b16 %v638
    %v3409 = vunpack.c.h.b16 %v638
    %v3410 = vunpack.c.l.b16 %v639
    %v3411 = vunpack.c.h.b16 %v639
    %v3412 = vunpack.c.l.b16 %v640
    %v3413 = vunpack.c.h.b16 %v640
    %v3414 = vunpack.c.l.b16 %v641
    %v3415 = vunpack.c.h.b16 %v641
    %v3416 = vunpack.c.l.b16 %v642
    %v3417 = vunpack.c.h.b16 %v642
    %v3418 = vunpack.c.l.b16 %v643
    %v3419 = vunpack.c.h.b16 %v643
    %v3420 = vunpack.c.l.b16 %v644
    %v3421 = vunpack.c.h.b16 %v644
    %v3422 = vunpack.c.l.b16 %v645
    %v3423 = vunpack.c.h.b16 %v645
    %v3424 = vunpack.c.l.b16 %v646
    %v3425 = vunpack.c.h.b16 %v646
    %v3426 = vunpack.c.l.b16 %v647
    %v3427 = vunpack.c.h.b16 %v647
    %v3428 = vunpack.c.l.b16 %v648
    %v3429 = vunpack.c.h.b16 %v648
    %v3430 = vunpack.c.l.b16 %v649
    %v3431 = vunpack.c.h.b16 %v649
    %v3432 = vunpack.c.l.b16 %v650
    %v3433 = vunpack.c.h.b16 %v650
    %v3434 = vunpack.c.l.b16 %v651
    %v3435 = vunpack.c.h.b16 %v651
    %v3436 = vunpack.c.l.b16 %v652
    %v3437 = vunpack.c.h.b16 %v652
    %v3438 = vunpack.c.l.b16 %v653
    %v3439 = vunpack.c.h.b16 %v653
    %v3440 = vunpack.c.l.b16 %v654
    %v3441 = vunpack.c.h.b16 %v654
    %v3442 = vunpack.c.l.b16 %v655
    %v3443 = vunpack.c.h.b16 %v655
    %v3444 = vunpack.c.l.b16 %v656
    %v3445 = vunpack.c.h.b16 %v656
    %v3446 = vunpack.c.l.b16 %v657
    %v3447 = vunpack.c.h.b16 %v657
    %v3448 = vunpack.c.l.b16 %v658
    %v3449 = vunpack.c.h.b16 %v658
    %v3450 = vunpack.c.l.b16 %v659
    %v3451 = vunpack.c.h.b16 %v659
    %v3452 = vunpack.c.l.b16 %v660
    %v3453 = vunpack.c.h.b16 %v660
    %v3454 = vunpack.c.l.b16 %v661
    %v3455 = vunpack.c.h.b16 %v661
    %v3456 = vunpack.c.l.b16 %v662
    %v3457 = vunpack.c.h.b16 %v662
    %v3458 = vunpack.c.l.b16 %v663
    %v3459 = vunpack.c.h.b16 %v663
    %v3460 = vunpack.c.l.b16 %v664
    %v3461 = vunpack.c.h.b16 %v664
    %v3462 = vunpack.c.l.b16 %v665
    %v3463 = vunpack.c.h.b16 %v665
    %v3464 = vunpack.c.l.b16 %v666
    %v3465 = vunpack.c.h.b16 %v666
    %v3466 = vunpack.c.l.b16 %v667
    %v3467 = vunpack.c.h.b16 %v667
    %v3468 = vunpack.c.l.b16 %v668
    %v3469 = vunpack.c.h.b16 %v668
    %v3470 = vunpack.c.l.b16 %v669
    %v3471 = vunpack.c.h.b16 %v669
    %v3472 = vunpack.c.l.b16 %v670
    %v3473 = vunpack.c.h.b16 %v670
    %v3474 = vunpack.c.l.b16 %v671
    %v3475 = vunpack.c.h.b16 %v671
    %v3476 = vunpack.c.l.b16 %v672
    %v3477 = vunpack.c.h.b16 %v672
    %v3478 = vunpack.c.l.b16 %v673
    %v3479 = vunpack.c.h.b16 %v673
    %v3480 = vunpack.c.l.b16 %v674
    %v3481 = vunpack.c.h.b16 %v674
    %v3482 = vunpack.c.l.b16 %v675
    %v3483 = vunpack.c.h.b16 %v675
    %v3484 = vunpack.c.l.b16 %v676
    %v3485 = vunpack.c.h.b16 %v676
    %v3486 = vunpack.c.l.b16 %v677
    %v3487 = vunpack.c.h.b16 %v677
    %v3488 = vunpack.c.l.b16 %v678
    %v3489 = vunpack.c.h.b16 %v678
    %v3490 = vunpack.c.l.b16 %v679
    %v3491 = vunpack.c.h.b16 %v679
    %v3492 = vunpack.c.l.b16 %v680
    %v3493 = vunpack.c.h.b16 %v680
    %v3494 = vunpack.c.l.b16 %v681
    %v3495 = vunpack.c.h.b16 %v681
    %v3496 = vunpack.c.l.b16 %v682
    %v3497 = vunpack.c.h.b16 %v682
    %v3498 = vunpack.c.l.b16 %v683
    %v3499 = vunpack.c.h.b16 %v683
    %v3500 = vunpack.c.l.b16 %v684
    %v3501 = vunpack.c.h.b16 %v684
    %v3502 = vunpack.c.l.b16 %v685
    %v3503 = vunpack.c.h.b16 %v685
    %v3504 = vunpack.c.l.b16 %v686
    %v3505 = vunpack.c.h.b16 %v686
    %v3506 = vunpack.c.l.b16 %v687
    %v3507 = vunpack.c.h.b16 %v687
    %v3508 = vunpack.c.l.b16 %v688
    %v3509 = vunpack.c.h.b16 %v688
    %v3510 = vunpack.c.l.b16 %v689
    %v3511 = vunpack.c.h.b16 %v689
    %v3512 = vunpack.c.l.b16 %v690
    %v3513 = vunpack.c.h.b16 %v690
    %v3514 = vunpack.c.l.b16 %v691
    %v3515 = vunpack.c.h.b16 %v691
    %v3516 = vunpack.c.l.b16 %v692
    %v3517 = vunpack.c.h.b16 %v692
    %v3518 = vunpack.c.l.b16 %v693
    %v3519 = vunpack.c.h.b16 %v693
    %v3520 = vunpack.c.l.b16 %v694
    %v3521 = vunpack.c.h.b16 %v694
    %v3522 = vunpack.c.l.b16 %v695
    %v3523 = vunpack.c.h.b16 %v695
    %v3524 = vunpack.c.l.b16 %v696
    %v3525 = vunpack.c.h.b16 %v696
    %v3526 = vunpack.c.l.b16 %v697
    %v3527 = vunpack.c.h.b16 %v697
    %v3528 = vunpack.c.l.b16 %v698
    %v3529 = vunpack.c.h.b16 %v698
    %v3530 = vunpack.c.l.b16 %v699
    %v3531 = vunpack.c.h.b16 %v699
    %v3532 = vunpack.c.l.b16 %v700
    %v3533 = vunpack.c.h.b16 %v700
    %v3534 = vunpack.c.l.b16 %v701
    %v3535 = vunpack.c.h.b16 %v701
    %v3536 = vunpack.c.l.b16 %v702
    %v3537 = vunpack.c.h.b16 %v702
    %v3538 = vunpack.c.l.b16 %v703
    %v3539 = vunpack.c.h.b16 %v703
    %v3540 = vunpack.c.l.b16 %v704
    %v3541 = vunpack.c.h.b16 %v704
    %v3542 = vunpack.c.l.b16 %v705
    %v3543 = vunpack.c.h.b16 %v705
    %v3544 = vunpack.c.l.b16 %v706
    %v3545 = vunpack.c.h.b16 %v706
    %v3546 = vunpack.c.l.b16 %v707
    %v3547 = vunpack.c.h.b16 %v707
    %v3548 = vunpack.c.l.b16 %v708
    %v3549 = vunpack.c.h.b16 %v708
    %v3550 = vunpack.c.l.b16 %v709
    %v3551 = vunpack.c.h.b16 %v709
    %v3552 = vunpack.c.l.b16 %v710
    %v3553 = vunpack.c.h.b16 %v710
    %v3554 = vunpack.c.l.b16 %v711
    %v3555 = vunpack.c.h.b16 %v711
    %v3556 = vunpack.c.l.b16 %v712
    %v3557 = vunpack.c.h.b16 %v712
    %v3558 = vunpack.c.l.b16 %v713
    %v3559 = vunpack.c.h.b16 %v713
    %v3560 = vunpack.c.l.b16 %v714
    %v3561 = vunpack.c.h.b16 %v714
    %v3562 = vunpack.c.l.b16 %v715
    %v3563 = vunpack.c.h.b16 %v715
    %v3564 = vunpack.c.l.b16 %v716
    %v3565 = vunpack.c.h.b16 %v716
    %v3566 = vunpack.c.l.b16 %v717
    %v3567 = vunpack.c.h.b16 %v717
    %v3568 = vunpack.c.l.b16 %v718
    %v3569 = vunpack.c.h.b16 %v718
    %v3570 = vunpack.c.l.b16 %v719
    %v3571 = vunpack.c.h.b16 %v719
    %v3572 = vunpack.c.l.b16 %v720
    %v3573 = vunpack.c.h.b16 %v720
    %v3574 = vunpack.c.l.b16 %v721
    %v3575 = vunpack.c.h.b16 %v721
    %v3576 = vunpack.c.l.b16 %v722
    %v3577 = vunpack.c.h.b16 %v722
    %v3578 = vunpack.c.l.b16 %v723
    %v3579 = vunpack.c.h.b16 %v723
    %v3580 = vunpack.c.l.b16 %v724
    %v3581 = vunpack.c.h.b16 %v724
    %v3582 = vunpack.c.l.b16 %v725
    %v3583 = vunpack.c.h.b16 %v725
    %v3584 = vunpack.c.l.b16 %v726
    %v3585 = vunpack.c.h.b16 %v726
    %v3586 = vunpack.c.l.b16 %v727
    %v3587 = vunpack.c.h.b16 %v727
    %v3588 = vunpack.c.l.b16 %v728
    %v3589 = vunpack.c.h.b16 %v728
    %v3590 = vunpack.c.l.b16 %v729
    %v3591 = vunpack.c.h.b16 %v729
    %v3592 = vunpack.c.l.b16 %v730
    %v3593 = vunpack.c.h.b16 %v730
    %v3594 = vunpack.c.l.b16 %v731
    %v3595 = vunpack.c.h.b16 %v731
    %v3596 = vunpack.c.l.b16 %v732
    %v3597 = vunpack.c.h.b16 %v732
    %v3598 = vunpack.c.l.b16 %v733
    %v3599 = vunpack.c.h.b16 %v733
    %v3600 = vunpack.c.l.b16 %v734
    %v3601 = vunpack.c.h.b16 %v734
    %v3602 = vunpack.c.l.b16 %v735
    %v3603 = vunpack.c.h.b16 %v735
    %v3604 = vunpack.c.l.b16 %v736
    %v3605 = vunpack.c.h.b16 %v736
    %v3606 = vunpack.c.l.b16 %v737
    %v3607 = vunpack.c.h.b16 %v737
    %v3608 = vunpack.c.l.b16 %v738
    %v3609 = vunpack.c.h.b16 %v738
    %v3610 = vunpack.c.l.b16 %v739
    %v3611 = vunpack.c.h.b16 %v739
    %v3612 = vunpack.c.l.b16 %v740
    %v3613 = vunpack.c.h.b16 %v740
    %v3614 = vunpack.c.l.b16 %v741
    %v3615 = vunpack.c.h.b16 %v741
    %v3616 = vunpack.c.l.b16 %v742
    %v3617 = vunpack.c.h.b16 %v742
    %v3618 = vunpack.c.l.b16 %v743
    %v3619 = vunpack.c.h.b16 %v743
    %v3620 = vunpack.c.l.b16 %v744
    %v3621 = vunpack.c.h.b16 %v744
    %v3622 = vunpack.c.l.b16 %v745
    %v3623 = vunpack.c.h.b16 %v745
    %v3624 = vunpack.c.l.b16 %v746
    %v3625 = vunpack.c.h.b16 %v746
    %v3626 = vunpack.c.l.b16 %v747
    %v3627 = vunpack.c.h.b16 %v747
    %v3628 = vunpack.c.l.b16 %v748
    %v3629 = vunpack.c.h.b16 %v748
    %v3630 = vunpack.c.l.b16 %v749
    %v3631 = vunpack.c.h.b16 %v749
    %v3632 = vunpack.c.l.b16 %v750
    %v3633 = vunpack.c.h.b16 %v750
    %v3634 = vunpack.c.l.b16 %v751
    %v3635 = vunpack.c.h.b16 %v751
    %v3636 = vunpack.c.l.b16 %v752
    %v3637 = vunpack.c.h.b16 %v752
    %v3638 = vunpack.c.l.b16 %v753
    %v3639 = vunpack.c.h.b16 %v753
    %v3640 = vunpack.c.l.b16 %v754
    %v3641 = vunpack.c.h.b16 %v754
    %v3642 = vunpack.c.l.b16 %v755
    %v3643 = vunpack.c.h.b16 %v755
    %v3644 = vunpack.c.l.b16 %v756
    %v3645 = vunpack.c.h.b16 %v756
    %v3646 = vunpack.c.l.b16 %v757
    %v3647 = vunpack.c.h.b16 %v757
    %v3648 = vunpack.c.l.b16 %v758
    %v3649 = vunpack.c.h.b16 %v758
    %v3650 = vunpack.c.l.b16 %v759
    %v3651 = vunpack.c.h.b16 %v759
    %v3652 = vunpack.c.l.b16 %v760
    %v3653 = vunpack.c.h.b16 %v760
    %v3654 = vunpack.c.l.b16 %v761
    %v3655 = vunpack.c.h.b16 %v761
    %v3656 = vunpack.c.l.b16 %v762
    %v3657 = vunpack.c.h.b16 %v762
    %v3658 = vunpack.c.l.b16 %v763
    %v3659 = vunpack.c.h.b16 %v763
    %v3660 = vunpack.c.l.b16 %v764
    %v3661 = vunpack.c.h.b16 %v764
    %v3662 = vunpack.c.l.b16 %v765
    %v3663 = vunpack.c.h.b16 %v765
    %v3664 = vunpack.c.l.b16 %v766
    %v3665 = vunpack.c.h.b16 %v766
    %v3666 = vunpack.c.l.b16 %v767
    %v3667 = vunpack.c.h.b16 %v767
    %v3668 = vunpack.c.l.b16 %v768
    %v3669 = vunpack.c.h.b16 %v768
    %v3670 = vunpack.c.l.b16 %v769
    %v3671 = vunpack.c.h.b16 %v769
    %v3672 = vunpack.c.l.b16 %v770
    %v3673 = vunpack.c.h.b16 %v770
    %v3674 = vunpack.c.l.b16 %v771
    %v3675 = vunpack.c.h.b16 %v771
    %v3676 = vunpack.c.l.b16 %v772
    %v3677 = vunpack.c.h.b16 %v772
    %v3678 = vunpack.c.l.b16 %v773
    %v3679 = vunpack.c.h.b16 %v773
    %v3680 = vunpack.c.l.b16 %v774
    %v3681 = vunpack.c.h.b16 %v774
    %v3682 = vunpack.c.l.b16 %v775
    %v3683 = vunpack.c.h.b16 %v775
    %v3684 = vunpack.c.l.b16 %v776
    %v3685 = vunpack.c.h.b16 %v776
    %v3686 = vunpack.c.l.b16 %v777
    %v3687 = vunpack.c.h.b16 %v777
    %v3688 = vunpack.c.l.b16 %v778
    %v3689 = vunpack.c.h.b16 %v778
    %v3690 = vunpack.c.l.b16 %v779
    %v3691 = vunpack.c.h.b16 %v779
    %v3692 = vunpack.c.l.b16 %v780
    %v3693 = vunpack.c.h.b16 %v780
    %v3694 = vunpack.c.l.b16 %v781
    %v3695 = vunpack.c.h.b16 %v781
    %v3696 = vunpack.c.l.b16 %v782
    %v3697 = vunpack.c.h.b16 %v782
    %v3698 = vunpack.c.l.b16 %v783
    %v3699 = vunpack.c.h.b16 %v783
    %v3700 = vunpack.c.l.b16 %v784
    %v3701 = vunpack.c.h.b16 %v784
    %v3702 = vunpack.c.l.b16 %v785
    %v3703 = vunpack.c.h.b16 %v785
    %v3704 = vunpack.c.l.b16 %v786
    %v3705 = vunpack.c.h.b16 %v786
    %v3706 = vunpack.c.l.b16 %v787
    %v3707 = vunpack.c.h.b16 %v787
    %v3708 = vunpack.c.l.b16 %v788
    %v3709 = vunpack.c.h.b16 %v788
    %v3710 = vunpack.c.l.b16 %v789
    %v3711 = vunpack.c.h.b16 %v789
    %v3712 = vunpack.c.l.b16 %v790
    %v3713 = vunpack.c.h.b16 %v790
    %v3714 = vunpack.c.l.b16 %v791
    %v3715 = vunpack.c.h.b16 %v791
    %v3716 = vunpack.c.l.b16 %v792
    %v3717 = vunpack.c.h.b16 %v792
    %v3718 = vunpack.c.l.b16 %v793
    %v3719 = vunpack.c.h.b16 %v793
    %v3720 = vunpack.c.l.b16 %v794
    %v3721 = vunpack.c.h.b16 %v794
    %v3722 = vunpack.c.l.b16 %v795
    %v3723 = vunpack.c.h.b16 %v795
    %v3724 = vunpack.c.l.b16 %v796
    %v3725 = vunpack.c.h.b16 %v796
    %v3726 = vunpack.c.l.b16 %v797
    %v3727 = vunpack.c.h.b16 %v797
    %v3728 = vunpack.c.l.b16 %v798
    %v3729 = vunpack.c.h.b16 %v798
    %v3730 = vunpack.c.l.b16 %v799
    %v3731 = vunpack.c.h.b16 %v799
    %v3732 = vunpack.c.l.b16 %v800
    %v3733 = vunpack.c.h.b16 %v800
    %v3734 = vunpack.c.l.b16 %v801
    %v3735 = vunpack.c.h.b16 %v801
    %v3736 = vunpack.c.l.b16 %v802
    %v3737 = vunpack.c.h.b16 %v802
    %v3738 = vunpack.c.l.b16 %v803
    %v3739 = vunpack.c.h.b16 %v803
    %v3740 = vunpack.c.l.b16 %v804
    %v3741 = vunpack.c.h.b16 %v804
    %v3742 = vunpack.c.l.b16 %v805
    %v3743 = vunpack.c.h.b16 %v805
    %v3744 = vunpack.c.l.b16 %v806
    %v3745 = vunpack.c.h.b16 %v806
    %v3746 = vunpack.c.l.b16 %v807
    %v3747 = vunpack.c.h.b16 %v807
    %v3748 = vunpack.c.l.b16 %v808
    %v3749 = vunpack.c.h.b16 %v808
    %v3750 = vunpack.c.l.b16 %v809
    %v3751 = vunpack.c.h.b16 %v809
    %v3752 = vunpack.c.l.b16 %v810
    %v3753 = vunpack.c.h.b16 %v810
    %v3754 = vunpack.c.l.b16 %v811
    %v3755 = vunpack.c.h.b16 %v811
    %v3756 = vunpack.c.l.b16 %v812
    %v3757 = vunpack.c.h.b16 %v812
    %v3758 = vunpack.c.l.b16 %v813
    %v3759 = vunpack.c.h.b16 %v813
    %v3760 = vunpack.c.l.b16 %v814
    %v3761 = vunpack.c.h.b16 %v814
    %v3762 = vunpack.c.l.b16 %v815
    %v3763 = vunpack.c.h.b16 %v815
    %v3764 = vunpack.c.l.b16 %v816
    %v3765 = vunpack.c.h.b16 %v816
    %v3766 = vunpack.c.l.b16 %v817
    %v3767 = vunpack.c.h.b16 %v817
    %v3768 = vunpack.c.l.b16 %v818
    %v3769 = vunpack.c.h.b16 %v818
    %v3770 = vunpack.c.l.b16 %v819
    %v3771 = vunpack.c.h.b16 %v819
    %v3772 = vunpack.c.l.b16 %v820
    %v3773 = vunpack.c.h.b16 %v820
    %v3774 = vunpack.c.l.b16 %v821
    %v3775 = vunpack.c.h.b16 %v821
    %v3776 = vunpack.c.l.b16 %v822
    %v3777 = vunpack.c.h.b16 %v822
    %v3778 = vunpack.c.l.b16 %v823
    %v3779 = vunpack.c.h.b16 %v823
    %v3780 = vunpack.c.l.b16 %v824
    %v3781 = vunpack.c.h.b16 %v824
    %v3782 = vunpack.c.l.b16 %v825
    %v3783 = vunpack.c.h.b16 %v825
    %v3784 = vunpack.c.l.b16 %v826
    %v3785 = vunpack.c.h.b16 %v826
    %v3786 = vunpack.c.l.b16 %v827
    %v3787 = vunpack.c.h.b16 %v827
    %v3788 = vunpack.c.l.b16 %v828
    %v3789 = vunpack.c.h.b16 %v828
    %v3790 = vunpack.c.l.b16 %v829
    %v3791 = vunpack.c.h.b16 %v829
    %v3792 = vunpack.c.l.b16 %v830
    %v3793 = vunpack.c.h.b16 %v830
    %v3794 = vunpack.c.l.b16 %v831
    %v3795 = vunpack.c.h.b16 %v831
    %v3796 = vunpack.c.l.b16 %v832
    %v3797 = vunpack.c.h.b16 %v832
    %v3798 = vunpack.c.l.b16 %v833
    %v3799 = vunpack.c.h.b16 %v833
    %v3800 = vunpack.c.l.b16 %v834
    %v3801 = vunpack.c.h.b16 %v834
    %v3802 = vunpack.c.l.b16 %v835
    %v3803 = vunpack.c.h.b16 %v835
    %v3804 = vunpack.c.l.b16 %v836
    %v3805 = vunpack.c.h.b16 %v836
    %v3806 = vunpack.c.l.b16 %v837
    %v3807 = vunpack.c.h.b16 %v837
    %v3808 = vunpack.c.l.b16 %v838
    %v3809 = vunpack.c.h.b16 %v838
    %v3810 = vunpack.c.l.b16 %v839
    %v3811 = vunpack.c.h.b16 %v839
    %v3812 = vunpack.c.l.b16 %v840
    %v3813 = vunpack.c.h.b16 %v840
    %v3814 = vunpack.c.l.b16 %v841
    %v3815 = vunpack.c.h.b16 %v841
    %v3816 = vunpack.c.l.b16 %v842
    %v3817 = vunpack.c.h.b16 %v842
    %v3818 = vunpack.c.l.b16 %v843
    %v3819 = vunpack.c.h.b16 %v843
    %v3820 = vunpack.c.l.b16 %v844
    %v3821 = vunpack.c.h.b16 %v844
    %v3822 = vunpack.c.l.b16 %v845
    %v3823 = vunpack.c.h.b16 %v845
    %v3824 = vunpack.c.l.b16 %v846
    %v3825 = vunpack.c.h.b16 %v846
    %v3826 = vunpack.c.l.b16 %v847
    %v3827 = vunpack.c.h.b16 %v847
    %v3828 = vunpack.c.l.b16 %v848
    %v3829 = vunpack.c.h.b16 %v848
    %v3830 = vunpack.c.l.b16 %v849
    %v3831 = vunpack.c.h.b16 %v849
    %v3832 = vunpack.c.l.b16 %v850
    %v3833 = vunpack.c.h.b16 %v850
    %v3834 = vunpack.c.l.b16 %v851
    %v3835 = vunpack.c.h.b16 %v851
    %v3836 = vunpack.c.l.b16 %v852
    %v3837 = vunpack.c.h.b16 %v852
    %v3838 = vunpack.c.l.b16 %v853
    %v3839 = vunpack.c.h.b16 %v853
    %v3840 = vunpack.c.l.b16 %v854
    %v3841 = vunpack.c.h.b16 %v854
    %v3842 = vunpack.c.l.b16 %v855
    %v3843 = vunpack.c.h.b16 %v855
    %v3844 = vunpack.c.l.b16 %v856
    %v3845 = vunpack.c.h.b16 %v856
    %v3846 = vunpack.c.l.b16 %v857
    %v3847 = vunpack.c.h.b16 %v857
    %v3848 = vunpack.c.l.b16 %v858
    %v3849 = vunpack.c.h.b16 %v858
    %v3850 = vunpack.c.l.b16 %v859
    %v3851 = vunpack.c.h.b16 %v859
    %v3852 = vunpack.c.l.b16 %v860
    %v3853 = vunpack.c.h.b16 %v860
    %v3854 = vunpack.c.l.b16 %v861
    %v3855 = vunpack.c.h.b16 %v861
    %v3856 = vunpack.c.l.b16 %v862
    %v3857 = vunpack.c.h.b16 %v862
    %v3858 = vunpack.c.l.b16 %v863
    %v3859 = vunpack.c.h.b16 %v863
    %v3860 = vunpack.c.l.b16 %v864
    %v3861 = vunpack.c.h.b16 %v864
    %v3862 = vunpack.c.l.b16 %v865
    %v3863 = vunpack.c.h.b16 %v865
    %v3864 = vunpack.c.l.b16 %v866
    %v3865 = vunpack.c.h.b16 %v866
    %v3866 = vunpack.c.l.b16 %v867
    %v3867 = vunpack.c.h.b16 %v867
    %v3868 = vunpack.c.l.b16 %v868
    %v3869 = vunpack.c.h.b16 %v868
    %v3870 = vunpack.c.l.b16 %v869
    %v3871 = vunpack.c.h.b16 %v869
    %v3872 = vunpack.c.l.b16 %v870
    %v3873 = vunpack.c.h.b16 %v870
    %v3874 = vunpack.c.l.b16 %v871
    %v3875 = vunpack.c.h.b16 %v871
    %v3876 = vunpack.c.l.b16 %v872
    %v3877 = vunpack.c.h.b16 %v872
    %v3878 = vunpack.c.l.b16 %v873
    %v3879 = vunpack.c.h.b16 %v873
    %v3880 = vunpack.c.l.b16 %v874
    %v3881 = vunpack.c.h.b16 %v874
    %v3882 = vunpack.c.l.b16 %v875
    %v3883 = vunpack.c.h.b16 %v875
    %v3884 = vunpack.c.l.b16 %v876
    %v3885 = vunpack.c.h.b16 %v876
    %v3886 = vunpack.c.l.b16 %v877
    %v3887 = vunpack.c.h.b16 %v877
    %v3888 = vunpack.c.l.b16 %v878
    %v3889 = vunpack.c.h.b16 %v878
    %v3890 = vunpack.c.l.b16 %v879
    %v3891 = vunpack.c.h.b16 %v879
    %v3892 = vunpack.c.l.b16 %v880
    %v3893 = vunpack.c.h.b16 %v880
    %v3894 = vunpack.c.l.b16 %v881
    %v3895 = vunpack.c.h.b16 %v881
    %v3896 = vunpack.c.l.b16 %v882
    %v3897 = vunpack.c.h.b16 %v882
    %v3898 = vunpack.c.l.b16 %v883
    %v3899 = vunpack.c.h.b16 %v883
    %v3900 = vunpack.c.l.b16 %v884
    %v3901 = vunpack.c.h.b16 %v884
    %v3902 = vunpack.c.l.b16 %v885
    %v3903 = vunpack.c.h.b16 %v885
    %v3904 = vunpack.c.l.b16 %v886
    %v3905 = vunpack.c.h.b16 %v886
    %v3906 = vunpack.c.l.b16 %v887
    %v3907 = vunpack.c.h.b16 %v887
    %v3908 = vunpack.c.l.b16 %v888
    %v3909 = vunpack.c.h.b16 %v888
    %v3910 = vunpack.c.l.b16 %v889
    %v3911 = vunpack.c.h.b16 %v889
    %v3912 = vunpack.c.l.b16 %v890
    %v3913 = vunpack.c.h.b16 %v890
    %v3914 = vunpack.c.l.b16 %v891
    %v3915 = vunpack.c.h.b16 %v891
    %v3916 = vunpack.c.l.b16 %v892
    %v3917 = vunpack.c.h.b16 %v892
    %v3918 = vunpack.c.l.b16 %v893
    %v3919 = vunpack.c.h.b16 %v893
    %v3920 = vunpack.c.l.b16 %v894
    %v3921 = vunpack.c.h.b16 %v894
    %v3922 = vunpack.c.l.b16 %v895
    %v3923 = vunpack.c.h.b16 %v895
    %v3924 = vunpack.c.l.b16 %v896
    %v3925 = vunpack.c.h.b16 %v896
    %v3926 = vunpack.c.l.b16 %v897
    %v3927 = vunpack.c.h.b16 %v897
    %v3928 = vunpack.c.l.b16 %v898
    %v3929 = vunpack.c.h.b16 %v898
    %v3930 = vunpack.c.l.b16 %v899
    %v3931 = vunpack.c.h.b16 %v899
    %v3932 = vunpack.c.l.b16 %v900
    %v3933 = vunpack.c.h.b16 %v900
    %v3934 = vunpack.c.l.b16 %v901
    %v3935 = vunpack.c.h.b16 %v901
    %v3936 = vunpack.c.l.b16 %v902
    %v3937 = vunpack.c.h.b16 %v902
    %v3938 = vunpack.c.l.b16 %v903
    %v3939 = vunpack.c.h.b16 %v903
    %v3940 = vunpack.c.l.b16 %v904
    %v3941 = vunpack.c.h.b16 %v904
    %v3942 = vunpack.c.l.b16 %v905
    %v3943 = vunpack.c.h.b16 %v905
    %v3944 = vunpack.c.l.b16 %v906
    %v3945 = vunpack.c.h.b16 %v906
    %v3946 = vunpack.c.l.b16 %v907
    %v3947 = vunpack.c.h.b16 %v907
    %v3948 = vunpack.c.l.b16 %v908
    %v3949 = vunpack.c.h.b16 %v908
    %v3950 = vunpack.c.l.b16 %v909
    %v3951 = vunpack.c.h.b16 %v909
    %v3952 = vunpack.c.l.b16 %v910
    %v3953 = vunpack.c.h.b16 %v910
    %v3954 = vunpack.c.l.b16 %v911
    %v3955 = vunpack.c.h.b16 %v911
    %v3956 = vunpack.c.l.b16 %v912
    %v3957 = vunpack.c.h.b16 %v912
    %v3958 = vunpack.c.l.b16 %v913
    %v3959 = vunpack.c.h.b16 %v913
    %v3960 = vunpack.c.l.b16 %v914
    %v3961 = vunpack.c.h.b16 %v914
    %v3962 = vunpack.c.l.b16 %v915
    %v3963 = vunpack.c.h.b16 %v915
    %v3964 = vunpack.c.l.b16 %v916
    %v3965 = vunpack.c.h.b16 %v916
    %v3966 = vunpack.c.l.b16 %v917
    %v3967 = vunpack.c.h.b16 %v917
    %v3968 = vunpack.c.l.b16 %v918
    %v3969 = vunpack.c.h.b16 %v918
    %v3970 = vunpack.c.l.b16 %v919
    %v3971 = vunpack.c.h.b16 %v919
    %v3972 = vunpack.c.l.b16 %v920
    %v3973 = vunpack.c.h.b16 %v920
    %v3974 = vunpack.c.l.b16 %v921
    %v3975 = vunpack.c.h.b16 %v921
    %v3976 = vunpack.c.l.b16 %v922
    %v3977 = vunpack.c.h.b16 %v922
    %v3978 = vunpack.c.l.b16 %v923
    %v3979 = vunpack.c.h.b16 %v923
    %v3980 = vunpack.c.l.b16 %v924
    %v3981 = vunpack.c.h.b16 %v924
    %v3982 = vunpack.c.l.b16 %v925
    %v3983 = vunpack.c.h.b16 %v925
    %v3984 = vunpack.c.l.b16 %v926
    %v3985 = vunpack.c.h.b16 %v926
    %v3986 = vunpack.c.l.b16 %v927
    %v3987 = vunpack.c.h.b16 %v927
    %v3988 = vunpack.c.l.b16 %v928
    %v3989 = vunpack.c.h.b16 %v928
    %v3990 = vunpack.c.l.b16 %v929
    %v3991 = vunpack.c.h.b16 %v929
    %v3992 = vunpack.c.l.b16 %v930
    %v3993 = vunpack.c.h.b16 %v930
    %v3994 = vunpack.c.l.b16 %v931
    %v3995 = vunpack.c.h.b16 %v931
    %v3996 = vunpack.c.l.b16 %v932
    %v3997 = vunpack.c.h.b16 %v932
    %v3998 = vunpack.c.l.b16 %v933
    %v3999 = vunpack.c.h.b16 %v933
    %v4000 = vunpack.c.l.b16 %v934
    %v4001 = vunpack.c.h.b16 %v934
    %v4002 = vunpack.c.l.b16 %v935
    %v4003 = vunpack.c.h.b16 %v935
    %v4004 = vunpack.c.l.b16 %v936
    %v4005 = vunpack.c.h.b16 %v936
    %v4006 = vunpack.c.l.b16 %v937
    %v4007 = vunpack.c.h.b16 %v937
    %v4008 = vunpack.c.l.b16 %v938
    %v4009 = vunpack.c.h.b16 %v938
    %v4010 = vunpack.c.l.b16 %v939
    %v4011 = vunpack.c.h.b16 %v939
    %v4012 = vunpack.c.l.b16 %v940
    %v4013 = vunpack.c.h.b16 %v940
    %v4014 = vunpack.c.l.b16 %v941
    %v4015 = vunpack.c.h.b16 %v941
    %v4016 = vunpack.c.l.b16 %v942
    %v4017 = vunpack.c.h.b16 %v942
    %v4018 = vunpack.c.l.b16 %v943
    %v4019 = vunpack.c.h.b16 %v943
    %v4020 = vunpack.c.l.b16 %v944
    %v4021 = vunpack.c.h.b16 %v944
    %v4022 = vunpack.c.l.b16 %v945
    %v4023 = vunpack.c.h.b16 %v945
    %v4024 = vunpack.c.l.b16 %v946
    %v4025 = vunpack.c.h.b16 %v946
    %v4026 = vunpack.c.l.b16 %v947
    %v4027 = vunpack.c.h.b16 %v947
    %v4028 = vunpack.c.l.b16 %v948
    %v4029 = vunpack.c.h.b16 %v948
    %v4030 = vunpack.c.l.b16 %v949
    %v4031 = vunpack.c.h.b16 %v949
    %v4032 = vunpack.c.l.b16 %v950
    %v4033 = vunpack.c.h.b16 %v950
    %v4034 = vunpack.c.l.b16 %v951
    %v4035 = vunpack.c.h.b16 %v951
    %v4036 = vunpack.c.l.b16 %v952
    %v4037 = vunpack.c.h.b16 %v952
    %v4038 = vunpack.c.l.b16 %v953
    %v4039 = vunpack.c.h.b16 %v953
    %v4040 = vunpack.c.l.b16 %v954
    %v4041 = vunpack.c.h.b16 %v954
    %v4042 = vunpack.c.l.b16 %v955
    %v4043 = vunpack.c.h.b16 %v955
    %v4044 = vunpack.c.l.b16 %v956
    %v4045 = vunpack.c.h.b16 %v956
    %v4046 = vunpack.c.l.b16 %v957
    %v4047 = vunpack.c.h.b16 %v957
    %v4048 = vunpack.c.l.b16 %v958
    %v4049 = vunpack.c.h.b16 %v958
    %v4050 = vunpack.c.l.b16 %v959
    %v4051 = vunpack.c.h.b16 %v959
    %v4052 = vunpack.c.l.b16 %v960
    %v4053 = vunpack.c.h.b16 %v960
    %v4054 = vunpack.c.l.b16 %v961
    %v4055 = vunpack.c.h.b16 %v961
    %v4056 = vunpack.c.l.b16 %v962
    %v4057 = vunpack.c.h.b16 %v962
    %v4058 = vunpack.c.l.b16 %v963
    %v4059 = vunpack.c.h.b16 %v963
    %v4060 = vunpack.c.l.b16 %v964
    %v4061 = vunpack.c.h.b16 %v964
    %v4062 = vunpack.c.l.b16 %v965
    %v4063 = vunpack.c.h.b16 %v965
    %v4064 = vunpack.c.l.b16 %v966
    %v4065 = vunpack.c.h.b16 %v966
    %v4066 = vunpack.c.l.b16 %v967
    %v4067 = vunpack.c.h.b16 %v967
    %v4068 = vunpack.c.l.b16 %v968
    %v4069 = vunpack.c.h.b16 %v968
    %v4070 = vunpack.c.l.b16 %v969
    %v4071 = vunpack.c.h.b16 %v969
    %v4072 = vunpack.c.l.b16 %v970
    %v4073 = vunpack.c.h.b16 %v970
    %v4074 = vunpack.c.l.b16 %v971
    %v4075 = vunpack.c.h.b16 %v971
    %v4076 = vunpack.c.l.b16 %v972
    %v4077 = vunpack.c.h.b16 %v972
    %v4078 = vunpack.c.l.b16 %v973
    %v4079 = vunpack.c.h.b16 %v973
    %v4080 = vunpack.c.l.b16 %v974
    %v4081 = vunpack.c.h.b16 %v974
    %v4082 = vunpack.c.l.b16 %v975
    %v4083 = vunpack.c.h.b16 %v975
    %v4084 = vunpack.c.l.b16 %v976
    %v4085 = vunpack.c.h.b16 %v976
    %v4086 = vunpack.c.l.b16 %v977
    %v4087 = vunpack.c.h.b16 %v977
    %v4088 = vunpack.c.l.b16 %v978
    %v4089 = vunpack.c.h.b16 %v978
    %v4090 = vunpack.c.l.b16 %v979
    %v4091 = vunpack.c.h.b16 %v979
    %v4092 = vunpack.c.l.b16 %v980
    %v4093 = vunpack.c.h.b16 %v980
    %v4094 = vunpack.c.l.b16 %v981
    %v4095 = vunpack.c.h.b16 %v981
    %v4096 = vunpack.c.l.b16 %v982
    %v4097 = vunpack.c.h.b16 %v982
    %v4098 = vunpack.c.l.b16 %v983
    %v4099 = vunpack.c.h.b16 %v983
    %v4100 = vunpack.c.l.b16 %v984
    %v4101 = vunpack.c.h.b16 %v984
    %v4102 = vunpack.c.l.b16 %v985
    %v4103 = vunpack.c.h.b16 %v985
    %v4104 = vunpack.c.l.b16 %v986
    %v4105 = vunpack.c.h.b16 %v986
    %v4106 = vunpack.c.l.b16 %v987
    %v4107 = vunpack.c.h.b16 %v987
    %v4108 = vunpack.c.l.b16 %v988
    %v4109 = vunpack.c.h.b16 %v988
    %v4110 = vunpack.c.l.b16 %v989
    %v4111 = vunpack.c.h.b16 %v989
    %v4112 = vunpack.c.l.b16 %v990
    %v4113 = vunpack.c.h.b16 %v990
    %v4114 = vunpack.c.l.b16 %v991
    %v4115 = vunpack.c.h.b16 %v991
    %v4116 = vunpack.c.l.b16 %v992
    %v4117 = vunpack.c.h.b16 %v992
    %v4118 = vunpack.c.l.b16 %v993
    %v4119 = vunpack.c.h.b16 %v993
    %v4120 = vunpack.c.l.b16 %v994
    %v4121 = vunpack.c.h.b16 %v994
    %v4122 = vunpack.c.l.b16 %v995
    %v4123 = vunpack.c.h.b16 %v995
    %v4124 = vunpack.c.l.b16 %v996
    %v4125 = vunpack.c.h.b16 %v996
    %v4126 = vunpack.c.l.b16 %v997
    %v4127 = vunpack.c.h.b16 %v997
    %v4128 = vunpack.c.l.b16 %v998
    %v4129 = vunpack.c.h.b16 %v998
    %v4130 = vunpack.c.l.b16 %v999
    %v4131 = vunpack.c.h.b16 %v999
    %v4132 = vunpack.c.l.b16 %v1000
    %v4133 = vunpack.c.h.b16 %v1000
    %v4134 = vunpack.c.l.b16 %v1001
    %v4135 = vunpack.c.h.b16 %v1001
    %v4136 = vunpack.c.l.b16 %v1002
    %v4137 = vunpack.c.h.b16 %v1002
    %v4138 = vunpack.c.l.b16 %v1003
    %v4139 = vunpack.c.h.b16 %v1003
    %v4140 = vunpack.c.l.b16 %v1004
    %v4141 = vunpack.c.h.b16 %v1004
    %v4142 = vunpack.c.l.b16 %v1005
    %v4143 = vunpack.c.h.b16 %v1005
    %v4144 = vunpack.c.l.b16 %v1006
    %v4145 = vunpack.c.h.b16 %v1006
    %v4146 = vunpack.c.l.b16 %v1007
    %v4147 = vunpack.c.h.b16 %v1007
    %v4148 = vunpack.c.l.b16 %v1008
    %v4149 = vunpack.c.h.b16 %v1008
    %v4150 = vunpack.c.l.b16 %v1009
    %v4151 = vunpack.c.h.b16 %v1009
    %v4152 = vunpack.c.l.b16 %v1010
    %v4153 = vunpack.c.h.b16 %v1010
    %v4154 = vunpack.c.l.b16 %v1011
    %v4155 = vunpack.c.h.b16 %v1011
    %v4156 = vunpack.c.l.b16 %v1012
    %v4157 = vunpack.c.h.b16 %v1012
    %v4158 = vunpack.c.l.b16 %v1013
    %v4159 = vunpack.c.h.b16 %v1013
    %v4160 = vunpack.c.l.b16 %v1014
    %v4161 = vunpack.c.h.b16 %v1014
    %v4162 = vunpack.c.l.b16 %v1015
    %v4163 = vunpack.c.h.b16 %v1015
    %v4164 = vunpack.c.l.b16 %v1016
    %v4165 = vunpack.c.h.b16 %v1016
    %v4166 = vunpack.c.l.b16 %v1017
    %v4167 = vunpack.c.h.b16 %v1017
    %v4168 = vunpack.c.l.b16 %v1018
    %v4169 = vunpack.c.h.b16 %v1018
    %v4170 = vunpack.c.l.b16 %v1019
    %v4171 = vunpack.c.h.b16 %v1019
    %v4172 = vunpack.c.l.b16 %v1020
    %v4173 = vunpack.c.h.b16 %v1020
    %v4174 = vunpack.c.l.b16 %v1021
    %v4175 = vunpack.c.h.b16 %v1021
    %v4176 = vunpack.c.l.b16 %v1022
    %v4177 = vunpack.c.h.b16 %v1022
    %v4178 = vunpack.c.l.b16 %v1023
    %v4179 = vunpack.c.h.b16 %v1023
    %v4180 = vunpack.c.l.b16 %v1024
    %v4181 = vunpack.c.h.b16 %v1024
    %v4182 = vunpack.c.l.b16 %v1025
    %v4183 = vunpack.c.h.b16 %v1025
    %v4184 = vunpack.c.l.b16 %v1026
    %v4185 = vunpack.c.h.b16 %v1026
    %v4186 = vunpack.c.l.b16 %v1027
    %v4187 = vunpack.c.h.b16 %v1027
    %v4188 = vunpack.c.l.b16 %v1028
    %v4189 = vunpack.c.h.b16 %v1028
    %v4190 = vunpack.c.l.b16 %v1029
    %v4191 = vunpack.c.h.b16 %v1029
    %v4192 = vunpack.c.l.b16 %v1030
    %v4193 = vunpack.c.h.b16 %v1030
    %v4194 = vunpack.c.l.b16 %v1031
    %v4195 = vunpack.c.h.b16 %v1031
    %v4196 = vunpack.c.l.b16 %v1032
    %v4197 = vunpack.c.h.b16 %v1032
    %v4198 = vunpack.c.l.b16 %v1033
    %v4199 = vunpack.c.h.b16 %v1033
    %v4200 = vunpack.c.l.b16 %v1034
    %v4201 = vunpack.c.h.b16 %v1034
    %v4202 = vunpack.c.l.b16 %v1035
    %v4203 = vunpack.c.h.b16 %v1035
    %v4204 = vunpack.c.l.b16 %v1036
    %v4205 = vunpack.c.h.b16 %v1036
    %v4206 = vunpack.c.l.b16 %v1037
    %v4207 = vunpack.c.h.b16 %v1037
    %v4208 = vunpack.c.l.b16 %v1038
    %v4209 = vunpack.c.h.b16 %v1038
    %v4210 = vunpack.c.l.b16 %v1039
    %v4211 = vunpack.c.h.b16 %v1039
    %v4212 = vunpack.c.l.b16 %v1040
    %v4213 = vunpack.c.h.b16 %v1040
    %v4214 = vunpack.c.l.b16 %v1041
    %v4215 = vunpack.c.h.b16 %v1041
    %v4216 = vunpack.c.l.b16 %v1042
    %v4217 = vunpack.c.h.b16 %v1042
    %v4218 = vunpack.c.l.b16 %v1043
    %v4219 = vunpack.c.h.b16 %v1043
    %v4220 = vunpack.c.l.b16 %v1044
    %v4221 = vunpack.c.h.b16 %v1044
    %v4222 = vunpack.c.l.b16 %v1045
    %v4223 = vunpack.c.h.b16 %v1045
    %v4224 = vunpack.c.l.b16 %v1046
    %v4225 = vunpack.c.h.b16 %v1046
    %v4226 = vunpack.c.l.b16 %v1047
    %v4227 = vunpack.c.h.b16 %v1047
    %v4228 = vunpack.c.l.b16 %v1048
    %v4229 = vunpack.c.h.b16 %v1048
    %v4230 = vunpack.c.l.b16 %v1049
    %v4231 = vunpack.c.h.b16 %v1049
    %v4232 = vunpack.c.l.b16 %v1050
    %v4233 = vunpack.c.h.b16 %v1050
    %v4234 = vunpack.c.l.b16 %v1051
    %v4235 = vunpack.c.h.b16 %v1051
    %v4236 = vunpack.c.l.b16 %v1052
    %v4237 = vunpack.c.h.b16 %v1052
    %v4238 = vunpack.c.l.b16 %v1053
    %v4239 = vunpack.c.h.b16 %v1053
    %v4240 = vunpack.c.l.b16 %v1054
    %v4241 = vunpack.c.h.b16 %v1054
    %v4242 = vunpack.c.l.b16 %v1055
    %v4243 = vunpack.c.h.b16 %v1055
    %v4244 = vunpack.c.l.b16 %v1056
    %v4245 = vunpack.c.h.b16 %v1056
    %v4246 = vunpack.c.l.b16 %v1057
    %v4247 = vunpack.c.h.b16 %v1057
    %v4248 = vunpack.c.l.b16 %v1058
    %v4249 = vunpack.c.h.b16 %v1058
    %v4250 = vunpack.c.l.b16 %v1059
    %v4251 = vunpack.c.h.b16 %v1059
    %v4252 = vunpack.c.l.b16 %v1060
    %v4253 = vunpack.c.h.b16 %v1060
    %v4254 = vunpack.c.l.b16 %v1061
    %v4255 = vunpack.c.h.b16 %v1061
    %v4256 = vunpack.c.l.b16 %v1062
    %v4257 = vunpack.c.h.b16 %v1062
    %v4258 = vunpack.c.l.b16 %v1063
    %v4259 = vunpack.c.h.b16 %v1063
    %v4260 = vunpack.c.l.b16 %v1064
    %v4261 = vunpack.c.h.b16 %v1064
    %v4262 = vunpack.c.l.b16 %v1065
    %v4263 = vunpack.c.h.b16 %v1065
    %v4264 = vunpack.c.l.b16 %v1066
    %v4265 = vunpack.c.h.b16 %v1066
    %v4266 = vunpack.c.l.b16 %v1067
    %v4267 = vunpack.c.h.b16 %v1067
    %v4268 = vunpack.c.l.b16 %v1068
    %v4269 = vunpack.c.h.b16 %v1068
    %v4270 = vunpack.c.l.b16 %v1069
    %v4271 = vunpack.c.h.b16 %v1069
    %v4272 = vunpack.c.l.b16 %v1070
    %v4273 = vunpack.c.h.b16 %v1070
    %v4274 = vunpack.c.l.b16 %v1071
    %v4275 = vunpack.c.h.b16 %v1071
    %v4276 = vunpack.c.l.b16 %v1072
    %v4277 = vunpack.c.h.b16 %v1072
    %v4278 = vunpack.c.l.b16 %v1073
    %v4279 = vunpack.c.h.b16 %v1073
    %v4280 = vunpack.c.l.b16 %v1074
    %v4281 = vunpack.c.h.b16 %v1074
    %v4282 = vunpack.c.l.b16 %v1075
    %v4283 = vunpack.c.h.b16 %v1075
    %v4284 = vunpack.c.l.b16 %v1076
    %v4285 = vunpack.c.h.b16 %v1076
    %v4286 = vunpack.c.l.b16 %v1077
    %v4287 = vunpack.c.h.b16 %v1077
    %v4288 = vunpack.c.l.b16 %v1078
    %v4289 = vunpack.c.h.b16 %v1078
    %v4290 = vunpack.c.l.b16 %v1079
    %v4291 = vunpack.c.h.b16 %v1079
    %v4292 = vunpack.c.l.b16 %v1080
    %v4293 = vunpack.c.h.b16 %v1080
    %v4294 = vunpack.c.l.b16 %v1081
    %v4295 = vunpack.c.h.b16 %v1081
    %v4296 = vunpack.c.l.b16 %v1082
    %v4297 = vunpack.c.h.b16 %v1082
    %v4298 = vunpack.c.l.b16 %v1083
    %v4299 = vunpack.c.h.b16 %v1083
    %v4300 = vunpack.c.l.b16 %v1084
    %v4301 = vunpack.c.h.b16 %v1084
    %v4302 = vunpack.c.l.b16 %v1085
    %v4303 = vunpack.c.h.b16 %v1085
    %v4304 = vunpack.c.l.b16 %v1086
    %v4305 = vunpack.c.h.b16 %v1086
    %v4306 = vunpack.c.l.b16 %v1087
    %v4307 = vunpack.c.h.b16 %v1087
    %v4308 = vunpack.c.l.b16 %v1088
    %v4309 = vunpack.c.h.b16 %v1088
    %v4310 = vunpack.c.l.b16 %v1089
    %v4311 = vunpack.c.h.b16 %v1089
    %v4312 = vunpack.c.l.b16 %v1090
    %v4313 = vunpack.c.h.b16 %v1090
    %v4314 = vunpack.c.l.b16 %v1091
    %v4315 = vunpack.c.h.b16 %v1091
    %v4316 = vunpack.c.l.b16 %v1092
    %v4317 = vunpack.c.h.b16 %v1092
    %v4318 = vunpack.c.l.b16 %v1093
    %v4319 = vunpack.c.h.b16 %v1093
    %v4320 = vunpack.c.l.b16 %v1094
    %v4321 = vunpack.c.h.b16 %v1094
    %v4322 = vunpack.c.l.b16 %v1095
    %v4323 = vunpack.c.h.b16 %v1095
    %v4324 = vunpack.c.l.b16 %v1096
    %v4325 = vunpack.c.h.b16 %v1096
    %v4326 = vunpack.c.l.b16 %v1097
    %v4327 = vunpack.c.h.b16 %v1097
    %v4328 = vunpack.c.l.b16 %v1098
    %v4329 = vunpack.c.h.b16 %v1098
    %v4330 = vunpack.c.l.b16 %v1099
    %v4331 = vunpack.c.h.b16 %v1099
    %v4332 = vpack.c.b16 %v2288, %v2284
    %v4333 = vpack.c.b16 %v2289, %v2285
    %v4334 = vpack.c.b16 %v2290, %v2286
    %v4335 = vpack.c.b16 %v2291, %v2287
    %v4336 = vpack.c.b16 %v2296, %v2292
    %v4337 = vpack.c.b16 %v2297, %v2293
    %v4338 = vpack.c.b16 %v2298, %v2294
    %v4339 = vpack.c.b16 %v2299, %v2295
    %v4340 = vpack.c.b16 %v2304, %v2300
    %v4341 = vpack.c.b16 %v2305, %v2301
    %v4342 = vpack.c.b16 %v2306, %v2302
    %v4343 = vpack.c.b16 %v2307, %v2303
    %v4344 = vpack.c.b16 %v2312, %v2308
    %v4345 = vpack.c.b16 %v2313, %v2309
    %v4346 = vpack.c.b16 %v2314, %v2310
    %v4347 = vpack.c.b16 %v2315, %v2311
    %v4348 = vpack.c.b16 %v2320, %v2316
    %v4349 = vpack.c.b16 %v2321, %v2317
    %v4350 = vpack.c.b16 %v2322, %v2318
    %v4351 = vpack.c.b16 %v2323, %v2319
    %v4352 = vpack.c.b16 %v2328, %v2324
    %v4353 = vpack.c.b16 %v2329, %v2325
    %v4354 = vpack.c.b16 %v2330, %v2326
    %v4355 = vpack.c.b16 %v2331, %v2327
    %v4356 = vpack.c.b16 %v2336, %v2332
    %v4357 = vpack.c.b16 %v2337, %v2333
    %v4358 = vpack.c.b16 %v2338, %v2334
    %v4359 = vpack.c.b16 %v2339, %v2335
    %v4360 = vpack.c.b16 %v2344, %v2340
    %v4361 = vpack.c.b16 %v2345, %v2341
    %v4362 = vpack.c.b16 %v2346, %v2342
    %v4363 = vpack.c.b16 %v2347, %v2343
    %v4364 = vpack.c.b16 %v2352, %v2348
    %v4365 = vpack.c.b16 %v2353, %v2349
    %v4366 = vpack.c.b16 %v2354, %v2350
    %v4367 = vpack.c.b16 %v2355, %v2351
    %v4368 = vpack.c.b16 %v2360, %v2356
    %v4369 = vpack.c.b16 %v2361, %v2357
    %v4370 = vpack.c.b16 %v2362, %v2358
    %v4371 = vpack.c.b16 %v2363, %v2359
    %v4372 = vpack.c.b16 %v2368, %v2364
    %v4373 = vpack.c.b16 %v2369, %v2365
    %v4374 = vpack.c.b16 %v2370, %v2366
    %v4375 = vpack.c.b16 %v2371, %v2367
    %v4376 = vpack.c.b16 %v2376, %v2372
    %v4377 = vpack.c.b16 %v2377, %v2373
    %v4378 = vpack.c.b16 %v2378, %v2374
    %v4379 = vpack.c.b16 %v2379, %v2375
    %v4380 = vpack.c.b16 %v2384, %v2380
    %v4381 = vpack.c.b16 %v2385, %v2381
    %v4382 = vpack.c.b16 %v2386, %v2382
    %v4383 = vpack.c.b16 %v2387, %v2383
    %v4384 = vpack.c.b16 %v2392, %v2388
    %v4385 = vpack.c.b16 %v2393, %v2389
    %v4386 = vpack.c.b16 %v2394, %v2390
    %v4387 = vpack.c.b16 %v2395, %v2391
    %v4388 = vpack.c.b16 %v2400, %v2396
    %v4389 = vpack.c.b16 %v2401, %v2397
    %v4390 = vpack.c.b16 %v2402, %v2398
    %v4391 = vpack.c.b16 %v2403, %v2399
    %v4392 = vpack.c.b16 %v2408, %v2404
    %v4393 = vpack.c.b16 %v2409, %v2405
    %v4394 = vpack.c.b16 %v2410, %v2406
    %v4395 = vpack.c.b16 %v2411, %v2407
    %v4396 = vpack.c.b16 %v2416, %v2412
    %v4397 = vpack.c.b16 %v2417, %v2413
    %v4398 = vpack.c.b16 %v2418, %v2414
    %v4399 = vpack.c.b16 %v2419, %v2415
    %v4400 = vpack.c.b16 %v2424, %v2420
    %v4401 = vpack.c.b16 %v2425, %v2421
    %v4402 = vpack.c.b16 %v2426, %v2422
    %v4403 = vpack.c.b16 %v2427, %v2423
    %v4404 = vpack.c.b16 %v2432, %v2428
    %v4405 = vpack.c.b16 %v2433, %v2429
    %v4406 = vpack.c.b16 %v2434, %v2430
    %v4407 = vpack.c.b16 %v2435, %v2431
    %v4408 = vpack.c.b16 %v2440, %v2436
    %v4409 = vpack.c.b16 %v2441, %v2437
    %v4410 = vpack.c.b16 %v2442, %v2438
    %v4411 = vpack.c.b16 %v2443, %v2439
    %v4412 = vpack.c.b16 %v2448, %v2444
    %v4413 = vpack.c.b16 %v2449, %v2445
    %v4414 = vpack.c.b16 %v2450, %v2446
    %v4415 = vpack.c.b16 %v2451, %v2447
    %v4416 = vpack.c.b16 %v2456, %v2452
    %v4417 = vpack.c.b16 %v2457, %v2453
    %v4418 = vpack.c.b16 %v2458, %v2454
    %v4419 = vpack.c.b16 %v2459, %v2455
    %v4420 = vpack.c.b16 %v2464, %v2460
    %v4421 = vpack.c.b16 %v2465, %v2461
    %v4422 = vpack.c.b16 %v2466, %v2462
    %v4423 = vpack.c.b16 %v2467, %v2463
    %v4424 = vpack.c.b16 %v2472, %v2468
    %v4425 = vpack.c.b16 %v2473, %v2469
    %v4426 = vpack.c.b16 %v2474, %v2470
    %v4427 = vpack.c.b16 %v2475, %v2471
    %v4428 = vpack.c.b16 %v2480, %v2476
    %v4429 = vpack.c.b16 %v2481, %v2477
    %v4430 = vpack.c.b16 %v2482, %v2478
    %v4431 = vpack.c.b16 %v2483, %v2479
    %v4432 = vpack.c.b16 %v2488, %v2484
    %v4433 = vpack.c.b16 %v2489, %v2485
    %v4434 = vpack.c.b16 %v2490, %v2486
    %v4435 = vpack.c.b16 %v2491, %v2487
    %v4436 = vpack.c.b16 %v2496, %v2492
    %v4437 = vpack.c.b16 %v2497, %v2493
    %v4438 = vpack.c.b16 %v2498, %v2494
    %v4439 = vpack.c.b16 %v2499, %v2495
    %v4440 = vpack.c.b16 %v2504, %v2500
    %v4441 = vpack.c.b16 %v2505, %v2501
    %v4442 = vpack.c.b16 %v2506, %v2502
    %v4443 = vpack.c.b16 %v2507, %v2503
    %v4444 = vpack.c.b16 %v2512, %v2508
    %v4445 = vpack.c.b16 %v2513, %v2509
    %v4446 = vpack.c.b16 %v2514, %v2510
    %v4447 = vpack.c.b16 %v2515, %v2511
    %v4448 = vpack.c.b16 %v2520, %v2516
    %v4449 = vpack.c.b16 %v2521, %v2517
    %v4450 = vpack.c.b16 %v2522, %v2518
    %v4451 = vpack.c.b16 %v2523, %v2519
    %v4452 = vpack.c.b16 %v2528, %v2524
    %v4453 = vpack.c.b16 %v2529, %v2525
    %v4454 = vpack.c.b16 %v2530, %v2526
    %v4455 = vpack.c.b16 %v2531, %v2527
    %v4456 = vpack.c.b16 %v2536, %v2532
    %v4457 = vpack.c.b16 %v2537, %v2533
    %v4458 = vpack.c.b16 %v2538, %v2534
    %v4459 = vpack.c.b16 %v2539, %v2535
    %v4460 = vpack.c.b16 %v2544, %v2540
    %v4461 = vpack.c.b16 %v2545, %v2541
    %v4462 = vpack.c.b16 %v2546, %v2542
    %v4463 = vpack.c.b16 %v2547, %v2543
    %v4464 = vpack.c.b16 %v2552, %v2548
    %v4465 = vpack.c.b16 %v2553, %v2549
    %v4466 = vpack.c.b16 %v2554, %v2550
    %v4467 = vpack.c.b16 %v2555, %v2551
    %v4468 = vpack.c.b16 %v2560, %v2556
    %v4469 = vpack.c.b16 %v2561, %v2557
    %v4470 = vpack.c.b16 %v2562, %v2558
    %v4471 = vpack.c.b16 %v2563, %v2559
    %v4472 = vpack.c.b16 %v2568, %v2564
    %v4473 = vpack.c.b16 %v2569, %v2565
    %v4474 = vpack.c.b16 %v2570, %v2566
    %v4475 = vpack.c.b16 %v2571, %v2567
    %v4476 = vpack.c.b16 %v2576, %v2572
    %v4477 = vpack.c.b16 %v2577, %v2573
    %v4478 = vpack.c.b16 %v2578, %v2574
    %v4479 = vpack.c.b16 %v2579, %v2575
    %v4480 = vpack.c.b16 %v2584, %v2580
    %v4481 = vpack.c.b16 %v2585, %v2581
    %v4482 = vpack.c.b16 %v2586, %v2582
    %v4483 = vpack.c.b16 %v2587, %v2583
    %v4484 = vpack.c.b16 %v2592, %v2588
    %v4485 = vpack.c.b16 %v2593, %v2589
    %v4486 = vpack.c.b16 %v2594, %v2590
    %v4487 = vpack.c.b16 %v2595, %v2591
    %v4488 = vpack.c.b16 %v2600, %v2596
    %v4489 = vpack.c.b16 %v2601, %v2597
    %v4490 = vpack.c.b16 %v2602, %v2598
    %v4491 = vpack.c.b16 %v2603, %v2599
    %v4492 = vpack.c.b16 %v2608, %v2604
    %v4493 = vpack.c.b16 %v2609, %v2605
    %v4494 = vpack.c.b16 %v2610, %v2606
    %v4495 = vpack.c.b16 %v2611, %v2607
    %v4496 = vpack.c.b16 %v2616, %v2612
    %v4497 = vpack.c.b16 %v2617, %v2613
    %v4498 = vpack.c.b16 %v2618, %v2614
    %v4499 = vpack.c.b16 %v2619, %v2615
    %v4500 = vpack.c.b16 %v2624, %v2620
    %v4501 = vpack.c.b16 %v2625, %v2621
    %v4502 = vpack.c.b16 %v2626, %v2622
    %v4503 = vpack.c.b16 %v2627, %v2623
    %v4504 = vpack.c.b16 %v2632, %v2628
    %v4505 = vpack.c.b16 %v2633, %v2629
    %v4506 = vpack.c.b16 %v2634, %v2630
    %v4507 = vpack.c.b16 %v2635, %v2631
    %v4508 = vpack.c.b16 %v2640, %v2636
    %v4509 = vpack.c.b16 %v2641, %v2637
    %v4510 = vpack.c.b16 %v2642, %v2638
    %v4511 = vpack.c.b16 %v2643, %v2639
    %v4512 = vpack.c.b16 %v2648, %v2644
    %v4513 = vpack.c.b16 %v2649, %v2645
    %v4514 = vpack.c.b16 %v2650, %v2646
    %v4515 = vpack.c.b16 %v2651, %v2647
    %v4516 = vpack.c.b16 %v2656, %v2652
    %v4517 = vpack.c.b16 %v2657, %v2653
    %v4518 = vpack.c.b16 %v2658, %v2654
    %v4519 = vpack.c.b16 %v2659, %v2655
    %v4520 = vpack.c.b16 %v2664, %v2660
    %v4521 = vpack.c.b16 %v2665, %v2661
    %v4522 = vpack.c.b16 %v2666, %v2662
    %v4523 = vpack.c.b16 %v2667, %v2663
    %v4524 = vpack.c.b16 %v2672, %v2668
    %v4525 = vpack.c.b16 %v2673, %v2669
    %v4526 = vpack.c.b16 %v2674, %v2670
    %v4527 = vpack.c.b16 %v2675, %v2671
    %v4528 = vpack.c.b16 %v2680, %v2676
    %v4529 = vpack.c.b16 %v2681, %v2677
    %v4530 = vpack.c.b16 %v2682, %v2678
    %v4531 = vpack.c.b16 %v2683, %v2679
    %v4532 = vpack.c.b16 %v2688, %v2684
    %v4533 = vpack.c.b16 %v2689, %v2685
    %v4534 = vpack.c.b16 %v2690, %v2686
    %v4535 = vpack.c.b16 %v2691, %v2687
    %v4536 = vpack.c.b16 %v2696, %v2692
    %v4537 = vpack.c.b16 %v2697, %v2693
    %v4538 = vpack.c.b16 %v2698, %v2694
    %v4539 = vpack.c.b16 %v2699, %v2695
    %v4540 = vpack.c.b16 %v2704, %v2700
    %v4541 = vpack.c.b16 %v2705, %v2701
    %v4542 = vpack.c.b16 %v2706, %v2702
    %v4543 = vpack.c.b16 %v2707, %v2703
    %v4544 = vpack.c.b16 %v2712, %v2708
    %v4545 = vpack.c.b16 %v2713, %v2709
    %v4546 = vpack.c.b16 %v2714, %v2710
    %v4547 = vpack.c.b16 %v2715, %v2711
    %v4548 = vpack.c.b16 %v2720, %v2716
    %v4549 = vpack.c.b16 %v2721, %v2717
    %v4550 = vpack.c.b16 %v2722, %v2718
    %v4551 = vpack.c.b16 %v2723, %v2719
    %v4552 = vpack.c.b16 %v2728, %v2724
    %v4553 = vpack.c.b16 %v2729, %v2725
    %v4554 = vpack.c.b16 %v2730, %v2726
    %v4555 = vpack.c.b16 %v2731, %v2727
    %v4556 = vpack.c.b16 %v2736, %v2732
    %v4557 = vpack.c.b16 %v2737, %v2733
    %v4558 = vpack.c.b16 %v2738, %v2734
    %v4559 = vpack.c.b16 %v2739, %v2735
    %v4560 = vpack.c.b16 %v2744, %v2740
    %v4561 = vpack.c.b16 %v2745, %v2741
    %v4562 = vpack.c.b16 %v2746, %v2742
    %v4563 = vpack.c.b16 %v2747, %v2743
    %v4564 = vpack.c.b16 %v2752, %v2748
    %v4565 = vpack.c.b16 %v2753, %v2749
    %v4566 = vpack.c.b16 %v2754, %v2750
    %v4567 = vpack.c.b16 %v2755, %v2751
    %v4568 = vpack.c.b16 %v2760, %v2756
    %v4569 = vpack.c.b16 %v2761, %v2757
    %v4570 = vpack.c.b16 %v2762, %v2758
    %v4571 = vpack.c.b16 %v2763, %v2759
    %v4572 = vpack.c.b16 %v2768, %v2764
    %v4573 = vpack.c.b16 %v2769, %v2765
    %v4574 = vpack.c.b16 %v2770, %v2766
    %v4575 = vpack.c.b16 %v2771, %v2767
    %v4576 = vpack.c.b16 %v2776, %v2772
    %v4577 = vpack.c.b16 %v2777, %v2773
    %v4578 = vpack.c.b16 %v2778, %v2774
    %v4579 = vpack.c.b16 %v2779, %v2775
    %v4580 = vpack.c.b16 %v2784, %v2780
    %v4581 = vpack.c.b16 %v2785, %v2781
    %v4582 = vpack.c.b16 %v2786, %v2782
    %v4583 = vpack.c.b16 %v2787, %v2783
    %v4584 = vpack.c.b16 %v2792, %v2788
    %v4585 = vpack.c.b16 %v2793, %v2789
    %v4586 = vpack.c.b16 %v2794, %v2790
    %v4587 = vpack.c.b16 %v2795, %v2791
    %v4588 = vpack.c.b16 %v2800, %v2796
    %v4589 = vpack.c.b16 %v2801, %v2797
    %v4590 = vpack.c.b16 %v2802, %v2798
    %v4591 = vpack.c.b16 %v2803, %v2799
    %v4592 = vpack.c.b16 %v2808, %v2804
    %v4593 = vpack.c.b16 %v2809, %v2805
    %v4594 = vpack.c.b16 %v2810, %v2806
    %v4595 = vpack.c.b16 %v2811, %v2807
    %v4596 = vpack.c.b16 %v2816, %v2812
    %v4597 = vpack.c.b16 %v2817, %v2813
    %v4598 = vpack.c.b16 %v2818, %v2814
    %v4599 = vpack.c.b16 %v2819, %v2815
    %v4600 = vpack.c.b16 %v2824, %v2820
    %v4601 = vpack.c.b16 %v2825, %v2821
    %v4602 = vpack.c.b16 %v2826, %v2822
    %v4603 = vpack.c.b16 %v2827, %v2823
    %v4604 = vpack.c.b16 %v2832, %v2828
    %v4605 = vpack.c.b16 %v2833, %v2829
    %v4606 = vpack.c.b16 %v2834, %v2830
    %v4607 = vpack.c.b16 %v2835, %v2831
    %v4608 = vpack.c.b16 %v2840, %v2836
    %v4609 = vpack.c.b16 %v2841, %v2837
    %v4610 = vpack.c.b16 %v2842, %v2838
    %v4611 = vpack.c.b16 %v2843, %v2839
    %v4612 = vpack.c.b16 %v2848, %v2844
    %v4613 = vpack.c.b16 %v2849, %v2845
    %v4614 = vpack.c.b16 %v2850, %v2846
    %v4615 = vpack.c.b16 %v2851, %v2847
    %v4616 = vpack.c.b16 %v2856, %v2852
    %v4617 = vpack.c.b16 %v2857, %v2853
    %v4618 = vpack.c.b16 %v2858, %v2854
    %v4619 = vpack.c.b16 %v2859, %v2855
    %v4620 = vpack.c.b16 %v2864, %v2860
    %v4621 = vpack.c.b16 %v2865, %v2861
    %v4622 = vpack.c.b16 %v2866, %v2862
    %v4623 = vpack.c.b16 %v2867, %v2863
    %v4624 = vpack.c.b16 %v2872, %v2868
    %v4625 = vpack.c.b16 %v2873, %v2869
    %v4626 = vpack.c.b16 %v2874, %v2870
    %v4627 = vpack.c.b16 %v2875, %v2871
    %v4628 = vpack.c.b16 %v2880, %v2876
    %v4629 = vpack.c.b16 %v2881, %v2877
    %v4630 = vpack.c.b16 %v2882, %v2878
    %v4631 = vpack.c.b16 %v2883, %v2879
    %v4632 = vpack.c.b16 %v2888, %v2884
    %v4633 = vpack.c.b16 %v2889, %v2885
    %v4634 = vpack.c.b16 %v2890, %v2886
    %v4635 = vpack.c.b16 %v2891, %v2887
    %v4636 = vpack.c.b16 %v2896, %v2892
    %v4637 = vpack.c.b16 %v2897, %v2893
    %v4638 = vpack.c.b16 %v2898, %v2894
    %v4639 = vpack.c.b16 %v2899, %v2895
    %v4640 = vpack.c.b16 %v2904, %v2900
    %v4641 = vpack.c.b16 %v2905, %v2901
    %v4642 = vpack.c.b16 %v2906, %v2902
    %v4643 = vpack.c.b16 %v2907, %v2903
    %v4644 = vpack.c.b16 %v2912, %v2908
    %v4645 = vpack.c.b16 %v2913, %v2909
    %v4646 = vpack.c.b16 %v2914, %v2910
    %v4647 = vpack.c.b16 %v2915, %v2911
    %v4648 = vpack.c.b16 %v2920, %v2916
    %v4649 = vpack.c.b16 %v2921, %v2917
    %v4650 = vpack.c.b16 %v2922, %v2918
    %v4651 = vpack.c.b16 %v2923, %v2919
    %v4652 = vpack.c.b16 %v2928, %v2924
    %v4653 = vpack.c.b16 %v2929, %v2925
    %v4654 = vpack.c.b16 %v2930, %v2926
    %v4655 = vpack.c.b16 %v2931, %v2927
    %v4656 = vpack.c.b16 %v2936, %v2932
    %v4657 = vpack.c.b16 %v2937, %v2933
    %v4658 = vpack.c.b16 %v2938, %v2934
    %v4659 = vpack.c.b16 %v2939, %v2935
    %v4660 = vpack.c.b16 %v2944, %v2940
    %v4661 = vpack.c.b16 %v2945, %v2941
    %v4662 = vpack.c.b16 %v2946, %v2942
    %v4663 = vpack.c.b16 %v2947, %v2943
    %v4664 = vpack.c.b16 %v2952, %v2948
    %v4665 = vpack.c.b16 %v2953, %v2949
    %v4666 = vpack.c.b16 %v2954, %v2950
    %v4667 = vpack.c.b16 %v2955, %v2951
    %v4668 = vpack.c.b16 %v2960, %v2956
    %v4669 = vpack.c.b16 %v2961, %v2957
    %v4670 = vpack.c.b16 %v2962, %v2958
    %v4671 = vpack.c.b16 %v2963, %v2959
    %v4672 = vpack.c.b16 %v2968, %v2964
    %v4673 = vpack.c.b16 %v2969, %v2965
    %v4674 = vpack.c.b16 %v2970, %v2966
    %v4675 = vpack.c.b16 %v2971, %v2967
    %v4676 = vpack.c.b16 %v2976, %v2972
    %v4677 = vpack.c.b16 %v2977, %v2973
    %v4678 = vpack.c.b16 %v2978, %v2974
    %v4679 = vpack.c.b16 %v2979, %v2975
    %v4680 = vpack.c.b16 %v2984, %v2980
    %v4681 = vpack.c.b16 %v2985, %v2981
    %v4682 = vpack.c.b16 %v2986, %v2982
    %v4683 = vpack.c.b16 %v2987, %v2983
    %v4684 = vpack.c.b16 %v2992, %v2988
    %v4685 = vpack.c.b16 %v2993, %v2989
    %v4686 = vpack.c.b16 %v2994, %v2990
    %v4687 = vpack.c.b16 %v2995, %v2991
    %v4688 = vpack.c.b16 %v3000, %v2996
    %v4689 = vpack.c.b16 %v3001, %v2997
    %v4690 = vpack.c.b16 %v3002, %v2998
    %v4691 = vpack.c.b16 %v3003, %v2999
    %v4692 = vpack.c.b16 %v3008, %v3004
    %v4693 = vpack.c.b16 %v3009, %v3005
    %v4694 = vpack.c.b16 %v3010, %v3006
    %v4695 = vpack.c.b16 %v3011, %v3007
    %v4696 = vpack.c.b16 %v3016, %v3012
    %v4697 = vpack.c.b16 %v3017, %v3013
    %v4698 = vpack.c.b16 %v3018, %v3014
    %v4699 = vpack.c.b16 %v3019, %v3015
    %v4700 = vpack.c.b16 %v3024, %v3020
    %v4701 = vpack.c.b16 %v3025, %v3021
    %v4702 = vpack.c.b16 %v3026, %v3022
    %v4703 = vpack.c.b16 %v3027, %v3023
    %v4704 = vpack.c.b16 %v3032, %v3028
    %v4705 = vpack.c.b16 %v3033, %v3029
    %v4706 = vpack.c.b16 %v3034, %v3030
    %v4707 = vpack.c.b16 %v3035, %v3031
    %v4708 = vpack.c.b16 %v3040, %v3036
    %v4709 = vpack.c.b16 %v3041, %v3037
    %v4710 = vpack.c.b16 %v3042, %v3038
    %v4711 = vpack.c.b16 %v3043, %v3039
    %v4712 = vpack.c.b16 %v3048, %v3044
    %v4713 = vpack.c.b16 %v3049, %v3045
    %v4714 = vpack.c.b16 %v3050, %v3046
    %v4715 = vpack.c.b16 %v3051, %v3047
    %v4716 = vpack.c.b16 %v3056, %v3052
    %v4717 = vpack.c.b16 %v3057, %v3053
    %v4718 = vpack.c.b16 %v3058, %v3054
    %v4719 = vpack.c.b16 %v3059, %v3055
    %v4720 = vpack.c.b16 %v3064, %v3060
    %v4721 = vpack.c.b16 %v3065, %v3061
    %v4722 = vpack.c.b16 %v3066, %v3062
    %v4723 = vpack.c.b16 %v3067, %v3063
    %v4724 = vpack.c.b16 %v3072, %v3068
    %v4725 = vpack.c.b16 %v3073, %v3069
    %v4726 = vpack.c.b16 %v3074, %v3070
    %v4727 = vpack.c.b16 %v3075, %v3071
    %v4728 = vpack.c.b16 %v3080, %v3076
    %v4729 = vpack.c.b16 %v3081, %v3077
    %v4730 = vpack.c.b16 %v3082, %v3078
    %v4731 = vpack.c.b16 %v3083, %v3079
    %v4732 = vpack.c.b16 %v3088, %v3084
    %v4733 = vpack.c.b16 %v3089, %v3085
    %v4734 = vpack.c.b16 %v3090, %v3086
    %v4735 = vpack.c.b16 %v3091, %v3087
    %v4736 = vpack.c.b16 %v3096, %v3092
    %v4737 = vpack.c.b16 %v3097, %v3093
    %v4738 = vpack.c.b16 %v3098, %v3094
    %v4739 = vpack.c.b16 %v3099, %v3095
    %v4740 = vpack.c.b16 %v3104, %v3100
    %v4741 = vpack.c.b16 %v3105, %v3101
    %v4742 = vpack.c.b16 %v3106, %v3102
    %v4743 = vpack.c.b16 %v3107, %v3103
    %v4744 = vpack.c.b16 %v3112, %v3108
    %v4745 = vpack.c.b16 %v3113, %v3109
    %v4746 = vpack.c.b16 %v3114, %v3110
    %v4747 = vpack.c.b16 %v3115, %v3111
    %v4748 = vpack.c.b16 %v3120, %v3116
    %v4749 = vpack.c.b16 %v3121, %v3117
    %v4750 = vpack.c.b16 %v3122, %v3118
    %v4751 = vpack.c.b16 %v3123, %v3119
    %v4752 = vpack.c.b16 %v3128, %v3124
    %v4753 = vpack.c.b16 %v3129, %v3125
    %v4754 = vpack.c.b16 %v3130, %v3126
    %v4755 = vpack.c.b16 %v3131, %v3127
    %v4756 = vpack.c.b16 %v3136, %v3132
    %v4757 = vpack.c.b16 %v3137, %v3133
    %v4758 = vpack.c.b16 %v3138, %v3134
    %v4759 = vpack.c.b16 %v3139, %v3135
    %v4760 = vpack.c.b16 %v3144, %v3140
    %v4761 = vpack.c.b16 %v3145, %v3141
    %v4762 = vpack.c.b16 %v3146, %v3142
    %v4763 = vpack.c.b16 %v3147, %v3143
    %v4764 = vpack.c.b16 %v3152, %v3148
    %v4765 = vpack.c.b16 %v3153, %v3149
    %v4766 = vpack.c.b16 %v3154, %v3150
    %v4767 = vpack.c.b16 %v3155, %v3151
    %v4768 = vpack.c.b16 %v3160, %v3156
    %v4769 = vpack.c.b16 %v3161, %v3157
    %v4770 = vpack.c.b16 %v3162, %v3158
    %v4771 = vpack.c.b16 %v3163, %v3159
    %v4772 = vpack.c.b16 %v3168, %v3164
    %v4773 = vpack.c.b16 %v3169, %v3165
    %v4774 = vpack.c.b16 %v3170, %v3166
    %v4775 = vpack.c.b16 %v3171, %v3167
    %v4776 = vpack.c.b16 %v3176, %v3172
    %v4777 = vpack.c.b16 %v3177, %v3173
    %v4778 = vpack.c.b16 %v3178, %v3174
    %v4779 = vpack.c.b16 %v3179, %v3175
    %v4780 = vpack.c.b16 %v3184, %v3180
    %v4781 = vpack.c.b16 %v3185, %v3181
    %v4782 = vpack.c.b16 %v3186, %v3182
    %v4783 = vpack.c.b16 %v3187, %v3183
    %v4784 = vpack.c.b16 %v3192, %v3188
    %v4785 = vpack.c.b16 %v3193, %v3189
    %v4786 = vpack.c.b16 %v3194, %v3190
    %v4787 = vpack.c.b16 %v3195, %v3191
    %v4788 = vpack.c.b16 %v3200, %v3196
    %v4789 = vpack.c.b16 %v3201, %v3197
    %v4790 = vpack.c.b16 %v3202, %v3198
    %v4791 = vpack.c.b16 %v3203, %v3199
    %v4792 = vpack.c.b16 %v3208, %v3204
    %v4793 = vpack.c.b16 %v3209, %v3205
    %v4794 = vpack.c.b16 %v3210, %v3206
    %v4795 = vpack.c.b16 %v3211, %v3207
    %v4796 = vpack.c.b16 %v3216, %v3212
    %v4797 = vpack.c.b16 %v3217, %v3213
    %v4798 = vpack.c.b16 %v3218, %v3214
    %v4799 = vpack.c.b16 %v3219, %v3215
    %v4800 = vpack.c.b16 %v3224, %v3220
    %v4801 = vpack.c.b16 %v3225, %v3221
    %v4802 = vpack.c.b16 %v3226, %v3222
    %v4803 = vpack.c.b16 %v3227, %v3223
    %v4804 = vpack.c.b16 %v3232, %v3228
    %v4805 = vpack.c.b16 %v3233, %v3229
    %v4806 = vpack.c.b16 %v3234, %v3230
    %v4807 = vpack.c.b16 %v3235, %v3231
    %v4808 = vpack.c.b16 %v3240, %v3236
    %v4809 = vpack.c.b16 %v3241, %v3237
    %v4810 = vpack.c.b16 %v3242, %v3238
    %v4811 = vpack.c.b16 %v3243, %v3239
    %v4812 = vpack.c.b16 %v3248, %v3244
    %v4813 = vpack.c.b16 %v3249, %v3245
    %v4814 = vpack.c.b16 %v3250, %v3246
    %v4815 = vpack.c.b16 %v3251, %v3247
    %v4816 = vpack.c.b16 %v3256, %v3252
    %v4817 = vpack.c.b16 %v3257, %v3253
    %v4818 = vpack.c.b16 %v3258, %v3254
    %v4819 = vpack.c.b16 %v3259, %v3255
    %v4820 = vpack.c.b16 %v3264, %v3260
    %v4821 = vpack.c.b16 %v3265, %v3261
    %v4822 = vpack.c.b16 %v3266, %v3262
    %v4823 = vpack.c.b16 %v3267, %v3263
    %v4824 = vpack.c.b16 %v3272, %v3268
    %v4825 = vpack.c.b16 %v3273, %v3269
    %v4826 = vpack.c.b16 %v3274, %v3270
    %v4827 = vpack.c.b16 %v3275, %v3271
    %v4828 = vpack.c.b16 %v3280, %v3276
    %v4829 = vpack.c.b16 %v3281, %v3277
    %v4830 = vpack.c.b16 %v3282, %v3278
    %v4831 = vpack.c.b16 %v3283, %v3279
    %v4832 = vpack.c.b16 %v3288, %v3284
    %v4833 = vpack.c.b16 %v3289, %v3285
    %v4834 = vpack.c.b16 %v3290, %v3286
    %v4835 = vpack.c.b16 %v3291, %v3287
    %v4836 = vpack.c.b16 %v3296, %v3292
    %v4837 = vpack.c.b16 %v3297, %v3293
    %v4838 = vpack.c.b16 %v3298, %v3294
    %v4839 = vpack.c.b16 %v3299, %v3295
    %v4840 = vpack.c.b16 %v3304, %v3300
    %v4841 = vpack.c.b16 %v3305, %v3301
    %v4842 = vpack.c.b16 %v3306, %v3302
    %v4843 = vpack.c.b16 %v3307, %v3303
    %v4844 = vpack.c.b16 %v3312, %v3308
    %v4845 = vpack.c.b16 %v3313, %v3309
    %v4846 = vpack.c.b16 %v3314, %v3310
    %v4847 = vpack.c.b16 %v3315, %v3311
    %v4848 = vpack.c.b16 %v3320, %v3316
    %v4849 = vpack.c.b16 %v3321, %v3317
    %v4850 = vpack.c.b16 %v3322, %v3318
    %v4851 = vpack.c.b16 %v3323, %v3319
    %v4852 = vpack.c.b16 %v3328, %v3324
    %v4853 = vpack.c.b16 %v3329, %v3325
    %v4854 = vpack.c.b16 %v3330, %v3326
    %v4855 = vpack.c.b16 %v3331, %v3327
    %v4856 = vpack.c.b16 %v3336, %v3332
    %v4857 = vpack.c.b16 %v3337, %v3333
    %v4858 = vpack.c.b16 %v3338, %v3334
    %v4859 = vpack.c.b16 %v3339, %v3335
    %v4860 = vpack.c.b16 %v3344, %v3340
    %v4861 = vpack.c.b16 %v3345, %v3341
    %v4862 = vpack.c.b16 %v3346, %v3342
    %v4863 = vpack.c.b16 %v3347, %v3343
    %v4864 = vpack.c.b16 %v3352, %v3348
    %v4865 = vpack.c.b16 %v3353, %v3349
    %v4866 = vpack.c.b16 %v3354, %v3350
    %v4867 = vpack.c.b16 %v3355, %v3351
    %v4868 = vpack.c.b16 %v3360, %v3356
    %v4869 = vpack.c.b16 %v3361, %v3357
    %v4870 = vpack.c.b16 %v3362, %v3358
    %v4871 = vpack.c.b16 %v3363, %v3359
    %v4872 = vpack.c.b16 %v3368, %v3364
    %v4873 = vpack.c.b16 %v3369, %v3365
    %v4874 = vpack.c.b16 %v3370, %v3366
    %v4875 = vpack.c.b16 %v3371, %v3367
    %v4876 = vpack.c.b16 %v3376, %v3372
    %v4877 = vpack.c.b16 %v3377, %v3373
    %v4878 = vpack.c.b16 %v3378, %v3374
    %v4879 = vpack.c.b16 %v3379, %v3375
    %v4880 = vpack.c.b16 %v3384, %v3380
    %v4881 = vpack.c.b16 %v3385, %v3381
    %v4882 = vpack.c.b16 %v3386, %v3382
    %v4883 = vpack.c.b16 %v3387, %v3383
    %v4884 = vpack.c.b16 %v3392, %v3388
    %v4885 = vpack.c.b16 %v3393, %v3389
    %v4886 = vpack.c.b16 %v3394, %v3390
    %v4887 = vpack.c.b16 %v3395, %v3391
    %v4888 = vpack.c.b16 %v3400, %v3396
    %v4889 = vpack.c.b16 %v3401, %v3397
    %v4890 = vpack.c.b16 %v3402, %v3398
    %v4891 = vpack.c.b16 %v3403, %v3399
    %v4892 = vpack.c.b16 %v3408, %v3404
    %v4893 = vpack.c.b16 %v3409, %v3405
    %v4894 = vpack.c.b16 %v3410, %v3406
    %v4895 = vpack.c.b16 %v3411, %v3407
    %v4896 = vpack.c.b16 %v3416, %v3412
    %v4897 = vpack.c.b16 %v3417, %v3413
    %v4898 = vpack.c.b16 %v3418, %v3414
    %v4899 = vpack.c.b16 %v3419, %v3415
    %v4900 = vpack.c.b16 %v3424, %v3420
    %v4901 = vpack.c.b16 %v3425, %v3421
    %v4902 = vpack.c.b16 %v3426, %v3422
    %v4903 = vpack.c.b16 %v3427, %v3423
    %v4904 = vpack.c.b16 %v3432, %v3428
    %v4905 = vpack.c.b16 %v3433, %v3429
    %v4906 = vpack.c.b16 %v3434, %v3430
    %v4907 = vpack.c.b16 %v3435, %v3431
    %v4908 = vpack.c.b16 %v3440, %v3436
    %v4909 = vpack.c.b16 %v3441, %v3437
    %v4910 = vpack.c.b16 %v3442, %v3438
    %v4911 = vpack.c.b16 %v3443, %v3439
    %v4912 = vpack.c.b16 %v3448, %v3444
    %v4913 = vpack.c.b16 %v3449, %v3445
    %v4914 = vpack.c.b16 %v3450, %v3446
    %v4915 = vpack.c.b16 %v3451, %v3447
    %v4916 = vpack.c.b16 %v3456, %v3452
    %v4917 = vpack.c.b16 %v3457, %v3453
    %v4918 = vpack.c.b16 %v3458, %v3454
    %v4919 = vpack.c.b16 %v3459, %v3455
    %v4920 = vpack.c.b16 %v3464, %v3460
    %v4921 = vpack.c.b16 %v3465, %v3461
    %v4922 = vpack.c.b16 %v3466, %v3462
    %v4923 = vpack.c.b16 %v3467, %v3463
    %v4924 = vpack.c.b16 %v3472, %v3468
    %v4925 = vpack.c.b16 %v3473, %v3469
    %v4926 = vpack.c.b16 %v3474, %v3470
    %v4927 = vpack.c.b16 %v3475, %v3471
    %v4928 = vpack.c.b16 %v3480, %v3476
    %v4929 = vpack.c.b16 %v3481, %v3477
    %v4930 = vpack.c.b16 %v3482, %v3478
    %v4931 = vpack.c.b16 %v3483, %v3479
    %v4932 = vpack.c.b16 %v3488, %v3484
    %v4933 = vpack.c.b16 %v3489, %v3485
    %v4934 = vpack.c.b16 %v3490, %v3486
    %v4935 = vpack.c.b16 %v3491, %v3487
    %v4936 = vpack.c.b16 %v3496, %v3492
    %v4937 = vpack.c.b16 %v3497, %v3493
    %v4938 = vpack.c.b16 %v3498, %v3494
    %v4939 = vpack.c.b16 %v3499, %v3495
    %v4940 = vpack.c.b16 %v3504, %v3500
    %v4941 = vpack.c.b16 %v3505, %v3501
    %v4942 = vpack.c.b16 %v3506, %v3502
    %v4943 = vpack.c.b16 %v3507, %v3503
    %v4944 = vpack.c.b16 %v3512, %v3508
    %v4945 = vpack.c.b16 %v3513, %v3509
    %v4946 = vpack.c.b16 %v3514, %v3510
    %v4947 = vpack.c.b16 %v3515, %v3511
    %v4948 = vpack.c.b16 %v3520, %v3516
    %v4949 = vpack.c.b16 %v3521, %v3517
    %v4950 = vpack.c.b16 %v3522, %v3518
    %v4951 = vpack.c.b16 %v3523, %v3519
    %v4952 = vpack.c.b16 %v3528, %v3524
    %v4953 = vpack.c.b16 %v3529, %v3525
    %v4954 = vpack.c.b16 %v3530, %v3526
    %v4955 = vpack.c.b16 %v3531, %v3527
    %v4956 = vpack.c.b16 %v3536, %v3532
    %v4957 = vpack.c.b16 %v3537, %v3533
    %v4958 = vpack.c.b16 %v3538, %v3534
    %v4959 = vpack.c.b16 %v3539, %v3535
    %v4960 = vpack.c.b16 %v3544, %v3540
    %v4961 = vpack.c.b16 %v3545, %v3541
    %v4962 = vpack.c.b16 %v3546, %v3542
    %v4963 = vpack.c.b16 %v3547, %v3543
    %v4964 = vpack.c.b16 %v3552, %v3548
    %v4965 = vpack.c.b16 %v3553, %v3549
    %v4966 = vpack.c.b16 %v3554, %v3550
    %v4967 = vpack.c.b16 %v3555, %v3551
    %v4968 = vpack.c.b16 %v3560, %v3556
    %v4969 = vpack.c.b16 %v3561, %v3557
    %v4970 = vpack.c.b16 %v3562, %v3558
    %v4971 = vpack.c.b16 %v3563, %v3559
    %v4972 = vpack.c.b16 %v3568, %v3564
    %v4973 = vpack.c.b16 %v3569, %v3565
    %v4974 = vpack.c.b16 %v3570, %v3566
    %v4975 = vpack.c.b16 %v3571, %v3567
    %v4976 = vpack.c.b16 %v3576, %v3572
    %v4977 = vpack.c.b16 %v3577, %v3573
    %v4978 = vpack.c.b16 %v3578, %v3574
    %v4979 = vpack.c.b16 %v3579, %v3575
    %v4980 = vpack.c.b16 %v3584, %v3580
    %v4981 = vpack.c.b16 %v3585, %v3581
    %v4982 = vpack.c.b16 %v3586, %v3582
    %v4983 = vpack.c.b16 %v3587, %v3583
    %v4984 = vpack.c.b16 %v3592, %v3588
    %v4985 = vpack.c.b16 %v3593, %v3589
    %v4986 = vpack.c.b16 %v3594, %v3590
    %v4987 = vpack.c.b16 %v3595, %v3591
    %v4988 = vpack.c.b16 %v3600, %v3596
    %v4989 = vpack.c.b16 %v3601, %v3597
    %v4990 = vpack.c.b16 %v3602, %v3598
    %v4991 = vpack.c.b16 %v3603, %v3599
    %v4992 = vpack.c.b16 %v3608, %v3604
    %v4993 = vpack.c.b16 %v3609, %v3605
    %v4994 = vpack.c.b16 %v3610, %v3606
    %v4995 = vpack.c.b16 %v3611, %v3607
    %v4996 = vpack.c.b16 %v3616, %v3612
    %v4997 = vpack.c.b16 %v3617, %v3613
    %v4998 = vpack.c.b16 %v3618, %v3614
    %v4999 = vpack.c.b16 %v3619, %v3615
    %v5000 = vpack.c.b16 %v3624, %v3620
    %v5001 = vpack.c.b16 %v3625, %v3621
    %v5002 = vpack.c.b16 %v3626, %v3622
    %v5003 = vpack.c.b16 %v3627, %v3623
    %v5004 = vpack.c.b16 %v3632, %v3628
    %v5005 = vpack.c.b16 %v3633, %v3629
    %v5006 = vpack.c.b16 %v3634, %v3630
    %v5007 = vpack.c.b16 %v3635, %v3631
    %v5008 = vpack.c.b16 %v3640, %v3636
    %v5009 = vpack.c.b16 %v3641, %v3637
    %v5010 = vpack.c.b16 %v3642, %v3638
    %v5011 = vpack.c.b16 %v3643, %v3639
    %v5012 = vpack.c.b16 %v3648, %v3644
    %v5013 = vpack.c.b16 %v3649, %v3645
    %v5014 = vpack.c.b16 %v3650, %v3646
    %v5015 = vpack.c.b16 %v3651, %v3647
    %v5016 = vpack.c.b16 %v3656, %v3652
    %v5017 = vpack.c.b16 %v3657, %v3653
    %v5018 = vpack.c.b16 %v3658, %v3654
    %v5019 = vpack.c.b16 %v3659, %v3655
    %v5020 = vpack.c.b16 %v3664, %v3660
    %v5021 = vpack.c.b16 %v3665, %v3661
    %v5022 = vpack.c.b16 %v3666, %v3662
    %v5023 = vpack.c.b16 %v3667, %v3663
    %v5024 = vpack.c.b16 %v3672, %v3668
    %v5025 = vpack.c.b16 %v3673, %v3669
    %v5026 = vpack.c.b16 %v3674, %v3670
    %v5027 = vpack.c.b16 %v3675, %v3671
    %v5028 = vpack.c.b16 %v3680, %v3676
    %v5029 = vpack.c.b16 %v3681, %v3677
    %v5030 = vpack.c.b16 %v3682, %v3678
    %v5031 = vpack.c.b16 %v3683, %v3679
    %v5032 = vpack.c.b16 %v3688, %v3684
    %v5033 = vpack.c.b16 %v3689, %v3685
    %v5034 = vpack.c.b16 %v3690, %v3686
    %v5035 = vpack.c.b16 %v3691, %v3687
    %v5036 = vpack.c.b16 %v3696, %v3692
    %v5037 = vpack.c.b16 %v3697, %v3693
    %v5038 = vpack.c.b16 %v3698, %v3694
    %v5039 = vpack.c.b16 %v3699, %v3695
    %v5040 = vpack.c.b16 %v3704, %v3700
    %v5041 = vpack.c.b16 %v3705, %v3701
    %v5042 = vpack.c.b16 %v3706, %v3702
    %v5043 = vpack.c.b16 %v3707, %v3703
    %v5044 = vpack.c.b16 %v3712, %v3708
    %v5045 = vpack.c.b16 %v3713, %v3709
    %v5046 = vpack.c.b16 %v3714, %v3710
    %v5047 = vpack.c.b16 %v3715, %v3711
    %v5048 = vpack.c.b16 %v3720, %v3716
    %v5049 = vpack.c.b16 %v3721, %v3717
    %v5050 = vpack.c.b16 %v3722, %v3718
    %v5051 = vpack.c.b16 %v3723, %v3719
    %v5052 = vpack.c.b16 %v3728, %v3724
    %v5053 = vpack.c.b16 %v3729, %v3725
    %v5054 = vpack.c.b16 %v3730, %v3726
    %v5055 = vpack.c.b16 %v3731, %v3727
    %v5056 = vpack.c.b16 %v3736, %v3732
    %v5057 = vpack.c.b16 %v3737, %v3733
    %v5058 = vpack.c.b16 %v3738, %v3734
    %v5059 = vpack.c.b16 %v3739, %v3735
    %v5060 = vpack.c.b16 %v3744, %v3740
    %v5061 = vpack.c.b16 %v3745, %v3741
    %v5062 = vpack.c.b16 %v3746, %v3742
    %v5063 = vpack.c.b16 %v3747, %v3743
    %v5064 = vpack.c.b16 %v3752, %v3748
    %v5065 = vpack.c.b16 %v3753, %v3749
    %v5066 = vpack.c.b16 %v3754, %v3750
    %v5067 = vpack.c.b16 %v3755, %v3751
    %v5068 = vpack.c.b16 %v3760, %v3756
    %v5069 = vpack.c.b16 %v3761, %v3757
    %v5070 = vpack.c.b16 %v3762, %v3758
    %v5071 = vpack.c.b16 %v3763, %v3759
    %v5072 = vpack.c.b16 %v3768, %v3764
    %v5073 = vpack.c.b16 %v3769, %v3765
    %v5074 = vpack.c.b16 %v3770, %v3766
    %v5075 = vpack.c.b16 %v3771, %v3767
    %v5076 = vpack.c.b16 %v3776, %v3772
    %v5077 = vpack.c.b16 %v3777, %v3773
    %v5078 = vpack.c.b16 %v3778, %v3774
    %v5079 = vpack.c.b16 %v3779, %v3775
    %v5080 = vpack.c.b16 %v3784, %v3780
    %v5081 = vpack.c.b16 %v3785, %v3781
    %v5082 = vpack.c.b16 %v3786, %v3782
    %v5083 = vpack.c.b16 %v3787, %v3783
    %v5084 = vpack.c.b16 %v3792, %v3788
    %v5085 = vpack.c.b16 %v3793, %v3789
    %v5086 = vpack.c.b16 %v3794, %v3790
    %v5087 = vpack.c.b16 %v3795, %v3791
    %v5088 = vpack.c.b16 %v3800, %v3796
    %v5089 = vpack.c.b16 %v3801, %v3797
    %v5090 = vpack.c.b16 %v3802, %v3798
    %v5091 = vpack.c.b16 %v3803, %v3799
    %v5092 = vpack.c.b16 %v3808, %v3804
    %v5093 = vpack.c.b16 %v3809, %v3805
    %v5094 = vpack.c.b16 %v3810, %v3806
    %v5095 = vpack.c.b16 %v3811, %v3807
    %v5096 = vpack.c.b16 %v3816, %v3812
    %v5097 = vpack.c.b16 %v3817, %v3813
    %v5098 = vpack.c.b16 %v3818, %v3814
    %v5099 = vpack.c.b16 %v3819, %v3815
    %v5100 = vpack.c.b16 %v3824, %v3820
    %v5101 = vpack.c.b16 %v3825, %v3821
    %v5102 = vpack.c.b16 %v3826, %v3822
    %v5103 = vpack.c.b16 %v3827, %v3823
    %v5104 = vpack.c.b16 %v3832, %v3828
    %v5105 = vpack.c.b16 %v3833, %v3829
    %v5106 = vpack.c.b16 %v3834, %v3830
    %v5107 = vpack.c.b16 %v3835, %v3831
    %v5108 = vpack.c.b16 %v3840, %v3836
    %v5109 = vpack.c.b16 %v3841, %v3837
    %v5110 = vpack.c.b16 %v3842, %v3838
    %v5111 = vpack.c.b16 %v3843, %v3839
    %v5112 = vpack.c.b16 %v3848, %v3844
    %v5113 = vpack.c.b16 %v3849, %v3845
    %v5114 = vpack.c.b16 %v3850, %v3846
    %v5115 = vpack.c.b16 %v3851, %v3847
    %v5116 = vpack.c.b16 %v3856, %v3852
    %v5117 = vpack.c.b16 %v3857, %v3853
    %v5118 = vpack.c.b16 %v3858, %v3854
    %v5119 = vpack.c.b16 %v3859, %v3855
    %v5120 = vpack.c.b16 %v3864, %v3860
    %v5121 = vpack.c.b16 %v3865, %v3861
    %v5122 = vpack.c.b16 %v3866, %v3862
    %v5123 = vpack.c.b16 %v3867, %v3863
    %v5124 = vpack.c.b16 %v3872, %v3868
    %v5125 = vpack.c.b16 %v3873, %v3869
    %v5126 = vpack.c.b16 %v3874, %v3870
    %v5127 = vpack.c.b16 %v3875, %v3871
    %v5128 = vpack.c.b16 %v3880, %v3876
    %v5129 = vpack.c.b16 %v3881, %v3877
    %v5130 = vpack.c.b16 %v3882, %v3878
    %v5131 = vpack.c.b16 %v3883, %v3879
    %v5132 = vpack.c.b16 %v3888, %v3884
    %v5133 = vpack.c.b16 %v3889, %v3885
    %v5134 = vpack.c.b16 %v3890, %v3886
    %v5135 = vpack.c.b16 %v3891, %v3887
    %v5136 = vpack.c.b16 %v3896, %v3892
    %v5137 = vpack.c.b16 %v3897, %v3893
    %v5138 = vpack.c.b16 %v3898, %v3894
    %v5139 = vpack.c.b16 %v3899, %v3895
    %v5140 = vpack.c.b16 %v3904, %v3900
    %v5141 = vpack.c.b16 %v3905, %v3901
    %v5142 = vpack.c.b16 %v3906, %v3902
    %v5143 = vpack.c.b16 %v3907, %v3903
    %v5144 = vpack.c.b16 %v3912, %v3908
    %v5145 = vpack.c.b16 %v3913, %v3909
    %v5146 = vpack.c.b16 %v3914, %v3910
    %v5147 = vpack.c.b16 %v3915, %v3911
    %v5148 = vpack.c.b16 %v3920, %v3916
    %v5149 = vpack.c.b16 %v3921, %v3917
    %v5150 = vpack.c.b16 %v3922, %v3918
    %v5151 = vpack.c.b16 %v3923, %v3919
    %v5152 = vpack.c.b16 %v3928, %v3924
    %v5153 = vpack.c.b16 %v3929, %v3925
    %v5154 = vpack.c.b16 %v3930, %v3926
    %v5155 = vpack.c.b16 %v3931, %v3927
    %v5156 = vpack.c.b16 %v3936, %v3932
    %v5157 = vpack.c.b16 %v3937, %v3933
    %v5158 = vpack.c.b16 %v3938, %v3934
    %v5159 = vpack.c.b16 %v3939, %v3935
    %v5160 = vpack.c.b16 %v3944, %v3940
    %v5161 = vpack.c.b16 %v3945, %v3941
    %v5162 = vpack.c.b16 %v3946, %v3942
    %v5163 = vpack.c.b16 %v3947, %v3943
    %v5164 = vpack.c.b16 %v3952, %v3948
    %v5165 = vpack.c.b16 %v3953, %v3949
    %v5166 = vpack.c.b16 %v3954, %v3950
    %v5167 = vpack.c.b16 %v3955, %v3951
    %v5168 = vpack.c.b16 %v3960, %v3956
    %v5169 = vpack.c.b16 %v3961, %v3957
    %v5170 = vpack.c.b16 %v3962, %v3958
    %v5171 = vpack.c.b16 %v3963, %v3959
    %v5172 = vpack.c.b16 %v3968, %v3964
    %v5173 = vpack.c.b16 %v3969, %v3965
    %v5174 = vpack.c.b16 %v3970, %v3966
    %v5175 = vpack.c.b16 %v3971, %v3967
    %v5176 = vpack.c.b16 %v3976, %v3972
    %v5177 = vpack.c.b16 %v3977, %v3973
    %v5178 = vpack.c.b16 %v3978, %v3974
    %v5179 = vpack.c.b16 %v3979, %v3975
    %v5180 = vpack.c.b16 %v3984, %v3980
    %v5181 = vpack.c.b16 %v3985, %v3981
    %v5182 = vpack.c.b16 %v3986, %v3982
    %v5183 = vpack.c.b16 %v3987, %v3983
    %v5184 = vpack.c.b16 %v3992, %v3988
    %v5185 = vpack.c.b16 %v3993, %v3989
    %v5186 = vpack.c.b16 %v3994, %v3990
    %v5187 = vpack.c.b16 %v3995, %v3991
    %v5188 = vpack.c.b16 %v4000, %v3996
    %v5189 = vpack.c.b16 %v4001, %v3997
    %v5190 = vpack.c.b16 %v4002, %v3998
    %v5191 = vpack.c.b16 %v4003, %v3999
    %v5192 = vpack.c.b16 %v4008, %v4004
    %v5193 = vpack.c.b16 %v4009, %v4005
    %v5194 = vpack.c.b16 %v4010, %v4006
    %v5195 = vpack.c.b16 %v4011, %v4007
    %v5196 = vpack.c.b16 %v4016, %v4012
    %v5197 = vpack.c.b16 %v4017, %v4013
    %v5198 = vpack.c.b16 %v4018, %v4014
    %v5199 = vpack.c.b16 %v4019, %v4015
    %v5200 = vpack.c.b16 %v4024, %v4020
    %v5201 = vpack.c.b16 %v4025, %v4021
    %v5202 = vpack.c.b16 %v4026, %v4022
    %v5203 = vpack.c.b16 %v4027, %v4023
    %v5204 = vpack.c.b16 %v4032, %v4028
    %v5205 = vpack.c.b16 %v4033, %v4029
    %v5206 = vpack.c.b16 %v4034, %v4030
    %v5207 = vpack.c.b16 %v4035, %v4031
    %v5208 = vpack.c.b16 %v4040, %v4036
    %v5209 = vpack.c.b16 %v4041, %v4037
    %v5210 = vpack.c.b16 %v4042, %v4038
    %v5211 = vpack.c.b16 %v4043, %v4039
    %v5212 = vpack.c.b16 %v4048, %v4044
    %v5213 = vpack.c.b16 %v4049, %v4045
    %v5214 = vpack.c.b16 %v4050, %v4046
    %v5215 = vpack.c.b16 %v4051, %v4047
    %v5216 = vpack.c.b16 %v4056, %v4052
    %v5217 = vpack.c.b16 %v4057, %v4053
    %v5218 = vpack.c.b16 %v4058, %v4054
    %v5219 = vpack.c.b16 %v4059, %v4055
    %v5220 = vpack.c.b16 %v4064, %v4060
    %v5221 = vpack.c.b16 %v4065, %v4061
    %v5222 = vpack.c.b16 %v4066, %v4062
    %v5223 = vpack.c.b16 %v4067, %v4063
    %v5224 = vpack.c.b16 %v4072, %v4068
    %v5225 = vpack.c.b16 %v4073, %v4069
    %v5226 = vpack.c.b16 %v4074, %v4070
    %v5227 = vpack.c.b16 %v4075, %v4071
    %v5228 = vpack.c.b16 %v4080, %v4076
    %v5229 = vpack.c.b16 %v4081, %v4077
    %v5230 = vpack.c.b16 %v4082, %v4078
    %v5231 = vpack.c.b16 %v4083, %v4079
    %v5232 = vpack.c.b16 %v4088, %v4084
    %v5233 = vpack.c.b16 %v4089, %v4085
    %v5234 = vpack.c.b16 %v4090, %v4086
    %v5235 = vpack.c.b16 %v4091, %v4087
    %v5236 = vpack.c.b16 %v4096, %v4092
    %v5237 = vpack.c.b16 %v4097, %v4093
    %v5238 = vpack.c.b16 %v4098, %v4094
    %v5239 = vpack.c.b16 %v4099, %v4095
    %v5240 = vpack.c.b16 %v4104, %v4100
    %v5241 = vpack.c.b16 %v4105, %v4101
    %v5242 = vpack.c.b16 %v4106, %v4102
    %v5243 = vpack.c.b16 %v4107, %v4103
    %v5244 = vpack.c.b16 %v4112, %v4108
    %v5245 = vpack.c.b16 %v4113, %v4109
    %v5246 = vpack.c.b16 %v4114, %v4110
    %v5247 = vpack.c.b16 %v4115, %v4111
    %v5248 = vpack.c.b16 %v4120, %v4116
    %v5249 = vpack.c.b16 %v4121, %v4117
    %v5250 = vpack.c.b16 %v4122, %v4118
    %v5251 = vpack.c.b16 %v4123, %v4119
    %v5252 = vpack.c.b16 %v4128, %v4124
    %v5253 = vpack.c.b16 %v4129, %v4125
    %v5254 = vpack.c.b16 %v4130, %v4126
    %v5255 = vpack.c.b16 %v4131, %v4127
    %v5256 = vpack.c.b16 %v4136, %v4132
    %v5257 = vpack.c.b16 %v4137, %v4133
    %v5258 = vpack.c.b16 %v4138, %v4134
    %v5259 = vpack.c.b16 %v4139, %v4135
    %v5260 = vpack.c.b16 %v4144, %v4140
    %v5261 = vpack.c.b16 %v4145, %v4141
    %v5262 = vpack.c.b16 %v4146, %v4142
    %v5263 = vpack.c.b16 %v4147, %v4143
    %v5264 = vpack.c.b16 %v4152, %v4148
    %v5265 = vpack.c.b16 %v4153, %v4149
    %v5266 = vpack.c.b16 %v4154, %v4150
    %v5267 = vpack.c.b16 %v4155, %v4151
    %v5268 = vpack.c.b16 %v4160, %v4156
    %v5269 = vpack.c.b16 %v4161, %v4157
    %v5270 = vpack.c.b16 %v4162, %v4158
    %v5271 = vpack.c.b16 %v4163, %v4159
    %v5272 = vpack.c.b16 %v4168, %v4164
    %v5273 = vpack.c.b16 %v4169, %v4165
    %v5274 = vpack.c.b16 %v4170, %v4166
    %v5275 = vpack.c.b16 %v4171, %v4167
    %v5276 = vpack.c.b16 %v4176, %v4172
    %v5277 = vpack.c.b16 %v4177, %v4173
    %v5278 = vpack.c.b16 %v4178, %v4174
    %v5279 = vpack.c.b16 %v4179, %v4175
    %v5280 = vpack.c.b16 %v4184, %v4180
    %v5281 = vpack.c.b16 %v4185, %v4181
    %v5282 = vpack.c.b16 %v4186, %v4182
    %v5283 = vpack.c.b16 %v4187, %v4183
    %v5284 = vpack.c.b16 %v4192, %v4188
    %v5285 = vpack.c.b16 %v4193, %v4189
    %v5286 = vpack.c.b16 %v4194, %v4190
    %v5287 = vpack.c.b16 %v4195, %v4191
    %v5288 = vpack.c.b16 %v4200, %v4196
    %v5289 = vpack.c.b16 %v4201, %v4197
    %v5290 = vpack.c.b16 %v4202, %v4198
    %v5291 = vpack.c.b16 %v4203, %v4199
    %v5292 = vpack.c.b16 %v4208, %v4204
    %v5293 = vpack.c.b16 %v4209, %v4205
    %v5294 = vpack.c.b16 %v4210, %v4206
    %v5295 = vpack.c.b16 %v4211, %v4207
    %v5296 = vpack.c.b16 %v4216, %v4212
    %v5297 = vpack.c.b16 %v4217, %v4213
    %v5298 = vpack.c.b16 %v4218, %v4214
    %v5299 = vpack.c.b16 %v4219, %v4215
    %v5300 = vpack.c.b16 %v4224, %v4220
    %v5301 = vpack.c.b16 %v4225, %v4221
    %v5302 = vpack.c.b16 %v4226, %v4222
    %v5303 = vpack.c.b16 %v4227, %v4223
    %v5304 = vpack.c.b16 %v4232, %v4228
    %v5305 = vpack.c.b16 %v4233, %v4229
    %v5306 = vpack.c.b16 %v4234, %v4230
    %v5307 = vpack.c.b16 %v4235, %v4231
    %v5308 = vpack.c.b16 %v4240, %v4236
    %v5309 = vpack.c.b16 %v4241, %v4237
    %v5310 = vpack.c.b16 %v4242, %v4238
    %v5311 = vpack.c.b16 %v4243, %v4239
    %v5312 = vpack.c.b16 %v4248, %v4244
    %v5313 = vpack.c.b16 %v4249, %v4245
    %v5314 = vpack.c.b16 %v4250, %v4246
    %v5315 = vpack.c.b16 %v4251, %v4247
    %v5316 = vpack.c.b16 %v4256, %v4252
    %v5317 = vpack.c.b16 %v4257, %v4253
    %v5318 = vpack.c.b16 %v4258, %v4254
    %v5319 = vpack.c.b16 %v4259, %v4255
    %v5320 = vpack.c.b16 %v4264, %v4260
    %v5321 = vpack.c.b16 %v4265, %v4261
    %v5322 = vpack.c.b16 %v4266, %v4262
    %v5323 = vpack.c.b16 %v4267, %v4263
    %v5324 = vpack.c.b16 %v4272, %v4268
    %v5325 = vpack.c.b16 %v4273, %v4269
    %v5326 = vpack.c.b16 %v4274, %v4270
    %v5327 = vpack.c.b16 %v4275, %v4271
    %v5328 = vpack.c.b16 %v4280, %v4276
    %v5329 = vpack.c.b16 %v4281, %v4277
    %v5330 = vpack.c.b16 %v4282, %v4278
    %v5331 = vpack.c.b16 %v4283, %v4279
    %v5332 = vpack.c.b16 %v4288, %v4284
    %v5333 = vpack.c.b16 %v4289, %v4285
    %v5334 = vpack.c.b16 %v4290, %v4286
    %v5335 = vpack.c.b16 %v4291, %v4287
    %v5336 = vpack.c.b16 %v4296, %v4292
    %v5337 = vpack.c.b16 %v4297, %v4293
    %v5338 = vpack.c.b16 %v4298, %v4294
    %v5339 = vpack.c.b16 %v4299, %v4295
    %v5340 = vpack.c.b16 %v4304, %v4300
    %v5341 = vpack.c.b16 %v4305, %v4301
    %v5342 = vpack.c.b16 %v4306, %v4302
    %v5343 = vpack.c.b16 %v4307, %v4303
    %v5344 = vpack.c.b16 %v4312, %v4308
    %v5345 = vpack.c.b16 %v4313, %v4309
    %v5346 = vpack.c.b16 %v4314, %v4310
    %v5347 = vpack.c.b16 %v4315, %v4311
    %v5348 = vpack.c.b16 %v4320, %v4316
    %v5349 = vpack.c.b16 %v4321, %v4317
    %v5350 = vpack.c.b16 %v4322, %v4318
    %v5351 = vpack.c.b16 %v4323, %v4319
    %v5352 = vpack.c.b16 %v4328, %v4324
    %v5353 = vpack.c.b16 %v4329, %v4325
    %v5354 = vpack.c.b16 %v4330, %v4326
    %v5355 = vpack.c.b16 %v4331, %v4327
    %6380 = vmatpush.bf16.msra.mxu0 %v4360
    %6381 = vmatpush.bf16.msra.mxu0 %v4356
    %6382 = vmatpush.bf16.msra.mxu0 %v4352
    %6383 = vmatpush.bf16.msra.mxu0 %v4348
    %6384 = vmatpush.bf16.msra.mxu0 %v4344
    %6385 = vmatpush.bf16.msra.mxu0 %v4340
    %6386 = vmatpush.bf16.msra.mxu0 %v4336
    %6387 = vmatpush.bf16.msra.mxu0 %v4332
    %6388 = vmatmul.bf16.gmra.mxu0 %v1196
    %v6389 = vpop.f32.mrf.mxu0
    %v6390 = vadd.f32 0.0, %v6389
    %v6391 = vpop.f32.mrf.mxu0
    %v6392 = vadd.f32 0.0, %v6391
    %6393 = vdwg.mxu0
    %6394 = vmatpush.bf16.msra.mxu0 %v4392
    %6395 = vmatpush.bf16.msra.mxu0 %v4388
    %6396 = vmatpush.bf16.msra.mxu0 %v4384
    %6397 = vmatpush.bf16.msra.mxu0 %v4380
    %6398 = vmatpush.bf16.msra.mxu0 %v4376
    %6399 = vmatpush.bf16.msra.mxu0 %v4372
    %6400 = vmatpush.bf16.msra.mxu0 %v4368
    %6401 = vmatpush.bf16.msra.mxu0 %v4364
    %6402 = vmatmul.bf16.gmra.mxu0 %v1197
    %v6403 = vpop.f32.mrf.mxu0
    %v6404 = vadd.f32 %v6390, %v6403
    %v6405 = vpop.f32.mrf.mxu0
    %v6406 = vadd.f32 %v6392, %v6405
    %6407 = vdwg.mxu0
    %6408 = vmatpush.bf16.msra.mxu0 %v4424
    %6409 = vmatpush.bf16.msra.mxu0 %v4420
    %6410 = vmatpush.bf16.msra.mxu0 %v4416
    %6411 = vmatpush.bf16.msra.mxu0 %v4412
    %6412 = vmatpush.bf16.msra.mxu0 %v4408
    %6413 = vmatpush.bf16.msra.mxu0 %v4404
    %6414 = vmatpush.bf16.msra.mxu0 %v4400
    %6415 = vmatpush.bf16.msra.mxu0 %v4396
    %6416 = vmatmul.bf16.gmra.mxu0 %v1198
    %v6417 = vpop.f32.mrf.mxu0
    %v6418 = vadd.f32 %v6404, %v6417
    %v6419 = vpop.f32.mrf.mxu0
    %v6420 = vadd.f32 %v6406, %v6419
    %6421 = vdwg.mxu0
    %6422 = vmatpush.bf16.msra.mxu0 %v4456
    %6423 = vmatpush.bf16.msra.mxu0 %v4452
    %6424 = vmatpush.bf16.msra.mxu0 %v4448
    %6425 = vmatpush.bf16.msra.mxu0 %v4444
    %6426 = vmatpush.bf16.msra.mxu0 %v4440
    %6427 = vmatpush.bf16.msra.mxu0 %v4436
    %6428 = vmatpush.bf16.msra.mxu0 %v4432
    %6429 = vmatpush.bf16.msra.mxu0 %v4428
    %6430 = vmatmul.bf16.gmra.mxu0 %v1199
    %v6431 = vpop.f32.mrf.mxu0
    %v6432 = vadd.f32 %v6418, %v6431
    %v6433 = vpop.f32.mrf.mxu0
    %v6434 = vadd.f32 %v6420, %v6433
    %6435 = vdwg.mxu0
    %6436 = vmatpush.bf16.msra.mxu0 %v4488
    %6437 = vmatpush.bf16.msra.mxu0 %v4484
    %6438 = vmatpush.bf16.msra.mxu0 %v4480
    %6439 = vmatpush.bf16.msra.mxu0 %v4476
    %6440 = vmatpush.bf16.msra.mxu0 %v4472
    %6441 = vmatpush.bf16.msra.mxu0 %v4468
    %6442 = vmatpush.bf16.msra.mxu0 %v4464
    %6443 = vmatpush.bf16.msra.mxu0 %v4460
    %6444 = vmatmul.bf16.gmra.mxu0 %v1200
    %v6445 = vpop.f32.mrf.mxu0
    %v6446 = vadd.f32 %v6432, %v6445
    %v6447 = vpop.f32.mrf.mxu0
    %v6448 = vadd.f32 %v6434, %v6447
    %6449 = vdwg.mxu0
    %6450 = vmatpush.bf16.msra.mxu0 %v4520
    %6451 = vmatpush.bf16.msra.mxu0 %v4516
    %6452 = vmatpush.bf16.msra.mxu0 %v4512
    %6453 = vmatpush.bf16.msra.mxu0 %v4508
    %6454 = vmatpush.bf16.msra.mxu0 %v4504
    %6455 = vmatpush.bf16.msra.mxu0 %v4500
    %6456 = vmatpush.bf16.msra.mxu0 %v4496
    %6457 = vmatpush.bf16.msra.mxu0 %v4492
    %6458 = vmatmul.bf16.gmra.mxu0 %v1201
    %v6459 = vpop.f32.mrf.mxu0
    %v6460 = vadd.f32 %v6446, %v6459
    %v6461 = vpop.f32.mrf.mxu0
    %v6462 = vadd.f32 %v6448, %v6461
    %6463 = vdwg.mxu0
    %6464 = vmatpush.bf16.msra.mxu0 %v4552
    %6465 = vmatpush.bf16.msra.mxu0 %v4548
    %6466 = vmatpush.bf16.msra.mxu0 %v4544
    %6467 = vmatpush.bf16.msra.mxu0 %v4540
    %6468 = vmatpush.bf16.msra.mxu0 %v4536
    %6469 = vmatpush.bf16.msra.mxu0 %v4532
    %6470 = vmatpush.bf16.msra.mxu0 %v4528
    %6471 = vmatpush.bf16.msra.mxu0 %v4524
    %6472 = vmatmul.bf16.gmra.mxu0 %v1202
    %v6473 = vpop.f32.mrf.mxu0
    %v6474 = vadd.f32 %v6460, %v6473
    %v6475 = vpop.f32.mrf.mxu0
    %v6476 = vadd.f32 %v6462, %v6475
    %6477 = vdwg.mxu0
    %6478 = vmatpush.bf16.msra.mxu0 %v4584
    %6479 = vmatpush.bf16.msra.mxu0 %v4580
    %6480 = vmatpush.bf16.msra.mxu0 %v4576
    %6481 = vmatpush.bf16.msra.mxu0 %v4572
    %6482 = vmatpush.bf16.msra.mxu0 %v4568
    %6483 = vmatpush.bf16.msra.mxu0 %v4564
    %6484 = vmatpush.bf16.msra.mxu0 %v4560
    %6485 = vmatpush.bf16.msra.mxu0 %v4556
    %6486 = vmatmul.bf16.gmra.mxu0 %v1203
    %v6487 = vpop.f32.mrf.mxu0
    %v6488 = vadd.f32 %v6474, %v6487
    %v6489 = vpop.f32.mrf.mxu0
    %v6490 = vadd.f32 %v6476, %v6489
    %6491 = vdwg.mxu0
    %6492 = vmatpush.bf16.msra.mxu0 %v4616
    %6493 = vmatpush.bf16.msra.mxu0 %v4612
    %6494 = vmatpush.bf16.msra.mxu0 %v4608
    %6495 = vmatpush.bf16.msra.mxu0 %v4604
    %6496 = vmatpush.bf16.msra.mxu0 %v4600
    %6497 = vmatpush.bf16.msra.mxu0 %v4596
    %6498 = vmatpush.bf16.msra.mxu0 %v4592
    %6499 = vmatpush.bf16.msra.mxu0 %v4588
    %6500 = vmatmul.bf16.gmra.mxu0 %v1204
    %v6501 = vpop.f32.mrf.mxu0
    %v6502 = vadd.f32 %v6488, %v6501
    %v6503 = vpop.f32.mrf.mxu0
    %v6504 = vadd.f32 %v6490, %v6503
    %6505 = vdwg.mxu0
    %6506 = vmatpush.bf16.msra.mxu0 %v4648
    %6507 = vmatpush.bf16.msra.mxu0 %v4644
    %6508 = vmatpush.bf16.msra.mxu0 %v4640
    %6509 = vmatpush.bf16.msra.mxu0 %v4636
    %6510 = vmatpush.bf16.msra.mxu0 %v4632
    %6511 = vmatpush.bf16.msra.mxu0 %v4628
    %6512 = vmatpush.bf16.msra.mxu0 %v4624
    %6513 = vmatpush.bf16.msra.mxu0 %v4620
    %6514 = vmatmul.bf16.gmra.mxu0 %v1205
    %v6515 = vpop.f32.mrf.mxu0
    %v6516 = vadd.f32 %v6502, %v6515
    %v6517 = vpop.f32.mrf.mxu0
    %v6518 = vadd.f32 %v6504, %v6517
    %6519 = vdwg.mxu0
    %6520 = vmatpush.bf16.msra.mxu0 %v4680
    %6521 = vmatpush.bf16.msra.mxu0 %v4676
    %6522 = vmatpush.bf16.msra.mxu0 %v4672
    %6523 = vmatpush.bf16.msra.mxu0 %v4668
    %6524 = vmatpush.bf16.msra.mxu0 %v4664
    %6525 = vmatpush.bf16.msra.mxu0 %v4660
    %6526 = vmatpush.bf16.msra.mxu0 %v4656
    %6527 = vmatpush.bf16.msra.mxu0 %v4652
    %6528 = vmatmul.bf16.gmra.mxu0 %v1206
    %v6529 = vpop.f32.mrf.mxu0
    %v6530 = vadd.f32 %v6516, %v6529
    %v6531 = vpop.f32.mrf.mxu0
    %v6532 = vadd.f32 %v6518, %v6531
    %6533 = vdwg.mxu0
    %6534 = vmatpush.bf16.msra.mxu0 %v4712
    %6535 = vmatpush.bf16.msra.mxu0 %v4708
    %6536 = vmatpush.bf16.msra.mxu0 %v4704
    %6537 = vmatpush.bf16.msra.mxu0 %v4700
    %6538 = vmatpush.bf16.msra.mxu0 %v4696
    %6539 = vmatpush.bf16.msra.mxu0 %v4692
    %6540 = vmatpush.bf16.msra.mxu0 %v4688
    %6541 = vmatpush.bf16.msra.mxu0 %v4684
    %6542 = vmatmul.bf16.gmra.mxu0 %v1207
    %v6543 = vpop.f32.mrf.mxu0
    %v6544 = vadd.f32 %v6530, %v6543
    %v6545 = vpop.f32.mrf.mxu0
    %v6546 = vadd.f32 %v6532, %v6545
    %6547 = vdwg.mxu0
    %6548 = vmatpush.bf16.msra.mxu0 %v4744
    %6549 = vmatpush.bf16.msra.mxu0 %v4740
    %6550 = vmatpush.bf16.msra.mxu0 %v4736
    %6551 = vmatpush.bf16.msra.mxu0 %v4732
    %6552 = vmatpush.bf16.msra.mxu0 %v4728
    %6553 = vmatpush.bf16.msra.mxu0 %v4724
    %6554 = vmatpush.bf16.msra.mxu0 %v4720
    %6555 = vmatpush.bf16.msra.mxu0 %v4716
    %6556 = vmatmul.bf16.gmra.mxu0 %v1208
    %v6557 = vpop.f32.mrf.mxu0
    %v6558 = vadd.f32 %v6544, %v6557
    %v6559 = vpop.f32.mrf.mxu0
    %v6560 = vadd.f32 %v6546, %v6559
    %6561 = vdwg.mxu0
    %6562 = vmatpush.bf16.msra.mxu0 %v4776
    %6563 = vmatpush.bf16.msra.mxu0 %v4772
    %6564 = vmatpush.bf16.msra.mxu0 %v4768
    %6565 = vmatpush.bf16.msra.mxu0 %v4764
    %6566 = vmatpush.bf16.msra.mxu0 %v4760
    %6567 = vmatpush.bf16.msra.mxu0 %v4756
    %6568 = vmatpush.bf16.msra.mxu0 %v4752
    %6569 = vmatpush.bf16.msra.mxu0 %v4748
    %6570 = vmatmul.bf16.gmra.mxu0 %v1209
    %v6571 = vpop.f32.mrf.mxu0
    %v6572 = vadd.f32 %v6558, %v6571
    %v6573 = vpop.f32.mrf.mxu0
    %v6574 = vadd.f32 %v6560, %v6573
    %6575 = vdwg.mxu0
    %6576 = vmatpush.bf16.msra.mxu0 %v4808
    %6577 = vmatpush.bf16.msra.mxu0 %v4804
    %6578 = vmatpush.bf16.msra.mxu0 %v4800
    %6579 = vmatpush.bf16.msra.mxu0 %v4796
    %6580 = vmatpush.bf16.msra.mxu0 %v4792
    %6581 = vmatpush.bf16.msra.mxu0 %v4788
    %6582 = vmatpush.bf16.msra.mxu0 %v4784
    %6583 = vmatpush.bf16.msra.mxu0 %v4780
    %6584 = vmatmul.bf16.gmra.mxu0 %v1210
    %v6585 = vpop.f32.mrf.mxu0
    %v6586 = vadd.f32 %v6572, %v6585
    %v6587 = vpop.f32.mrf.mxu0
    %v6588 = vadd.f32 %v6574, %v6587
    %6589 = vdwg.mxu0
    %6590 = vmatpush.bf16.msra.mxu0 %v4840
    %6591 = vmatpush.bf16.msra.mxu0 %v4836
    %6592 = vmatpush.bf16.msra.mxu0 %v4832
    %6593 = vmatpush.bf16.msra.mxu0 %v4828
    %6594 = vmatpush.bf16.msra.mxu0 %v4824
    %6595 = vmatpush.bf16.msra.mxu0 %v4820
    %6596 = vmatpush.bf16.msra.mxu0 %v4816
    %6597 = vmatpush.bf16.msra.mxu0 %v4812
    %6598 = vmatmul.bf16.gmra.mxu0 %v1211
    %v6599 = vpop.f32.mrf.mxu0
    %v6600 = vadd.f32 %v6586, %v6599
    %v6601 = vpop.f32.mrf.mxu0
    %v6602 = vadd.f32 %v6588, %v6601
    %6603 = vdwg.mxu0
    %6604 = vmatpush.bf16.msra.mxu0 %v4872
    %6605 = vmatpush.bf16.msra.mxu0 %v4868
    %6606 = vmatpush.bf16.msra.mxu0 %v4864
    %6607 = vmatpush.bf16.msra.mxu0 %v4860
    %6608 = vmatpush.bf16.msra.mxu0 %v4856
    %6609 = vmatpush.bf16.msra.mxu0 %v4852
    %6610 = vmatpush.bf16.msra.mxu0 %v4848
    %6611 = vmatpush.bf16.msra.mxu0 %v4844
    %6612 = vmatmul.bf16.gmra.mxu0 %v1212
    %v6613 = vpop.f32.mrf.mxu0
    %v6614 = vadd.f32 %v6600, %v6613
    %v6615 = vpop.f32.mrf.mxu0
    %v6616 = vadd.f32 %v6602, %v6615
    %6617 = vdwg.mxu0
    %6618 = vmatpush.bf16.msra.mxu0 %v4904
    %6619 = vmatpush.bf16.msra.mxu0 %v4900
    %6620 = vmatpush.bf16.msra.mxu0 %v4896
    %6621 = vmatpush.bf16.msra.mxu0 %v4892
    %6622 = vmatpush.bf16.msra.mxu0 %v4888
    %6623 = vmatpush.bf16.msra.mxu0 %v4884
    %6624 = vmatpush.bf16.msra.mxu0 %v4880
    %6625 = vmatpush.bf16.msra.mxu0 %v4876
    %6626 = vmatmul.bf16.gmra.mxu0 %v1213
    %v6627 = vpop.f32.mrf.mxu0
    %v6628 = vadd.f32 %v6614, %v6627
    %v6629 = vpop.f32.mrf.mxu0
    %v6630 = vadd.f32 %v6616, %v6629
    %6631 = vdwg.mxu0
    %6632 = vmatpush.bf16.msra.mxu0 %v4936
    %6633 = vmatpush.bf16.msra.mxu0 %v4932
    %6634 = vmatpush.bf16.msra.mxu0 %v4928
    %6635 = vmatpush.bf16.msra.mxu0 %v4924
    %6636 = vmatpush.bf16.msra.mxu0 %v4920
    %6637 = vmatpush.bf16.msra.mxu0 %v4916
    %6638 = vmatpush.bf16.msra.mxu0 %v4912
    %6639 = vmatpush.bf16.msra.mxu0 %v4908
    %6640 = vmatmul.bf16.gmra.mxu0 %v1214
    %v6641 = vpop.f32.mrf.mxu0
    %v6642 = vadd.f32 %v6628, %v6641
    %v6643 = vpop.f32.mrf.mxu0
    %v6644 = vadd.f32 %v6630, %v6643
    %6645 = vdwg.mxu0
    %6646 = vmatpush.bf16.msra.mxu0 %v4968
    %6647 = vmatpush.bf16.msra.mxu0 %v4964
    %6648 = vmatpush.bf16.msra.mxu0 %v4960
    %6649 = vmatpush.bf16.msra.mxu0 %v4956
    %6650 = vmatpush.bf16.msra.mxu0 %v4952
    %6651 = vmatpush.bf16.msra.mxu0 %v4948
    %6652 = vmatpush.bf16.msra.mxu0 %v4944
    %6653 = vmatpush.bf16.msra.mxu0 %v4940
    %6654 = vmatmul.bf16.gmra.mxu0 %v1215
    %v6655 = vpop.f32.mrf.mxu0
    %v6656 = vadd.f32 %v6642, %v6655
    %v6657 = vpop.f32.mrf.mxu0
    %v6658 = vadd.f32 %v6644, %v6657
    %6659 = vdwg.mxu0
    %6660 = vmatpush.bf16.msra.mxu0 %v5000
    %6661 = vmatpush.bf16.msra.mxu0 %v4996
    %6662 = vmatpush.bf16.msra.mxu0 %v4992
    %6663 = vmatpush.bf16.msra.mxu0 %v4988
    %6664 = vmatpush.bf16.msra.mxu0 %v4984
    %6665 = vmatpush.bf16.msra.mxu0 %v4980
    %6666 = vmatpush.bf16.msra.mxu0 %v4976
    %6667 = vmatpush.bf16.msra.mxu0 %v4972
    %6668 = vmatmul.bf16.gmra.mxu0 %v1216
    %v6669 = vpop.f32.mrf.mxu0
    %v6670 = vadd.f32 %v6656, %v6669
    %v6671 = vpop.f32.mrf.mxu0
    %v6672 = vadd.f32 %v6658, %v6671
    %6673 = vdwg.mxu0
    %6674 = vmatpush.bf16.msra.mxu0 %v5032
    %6675 = vmatpush.bf16.msra.mxu0 %v5028
    %6676 = vmatpush.bf16.msra.mxu0 %v5024
    %6677 = vmatpush.bf16.msra.mxu0 %v5020
    %6678 = vmatpush.bf16.msra.mxu0 %v5016
    %6679 = vmatpush.bf16.msra.mxu0 %v5012
    %6680 = vmatpush.bf16.msra.mxu0 %v5008
    %6681 = vmatpush.bf16.msra.mxu0 %v5004
    %6682 = vmatmul.bf16.gmra.mxu0 %v1217
    %v6683 = vpop.f32.mrf.mxu0
    %v6684 = vadd.f32 %v6670, %v6683
    %v6685 = vpop.f32.mrf.mxu0
    %v6686 = vadd.f32 %v6672, %v6685
    %6687 = vdwg.mxu0
    %6688 = vmatpush.bf16.msra.mxu0 %v5064
    %6689 = vmatpush.bf16.msra.mxu0 %v5060
    %6690 = vmatpush.bf16.msra.mxu0 %v5056
    %6691 = vmatpush.bf16.msra.mxu0 %v5052
    %6692 = vmatpush.bf16.msra.mxu0 %v5048
    %6693 = vmatpush.bf16.msra.mxu0 %v5044
    %6694 = vmatpush.bf16.msra.mxu0 %v5040
    %6695 = vmatpush.bf16.msra.mxu0 %v5036
    %6696 = vmatmul.bf16.gmra.mxu0 %v1218
    %v6697 = vpop.f32.mrf.mxu0
    %v6698 = vadd.f32 %v6684, %v6697
    %v6699 = vpop.f32.mrf.mxu0
    %v6700 = vadd.f32 %v6686, %v6699
    %6701 = vdwg.mxu0
    %6702 = vmatpush.bf16.msra.mxu0 %v5096
    %6703 = vmatpush.bf16.msra.mxu0 %v5092
    %6704 = vmatpush.bf16.msra.mxu0 %v5088
    %6705 = vmatpush.bf16.msra.mxu0 %v5084
    %6706 = vmatpush.bf16.msra.mxu0 %v5080
    %6707 = vmatpush.bf16.msra.mxu0 %v5076
    %6708 = vmatpush.bf16.msra.mxu0 %v5072
    %6709 = vmatpush.bf16.msra.mxu0 %v5068
    %6710 = vmatmul.bf16.gmra.mxu0 %v1219
    %v6711 = vpop.f32.mrf.mxu0
    %v6712 = vadd.f32 %v6698, %v6711
    %v6713 = vpop.f32.mrf.mxu0
    %v6714 = vadd.f32 %v6700, %v6713
    %6715 = vdwg.mxu0
    %6716 = vmatpush.bf16.msra.mxu0 %v5128
    %6717 = vmatpush.bf16.msra.mxu0 %v5124
    %6718 = vmatpush.bf16.msra.mxu0 %v5120
    %6719 = vmatpush.bf16.msra.mxu0 %v5116
    %6720 = vmatpush.bf16.msra.mxu0 %v5112
    %6721 = vmatpush.bf16.msra.mxu0 %v5108
    %6722 = vmatpush.bf16.msra.mxu0 %v5104
    %6723 = vmatpush.bf16.msra.mxu0 %v5100
    %6724 = vmatmul.bf16.gmra.mxu0 %v1220
    %v6725 = vpop.f32.mrf.mxu0
    %v6726 = vadd.f32 %v6712, %v6725
    %v6727 = vpop.f32.mrf.mxu0
    %v6728 = vadd.f32 %v6714, %v6727
    %6729 = vdwg.mxu0
    %6730 = vmatpush.bf16.msra.mxu0 %v5160
    %6731 = vmatpush.bf16.msra.mxu0 %v5156
    %6732 = vmatpush.bf16.msra.mxu0 %v5152
    %6733 = vmatpush.bf16.msra.mxu0 %v5148
    %6734 = vmatpush.bf16.msra.mxu0 %v5144
    %6735 = vmatpush.bf16.msra.mxu0 %v5140
    %6736 = vmatpush.bf16.msra.mxu0 %v5136
    %6737 = vmatpush.bf16.msra.mxu0 %v5132
    %6738 = vmatmul.bf16.gmra.mxu0 %v1221
    %v6739 = vpop.f32.mrf.mxu0
    %v6740 = vadd.f32 %v6726, %v6739
    %v6741 = vpop.f32.mrf.mxu0
    %v6742 = vadd.f32 %v6728, %v6741
    %6743 = vdwg.mxu0
    %6744 = vmatpush.bf16.msra.mxu0 %v5192
    %6745 = vmatpush.bf16.msra.mxu0 %v5188
    %6746 = vmatpush.bf16.msra.mxu0 %v5184
    %6747 = vmatpush.bf16.msra.mxu0 %v5180
    %6748 = vmatpush.bf16.msra.mxu0 %v5176
    %6749 = vmatpush.bf16.msra.mxu0 %v5172
    %6750 = vmatpush.bf16.msra.mxu0 %v5168
    %6751 = vmatpush.bf16.msra.mxu0 %v5164
    %6752 = vmatmul.bf16.gmra.mxu0 %v1222
    %v6753 = vpop.f32.mrf.mxu0
    %v6754 = vadd.f32 %v6740, %v6753
    %v6755 = vpop.f32.mrf.mxu0
    %v6756 = vadd.f32 %v6742, %v6755
    %6757 = vdwg.mxu0
    %6758 = vmatpush.bf16.msra.mxu0 %v5224
    %6759 = vmatpush.bf16.msra.mxu0 %v5220
    %6760 = vmatpush.bf16.msra.mxu0 %v5216
    %6761 = vmatpush.bf16.msra.mxu0 %v5212
    %6762 = vmatpush.bf16.msra.mxu0 %v5208
    %6763 = vmatpush.bf16.msra.mxu0 %v5204
    %6764 = vmatpush.bf16.msra.mxu0 %v5200
    %6765 = vmatpush.bf16.msra.mxu0 %v5196
    %6766 = vmatmul.bf16.gmra.mxu0 %v1223
    %v6767 = vpop.f32.mrf.mxu0
    %v6768 = vadd.f32 %v6754, %v6767
    %v6769 = vpop.f32.mrf.mxu0
    %v6770 = vadd.f32 %v6756, %v6769
    %6771 = vdwg.mxu0
    %6772 = vmatpush.bf16.msra.mxu0 %v5256
    %6773 = vmatpush.bf16.msra.mxu0 %v5252
    %6774 = vmatpush.bf16.msra.mxu0 %v5248
    %6775 = vmatpush.bf16.msra.mxu0 %v5244
    %6776 = vmatpush.bf16.msra.mxu0 %v5240
    %6777 = vmatpush.bf16.msra.mxu0 %v5236
    %6778 = vmatpush.bf16.msra.mxu0 %v5232
    %6779 = vmatpush.bf16.msra.mxu0 %v5228
    %6780 = vmatmul.bf16.gmra.mxu0 %v1224
    %v6781 = vpop.f32.mrf.mxu0
    %v6782 = vadd.f32 %v6768, %v6781
    %v6783 = vpop.f32.mrf.mxu0
    %v6784 = vadd.f32 %v6770, %v6783
    %6785 = vdwg.mxu0
    %6786 = vmatpush.bf16.msra.mxu0 %v5288
    %6787 = vmatpush.bf16.msra.mxu0 %v5284
    %6788 = vmatpush.bf16.msra.mxu0 %v5280
    %6789 = vmatpush.bf16.msra.mxu0 %v5276
    %6790 = vmatpush.bf16.msra.mxu0 %v5272
    %6791 = vmatpush.bf16.msra.mxu0 %v5268
    %6792 = vmatpush.bf16.msra.mxu0 %v5264
    %6793 = vmatpush.bf16.msra.mxu0 %v5260
    %6794 = vmatmul.bf16.gmra.mxu0 %v1225
    %v6795 = vpop.f32.mrf.mxu0
    %v6796 = vadd.f32 %v6782, %v6795
    %v6797 = vpop.f32.mrf.mxu0
    %v6798 = vadd.f32 %v6784, %v6797
    %6799 = vdwg.mxu0
    %6800 = vmatpush.bf16.msra.mxu0 %v5320
    %6801 = vmatpush.bf16.msra.mxu0 %v5316
    %6802 = vmatpush.bf16.msra.mxu0 %v5312
    %6803 = vmatpush.bf16.msra.mxu0 %v5308
    %6804 = vmatpush.bf16.msra.mxu0 %v5304
    %6805 = vmatpush.bf16.msra.mxu0 %v5300
    %6806 = vmatpush.bf16.msra.mxu0 %v5296
    %6807 = vmatpush.bf16.msra.mxu0 %v5292
    %6808 = vmatmul.bf16.gmra.mxu0 %v1226
    %v6809 = vpop.f32.mrf.mxu0
    %v6810 = vadd.f32 %v6796, %v6809
    %v6811 = vpop.f32.mrf.mxu0
    %v6812 = vadd.f32 %v6798, %v6811
    %6813 = vdwg.mxu0
    %6814 = vmatpush.bf16.msra.mxu0 %v5352
    %6815 = vmatpush.bf16.msra.mxu0 %v5348
    %6816 = vmatpush.bf16.msra.mxu0 %v5344
    %6817 = vmatpush.bf16.msra.mxu0 %v5340
    %6818 = vmatpush.bf16.msra.mxu0 %v5336
    %6819 = vmatpush.bf16.msra.mxu0 %v5332
    %6820 = vmatpush.bf16.msra.mxu0 %v5328
    %6821 = vmatpush.bf16.msra.mxu0 %v5324
    %6822 = vmatmul.bf16.gmra.mxu0 %v1227
    %v6823 = vpop.f32.mrf.mxu0
    %v6824 = vadd.f32 %v6810, %v6823
    %v6825 = vpop.f32.mrf.mxu0
    %v6826 = vadd.f32 %v6812, %v6825
    %6827 = vdwg.mxu0
    %6828 = vmatpush.bf16.msra.mxu0 %v4361
    %6829 = vmatpush.bf16.msra.mxu0 %v4357
    %6830 = vmatpush.bf16.msra.mxu0 %v4353
    %6831 = vmatpush.bf16.msra.mxu0 %v4349
    %6832 = vmatpush.bf16.msra.mxu0 %v4345
    %6833 = vmatpush.bf16.msra.mxu0 %v4341
    %6834 = vmatpush.bf16.msra.mxu0 %v4337
    %6835 = vmatpush.bf16.msra.mxu0 %v4333
    %6836 = vmatmul.bf16.gmra.mxu0 %v1196
    %v6837 = vpop.f32.mrf.mxu0
    %v6838 = vadd.f32 0.0, %v6837
    %v6839 = vpop.f32.mrf.mxu0
    %v6840 = vadd.f32 0.0, %v6839
    %6841 = vdwg.mxu0
    %6842 = vmatpush.bf16.msra.mxu0 %v4393
    %6843 = vmatpush.bf16.msra.mxu0 %v4389
    %6844 = vmatpush.bf16.msra.mxu0 %v4385
    %6845 = vmatpush.bf16.msra.mxu0 %v4381
    %6846 = vmatpush.bf16.msra.mxu0 %v4377
    %6847 = vmatpush.bf16.msra.mxu0 %v4373
    %6848 = vmatpush.bf16.msra.mxu0 %v4369
    %6849 = vmatpush.bf16.msra.mxu0 %v4365
    %6850 = vmatmul.bf16.gmra.mxu0 %v1197
    %v6851 = vpop.f32.mrf.mxu0
    %v6852 = vadd.f32 %v6838, %v6851
    %v6853 = vpop.f32.mrf.mxu0
    %v6854 = vadd.f32 %v6840, %v6853
    %6855 = vdwg.mxu0
    %6856 = vmatpush.bf16.msra.mxu0 %v4425
    %6857 = vmatpush.bf16.msra.mxu0 %v4421
    %6858 = vmatpush.bf16.msra.mxu0 %v4417
    %6859 = vmatpush.bf16.msra.mxu0 %v4413
    %6860 = vmatpush.bf16.msra.mxu0 %v4409
    %6861 = vmatpush.bf16.msra.mxu0 %v4405
    %6862 = vmatpush.bf16.msra.mxu0 %v4401
    %6863 = vmatpush.bf16.msra.mxu0 %v4397
    %6864 = vmatmul.bf16.gmra.mxu0 %v1198
    %v6865 = vpop.f32.mrf.mxu0
    %v6866 = vadd.f32 %v6852, %v6865
    %v6867 = vpop.f32.mrf.mxu0
    %v6868 = vadd.f32 %v6854, %v6867
    %6869 = vdwg.mxu0
    %6870 = vmatpush.bf16.msra.mxu0 %v4457
    %6871 = vmatpush.bf16.msra.mxu0 %v4453
    %6872 = vmatpush.bf16.msra.mxu0 %v4449
    %6873 = vmatpush.bf16.msra.mxu0 %v4445
    %6874 = vmatpush.bf16.msra.mxu0 %v4441
    %6875 = vmatpush.bf16.msra.mxu0 %v4437
    %6876 = vmatpush.bf16.msra.mxu0 %v4433
    %6877 = vmatpush.bf16.msra.mxu0 %v4429
    %6878 = vmatmul.bf16.gmra.mxu0 %v1199
    %v6879 = vpop.f32.mrf.mxu0
    %v6880 = vadd.f32 %v6866, %v6879
    %v6881 = vpop.f32.mrf.mxu0
    %v6882 = vadd.f32 %v6868, %v6881
    %6883 = vdwg.mxu0
    %6884 = vmatpush.bf16.msra.mxu0 %v4489
    %6885 = vmatpush.bf16.msra.mxu0 %v4485
    %6886 = vmatpush.bf16.msra.mxu0 %v4481
    %6887 = vmatpush.bf16.msra.mxu0 %v4477
    %6888 = vmatpush.bf16.msra.mxu0 %v4473
    %6889 = vmatpush.bf16.msra.mxu0 %v4469
    %6890 = vmatpush.bf16.msra.mxu0 %v4465
    %6891 = vmatpush.bf16.msra.mxu0 %v4461
    %6892 = vmatmul.bf16.gmra.mxu0 %v1200
    %v6893 = vpop.f32.mrf.mxu0
    %v6894 = vadd.f32 %v6880, %v6893
    %v6895 = vpop.f32.mrf.mxu0
    %v6896 = vadd.f32 %v6882, %v6895
    %6897 = vdwg.mxu0
    %6898 = vmatpush.bf16.msra.mxu0 %v4521
    %6899 = vmatpush.bf16.msra.mxu0 %v4517
    %6900 = vmatpush.bf16.msra.mxu0 %v4513
    %6901 = vmatpush.bf16.msra.mxu0 %v4509
    %6902 = vmatpush.bf16.msra.mxu0 %v4505
    %6903 = vmatpush.bf16.msra.mxu0 %v4501
    %6904 = vmatpush.bf16.msra.mxu0 %v4497
    %6905 = vmatpush.bf16.msra.mxu0 %v4493
    %6906 = vmatmul.bf16.gmra.mxu0 %v1201
    %v6907 = vpop.f32.mrf.mxu0
    %v6908 = vadd.f32 %v6894, %v6907
    %v6909 = vpop.f32.mrf.mxu0
    %v6910 = vadd.f32 %v6896, %v6909
    %6911 = vdwg.mxu0
    %6912 = vmatpush.bf16.msra.mxu0 %v4553
    %6913 = vmatpush.bf16.msra.mxu0 %v4549
    %6914 = vmatpush.bf16.msra.mxu0 %v4545
    %6915 = vmatpush.bf16.msra.mxu0 %v4541
    %6916 = vmatpush.bf16.msra.mxu0 %v4537
    %6917 = vmatpush.bf16.msra.mxu0 %v4533
    %6918 = vmatpush.bf16.msra.mxu0 %v4529
    %6919 = vmatpush.bf16.msra.mxu0 %v4525
    %6920 = vmatmul.bf16.gmra.mxu0 %v1202
    %v6921 = vpop.f32.mrf.mxu0
    %v6922 = vadd.f32 %v6908, %v6921
    %v6923 = vpop.f32.mrf.mxu0
    %v6924 = vadd.f32 %v6910, %v6923
    %6925 = vdwg.mxu0
    %6926 = vmatpush.bf16.msra.mxu0 %v4585
    %6927 = vmatpush.bf16.msra.mxu0 %v4581
    %6928 = vmatpush.bf16.msra.mxu0 %v4577
    %6929 = vmatpush.bf16.msra.mxu0 %v4573
    %6930 = vmatpush.bf16.msra.mxu0 %v4569
    %6931 = vmatpush.bf16.msra.mxu0 %v4565
    %6932 = vmatpush.bf16.msra.mxu0 %v4561
    %6933 = vmatpush.bf16.msra.mxu0 %v4557
    %6934 = vmatmul.bf16.gmra.mxu0 %v1203
    %v6935 = vpop.f32.mrf.mxu0
    %v6936 = vadd.f32 %v6922, %v6935
    %v6937 = vpop.f32.mrf.mxu0
    %v6938 = vadd.f32 %v6924, %v6937
    %6939 = vdwg.mxu0
    %6940 = vmatpush.bf16.msra.mxu0 %v4617
    %6941 = vmatpush.bf16.msra.mxu0 %v4613
    %6942 = vmatpush.bf16.msra.mxu0 %v4609
    %6943 = vmatpush.bf16.msra.mxu0 %v4605
    %6944 = vmatpush.bf16.msra.mxu0 %v4601
    %6945 = vmatpush.bf16.msra.mxu0 %v4597
    %6946 = vmatpush.bf16.msra.mxu0 %v4593
    %6947 = vmatpush.bf16.msra.mxu0 %v4589
    %6948 = vmatmul.bf16.gmra.mxu0 %v1204
    %v6949 = vpop.f32.mrf.mxu0
    %v6950 = vadd.f32 %v6936, %v6949
    %v6951 = vpop.f32.mrf.mxu0
    %v6952 = vadd.f32 %v6938, %v6951
    %6953 = vdwg.mxu0
    %6954 = vmatpush.bf16.msra.mxu0 %v4649
    %6955 = vmatpush.bf16.msra.mxu0 %v4645
    %6956 = vmatpush.bf16.msra.mxu0 %v4641
    %6957 = vmatpush.bf16.msra.mxu0 %v4637
    %6958 = vmatpush.bf16.msra.mxu0 %v4633
    %6959 = vmatpush.bf16.msra.mxu0 %v4629
    %6960 = vmatpush.bf16.msra.mxu0 %v4625
    %6961 = vmatpush.bf16.msra.mxu0 %v4621
    %6962 = vmatmul.bf16.gmra.mxu0 %v1205
    %v6963 = vpop.f32.mrf.mxu0
    %v6964 = vadd.f32 %v6950, %v6963
    %v6965 = vpop.f32.mrf.mxu0
    %v6966 = vadd.f32 %v6952, %v6965
    %6967 = vdwg.mxu0
    %6968 = vmatpush.bf16.msra.mxu0 %v4681
    %6969 = vmatpush.bf16.msra.mxu0 %v4677
    %6970 = vmatpush.bf16.msra.mxu0 %v4673
    %6971 = vmatpush.bf16.msra.mxu0 %v4669
    %6972 = vmatpush.bf16.msra.mxu0 %v4665
    %6973 = vmatpush.bf16.msra.mxu0 %v4661
    %6974 = vmatpush.bf16.msra.mxu0 %v4657
    %6975 = vmatpush.bf16.msra.mxu0 %v4653
    %6976 = vmatmul.bf16.gmra.mxu0 %v1206
    %v6977 = vpop.f32.mrf.mxu0
    %v6978 = vadd.f32 %v6964, %v6977
    %v6979 = vpop.f32.mrf.mxu0
    %v6980 = vadd.f32 %v6966, %v6979
    %6981 = vdwg.mxu0
    %6982 = vmatpush.bf16.msra.mxu0 %v4713
    %6983 = vmatpush.bf16.msra.mxu0 %v4709
    %6984 = vmatpush.bf16.msra.mxu0 %v4705
    %6985 = vmatpush.bf16.msra.mxu0 %v4701
    %6986 = vmatpush.bf16.msra.mxu0 %v4697
    %6987 = vmatpush.bf16.msra.mxu0 %v4693
    %6988 = vmatpush.bf16.msra.mxu0 %v4689
    %6989 = vmatpush.bf16.msra.mxu0 %v4685
    %6990 = vmatmul.bf16.gmra.mxu0 %v1207
    %v6991 = vpop.f32.mrf.mxu0
    %v6992 = vadd.f32 %v6978, %v6991
    %v6993 = vpop.f32.mrf.mxu0
    %v6994 = vadd.f32 %v6980, %v6993
    %6995 = vdwg.mxu0
    %6996 = vmatpush.bf16.msra.mxu0 %v4745
    %6997 = vmatpush.bf16.msra.mxu0 %v4741
    %6998 = vmatpush.bf16.msra.mxu0 %v4737
    %6999 = vmatpush.bf16.msra.mxu0 %v4733
    %7000 = vmatpush.bf16.msra.mxu0 %v4729
    %7001 = vmatpush.bf16.msra.mxu0 %v4725
    %7002 = vmatpush.bf16.msra.mxu0 %v4721
    %7003 = vmatpush.bf16.msra.mxu0 %v4717
    %7004 = vmatmul.bf16.gmra.mxu0 %v1208
    %v7005 = vpop.f32.mrf.mxu0
    %v7006 = vadd.f32 %v6992, %v7005
    %v7007 = vpop.f32.mrf.mxu0
    %v7008 = vadd.f32 %v6994, %v7007
    %7009 = vdwg.mxu0
    %7010 = vmatpush.bf16.msra.mxu0 %v4777
    %7011 = vmatpush.bf16.msra.mxu0 %v4773
    %7012 = vmatpush.bf16.msra.mxu0 %v4769
    %7013 = vmatpush.bf16.msra.mxu0 %v4765
    %7014 = vmatpush.bf16.msra.mxu0 %v4761
    %7015 = vmatpush.bf16.msra.mxu0 %v4757
    %7016 = vmatpush.bf16.msra.mxu0 %v4753
    %7017 = vmatpush.bf16.msra.mxu0 %v4749
    %7018 = vmatmul.bf16.gmra.mxu0 %v1209
    %v7019 = vpop.f32.mrf.mxu0
    %v7020 = vadd.f32 %v7006, %v7019
    %v7021 = vpop.f32.mrf.mxu0
    %v7022 = vadd.f32 %v7008, %v7021
    %7023 = vdwg.mxu0
    %7024 = vmatpush.bf16.msra.mxu0 %v4809
    %7025 = vmatpush.bf16.msra.mxu0 %v4805
    %7026 = vmatpush.bf16.msra.mxu0 %v4801
    %7027 = vmatpush.bf16.msra.mxu0 %v4797
    %7028 = vmatpush.bf16.msra.mxu0 %v4793
    %7029 = vmatpush.bf16.msra.mxu0 %v4789
    %7030 = vmatpush.bf16.msra.mxu0 %v4785
    %7031 = vmatpush.bf16.msra.mxu0 %v4781
    %7032 = vmatmul.bf16.gmra.mxu0 %v1210
    %v7033 = vpop.f32.mrf.mxu0
    %v7034 = vadd.f32 %v7020, %v7033
    %v7035 = vpop.f32.mrf.mxu0
    %v7036 = vadd.f32 %v7022, %v7035
    %7037 = vdwg.mxu0
    %7038 = vmatpush.bf16.msra.mxu0 %v4841
    %7039 = vmatpush.bf16.msra.mxu0 %v4837
    %7040 = vmatpush.bf16.msra.mxu0 %v4833
    %7041 = vmatpush.bf16.msra.mxu0 %v4829
    %7042 = vmatpush.bf16.msra.mxu0 %v4825
    %7043 = vmatpush.bf16.msra.mxu0 %v4821
    %7044 = vmatpush.bf16.msra.mxu0 %v4817
    %7045 = vmatpush.bf16.msra.mxu0 %v4813
    %7046 = vmatmul.bf16.gmra.mxu0 %v1211
    %v7047 = vpop.f32.mrf.mxu0
    %v7048 = vadd.f32 %v7034, %v7047
    %v7049 = vpop.f32.mrf.mxu0
    %v7050 = vadd.f32 %v7036, %v7049
    %7051 = vdwg.mxu0
    %7052 = vmatpush.bf16.msra.mxu0 %v4873
    %7053 = vmatpush.bf16.msra.mxu0 %v4869
    %7054 = vmatpush.bf16.msra.mxu0 %v4865
    %7055 = vmatpush.bf16.msra.mxu0 %v4861
    %7056 = vmatpush.bf16.msra.mxu0 %v4857
    %7057 = vmatpush.bf16.msra.mxu0 %v4853
    %7058 = vmatpush.bf16.msra.mxu0 %v4849
    %7059 = vmatpush.bf16.msra.mxu0 %v4845
    %7060 = vmatmul.bf16.gmra.mxu0 %v1212
    %v7061 = vpop.f32.mrf.mxu0
    %v7062 = vadd.f32 %v7048, %v7061
    %v7063 = vpop.f32.mrf.mxu0
    %v7064 = vadd.f32 %v7050, %v7063
    %7065 = vdwg.mxu0
    %7066 = vmatpush.bf16.msra.mxu0 %v4905
    %7067 = vmatpush.bf16.msra.mxu0 %v4901
    %7068 = vmatpush.bf16.msra.mxu0 %v4897
    %7069 = vmatpush.bf16.msra.mxu0 %v4893
    %7070 = vmatpush.bf16.msra.mxu0 %v4889
    %7071 = vmatpush.bf16.msra.mxu0 %v4885
    %7072 = vmatpush.bf16.msra.mxu0 %v4881
    %7073 = vmatpush.bf16.msra.mxu0 %v4877
    %7074 = vmatmul.bf16.gmra.mxu0 %v1213
    %v7075 = vpop.f32.mrf.mxu0
    %v7076 = vadd.f32 %v7062, %v7075
    %v7077 = vpop.f32.mrf.mxu0
    %v7078 = vadd.f32 %v7064, %v7077
    %7079 = vdwg.mxu0
    %7080 = vmatpush.bf16.msra.mxu0 %v4937
    %7081 = vmatpush.bf16.msra.mxu0 %v4933
    %7082 = vmatpush.bf16.msra.mxu0 %v4929
    %7083 = vmatpush.bf16.msra.mxu0 %v4925
    %7084 = vmatpush.bf16.msra.mxu0 %v4921
    %7085 = vmatpush.bf16.msra.mxu0 %v4917
    %7086 = vmatpush.bf16.msra.mxu0 %v4913
    %7087 = vmatpush.bf16.msra.mxu0 %v4909
    %7088 = vmatmul.bf16.gmra.mxu0 %v1214
    %v7089 = vpop.f32.mrf.mxu0
    %v7090 = vadd.f32 %v7076, %v7089
    %v7091 = vpop.f32.mrf.mxu0
    %v7092 = vadd.f32 %v7078, %v7091
    %7093 = vdwg.mxu0
    %7094 = vmatpush.bf16.msra.mxu0 %v4969
    %7095 = vmatpush.bf16.msra.mxu0 %v4965
    %7096 = vmatpush.bf16.msra.mxu0 %v4961
    %7097 = vmatpush.bf16.msra.mxu0 %v4957
    %7098 = vmatpush.bf16.msra.mxu0 %v4953
    %7099 = vmatpush.bf16.msra.mxu0 %v4949
    %7100 = vmatpush.bf16.msra.mxu0 %v4945
    %7101 = vmatpush.bf16.msra.mxu0 %v4941
    %7102 = vmatmul.bf16.gmra.mxu0 %v1215
    %v7103 = vpop.f32.mrf.mxu0
    %v7104 = vadd.f32 %v7090, %v7103
    %v7105 = vpop.f32.mrf.mxu0
    %v7106 = vadd.f32 %v7092, %v7105
    %7107 = vdwg.mxu0
    %7108 = vmatpush.bf16.msra.mxu0 %v5001
    %7109 = vmatpush.bf16.msra.mxu0 %v4997
    %7110 = vmatpush.bf16.msra.mxu0 %v4993
    %7111 = vmatpush.bf16.msra.mxu0 %v4989
    %7112 = vmatpush.bf16.msra.mxu0 %v4985
    %7113 = vmatpush.bf16.msra.mxu0 %v4981
    %7114 = vmatpush.bf16.msra.mxu0 %v4977
    %7115 = vmatpush.bf16.msra.mxu0 %v4973
    %7116 = vmatmul.bf16.gmra.mxu0 %v1216
    %v7117 = vpop.f32.mrf.mxu0
    %v7118 = vadd.f32 %v7104, %v7117
    %v7119 = vpop.f32.mrf.mxu0
    %v7120 = vadd.f32 %v7106, %v7119
    %7121 = vdwg.mxu0
    %7122 = vmatpush.bf16.msra.mxu0 %v5033
    %7123 = vmatpush.bf16.msra.mxu0 %v5029
    %7124 = vmatpush.bf16.msra.mxu0 %v5025
    %7125 = vmatpush.bf16.msra.mxu0 %v5021
    %7126 = vmatpush.bf16.msra.mxu0 %v5017
    %7127 = vmatpush.bf16.msra.mxu0 %v5013
    %7128 = vmatpush.bf16.msra.mxu0 %v5009
    %7129 = vmatpush.bf16.msra.mxu0 %v5005
    %7130 = vmatmul.bf16.gmra.mxu0 %v1217
    %v7131 = vpop.f32.mrf.mxu0
    %v7132 = vadd.f32 %v7118, %v7131
    %v7133 = vpop.f32.mrf.mxu0
    %v7134 = vadd.f32 %v7120, %v7133
    %7135 = vdwg.mxu0
    %7136 = vmatpush.bf16.msra.mxu0 %v5065
    %7137 = vmatpush.bf16.msra.mxu0 %v5061
    %7138 = vmatpush.bf16.msra.mxu0 %v5057
    %7139 = vmatpush.bf16.msra.mxu0 %v5053
    %7140 = vmatpush.bf16.msra.mxu0 %v5049
    %7141 = vmatpush.bf16.msra.mxu0 %v5045
    %7142 = vmatpush.bf16.msra.mxu0 %v5041
    %7143 = vmatpush.bf16.msra.mxu0 %v5037
    %7144 = vmatmul.bf16.gmra.mxu0 %v1218
    %v7145 = vpop.f32.mrf.mxu0
    %v7146 = vadd.f32 %v7132, %v7145
    %v7147 = vpop.f32.mrf.mxu0
    %v7148 = vadd.f32 %v7134, %v7147
    %7149 = vdwg.mxu0
    %7150 = vmatpush.bf16.msra.mxu0 %v5097
    %7151 = vmatpush.bf16.msra.mxu0 %v5093
    %7152 = vmatpush.bf16.msra.mxu0 %v5089
    %7153 = vmatpush.bf16.msra.mxu0 %v5085
    %7154 = vmatpush.bf16.msra.mxu0 %v5081
    %7155 = vmatpush.bf16.msra.mxu0 %v5077
    %7156 = vmatpush.bf16.msra.mxu0 %v5073
    %7157 = vmatpush.bf16.msra.mxu0 %v5069
    %7158 = vmatmul.bf16.gmra.mxu0 %v1219
    %v7159 = vpop.f32.mrf.mxu0
    %v7160 = vadd.f32 %v7146, %v7159
    %v7161 = vpop.f32.mrf.mxu0
    %v7162 = vadd.f32 %v7148, %v7161
    %7163 = vdwg.mxu0
    %7164 = vmatpush.bf16.msra.mxu0 %v5129
    %7165 = vmatpush.bf16.msra.mxu0 %v5125
    %7166 = vmatpush.bf16.msra.mxu0 %v5121
    %7167 = vmatpush.bf16.msra.mxu0 %v5117
    %7168 = vmatpush.bf16.msra.mxu0 %v5113
    %7169 = vmatpush.bf16.msra.mxu0 %v5109
    %7170 = vmatpush.bf16.msra.mxu0 %v5105
    %7171 = vmatpush.bf16.msra.mxu0 %v5101
    %7172 = vmatmul.bf16.gmra.mxu0 %v1220
    %v7173 = vpop.f32.mrf.mxu0
    %v7174 = vadd.f32 %v7160, %v7173
    %v7175 = vpop.f32.mrf.mxu0
    %v7176 = vadd.f32 %v7162, %v7175
    %7177 = vdwg.mxu0
    %7178 = vmatpush.bf16.msra.mxu0 %v5161
    %7179 = vmatpush.bf16.msra.mxu0 %v5157
    %7180 = vmatpush.bf16.msra.mxu0 %v5153
    %7181 = vmatpush.bf16.msra.mxu0 %v5149
    %7182 = vmatpush.bf16.msra.mxu0 %v5145
    %7183 = vmatpush.bf16.msra.mxu0 %v5141
    %7184 = vmatpush.bf16.msra.mxu0 %v5137
    %7185 = vmatpush.bf16.msra.mxu0 %v5133
    %7186 = vmatmul.bf16.gmra.mxu0 %v1221
    %v7187 = vpop.f32.mrf.mxu0
    %v7188 = vadd.f32 %v7174, %v7187
    %v7189 = vpop.f32.mrf.mxu0
    %v7190 = vadd.f32 %v7176, %v7189
    %7191 = vdwg.mxu0
    %7192 = vmatpush.bf16.msra.mxu0 %v5193
    %7193 = vmatpush.bf16.msra.mxu0 %v5189
    %7194 = vmatpush.bf16.msra.mxu0 %v5185
    %7195 = vmatpush.bf16.msra.mxu0 %v5181
    %7196 = vmatpush.bf16.msra.mxu0 %v5177
    %7197 = vmatpush.bf16.msra.mxu0 %v5173
    %7198 = vmatpush.bf16.msra.mxu0 %v5169
    %7199 = vmatpush.bf16.msra.mxu0 %v5165
    %7200 = vmatmul.bf16.gmra.mxu0 %v1222
    %v7201 = vpop.f32.mrf.mxu0
    %v7202 = vadd.f32 %v7188, %v7201
    %v7203 = vpop.f32.mrf.mxu0
    %v7204 = vadd.f32 %v7190, %v7203
    %7205 = vdwg.mxu0
    %7206 = vmatpush.bf16.msra.mxu0 %v5225
    %7207 = vmatpush.bf16.msra.mxu0 %v5221
    %7208 = vmatpush.bf16.msra.mxu0 %v5217
    %7209 = vmatpush.bf16.msra.mxu0 %v5213
    %7210 = vmatpush.bf16.msra.mxu0 %v5209
    %7211 = vmatpush.bf16.msra.mxu0 %v5205
    %7212 = vmatpush.bf16.msra.mxu0 %v5201
    %7213 = vmatpush.bf16.msra.mxu0 %v5197
    %7214 = vmatmul.bf16.gmra.mxu0 %v1223
    %v7215 = vpop.f32.mrf.mxu0
    %v7216 = vadd.f32 %v7202, %v7215
    %v7217 = vpop.f32.mrf.mxu0
    %v7218 = vadd.f32 %v7204, %v7217
    %7219 = vdwg.mxu0
    %7220 = vmatpush.bf16.msra.mxu0 %v5257
    %7221 = vmatpush.bf16.msra.mxu0 %v5253
    %7222 = vmatpush.bf16.msra.mxu0 %v5249
    %7223 = vmatpush.bf16.msra.mxu0 %v5245
    %7224 = vmatpush.bf16.msra.mxu0 %v5241
    %7225 = vmatpush.bf16.msra.mxu0 %v5237
    %7226 = vmatpush.bf16.msra.mxu0 %v5233
    %7227 = vmatpush.bf16.msra.mxu0 %v5229
    %7228 = vmatmul.bf16.gmra.mxu0 %v1224
    %v7229 = vpop.f32.mrf.mxu0
    %v7230 = vadd.f32 %v7216, %v7229
    %v7231 = vpop.f32.mrf.mxu0
    %v7232 = vadd.f32 %v7218, %v7231
    %7233 = vdwg.mxu0
    %7234 = vmatpush.bf16.msra.mxu0 %v5289
    %7235 = vmatpush.bf16.msra.mxu0 %v5285
    %7236 = vmatpush.bf16.msra.mxu0 %v5281
    %7237 = vmatpush.bf16.msra.mxu0 %v5277
    %7238 = vmatpush.bf16.msra.mxu0 %v5273
    %7239 = vmatpush.bf16.msra.mxu0 %v5269
    %7240 = vmatpush.bf16.msra.mxu0 %v5265
    %7241 = vmatpush.bf16.msra.mxu0 %v5261
    %7242 = vmatmul.bf16.gmra.mxu0 %v1225
    %v7243 = vpop.f32.mrf.mxu0
    %v7244 = vadd.f32 %v7230, %v7243
    %v7245 = vpop.f32.mrf.mxu0
    %v7246 = vadd.f32 %v7232, %v7245
    %7247 = vdwg.mxu0
    %7248 = vmatpush.bf16.msra.mxu0 %v5321
    %7249 = vmatpush.bf16.msra.mxu0 %v5317
    %7250 = vmatpush.bf16.msra.mxu0 %v5313
    %7251 = vmatpush.bf16.msra.mxu0 %v5309
    %7252 = vmatpush.bf16.msra.mxu0 %v5305
    %7253 = vmatpush.bf16.msra.mxu0 %v5301
    %7254 = vmatpush.bf16.msra.mxu0 %v5297
    %7255 = vmatpush.bf16.msra.mxu0 %v5293
    %7256 = vmatmul.bf16.gmra.mxu0 %v1226
    %v7257 = vpop.f32.mrf.mxu0
    %v7258 = vadd.f32 %v7244, %v7257
    %v7259 = vpop.f32.mrf.mxu0
    %v7260 = vadd.f32 %v7246, %v7259
    %7261 = vdwg.mxu0
    %7262 = vmatpush.bf16.msra.mxu0 %v5353
    %7263 = vmatpush.bf16.msra.mxu0 %v5349
    %7264 = vmatpush.bf16.msra.mxu0 %v5345
    %7265 = vmatpush.bf16.msra.mxu0 %v5341
    %7266 = vmatpush.bf16.msra.mxu0 %v5337
    %7267 = vmatpush.bf16.msra.mxu0 %v5333
    %7268 = vmatpush.bf16.msra.mxu0 %v5329
    %7269 = vmatpush.bf16.msra.mxu0 %v5325
    %7270 = vmatmul.bf16.gmra.mxu0 %v1227
    %v7271 = vpop.f32.mrf.mxu0
    %v7272 = vadd.f32 %v7258, %v7271
    %v7273 = vpop.f32.mrf.mxu0
    %v7274 = vadd.f32 %v7260, %v7273
    %7275 = vdwg.mxu0
    %7276 = vmatpush.bf16.msra.mxu0 %v4362
    %7277 = vmatpush.bf16.msra.mxu0 %v4358
    %7278 = vmatpush.bf16.msra.mxu0 %v4354
    %7279 = vmatpush.bf16.msra.mxu0 %v4350
    %7280 = vmatpush.bf16.msra.mxu0 %v4346
    %7281 = vmatpush.bf16.msra.mxu0 %v4342
    %7282 = vmatpush.bf16.msra.mxu0 %v4338
    %7283 = vmatpush.bf16.msra.mxu0 %v4334
    %7284 = vmatmul.bf16.gmra.mxu0 %v1196
    %v7285 = vpop.f32.mrf.mxu0
    %v7286 = vadd.f32 0.0, %v7285
    %v7287 = vpop.f32.mrf.mxu0
    %v7288 = vadd.f32 0.0, %v7287
    %7289 = vdwg.mxu0
    %7290 = vmatpush.bf16.msra.mxu0 %v4394
    %7291 = vmatpush.bf16.msra.mxu0 %v4390
    %7292 = vmatpush.bf16.msra.mxu0 %v4386
    %7293 = vmatpush.bf16.msra.mxu0 %v4382
    %7294 = vmatpush.bf16.msra.mxu0 %v4378
    %7295 = vmatpush.bf16.msra.mxu0 %v4374
    %7296 = vmatpush.bf16.msra.mxu0 %v4370
    %7297 = vmatpush.bf16.msra.mxu0 %v4366
    %7298 = vmatmul.bf16.gmra.mxu0 %v1197
    %v7299 = vpop.f32.mrf.mxu0
    %v7300 = vadd.f32 %v7286, %v7299
    %v7301 = vpop.f32.mrf.mxu0
    %v7302 = vadd.f32 %v7288, %v7301
    %7303 = vdwg.mxu0
    %7304 = vmatpush.bf16.msra.mxu0 %v4426
    %7305 = vmatpush.bf16.msra.mxu0 %v4422
    %7306 = vmatpush.bf16.msra.mxu0 %v4418
    %7307 = vmatpush.bf16.msra.mxu0 %v4414
    %7308 = vmatpush.bf16.msra.mxu0 %v4410
    %7309 = vmatpush.bf16.msra.mxu0 %v4406
    %7310 = vmatpush.bf16.msra.mxu0 %v4402
    %7311 = vmatpush.bf16.msra.mxu0 %v4398
    %7312 = vmatmul.bf16.gmra.mxu0 %v1198
    %v7313 = vpop.f32.mrf.mxu0
    %v7314 = vadd.f32 %v7300, %v7313
    %v7315 = vpop.f32.mrf.mxu0
    %v7316 = vadd.f32 %v7302, %v7315
    %7317 = vdwg.mxu0
    %7318 = vmatpush.bf16.msra.mxu0 %v4458
    %7319 = vmatpush.bf16.msra.mxu0 %v4454
    %7320 = vmatpush.bf16.msra.mxu0 %v4450
    %7321 = vmatpush.bf16.msra.mxu0 %v4446
    %7322 = vmatpush.bf16.msra.mxu0 %v4442
    %7323 = vmatpush.bf16.msra.mxu0 %v4438
    %7324 = vmatpush.bf16.msra.mxu0 %v4434
    %7325 = vmatpush.bf16.msra.mxu0 %v4430
    %7326 = vmatmul.bf16.gmra.mxu0 %v1199
    %v7327 = vpop.f32.mrf.mxu0
    %v7328 = vadd.f32 %v7314, %v7327
    %v7329 = vpop.f32.mrf.mxu0
    %v7330 = vadd.f32 %v7316, %v7329
    %7331 = vdwg.mxu0
    %7332 = vmatpush.bf16.msra.mxu0 %v4490
    %7333 = vmatpush.bf16.msra.mxu0 %v4486
    %7334 = vmatpush.bf16.msra.mxu0 %v4482
    %7335 = vmatpush.bf16.msra.mxu0 %v4478
    %7336 = vmatpush.bf16.msra.mxu0 %v4474
    %7337 = vmatpush.bf16.msra.mxu0 %v4470
    %7338 = vmatpush.bf16.msra.mxu0 %v4466
    %7339 = vmatpush.bf16.msra.mxu0 %v4462
    %7340 = vmatmul.bf16.gmra.mxu0 %v1200
    %v7341 = vpop.f32.mrf.mxu0
    %v7342 = vadd.f32 %v7328, %v7341
    %v7343 = vpop.f32.mrf.mxu0
    %v7344 = vadd.f32 %v7330, %v7343
    %7345 = vdwg.mxu0
    %7346 = vmatpush.bf16.msra.mxu0 %v4522
    %7347 = vmatpush.bf16.msra.mxu0 %v4518
    %7348 = vmatpush.bf16.msra.mxu0 %v4514
    %7349 = vmatpush.bf16.msra.mxu0 %v4510
    %7350 = vmatpush.bf16.msra.mxu0 %v4506
    %7351 = vmatpush.bf16.msra.mxu0 %v4502
    %7352 = vmatpush.bf16.msra.mxu0 %v4498
    %7353 = vmatpush.bf16.msra.mxu0 %v4494
    %7354 = vmatmul.bf16.gmra.mxu0 %v1201
    %v7355 = vpop.f32.mrf.mxu0
    %v7356 = vadd.f32 %v7342, %v7355
    %v7357 = vpop.f32.mrf.mxu0
    %v7358 = vadd.f32 %v7344, %v7357
    %7359 = vdwg.mxu0
    %7360 = vmatpush.bf16.msra.mxu0 %v4554
    %7361 = vmatpush.bf16.msra.mxu0 %v4550
    %7362 = vmatpush.bf16.msra.mxu0 %v4546
    %7363 = vmatpush.bf16.msra.mxu0 %v4542
    %7364 = vmatpush.bf16.msra.mxu0 %v4538
    %7365 = vmatpush.bf16.msra.mxu0 %v4534
    %7366 = vmatpush.bf16.msra.mxu0 %v4530
    %7367 = vmatpush.bf16.msra.mxu0 %v4526
    %7368 = vmatmul.bf16.gmra.mxu0 %v1202
    %v7369 = vpop.f32.mrf.mxu0
    %v7370 = vadd.f32 %v7356, %v7369
    %v7371 = vpop.f32.mrf.mxu0
    %v7372 = vadd.f32 %v7358, %v7371
    %7373 = vdwg.mxu0
    %7374 = vmatpush.bf16.msra.mxu0 %v4586
    %7375 = vmatpush.bf16.msra.mxu0 %v4582
    %7376 = vmatpush.bf16.msra.mxu0 %v4578
    %7377 = vmatpush.bf16.msra.mxu0 %v4574
    %7378 = vmatpush.bf16.msra.mxu0 %v4570
    %7379 = vmatpush.bf16.msra.mxu0 %v4566
    %7380 = vmatpush.bf16.msra.mxu0 %v4562
    %7381 = vmatpush.bf16.msra.mxu0 %v4558
    %7382 = vmatmul.bf16.gmra.mxu0 %v1203
    %v7383 = vpop.f32.mrf.mxu0
    %v7384 = vadd.f32 %v7370, %v7383
    %v7385 = vpop.f32.mrf.mxu0
    %v7386 = vadd.f32 %v7372, %v7385
    %7387 = vdwg.mxu0
    %7388 = vmatpush.bf16.msra.mxu0 %v4618
    %7389 = vmatpush.bf16.msra.mxu0 %v4614
    %7390 = vmatpush.bf16.msra.mxu0 %v4610
    %7391 = vmatpush.bf16.msra.mxu0 %v4606
    %7392 = vmatpush.bf16.msra.mxu0 %v4602
    %7393 = vmatpush.bf16.msra.mxu0 %v4598
    %7394 = vmatpush.bf16.msra.mxu0 %v4594
    %7395 = vmatpush.bf16.msra.mxu0 %v4590
    %7396 = vmatmul.bf16.gmra.mxu0 %v1204
    %v7397 = vpop.f32.mrf.mxu0
    %v7398 = vadd.f32 %v7384, %v7397
    %v7399 = vpop.f32.mrf.mxu0
    %v7400 = vadd.f32 %v7386, %v7399
    %7401 = vdwg.mxu0
    %7402 = vmatpush.bf16.msra.mxu0 %v4650
    %7403 = vmatpush.bf16.msra.mxu0 %v4646
    %7404 = vmatpush.bf16.msra.mxu0 %v4642
    %7405 = vmatpush.bf16.msra.mxu0 %v4638
    %7406 = vmatpush.bf16.msra.mxu0 %v4634
    %7407 = vmatpush.bf16.msra.mxu0 %v4630
    %7408 = vmatpush.bf16.msra.mxu0 %v4626
    %7409 = vmatpush.bf16.msra.mxu0 %v4622
    %7410 = vmatmul.bf16.gmra.mxu0 %v1205
    %v7411 = vpop.f32.mrf.mxu0
    %v7412 = vadd.f32 %v7398, %v7411
    %v7413 = vpop.f32.mrf.mxu0
    %v7414 = vadd.f32 %v7400, %v7413
    %7415 = vdwg.mxu0
    %7416 = vmatpush.bf16.msra.mxu0 %v4682
    %7417 = vmatpush.bf16.msra.mxu0 %v4678
    %7418 = vmatpush.bf16.msra.mxu0 %v4674
    %7419 = vmatpush.bf16.msra.mxu0 %v4670
    %7420 = vmatpush.bf16.msra.mxu0 %v4666
    %7421 = vmatpush.bf16.msra.mxu0 %v4662
    %7422 = vmatpush.bf16.msra.mxu0 %v4658
    %7423 = vmatpush.bf16.msra.mxu0 %v4654
    %7424 = vmatmul.bf16.gmra.mxu0 %v1206
    %v7425 = vpop.f32.mrf.mxu0
    %v7426 = vadd.f32 %v7412, %v7425
    %v7427 = vpop.f32.mrf.mxu0
    %v7428 = vadd.f32 %v7414, %v7427
    %7429 = vdwg.mxu0
    %7430 = vmatpush.bf16.msra.mxu0 %v4714
    %7431 = vmatpush.bf16.msra.mxu0 %v4710
    %7432 = vmatpush.bf16.msra.mxu0 %v4706
    %7433 = vmatpush.bf16.msra.mxu0 %v4702
    %7434 = vmatpush.bf16.msra.mxu0 %v4698
    %7435 = vmatpush.bf16.msra.mxu0 %v4694
    %7436 = vmatpush.bf16.msra.mxu0 %v4690
    %7437 = vmatpush.bf16.msra.mxu0 %v4686
    %7438 = vmatmul.bf16.gmra.mxu0 %v1207
    %v7439 = vpop.f32.mrf.mxu0
    %v7440 = vadd.f32 %v7426, %v7439
    %v7441 = vpop.f32.mrf.mxu0
    %v7442 = vadd.f32 %v7428, %v7441
    %7443 = vdwg.mxu0
    %7444 = vmatpush.bf16.msra.mxu0 %v4746
    %7445 = vmatpush.bf16.msra.mxu0 %v4742
    %7446 = vmatpush.bf16.msra.mxu0 %v4738
    %7447 = vmatpush.bf16.msra.mxu0 %v4734
    %7448 = vmatpush.bf16.msra.mxu0 %v4730
    %7449 = vmatpush.bf16.msra.mxu0 %v4726
    %7450 = vmatpush.bf16.msra.mxu0 %v4722
    %7451 = vmatpush.bf16.msra.mxu0 %v4718
    %7452 = vmatmul.bf16.gmra.mxu0 %v1208
    %v7453 = vpop.f32.mrf.mxu0
    %v7454 = vadd.f32 %v7440, %v7453
    %v7455 = vpop.f32.mrf.mxu0
    %v7456 = vadd.f32 %v7442, %v7455
    %7457 = vdwg.mxu0
    %7458 = vmatpush.bf16.msra.mxu0 %v4778
    %7459 = vmatpush.bf16.msra.mxu0 %v4774
    %7460 = vmatpush.bf16.msra.mxu0 %v4770
    %7461 = vmatpush.bf16.msra.mxu0 %v4766
    %7462 = vmatpush.bf16.msra.mxu0 %v4762
    %7463 = vmatpush.bf16.msra.mxu0 %v4758
    %7464 = vmatpush.bf16.msra.mxu0 %v4754
    %7465 = vmatpush.bf16.msra.mxu0 %v4750
    %7466 = vmatmul.bf16.gmra.mxu0 %v1209
    %v7467 = vpop.f32.mrf.mxu0
    %v7468 = vadd.f32 %v7454, %v7467
    %v7469 = vpop.f32.mrf.mxu0
    %v7470 = vadd.f32 %v7456, %v7469
    %7471 = vdwg.mxu0
    %7472 = vmatpush.bf16.msra.mxu0 %v4810
    %7473 = vmatpush.bf16.msra.mxu0 %v4806
    %7474 = vmatpush.bf16.msra.mxu0 %v4802
    %7475 = vmatpush.bf16.msra.mxu0 %v4798
    %7476 = vmatpush.bf16.msra.mxu0 %v4794
    %7477 = vmatpush.bf16.msra.mxu0 %v4790
    %7478 = vmatpush.bf16.msra.mxu0 %v4786
    %7479 = vmatpush.bf16.msra.mxu0 %v4782
    %7480 = vmatmul.bf16.gmra.mxu0 %v1210
    %v7481 = vpop.f32.mrf.mxu0
    %v7482 = vadd.f32 %v7468, %v7481
    %v7483 = vpop.f32.mrf.mxu0
    %v7484 = vadd.f32 %v7470, %v7483
    %7485 = vdwg.mxu0
    %7486 = vmatpush.bf16.msra.mxu0 %v4842
    %7487 = vmatpush.bf16.msra.mxu0 %v4838
    %7488 = vmatpush.bf16.msra.mxu0 %v4834
    %7489 = vmatpush.bf16.msra.mxu0 %v4830
    %7490 = vmatpush.bf16.msra.mxu0 %v4826
    %7491 = vmatpush.bf16.msra.mxu0 %v4822
    %7492 = vmatpush.bf16.msra.mxu0 %v4818
    %7493 = vmatpush.bf16.msra.mxu0 %v4814
    %7494 = vmatmul.bf16.gmra.mxu0 %v1211
    %v7495 = vpop.f32.mrf.mxu0
    %v7496 = vadd.f32 %v7482, %v7495
    %v7497 = vpop.f32.mrf.mxu0
    %v7498 = vadd.f32 %v7484, %v7497
    %7499 = vdwg.mxu0
    %7500 = vmatpush.bf16.msra.mxu0 %v4874
    %7501 = vmatpush.bf16.msra.mxu0 %v4870
    %7502 = vmatpush.bf16.msra.mxu0 %v4866
    %7503 = vmatpush.bf16.msra.mxu0 %v4862
    %7504 = vmatpush.bf16.msra.mxu0 %v4858
    %7505 = vmatpush.bf16.msra.mxu0 %v4854
    %7506 = vmatpush.bf16.msra.mxu0 %v4850
    %7507 = vmatpush.bf16.msra.mxu0 %v4846
    %7508 = vmatmul.bf16.gmra.mxu0 %v1212
    %v7509 = vpop.f32.mrf.mxu0
    %v7510 = vadd.f32 %v7496, %v7509
    %v7511 = vpop.f32.mrf.mxu0
    %v7512 = vadd.f32 %v7498, %v7511
    %7513 = vdwg.mxu0
    %7514 = vmatpush.bf16.msra.mxu0 %v4906
    %7515 = vmatpush.bf16.msra.mxu0 %v4902
    %7516 = vmatpush.bf16.msra.mxu0 %v4898
    %7517 = vmatpush.bf16.msra.mxu0 %v4894
    %7518 = vmatpush.bf16.msra.mxu0 %v4890
    %7519 = vmatpush.bf16.msra.mxu0 %v4886
    %7520 = vmatpush.bf16.msra.mxu0 %v4882
    %7521 = vmatpush.bf16.msra.mxu0 %v4878
    %7522 = vmatmul.bf16.gmra.mxu0 %v1213
    %v7523 = vpop.f32.mrf.mxu0
    %v7524 = vadd.f32 %v7510, %v7523
    %v7525 = vpop.f32.mrf.mxu0
    %v7526 = vadd.f32 %v7512, %v7525
    %7527 = vdwg.mxu0
    %7528 = vmatpush.bf16.msra.mxu0 %v4938
    %7529 = vmatpush.bf16.msra.mxu0 %v4934
    %7530 = vmatpush.bf16.msra.mxu0 %v4930
    %7531 = vmatpush.bf16.msra.mxu0 %v4926
    %7532 = vmatpush.bf16.msra.mxu0 %v4922
    %7533 = vmatpush.bf16.msra.mxu0 %v4918
    %7534 = vmatpush.bf16.msra.mxu0 %v4914
    %7535 = vmatpush.bf16.msra.mxu0 %v4910
    %7536 = vmatmul.bf16.gmra.mxu0 %v1214
    %v7537 = vpop.f32.mrf.mxu0
    %v7538 = vadd.f32 %v7524, %v7537
    %v7539 = vpop.f32.mrf.mxu0
    %v7540 = vadd.f32 %v7526, %v7539
    %7541 = vdwg.mxu0
    %7542 = vmatpush.bf16.msra.mxu0 %v4970
    %7543 = vmatpush.bf16.msra.mxu0 %v4966
    %7544 = vmatpush.bf16.msra.mxu0 %v4962
    %7545 = vmatpush.bf16.msra.mxu0 %v4958
    %7546 = vmatpush.bf16.msra.mxu0 %v4954
    %7547 = vmatpush.bf16.msra.mxu0 %v4950
    %7548 = vmatpush.bf16.msra.mxu0 %v4946
    %7549 = vmatpush.bf16.msra.mxu0 %v4942
    %7550 = vmatmul.bf16.gmra.mxu0 %v1215
    %v7551 = vpop.f32.mrf.mxu0
    %v7552 = vadd.f32 %v7538, %v7551
    %v7553 = vpop.f32.mrf.mxu0
    %v7554 = vadd.f32 %v7540, %v7553
    %7555 = vdwg.mxu0
    %7556 = vmatpush.bf16.msra.mxu0 %v5002
    %7557 = vmatpush.bf16.msra.mxu0 %v4998
    %7558 = vmatpush.bf16.msra.mxu0 %v4994
    %7559 = vmatpush.bf16.msra.mxu0 %v4990
    %7560 = vmatpush.bf16.msra.mxu0 %v4986
    %7561 = vmatpush.bf16.msra.mxu0 %v4982
    %7562 = vmatpush.bf16.msra.mxu0 %v4978
    %7563 = vmatpush.bf16.msra.mxu0 %v4974
    %7564 = vmatmul.bf16.gmra.mxu0 %v1216
    %v7565 = vpop.f32.mrf.mxu0
    %v7566 = vadd.f32 %v7552, %v7565
    %v7567 = vpop.f32.mrf.mxu0
    %v7568 = vadd.f32 %v7554, %v7567
    %7569 = vdwg.mxu0
    %7570 = vmatpush.bf16.msra.mxu0 %v5034
    %7571 = vmatpush.bf16.msra.mxu0 %v5030
    %7572 = vmatpush.bf16.msra.mxu0 %v5026
    %7573 = vmatpush.bf16.msra.mxu0 %v5022
    %7574 = vmatpush.bf16.msra.mxu0 %v5018
    %7575 = vmatpush.bf16.msra.mxu0 %v5014
    %7576 = vmatpush.bf16.msra.mxu0 %v5010
    %7577 = vmatpush.bf16.msra.mxu0 %v5006
    %7578 = vmatmul.bf16.gmra.mxu0 %v1217
    %v7579 = vpop.f32.mrf.mxu0
    %v7580 = vadd.f32 %v7566, %v7579
    %v7581 = vpop.f32.mrf.mxu0
    %v7582 = vadd.f32 %v7568, %v7581
    %7583 = vdwg.mxu0
    %7584 = vmatpush.bf16.msra.mxu0 %v5066
    %7585 = vmatpush.bf16.msra.mxu0 %v5062
    %7586 = vmatpush.bf16.msra.mxu0 %v5058
    %7587 = vmatpush.bf16.msra.mxu0 %v5054
    %7588 = vmatpush.bf16.msra.mxu0 %v5050
    %7589 = vmatpush.bf16.msra.mxu0 %v5046
    %7590 = vmatpush.bf16.msra.mxu0 %v5042
    %7591 = vmatpush.bf16.msra.mxu0 %v5038
    %7592 = vmatmul.bf16.gmra.mxu0 %v1218
    %v7593 = vpop.f32.mrf.mxu0
    %v7594 = vadd.f32 %v7580, %v7593
    %v7595 = vpop.f32.mrf.mxu0
    %v7596 = vadd.f32 %v7582, %v7595
    %7597 = vdwg.mxu0
    %7598 = vmatpush.bf16.msra.mxu0 %v5098
    %7599 = vmatpush.bf16.msra.mxu0 %v5094
    %7600 = vmatpush.bf16.msra.mxu0 %v5090
    %7601 = vmatpush.bf16.msra.mxu0 %v5086
    %7602 = vmatpush.bf16.msra.mxu0 %v5082
    %7603 = vmatpush.bf16.msra.mxu0 %v5078
    %7604 = vmatpush.bf16.msra.mxu0 %v5074
    %7605 = vmatpush.bf16.msra.mxu0 %v5070
    %7606 = vmatmul.bf16.gmra.mxu0 %v1219
    %v7607 = vpop.f32.mrf.mxu0
    %v7608 = vadd.f32 %v7594, %v7607
    %v7609 = vpop.f32.mrf.mxu0
    %v7610 = vadd.f32 %v7596, %v7609
    %7611 = vdwg.mxu0
    %7612 = vmatpush.bf16.msra.mxu0 %v5130
    %7613 = vmatpush.bf16.msra.mxu0 %v5126
    %7614 = vmatpush.bf16.msra.mxu0 %v5122
    %7615 = vmatpush.bf16.msra.mxu0 %v5118
    %7616 = vmatpush.bf16.msra.mxu0 %v5114
    %7617 = vmatpush.bf16.msra.mxu0 %v5110
    %7618 = vmatpush.bf16.msra.mxu0 %v5106
    %7619 = vmatpush.bf16.msra.mxu0 %v5102
    %7620 = vmatmul.bf16.gmra.mxu0 %v1220
    %v7621 = vpop.f32.mrf.mxu0
    %v7622 = vadd.f32 %v7608, %v7621
    %v7623 = vpop.f32.mrf.mxu0
    %v7624 = vadd.f32 %v7610, %v7623
    %7625 = vdwg.mxu0
    %7626 = vmatpush.bf16.msra.mxu0 %v5162
    %7627 = vmatpush.bf16.msra.mxu0 %v5158
    %7628 = vmatpush.bf16.msra.mxu0 %v5154
    %7629 = vmatpush.bf16.msra.mxu0 %v5150
    %7630 = vmatpush.bf16.msra.mxu0 %v5146
    %7631 = vmatpush.bf16.msra.mxu0 %v5142
    %7632 = vmatpush.bf16.msra.mxu0 %v5138
    %7633 = vmatpush.bf16.msra.mxu0 %v5134
    %7634 = vmatmul.bf16.gmra.mxu0 %v1221
    %v7635 = vpop.f32.mrf.mxu0
    %v7636 = vadd.f32 %v7622, %v7635
    %v7637 = vpop.f32.mrf.mxu0
    %v7638 = vadd.f32 %v7624, %v7637
    %7639 = vdwg.mxu0
    %7640 = vmatpush.bf16.msra.mxu0 %v5194
    %7641 = vmatpush.bf16.msra.mxu0 %v5190
    %7642 = vmatpush.bf16.msra.mxu0 %v5186
    %7643 = vmatpush.bf16.msra.mxu0 %v5182
    %7644 = vmatpush.bf16.msra.mxu0 %v5178
    %7645 = vmatpush.bf16.msra.mxu0 %v5174
    %7646 = vmatpush.bf16.msra.mxu0 %v5170
    %7647 = vmatpush.bf16.msra.mxu0 %v5166
    %7648 = vmatmul.bf16.gmra.mxu0 %v1222
    %v7649 = vpop.f32.mrf.mxu0
    %v7650 = vadd.f32 %v7636, %v7649
    %v7651 = vpop.f32.mrf.mxu0
    %v7652 = vadd.f32 %v7638, %v7651
    %7653 = vdwg.mxu0
    %7654 = vmatpush.bf16.msra.mxu0 %v5226
    %7655 = vmatpush.bf16.msra.mxu0 %v5222
    %7656 = vmatpush.bf16.msra.mxu0 %v5218
    %7657 = vmatpush.bf16.msra.mxu0 %v5214
    %7658 = vmatpush.bf16.msra.mxu0 %v5210
    %7659 = vmatpush.bf16.msra.mxu0 %v5206
    %7660 = vmatpush.bf16.msra.mxu0 %v5202
    %7661 = vmatpush.bf16.msra.mxu0 %v5198
    %7662 = vmatmul.bf16.gmra.mxu0 %v1223
    %v7663 = vpop.f32.mrf.mxu0
    %v7664 = vadd.f32 %v7650, %v7663
    %v7665 = vpop.f32.mrf.mxu0
    %v7666 = vadd.f32 %v7652, %v7665
    %7667 = vdwg.mxu0
    %7668 = vmatpush.bf16.msra.mxu0 %v5258
    %7669 = vmatpush.bf16.msra.mxu0 %v5254
    %7670 = vmatpush.bf16.msra.mxu0 %v5250
    %7671 = vmatpush.bf16.msra.mxu0 %v5246
    %7672 = vmatpush.bf16.msra.mxu0 %v5242
    %7673 = vmatpush.bf16.msra.mxu0 %v5238
    %7674 = vmatpush.bf16.msra.mxu0 %v5234
    %7675 = vmatpush.bf16.msra.mxu0 %v5230
    %7676 = vmatmul.bf16.gmra.mxu0 %v1224
    %v7677 = vpop.f32.mrf.mxu0
    %v7678 = vadd.f32 %v7664, %v7677
    %v7679 = vpop.f32.mrf.mxu0
    %v7680 = vadd.f32 %v7666, %v7679
    %7681 = vdwg.mxu0
    %7682 = vmatpush.bf16.msra.mxu0 %v5290
    %7683 = vmatpush.bf16.msra.mxu0 %v5286
    %7684 = vmatpush.bf16.msra.mxu0 %v5282
    %7685 = vmatpush.bf16.msra.mxu0 %v5278
    %7686 = vmatpush.bf16.msra.mxu0 %v5274
    %7687 = vmatpush.bf16.msra.mxu0 %v5270
    %7688 = vmatpush.bf16.msra.mxu0 %v5266
    %7689 = vmatpush.bf16.msra.mxu0 %v5262
    %7690 = vmatmul.bf16.gmra.mxu0 %v1225
    %v7691 = vpop.f32.mrf.mxu0
    %v7692 = vadd.f32 %v7678, %v7691
    %v7693 = vpop.f32.mrf.mxu0
    %v7694 = vadd.f32 %v7680, %v7693
    %7695 = vdwg.mxu0
    %7696 = vmatpush.bf16.msra.mxu0 %v5322
    %7697 = vmatpush.bf16.msra.mxu0 %v5318
    %7698 = vmatpush.bf16.msra.mxu0 %v5314
    %7699 = vmatpush.bf16.msra.mxu0 %v5310
    %7700 = vmatpush.bf16.msra.mxu0 %v5306
    %7701 = vmatpush.bf16.msra.mxu0 %v5302
    %7702 = vmatpush.bf16.msra.mxu0 %v5298
    %7703 = vmatpush.bf16.msra.mxu0 %v5294
    %7704 = vmatmul.bf16.gmra.mxu0 %v1226
    %v7705 = vpop.f32.mrf.mxu0
    %v7706 = vadd.f32 %v7692, %v7705
    %v7707 = vpop.f32.mrf.mxu0
    %v7708 = vadd.f32 %v7694, %v7707
    %7709 = vdwg.mxu0
    %7710 = vmatpush.bf16.msra.mxu0 %v5354
    %7711 = vmatpush.bf16.msra.mxu0 %v5350
    %7712 = vmatpush.bf16.msra.mxu0 %v5346
    %7713 = vmatpush.bf16.msra.mxu0 %v5342
    %7714 = vmatpush.bf16.msra.mxu0 %v5338
    %7715 = vmatpush.bf16.msra.mxu0 %v5334
    %7716 = vmatpush.bf16.msra.mxu0 %v5330
    %7717 = vmatpush.bf16.msra.mxu0 %v5326
    %7718 = vmatmul.bf16.gmra.mxu0 %v1227
    %v7719 = vpop.f32.mrf.mxu0
    %v7720 = vadd.f32 %v7706, %v7719
    %v7721 = vpop.f32.mrf.mxu0
    %v7722 = vadd.f32 %v7708, %v7721
    %7723 = vdwg.mxu0
    %7724 = vmatpush.bf16.msra.mxu0 %v4363
    %7725 = vmatpush.bf16.msra.mxu0 %v4359
    %7726 = vmatpush.bf16.msra.mxu0 %v4355
    %7727 = vmatpush.bf16.msra.mxu0 %v4351
    %7728 = vmatpush.bf16.msra.mxu0 %v4347
    %7729 = vmatpush.bf16.msra.mxu0 %v4343
    %7730 = vmatpush.bf16.msra.mxu0 %v4339
    %7731 = vmatpush.bf16.msra.mxu0 %v4335
    %7732 = vmatmul.bf16.gmra.mxu0 %v1196
    %v7733 = vpop.f32.mrf.mxu0
    %v7734 = vadd.f32 0.0, %v7733
    %v7735 = vpop.f32.mrf.mxu0
    %v7736 = vadd.f32 0.0, %v7735
    %7737 = vdwg.mxu0
    %7738 = vmatpush.bf16.msra.mxu0 %v4395
    %7739 = vmatpush.bf16.msra.mxu0 %v4391
    %7740 = vmatpush.bf16.msra.mxu0 %v4387
    %7741 = vmatpush.bf16.msra.mxu0 %v4383
    %7742 = vmatpush.bf16.msra.mxu0 %v4379
    %7743 = vmatpush.bf16.msra.mxu0 %v4375
    %7744 = vmatpush.bf16.msra.mxu0 %v4371
    %7745 = vmatpush.bf16.msra.mxu0 %v4367
    %7746 = vmatmul.bf16.gmra.mxu0 %v1197
    %v7747 = vpop.f32.mrf.mxu0
    %v7748 = vadd.f32 %v7734, %v7747
    %v7749 = vpop.f32.mrf.mxu0
    %v7750 = vadd.f32 %v7736, %v7749
    %7751 = vdwg.mxu0
    %7752 = vmatpush.bf16.msra.mxu0 %v4427
    %7753 = vmatpush.bf16.msra.mxu0 %v4423
    %7754 = vmatpush.bf16.msra.mxu0 %v4419
    %7755 = vmatpush.bf16.msra.mxu0 %v4415
    %7756 = vmatpush.bf16.msra.mxu0 %v4411
    %7757 = vmatpush.bf16.msra.mxu0 %v4407
    %7758 = vmatpush.bf16.msra.mxu0 %v4403
    %7759 = vmatpush.bf16.msra.mxu0 %v4399
    %7760 = vmatmul.bf16.gmra.mxu0 %v1198
    %v7761 = vpop.f32.mrf.mxu0
    %v7762 = vadd.f32 %v7748, %v7761
    %v7763 = vpop.f32.mrf.mxu0
    %v7764 = vadd.f32 %v7750, %v7763
    %7765 = vdwg.mxu0
    %7766 = vmatpush.bf16.msra.mxu0 %v4459
    %7767 = vmatpush.bf16.msra.mxu0 %v4455
    %7768 = vmatpush.bf16.msra.mxu0 %v4451
    %7769 = vmatpush.bf16.msra.mxu0 %v4447
    %7770 = vmatpush.bf16.msra.mxu0 %v4443
    %7771 = vmatpush.bf16.msra.mxu0 %v4439
    %7772 = vmatpush.bf16.msra.mxu0 %v4435
    %7773 = vmatpush.bf16.msra.mxu0 %v4431
    %7774 = vmatmul.bf16.gmra.mxu0 %v1199
    %v7775 = vpop.f32.mrf.mxu0
    %v7776 = vadd.f32 %v7762, %v7775
    %v7777 = vpop.f32.mrf.mxu0
    %v7778 = vadd.f32 %v7764, %v7777
    %7779 = vdwg.mxu0
    %7780 = vmatpush.bf16.msra.mxu0 %v4491
    %7781 = vmatpush.bf16.msra.mxu0 %v4487
    %7782 = vmatpush.bf16.msra.mxu0 %v4483
    %7783 = vmatpush.bf16.msra.mxu0 %v4479
    %7784 = vmatpush.bf16.msra.mxu0 %v4475
    %7785 = vmatpush.bf16.msra.mxu0 %v4471
    %7786 = vmatpush.bf16.msra.mxu0 %v4467
    %7787 = vmatpush.bf16.msra.mxu0 %v4463
    %7788 = vmatmul.bf16.gmra.mxu0 %v1200
    %v7789 = vpop.f32.mrf.mxu0
    %v7790 = vadd.f32 %v7776, %v7789
    %v7791 = vpop.f32.mrf.mxu0
    %v7792 = vadd.f32 %v7778, %v7791
    %7793 = vdwg.mxu0
    %7794 = vmatpush.bf16.msra.mxu0 %v4523
    %7795 = vmatpush.bf16.msra.mxu0 %v4519
    %7796 = vmatpush.bf16.msra.mxu0 %v4515
    %7797 = vmatpush.bf16.msra.mxu0 %v4511
    %7798 = vmatpush.bf16.msra.mxu0 %v4507
    %7799 = vmatpush.bf16.msra.mxu0 %v4503
    %7800 = vmatpush.bf16.msra.mxu0 %v4499
    %7801 = vmatpush.bf16.msra.mxu0 %v4495
    %7802 = vmatmul.bf16.gmra.mxu0 %v1201
    %v7803 = vpop.f32.mrf.mxu0
    %v7804 = vadd.f32 %v7790, %v7803
    %v7805 = vpop.f32.mrf.mxu0
    %v7806 = vadd.f32 %v7792, %v7805
    %7807 = vdwg.mxu0
    %7808 = vmatpush.bf16.msra.mxu0 %v4555
    %7809 = vmatpush.bf16.msra.mxu0 %v4551
    %7810 = vmatpush.bf16.msra.mxu0 %v4547
    %7811 = vmatpush.bf16.msra.mxu0 %v4543
    %7812 = vmatpush.bf16.msra.mxu0 %v4539
    %7813 = vmatpush.bf16.msra.mxu0 %v4535
    %7814 = vmatpush.bf16.msra.mxu0 %v4531
    %7815 = vmatpush.bf16.msra.mxu0 %v4527
    %7816 = vmatmul.bf16.gmra.mxu0 %v1202
    %v7817 = vpop.f32.mrf.mxu0
    %v7818 = vadd.f32 %v7804, %v7817
    %v7819 = vpop.f32.mrf.mxu0
    %v7820 = vadd.f32 %v7806, %v7819
    %7821 = vdwg.mxu0
    %7822 = vmatpush.bf16.msra.mxu0 %v4587
    %7823 = vmatpush.bf16.msra.mxu0 %v4583
    %7824 = vmatpush.bf16.msra.mxu0 %v4579
    %7825 = vmatpush.bf16.msra.mxu0 %v4575
    %7826 = vmatpush.bf16.msra.mxu0 %v4571
    %7827 = vmatpush.bf16.msra.mxu0 %v4567
    %7828 = vmatpush.bf16.msra.mxu0 %v4563
    %7829 = vmatpush.bf16.msra.mxu0 %v4559
    %7830 = vmatmul.bf16.gmra.mxu0 %v1203
    %v7831 = vpop.f32.mrf.mxu0
    %v7832 = vadd.f32 %v7818, %v7831
    %v7833 = vpop.f32.mrf.mxu0
    %v7834 = vadd.f32 %v7820, %v7833
    %7835 = vdwg.mxu0
    %7836 = vmatpush.bf16.msra.mxu0 %v4619
    %7837 = vmatpush.bf16.msra.mxu0 %v4615
    %7838 = vmatpush.bf16.msra.mxu0 %v4611
    %7839 = vmatpush.bf16.msra.mxu0 %v4607
    %7840 = vmatpush.bf16.msra.mxu0 %v4603
    %7841 = vmatpush.bf16.msra.mxu0 %v4599
    %7842 = vmatpush.bf16.msra.mxu0 %v4595
    %7843 = vmatpush.bf16.msra.mxu0 %v4591
    %7844 = vmatmul.bf16.gmra.mxu0 %v1204
    %v7845 = vpop.f32.mrf.mxu0
    %v7846 = vadd.f32 %v7832, %v7845
    %v7847 = vpop.f32.mrf.mxu0
    %v7848 = vadd.f32 %v7834, %v7847
    %7849 = vdwg.mxu0
    %7850 = vmatpush.bf16.msra.mxu0 %v4651
    %7851 = vmatpush.bf16.msra.mxu0 %v4647
    %7852 = vmatpush.bf16.msra.mxu0 %v4643
    %7853 = vmatpush.bf16.msra.mxu0 %v4639
    %7854 = vmatpush.bf16.msra.mxu0 %v4635
    %7855 = vmatpush.bf16.msra.mxu0 %v4631
    %7856 = vmatpush.bf16.msra.mxu0 %v4627
    %7857 = vmatpush.bf16.msra.mxu0 %v4623
    %7858 = vmatmul.bf16.gmra.mxu0 %v1205
    %v7859 = vpop.f32.mrf.mxu0
    %v7860 = vadd.f32 %v7846, %v7859
    %v7861 = vpop.f32.mrf.mxu0
    %v7862 = vadd.f32 %v7848, %v7861
    %7863 = vdwg.mxu0
    %7864 = vmatpush.bf16.msra.mxu0 %v4683
    %7865 = vmatpush.bf16.msra.mxu0 %v4679
    %7866 = vmatpush.bf16.msra.mxu0 %v4675
    %7867 = vmatpush.bf16.msra.mxu0 %v4671
    %7868 = vmatpush.bf16.msra.mxu0 %v4667
    %7869 = vmatpush.bf16.msra.mxu0 %v4663
    %7870 = vmatpush.bf16.msra.mxu0 %v4659
    %7871 = vmatpush.bf16.msra.mxu0 %v4655
    %7872 = vmatmul.bf16.gmra.mxu0 %v1206
    %v7873 = vpop.f32.mrf.mxu0
    %v7874 = vadd.f32 %v7860, %v7873
    %v7875 = vpop.f32.mrf.mxu0
    %v7876 = vadd.f32 %v7862, %v7875
    %7877 = vdwg.mxu0
    %7878 = vmatpush.bf16.msra.mxu0 %v4715
    %7879 = vmatpush.bf16.msra.mxu0 %v4711
    %7880 = vmatpush.bf16.msra.mxu0 %v4707
    %7881 = vmatpush.bf16.msra.mxu0 %v4703
    %7882 = vmatpush.bf16.msra.mxu0 %v4699
    %7883 = vmatpush.bf16.msra.mxu0 %v4695
    %7884 = vmatpush.bf16.msra.mxu0 %v4691
    %7885 = vmatpush.bf16.msra.mxu0 %v4687
    %7886 = vmatmul.bf16.gmra.mxu0 %v1207
    %v7887 = vpop.f32.mrf.mxu0
    %v7888 = vadd.f32 %v7874, %v7887
    %v7889 = vpop.f32.mrf.mxu0
    %v7890 = vadd.f32 %v7876, %v7889
    %7891 = vdwg.mxu0
    %7892 = vmatpush.bf16.msra.mxu0 %v4747
    %7893 = vmatpush.bf16.msra.mxu0 %v4743
    %7894 = vmatpush.bf16.msra.mxu0 %v4739
    %7895 = vmatpush.bf16.msra.mxu0 %v4735
    %7896 = vmatpush.bf16.msra.mxu0 %v4731
    %7897 = vmatpush.bf16.msra.mxu0 %v4727
    %7898 = vmatpush.bf16.msra.mxu0 %v4723
    %7899 = vmatpush.bf16.msra.mxu0 %v4719
    %7900 = vmatmul.bf16.gmra.mxu0 %v1208
    %v7901 = vpop.f32.mrf.mxu0
    %v7902 = vadd.f32 %v7888, %v7901
    %v7903 = vpop.f32.mrf.mxu0
    %v7904 = vadd.f32 %v7890, %v7903
    %7905 = vdwg.mxu0
    %7906 = vmatpush.bf16.msra.mxu0 %v4779
    %7907 = vmatpush.bf16.msra.mxu0 %v4775
    %7908 = vmatpush.bf16.msra.mxu0 %v4771
    %7909 = vmatpush.bf16.msra.mxu0 %v4767
    %7910 = vmatpush.bf16.msra.mxu0 %v4763
    %7911 = vmatpush.bf16.msra.mxu0 %v4759
    %7912 = vmatpush.bf16.msra.mxu0 %v4755
    %7913 = vmatpush.bf16.msra.mxu0 %v4751
    %7914 = vmatmul.bf16.gmra.mxu0 %v1209
    %v7915 = vpop.f32.mrf.mxu0
    %v7916 = vadd.f32 %v7902, %v7915
    %v7917 = vpop.f32.mrf.mxu0
    %v7918 = vadd.f32 %v7904, %v7917
    %7919 = vdwg.mxu0
    %7920 = vmatpush.bf16.msra.mxu0 %v4811
    %7921 = vmatpush.bf16.msra.mxu0 %v4807
    %7922 = vmatpush.bf16.msra.mxu0 %v4803
    %7923 = vmatpush.bf16.msra.mxu0 %v4799
    %7924 = vmatpush.bf16.msra.mxu0 %v4795
    %7925 = vmatpush.bf16.msra.mxu0 %v4791
    %7926 = vmatpush.bf16.msra.mxu0 %v4787
    %7927 = vmatpush.bf16.msra.mxu0 %v4783
    %7928 = vmatmul.bf16.gmra.mxu0 %v1210
    %v7929 = vpop.f32.mrf.mxu0
    %v7930 = vadd.f32 %v7916, %v7929
    %v7931 = vpop.f32.mrf.mxu0
    %v7932 = vadd.f32 %v7918, %v7931
    %7933 = vdwg.mxu0
    %7934 = vmatpush.bf16.msra.mxu0 %v4843
    %7935 = vmatpush.bf16.msra.mxu0 %v4839
    %7936 = vmatpush.bf16.msra.mxu0 %v4835
    %7937 = vmatpush.bf16.msra.mxu0 %v4831
    %7938 = vmatpush.bf16.msra.mxu0 %v4827
    %7939 = vmatpush.bf16.msra.mxu0 %v4823
    %7940 = vmatpush.bf16.msra.mxu0 %v4819
    %7941 = vmatpush.bf16.msra.mxu0 %v4815
    %7942 = vmatmul.bf16.gmra.mxu0 %v1211
    %v7943 = vpop.f32.mrf.mxu0
    %v7944 = vadd.f32 %v7930, %v7943
    %v7945 = vpop.f32.mrf.mxu0
    %v7946 = vadd.f32 %v7932, %v7945
    %7947 = vdwg.mxu0
    %7948 = vmatpush.bf16.msra.mxu0 %v4875
    %7949 = vmatpush.bf16.msra.mxu0 %v4871
    %7950 = vmatpush.bf16.msra.mxu0 %v4867
    %7951 = vmatpush.bf16.msra.mxu0 %v4863
    %7952 = vmatpush.bf16.msra.mxu0 %v4859
    %7953 = vmatpush.bf16.msra.mxu0 %v4855
    %7954 = vmatpush.bf16.msra.mxu0 %v4851
    %7955 = vmatpush.bf16.msra.mxu0 %v4847
    %7956 = vmatmul.bf16.gmra.mxu0 %v1212
    %v7957 = vpop.f32.mrf.mxu0
    %v7958 = vadd.f32 %v7944, %v7957
    %v7959 = vpop.f32.mrf.mxu0
    %v7960 = vadd.f32 %v7946, %v7959
    %7961 = vdwg.mxu0
    %7962 = vmatpush.bf16.msra.mxu0 %v4907
    %7963 = vmatpush.bf16.msra.mxu0 %v4903
    %7964 = vmatpush.bf16.msra.mxu0 %v4899
    %7965 = vmatpush.bf16.msra.mxu0 %v4895
    %7966 = vmatpush.bf16.msra.mxu0 %v4891
    %7967 = vmatpush.bf16.msra.mxu0 %v4887
    %7968 = vmatpush.bf16.msra.mxu0 %v4883
    %7969 = vmatpush.bf16.msra.mxu0 %v4879
    %7970 = vmatmul.bf16.gmra.mxu0 %v1213
    %v7971 = vpop.f32.mrf.mxu0
    %v7972 = vadd.f32 %v7958, %v7971
    %v7973 = vpop.f32.mrf.mxu0
    %v7974 = vadd.f32 %v7960, %v7973
    %7975 = vdwg.mxu0
    %7976 = vmatpush.bf16.msra.mxu0 %v4939
    %7977 = vmatpush.bf16.msra.mxu0 %v4935
    %7978 = vmatpush.bf16.msra.mxu0 %v4931
    %7979 = vmatpush.bf16.msra.mxu0 %v4927
    %7980 = vmatpush.bf16.msra.mxu0 %v4923
    %7981 = vmatpush.bf16.msra.mxu0 %v4919
    %7982 = vmatpush.bf16.msra.mxu0 %v4915
    %7983 = vmatpush.bf16.msra.mxu0 %v4911
    %7984 = vmatmul.bf16.gmra.mxu0 %v1214
    %v7985 = vpop.f32.mrf.mxu0
    %v7986 = vadd.f32 %v7972, %v7985
    %v7987 = vpop.f32.mrf.mxu0
    %v7988 = vadd.f32 %v7974, %v7987
    %7989 = vdwg.mxu0
    %7990 = vmatpush.bf16.msra.mxu0 %v4971
    %7991 = vmatpush.bf16.msra.mxu0 %v4967
    %7992 = vmatpush.bf16.msra.mxu0 %v4963
    %7993 = vmatpush.bf16.msra.mxu0 %v4959
    %7994 = vmatpush.bf16.msra.mxu0 %v4955
    %7995 = vmatpush.bf16.msra.mxu0 %v4951
    %7996 = vmatpush.bf16.msra.mxu0 %v4947
    %7997 = vmatpush.bf16.msra.mxu0 %v4943
    %7998 = vmatmul.bf16.gmra.mxu0 %v1215
    %v7999 = vpop.f32.mrf.mxu0
    %v8000 = vadd.f32 %v7986, %v7999
    %v8001 = vpop.f32.mrf.mxu0
    %v8002 = vadd.f32 %v7988, %v8001
    %8003 = vdwg.mxu0
    %8004 = vmatpush.bf16.msra.mxu0 %v5003
    %8005 = vmatpush.bf16.msra.mxu0 %v4999
    %8006 = vmatpush.bf16.msra.mxu0 %v4995
    %8007 = vmatpush.bf16.msra.mxu0 %v4991
    %8008 = vmatpush.bf16.msra.mxu0 %v4987
    %8009 = vmatpush.bf16.msra.mxu0 %v4983
    %8010 = vmatpush.bf16.msra.mxu0 %v4979
    %8011 = vmatpush.bf16.msra.mxu0 %v4975
    %8012 = vmatmul.bf16.gmra.mxu0 %v1216
    %v8013 = vpop.f32.mrf.mxu0
    %v8014 = vadd.f32 %v8000, %v8013
    %v8015 = vpop.f32.mrf.mxu0
    %v8016 = vadd.f32 %v8002, %v8015
    %8017 = vdwg.mxu0
    %8018 = vmatpush.bf16.msra.mxu0 %v5035
    %8019 = vmatpush.bf16.msra.mxu0 %v5031
    %8020 = vmatpush.bf16.msra.mxu0 %v5027
    %8021 = vmatpush.bf16.msra.mxu0 %v5023
    %8022 = vmatpush.bf16.msra.mxu0 %v5019
    %8023 = vmatpush.bf16.msra.mxu0 %v5015
    %8024 = vmatpush.bf16.msra.mxu0 %v5011
    %8025 = vmatpush.bf16.msra.mxu0 %v5007
    %8026 = vmatmul.bf16.gmra.mxu0 %v1217
    %v8027 = vpop.f32.mrf.mxu0
    %v8028 = vadd.f32 %v8014, %v8027
    %v8029 = vpop.f32.mrf.mxu0
    %v8030 = vadd.f32 %v8016, %v8029
    %8031 = vdwg.mxu0
    %8032 = vmatpush.bf16.msra.mxu0 %v5067
    %8033 = vmatpush.bf16.msra.mxu0 %v5063
    %8034 = vmatpush.bf16.msra.mxu0 %v5059
    %8035 = vmatpush.bf16.msra.mxu0 %v5055
    %8036 = vmatpush.bf16.msra.mxu0 %v5051
    %8037 = vmatpush.bf16.msra.mxu0 %v5047
    %8038 = vmatpush.bf16.msra.mxu0 %v5043
    %8039 = vmatpush.bf16.msra.mxu0 %v5039
    %8040 = vmatmul.bf16.gmra.mxu0 %v1218
    %v8041 = vpop.f32.mrf.mxu0
    %v8042 = vadd.f32 %v8028, %v8041
    %v8043 = vpop.f32.mrf.mxu0
    %v8044 = vadd.f32 %v8030, %v8043
    %8045 = vdwg.mxu0
    %8046 = vmatpush.bf16.msra.mxu0 %v5099
    %8047 = vmatpush.bf16.msra.mxu0 %v5095
    %8048 = vmatpush.bf16.msra.mxu0 %v5091
    %8049 = vmatpush.bf16.msra.mxu0 %v5087
    %8050 = vmatpush.bf16.msra.mxu0 %v5083
    %8051 = vmatpush.bf16.msra.mxu0 %v5079
    %8052 = vmatpush.bf16.msra.mxu0 %v5075
    %8053 = vmatpush.bf16.msra.mxu0 %v5071
    %8054 = vmatmul.bf16.gmra.mxu0 %v1219
    %v8055 = vpop.f32.mrf.mxu0
    %v8056 = vadd.f32 %v8042, %v8055
    %v8057 = vpop.f32.mrf.mxu0
    %v8058 = vadd.f32 %v8044, %v8057
    %8059 = vdwg.mxu0
    %8060 = vmatpush.bf16.msra.mxu0 %v5131
    %8061 = vmatpush.bf16.msra.mxu0 %v5127
    %8062 = vmatpush.bf16.msra.mxu0 %v5123
    %8063 = vmatpush.bf16.msra.mxu0 %v5119
    %8064 = vmatpush.bf16.msra.mxu0 %v5115
    %8065 = vmatpush.bf16.msra.mxu0 %v5111
    %8066 = vmatpush.bf16.msra.mxu0 %v5107
    %8067 = vmatpush.bf16.msra.mxu0 %v5103
    %8068 = vmatmul.bf16.gmra.mxu0 %v1220
    %v8069 = vpop.f32.mrf.mxu0
    %v8070 = vadd.f32 %v8056, %v8069
    %v8071 = vpop.f32.mrf.mxu0
    %v8072 = vadd.f32 %v8058, %v8071
    %8073 = vdwg.mxu0
    %8074 = vmatpush.bf16.msra.mxu0 %v5163
    %8075 = vmatpush.bf16.msra.mxu0 %v5159
    %8076 = vmatpush.bf16.msra.mxu0 %v5155
    %8077 = vmatpush.bf16.msra.mxu0 %v5151
    %8078 = vmatpush.bf16.msra.mxu0 %v5147
    %8079 = vmatpush.bf16.msra.mxu0 %v5143
    %8080 = vmatpush.bf16.msra.mxu0 %v5139
    %8081 = vmatpush.bf16.msra.mxu0 %v5135
    %8082 = vmatmul.bf16.gmra.mxu0 %v1221
    %v8083 = vpop.f32.mrf.mxu0
    %v8084 = vadd.f32 %v8070, %v8083
    %v8085 = vpop.f32.mrf.mxu0
    %v8086 = vadd.f32 %v8072, %v8085
    %8087 = vdwg.mxu0
    %8088 = vmatpush.bf16.msra.mxu0 %v5195
    %8089 = vmatpush.bf16.msra.mxu0 %v5191
    %8090 = vmatpush.bf16.msra.mxu0 %v5187
    %8091 = vmatpush.bf16.msra.mxu0 %v5183
    %8092 = vmatpush.bf16.msra.mxu0 %v5179
    %8093 = vmatpush.bf16.msra.mxu0 %v5175
    %8094 = vmatpush.bf16.msra.mxu0 %v5171
    %8095 = vmatpush.bf16.msra.mxu0 %v5167
    %8096 = vmatmul.bf16.gmra.mxu0 %v1222
    %v8097 = vpop.f32.mrf.mxu0
    %v8098 = vadd.f32 %v8084, %v8097
    %v8099 = vpop.f32.mrf.mxu0
    %v8100 = vadd.f32 %v8086, %v8099
    %8101 = vdwg.mxu0
    %8102 = vmatpush.bf16.msra.mxu0 %v5227
    %8103 = vmatpush.bf16.msra.mxu0 %v5223
    %8104 = vmatpush.bf16.msra.mxu0 %v5219
    %8105 = vmatpush.bf16.msra.mxu0 %v5215
    %8106 = vmatpush.bf16.msra.mxu0 %v5211
    %8107 = vmatpush.bf16.msra.mxu0 %v5207
    %8108 = vmatpush.bf16.msra.mxu0 %v5203
    %8109 = vmatpush.bf16.msra.mxu0 %v5199
    %8110 = vmatmul.bf16.gmra.mxu0 %v1223
    %v8111 = vpop.f32.mrf.mxu0
    %v8112 = vadd.f32 %v8098, %v8111
    %v8113 = vpop.f32.mrf.mxu0
    %v8114 = vadd.f32 %v8100, %v8113
    %8115 = vdwg.mxu0
    %8116 = vmatpush.bf16.msra.mxu0 %v5259
    %8117 = vmatpush.bf16.msra.mxu0 %v5255
    %8118 = vmatpush.bf16.msra.mxu0 %v5251
    %8119 = vmatpush.bf16.msra.mxu0 %v5247
    %8120 = vmatpush.bf16.msra.mxu0 %v5243
    %8121 = vmatpush.bf16.msra.mxu0 %v5239
    %8122 = vmatpush.bf16.msra.mxu0 %v5235
    %8123 = vmatpush.bf16.msra.mxu0 %v5231
    %8124 = vmatmul.bf16.gmra.mxu0 %v1224
    %v8125 = vpop.f32.mrf.mxu0
    %v8126 = vadd.f32 %v8112, %v8125
    %v8127 = vpop.f32.mrf.mxu0
    %v8128 = vadd.f32 %v8114, %v8127
    %8129 = vdwg.mxu0
    %8130 = vmatpush.bf16.msra.mxu0 %v5291
    %8131 = vmatpush.bf16.msra.mxu0 %v5287
    %8132 = vmatpush.bf16.msra.mxu0 %v5283
    %8133 = vmatpush.bf16.msra.mxu0 %v5279
    %8134 = vmatpush.bf16.msra.mxu0 %v5275
    %8135 = vmatpush.bf16.msra.mxu0 %v5271
    %8136 = vmatpush.bf16.msra.mxu0 %v5267
    %8137 = vmatpush.bf16.msra.mxu0 %v5263
    %8138 = vmatmul.bf16.gmra.mxu0 %v1225
    %v8139 = vpop.f32.mrf.mxu0
    %v8140 = vadd.f32 %v8126, %v8139
    %v8141 = vpop.f32.mrf.mxu0
    %v8142 = vadd.f32 %v8128, %v8141
    %8143 = vdwg.mxu0
    %8144 = vmatpush.bf16.msra.mxu0 %v5323
    %8145 = vmatpush.bf16.msra.mxu0 %v5319
    %8146 = vmatpush.bf16.msra.mxu0 %v5315
    %8147 = vmatpush.bf16.msra.mxu0 %v5311
    %8148 = vmatpush.bf16.msra.mxu0 %v5307
    %8149 = vmatpush.bf16.msra.mxu0 %v5303
    %8150 = vmatpush.bf16.msra.mxu0 %v5299
    %8151 = vmatpush.bf16.msra.mxu0 %v5295
    %8152 = vmatmul.bf16.gmra.mxu0 %v1226
    %v8153 = vpop.f32.mrf.mxu0
    %v8154 = vadd.f32 %v8140, %v8153
    %v8155 = vpop.f32.mrf.mxu0
    %v8156 = vadd.f32 %v8142, %v8155
    %8157 = vdwg.mxu0
    %8158 = vmatpush.bf16.msra.mxu0 %v5355
    %8159 = vmatpush.bf16.msra.mxu0 %v5351
    %8160 = vmatpush.bf16.msra.mxu0 %v5347
    %8161 = vmatpush.bf16.msra.mxu0 %v5343
    %8162 = vmatpush.bf16.msra.mxu0 %v5339
    %8163 = vmatpush.bf16.msra.mxu0 %v5335
    %8164 = vmatpush.bf16.msra.mxu0 %v5331
    %8165 = vmatpush.bf16.msra.mxu0 %v5327
    %8166 = vmatmul.bf16.gmra.mxu0 %v1227
    %v8167 = vpop.f32.mrf.mxu0
    %v8168 = vadd.f32 %v8154, %v8167
    %v8169 = vpop.f32.mrf.mxu0
    %v8170 = vadd.f32 %v8156, %v8169
    %8171 = vdwg.mxu0
    %v8172 = vmax.f32 %v6824, %v7272
    %v8173 = vmax.f32 %v6826, %v7274
    %v8174 = vmax.f32 %v7720, %v8168
    %v8175 = vmax.f32 %v7722, %v8170
    %v8176 = vmax.f32 %v8172, %v8174
    %v8177 = vmax.f32 %v8173, %v8175
    %v8178 = vld [vmem:[#allocation4] sm:$0x1]
    %v8180 = vperm.slane %v8178, 0
    %v8182 = vadd.f32 %v8176, %v8180
    %v8183 = vadd.f32 %v8177, %v8180
    %v8184 = vmax.f32 %v8182, 0.0
    %v8185 = vmax.f32 %v8183, 0.0
    %v8186 = vpack.c.bf16 %v8184, %v8184
    %v8187 = vpack.c.bf16 %v8185, %v8185
    %8188 = vst [vmem:[%s3] sm:$0xf] %v8186
    %8189 = vst [vmem:[%s3 + $0x4] sm:$0xf] %v8187
    // Predicated region
    $region22: #{forward.5} parent=1 // pred_check
      _
    $region23: #{forward.5} parent=1 // pred_check_branch
      %8191 = sbr.rel (0) target = $region25
    $region24: #{forward.5} parent=1 // pred_region
      _
    $region25: #{forward.5} parent=1 // pred_fallthru
      _
    // Predicated region
    $region26: #{forward.5} parent=1 // pred_check
      _
    $region27: #{forward.5} parent=1 // pred_check_branch
      %8193 = sbr.rel (0) target = $region29
    $region28: #{forward.5} parent=1 // pred_region
      _
    $region29: #{forward.5} parent=1 // pred_fallthru
      _
    %8194 = vsyncpa [#allocation3], 1
    %8195 = vsyncpa [#allocation5], 1

</llo_original>
